<compile_context>
chip_gen: v7x
topology: tpu7x:2x2x1
jax: 0.10.0
libtpu: 0.0.40
codegen_flags: <defaults>
</compile_context>

<pallas_src>
import jax
import jax.numpy as jnp
from jax.experimental import pallas as pl
from jax.experimental.pallas import tpu as pltpu


D_IN = 128
D_HID = 1024
D_OUT = 10
D_OUT_PAD = 128   # lane-dense padded width for the final layer


def mlp_kernel(x_ref,
               w1_ref, b1_ref,
               w2_ref, b2_ref,
               w3_ref, b3_ref,
               w4_ref, b4_ref,
               w5_ref, b5_ref,
               o_ref):
    # x arrives bf16; weights are bf16; biases f32.  Every dot is a pure
    # bf16 x bf16 MXU matmul with f32 accumulation; ReLU / bias-add in f32.
    h = jnp.dot(x_ref[...], w1_ref[...],
                preferred_element_type=jnp.float32) + b1_ref[...]
    h = jnp.maximum(h, 0.0)
    h = jnp.dot(h.astype(jnp.bfloat16), w2_ref[...],
                preferred_element_type=jnp.float32) + b2_ref[...]
    h = jnp.maximum(h, 0.0)
    h = jnp.dot(h.astype(jnp.bfloat16), w3_ref[...],
                preferred_element_type=jnp.float32) + b3_ref[...]
    h = jnp.maximum(h, 0.0)
    h = jnp.dot(h.astype(jnp.bfloat16), w4_ref[...],
                preferred_element_type=jnp.float32) + b4_ref[...]
    h = jnp.maximum(h, 0.0)
    o_ref[...] = (
        jnp.dot(h.astype(jnp.bfloat16), w5_ref[...],
                preferred_element_type=jnp.float32) + b5_ref[...]
    ).astype(o_ref.dtype)


def mlp_forward(x, params):
    """x: (B, 128) f32.
    params: 5 (W, b) pairs; W is bf16 of shape (in, out), b is f32 (1, out);
    the last layer is pre-padded to out = D_OUT_PAD lanes.
    Returns (B, 10) f32."""
    B = x.shape[0]

    # Halve the per-tile input DMA; kernel consumes bf16 activations anyway.
    x = x.astype(jnp.bfloat16)

    # Batch tile: small batches -> one 16-row-aligned tile (bf16 sublane
    # packing); large batches -> 512-row tiles so VMEM-resident weights are
    # amortized and the x/out pipeline hides the (tiny) per-tile DMA.
    TB = 512
    if B <= TB:
        TB = max(16, ((B + 15) // 16) * 16)
    B_pad = ((B + TB - 1) // TB) * TB
    if B_pad != B:
        x = jnp.pad(x, ((0, B_pad - B), (0, 0)))
    num_tiles = B_pad // TB

    (w1, b1), (w2, b2), (w3, b3), (w4, b4), (w5, b5) = params

    def resident(arr):
        # Full-operand block, constant block index: DMA'd once, reused for
        # every batch tile.  Single-buffered (Buffered(1)) since it never
        # changes -> reclaims ~7 MiB of VMEM vs the default double buffer.
        n = arr.ndim
        return pl.BlockSpec(arr.shape, lambda i, n=n: (0,) * n,
                            pipeline_mode=pl.Buffered(1))

    in_specs = [
        pl.BlockSpec((TB, D_IN), lambda i: (i, 0)),       # x: tiled on batch
        resident(w1), resident(b1),
        resident(w2), resident(b2),
        resident(w3), resident(b3),
        resident(w4), resident(b4),
        resident(w5), resident(b5),
    ]
    out_specs = pl.BlockSpec((TB, D_OUT_PAD), lambda i: (i, 0))

    weight_bytes = sum(int(w.size) * w.dtype.itemsize + int(b.size) * 4
                       for w, b in params)
    flops = 2 * B_pad * (D_IN * D_HID + 3 * D_HID * D_HID + D_HID * D_OUT_PAD)
    bytes_accessed = (weight_bytes
                      + B_pad * D_IN * 2          # bf16 input
                      + B_pad * D_OUT_PAD * 4)    # f32 padded output

    out_padded = pl.pallas_call(
        mlp_kernel,
        out_shape=jax.ShapeDtypeStruct((B_pad, D_OUT_PAD), jnp.float32),
        grid=(num_tiles,),
        in_specs=in_specs,
        out_specs=out_specs,
        compiler_params=pltpu.CompilerParams(
            # Batch tiles are fully independent -> shard across TCs on v7x.
            dimension_semantics=("parallel",),
            vmem_limit_bytes=40 << 20,
        ),
        cost_estimate=pl.CostEstimate(
            flops=flops, transcendentals=0, bytes_accessed=bytes_accessed),
    )(x, w1, b1, w2, b2, w3, b3, w4, b4, w5, b5)

    return out_padded[:B, :D_OUT]


def init_linear(key, fan_in, fan_out, pad_out=None):
    """Deterministic init mimicking nn.Linear defaults (uniform +-1/sqrt(fan_in)).
    Returns W transposed to (fan_in, fan_out) in bf16 and bias (1, fan_out) f32;
    optionally zero-pads the output dimension to `pad_out` lanes."""
    kw, kb = jax.random.split(key)
    bound = 1.0 / jnp.sqrt(jnp.float32(fan_in))
    w = jax.random.uniform(kw, (fan_in, fan_out), jnp.float32, -bound, bound)
    b = jax.random.uniform(kb, (1, fan_out), jnp.float32, -bound, bound)
    if pad_out is not None and pad_out > fan_out:
        w = jnp.pad(w, ((0, 0), (0, pad_out - fan_out)))
        b = jnp.pad(b, ((0, 0), (0, pad_out - fan_out)))
    return w.astype(jnp.bfloat16), b


if __name__ == "__main__":
    key = jax.random.PRNGKey(0)
    keys = jax.random.split(key, 6)

    # Parameter shapes match the PyTorch module; final layer padded 10 -> 128.
    dims = [(D_IN, D_HID, None),
            (D_HID, D_HID, None),
            (D_HID, D_HID, None),
            (D_HID, D_HID, None),
            (D_HID, D_OUT, D_OUT_PAD)]
    params = [init_linear(keys[i], fi, fo, pad)
              for i, (fi, fo, pad) in enumerate(dims)]

    # Small example input: batch=8, features=128 (as implied by fc1).
    x = jax.random.normal(keys[5], (8, D_IN), jnp.float32)

    out = mlp_forward(x, params)
    out = jax.block_until_ready(out)

    # Reference in plain JAX, same bf16-quantized x and weights upcast to f32.
    ref = x.astype(jnp.bfloat16).astype(jnp.float32)
    for i, (w, b) in enumerate(params):
        ref = ref @ w.astype(jnp.float32) + b
        if i < len(params) - 1:
            ref = jnp.maximum(ref, 0.0)
    ref = ref[:, :D_OUT]

    assert out.shape == (8, D_OUT)
    assert jnp.allclose(out, ref, atol=2e-2, rtol=2e-2)

    print("KERNEL_OK")
</pallas_src>

<mosaic_0001>
module attributes {stable_mosaic.version = 11 : i64} {
  func.func @mlp_kernel(%arg0: i32, %arg1: memref<16x128xbf16, #tpu.memory_space<vmem>>, %arg2: memref<128x1024xbf16, #tpu.memory_space<vmem>>, %arg3: memref<1x1024xf32, #tpu.memory_space<vmem>>, %arg4: memref<1024x1024xbf16, #tpu.memory_space<vmem>>, %arg5: memref<1x1024xf32, #tpu.memory_space<vmem>>, %arg6: memref<1024x1024xbf16, #tpu.memory_space<vmem>>, %arg7: memref<1x1024xf32, #tpu.memory_space<vmem>>, %arg8: memref<1024x1024xbf16, #tpu.memory_space<vmem>>, %arg9: memref<1x1024xf32, #tpu.memory_space<vmem>>, %arg10: memref<1024x128xbf16, #tpu.memory_space<vmem>>, %arg11: memref<1x128xf32, #tpu.memory_space<vmem>>, %arg12: memref<16x128xf32, #tpu.memory_space<vmem>>) attributes {dimension_semantics = [#tpu.dimension_semantics<parallel>], iteration_bounds = array<i64: 1>, scalar_prefetch = 0 : i64, scratch_operands = 0 : i64, tpu.core_type = #tpu.core_type<tc>, window_params = [{transform_indices = @transform_0, window_bounds = array<i64: 16, 128>}, {pipeline_mode = #tpu.pipeline_mode<synchronous>, transform_indices = @transform_1, window_bounds = array<i64: 128, 1024>}, {pipeline_mode = #tpu.pipeline_mode<synchronous>, transform_indices = @transform_2, window_bounds = array<i64: 1, 1024>}, {pipeline_mode = #tpu.pipeline_mode<synchronous>, transform_indices = @transform_3, window_bounds = array<i64: 1024, 1024>}, {pipeline_mode = #tpu.pipeline_mode<synchronous>, transform_indices = @transform_4, window_bounds = array<i64: 1, 1024>}, {pipeline_mode = #tpu.pipeline_mode<synchronous>, transform_indices = @transform_5, window_bounds = array<i64: 1024, 1024>}, {pipeline_mode = #tpu.pipeline_mode<synchronous>, transform_indices = @transform_6, window_bounds = array<i64: 1, 1024>}, {pipeline_mode = #tpu.pipeline_mode<synchronous>, transform_indices = @transform_7, window_bounds = array<i64: 1024, 1024>}, {pipeline_mode = #tpu.pipeline_mode<synchronous>, transform_indices = @transform_8, window_bounds = array<i64: 1, 1024>}, {pipeline_mode = #tpu.pipeline_mode<synchronous>, transform_indices = @transform_9, window_bounds = array<i64: 1024, 128>}, {pipeline_mode = #tpu.pipeline_mode<synchronous>, transform_indices = @transform_10, window_bounds = array<i64: 1, 128>}, {transform_indices = @transform_11, window_bounds = array<i64: 16, 128>}]} {
    %c0 = arith.constant 0 : index
    %c0_0 = arith.constant 0 : index
    %0 = vector.load %arg1[%c0, %c0_0] : memref<16x128xbf16, #tpu.memory_space<vmem>>, vector<16x128xbf16>
    %c0_1 = arith.constant 0 : index
    %c0_2 = arith.constant 0 : index
    %1 = vector.load %arg2[%c0_1, %c0_2] : memref<128x1024xbf16, #tpu.memory_space<vmem>>, vector<128x1024xbf16>
    %cst = arith.constant dense<0.000000e+00> : vector<16x1024xf32>
    %2 = tpu.matmul %0, %1, %cst {dimension_numbers = #tpu.dot_dimension_numbers<[1], [0], [0], [1], [0, 0, 1, 1], [], []>} : vector<16x128xbf16>, vector<128x1024xbf16>, vector<16x1024xf32> -> vector<16x1024xf32>
    %c0_3 = arith.constant 0 : index
    %c0_4 = arith.constant 0 : index
    %3 = vector.load %arg3[%c0_3, %c0_4] : memref<1x1024xf32, #tpu.memory_space<vmem>>, vector<1x1024xf32>
    %4 = vector.broadcast %3 : vector<1x1024xf32> to vector<16x1024xf32>
    %5 = arith.addf %2, %4 : vector<16x1024xf32>
    %cst_5 = arith.constant 0.000000e+00 : f32
    %6 = vector.broadcast %cst_5 : f32 to vector<16x1024xf32>
    %7 = arith.maximumf %5, %6 : vector<16x1024xf32>
    %8 = arith.truncf %7 : vector<16x1024xf32> to vector<16x1024xbf16>
    %c0_6 = arith.constant 0 : index
    %c0_7 = arith.constant 0 : index
    %9 = vector.load %arg4[%c0_6, %c0_7] : memref<1024x1024xbf16, #tpu.memory_space<vmem>>, vector<1024x1024xbf16>
    %cst_8 = arith.constant dense<0.000000e+00> : vector<16x1024xf32>
    %10 = tpu.matmul %8, %9, %cst_8 {dimension_numbers = #tpu.dot_dimension_numbers<[1], [0], [0], [1], [0, 0, 1, 1], [], []>} : vector<16x1024xbf16>, vector<1024x1024xbf16>, vector<16x1024xf32> -> vector<16x1024xf32>
    %c0_9 = arith.constant 0 : index
    %c0_10 = arith.constant 0 : index
    %11 = vector.load %arg5[%c0_9, %c0_10] : memref<1x1024xf32, #tpu.memory_space<vmem>>, vector<1x1024xf32>
    %12 = vector.broadcast %11 : vector<1x1024xf32> to vector<16x1024xf32>
    %13 = arith.addf %10, %12 : vector<16x1024xf32>
    %cst_11 = arith.constant 0.000000e+00 : f32
    %14 = vector.broadcast %cst_11 : f32 to vector<16x1024xf32>
    %15 = arith.maximumf %13, %14 : vector<16x1024xf32>
    %16 = arith.truncf %15 : vector<16x1024xf32> to vector<16x1024xbf16>
    %c0_12 = arith.constant 0 : index
    %c0_13 = arith.constant 0 : index
    %17 = vector.load %arg6[%c0_12, %c0_13] : memref<1024x1024xbf16, #tpu.memory_space<vmem>>, vector<1024x1024xbf16>
    %cst_14 = arith.constant dense<0.000000e+00> : vector<16x1024xf32>
    %18 = tpu.matmul %16, %17, %cst_14 {dimension_numbers = #tpu.dot_dimension_numbers<[1], [0], [0], [1], [0, 0, 1, 1], [], []>} : vector<16x1024xbf16>, vector<1024x1024xbf16>, vector<16x1024xf32> -> vector<16x1024xf32>
    %c0_15 = arith.constant 0 : index
    %c0_16 = arith.constant 0 : index
    %19 = vector.load %arg7[%c0_15, %c0_16] : memref<1x1024xf32, #tpu.memory_space<vmem>>, vector<1x1024xf32>
    %20 = vector.broadcast %19 : vector<1x1024xf32> to vector<16x1024xf32>
    %21 = arith.addf %18, %20 : vector<16x1024xf32>
    %cst_17 = arith.constant 0.000000e+00 : f32
    %22 = vector.broadcast %cst_17 : f32 to vector<16x1024xf32>
    %23 = arith.maximumf %21, %22 : vector<16x1024xf32>
    %24 = arith.truncf %23 : vector<16x1024xf32> to vector<16x1024xbf16>
    %c0_18 = arith.constant 0 : index
    %c0_19 = arith.constant 0 : index
    %25 = vector.load %arg8[%c0_18, %c0_19] : memref<1024x1024xbf16, #tpu.memory_space<vmem>>, vector<1024x1024xbf16>
    %cst_20 = arith.constant dense<0.000000e+00> : vector<16x1024xf32>
    %26 = tpu.matmul %24, %25, %cst_20 {dimension_numbers = #tpu.dot_dimension_numbers<[1], [0], [0], [1], [0, 0, 1, 1], [], []>} : vector<16x1024xbf16>, vector<1024x1024xbf16>, vector<16x1024xf32> -> vector<16x1024xf32>
    %c0_21 = arith.constant 0 : index
    %c0_22 = arith.constant 0 : index
    %27 = vector.load %arg9[%c0_21, %c0_22] : memref<1x1024xf32, #tpu.memory_space<vmem>>, vector<1x1024xf32>
    %28 = vector.broadcast %27 : vector<1x1024xf32> to vector<16x1024xf32>
    %29 = arith.addf %26, %28 : vector<16x1024xf32>
    %cst_23 = arith.constant 0.000000e+00 : f32
    %30 = vector.broadcast %cst_23 : f32 to vector<16x1024xf32>
    %31 = arith.maximumf %29, %30 : vector<16x1024xf32>
    %32 = arith.truncf %31 : vector<16x1024xf32> to vector<16x1024xbf16>
    %c0_24 = arith.constant 0 : index
    %c0_25 = arith.constant 0 : index
    %33 = vector.load %arg10[%c0_24, %c0_25] : memref<1024x128xbf16, #tpu.memory_space<vmem>>, vector<1024x128xbf16>
    %cst_26 = arith.constant dense<0.000000e+00> : vector<16x128xf32>
    %34 = tpu.matmul %32, %33, %cst_26 {dimension_numbers = #tpu.dot_dimension_numbers<[1], [0], [0], [1], [0, 0, 1, 1], [], []>} : vector<16x1024xbf16>, vector<1024x128xbf16>, vector<16x128xf32> -> vector<16x128xf32>
    %c0_27 = arith.constant 0 : index
    %c0_28 = arith.constant 0 : index
    %35 = vector.load %arg11[%c0_27, %c0_28] : memref<1x128xf32, #tpu.memory_space<vmem>>, vector<1x128xf32>
    %36 = vector.broadcast %35 : vector<1x128xf32> to vector<16x128xf32>
    %37 = arith.addf %34, %36 : vector<16x128xf32>
    %c0_29 = arith.constant 0 : index
    %c0_30 = arith.constant 0 : index
    %38 = vector.load %arg12[%c0_29, %c0_30] : memref<16x128xf32, #tpu.memory_space<vmem>>, vector<16x128xf32>
    tpu.vector_store %arg12[%c0_29, %c0_30], %37 {strides = array<i32>} : memref<16x128xf32, #tpu.memory_space<vmem>>, vector<16x128xf32>,
    return
  }
  func.func @transform_0(%arg0: i32) -> (i32, i32) {
    %c0_i32 = arith.constant 0 : i32
    %c0_i32_0 = arith.constant 0 : i32
    return %arg0, %c0_i32 : i32, i32
  }
  func.func @transform_1(%arg0: i32) -> (i32, i32) {
    %c0_i32 = arith.constant 0 : i32
    %c0_i32_0 = arith.constant 0 : i32
    %c0_i32_1 = arith.constant 0 : i32
    return %c0_i32, %c0_i32_0 : i32, i32
  }
  func.func @transform_2(%arg0: i32) -> (i32, i32) {
    %c0_i32 = arith.constant 0 : i32
    %c0_i32_0 = arith.constant 0 : i32
    %c0_i32_1 = arith.constant 0 : i32
    return %c0_i32, %c0_i32_0 : i32, i32
  }
  func.func @transform_3(%arg0: i32) -> (i32, i32) {
    %c0_i32 = arith.constant 0 : i32
    %c0_i32_0 = arith.constant 0 : i32
    %c0_i32_1 = arith.constant 0 : i32
    return %c0_i32, %c0_i32_0 : i32, i32
  }
  func.func @transform_4(%arg0: i32) -> (i32, i32) {
    %c0_i32 = arith.constant 0 : i32
    %c0_i32_0 = arith.constant 0 : i32
    %c0_i32_1 = arith.constant 0 : i32
    return %c0_i32, %c0_i32_0 : i32, i32
  }
  func.func @transform_5(%arg0: i32) -> (i32, i32) {
    %c0_i32 = arith.constant 0 : i32
    %c0_i32_0 = arith.constant 0 : i32
    %c0_i32_1 = arith.constant 0 : i32
    return %c0_i32, %c0_i32_0 : i32, i32
  }
  func.func @transform_6(%arg0: i32) -> (i32, i32) {
    %c0_i32 = arith.constant 0 : i32
    %c0_i32_0 = arith.constant 0 : i32
    %c0_i32_1 = arith.constant 0 : i32
    return %c0_i32, %c0_i32_0 : i32, i32
  }
  func.func @transform_7(%arg0: i32) -> (i32, i32) {
    %c0_i32 = arith.constant 0 : i32
    %c0_i32_0 = arith.constant 0 : i32
    %c0_i32_1 = arith.constant 0 : i32
    return %c0_i32, %c0_i32_0 : i32, i32
  }
  func.func @transform_8(%arg0: i32) -> (i32, i32) {
    %c0_i32 = arith.constant 0 : i32
    %c0_i32_0 = arith.constant 0 : i32
    %c0_i32_1 = arith.constant 0 : i32
    return %c0_i32, %c0_i32_0 : i32, i32
  }
  func.func @transform_9(%arg0: i32) -> (i32, i32) {
    %c0_i32 = arith.constant 0 : i32
    %c0_i32_0 = arith.constant 0 : i32
    %c0_i32_1 = arith.constant 0 : i32
    return %c0_i32, %c0_i32_0 : i32, i32
  }
  func.func @transform_10(%arg0: i32) -> (i32, i32) {
    %c0_i32 = arith.constant 0 : i32
    %c0_i32_0 = arith.constant 0 : i32
    %c0_i32_1 = arith.constant 0 : i32
    return %c0_i32, %c0_i32_0 : i32, i32
  }
  func.func @transform_11(%arg0: i32) -> (i32, i32) {
    %c0_i32 = arith.constant 0 : i32
    %c0_i32_0 = arith.constant 0 : i32
    return %arg0, %c0_i32 : i32, i32
  }
}

</mosaic_0001>

<llo_original>
// kernel: tpu_custom_call.1
$region0: #{tpu_custom_call.1}
  #allocation0 [shape = 'u32[]', space=smem, size = 0x4, offset = 0x4, fixed_abs, tag = 'smem constant byte address 0x4 - core index']
  #allocation1 [shape = 'u32[144,128]{1,0:T(1,128)}', space=vmem, size = 0x12000, scoped, tag = 'internal scratch']
  %s0 = inlined_call_operand.hbm [shape: bf16[16,128], index: 0, kind: input, shape index: {}]
  %s1 = inlined_call_operand.hbm [shape: bf16[128,1024], index: 1, kind: input, shape index: {}]
  %s2 = inlined_call_operand.hbm [shape: f32[1,1024], index: 2, kind: input, shape index: {}]
  %s3 = inlined_call_operand.hbm [shape: bf16[1024,1024], index: 3, kind: input, shape index: {}]
  %s4 = inlined_call_operand.hbm [shape: f32[1,1024], index: 4, kind: input, shape index: {}]
  %s5 = inlined_call_operand.hbm [shape: bf16[1024,1024], index: 5, kind: input, shape index: {}]
  %s6 = inlined_call_operand.hbm [shape: f32[1,1024], index: 6, kind: input, shape index: {}]
  %s7 = inlined_call_operand.hbm [shape: bf16[1024,1024], index: 7, kind: input, shape index: {}]
  %s8 = inlined_call_operand.hbm [shape: f32[1,1024], index: 8, kind: input, shape index: {}]
  %s9 = inlined_call_operand.hbm [shape: bf16[1024,128], index: 9, kind: input, shape index: {}]
  %s10 = inlined_call_operand.hbm [shape: f32[1,128], index: 10, kind: input, shape index: {}]
  %s11 = inlined_call_operand.hbm [shape: f32[16,128], index: 11, kind: output, shape index: {}]
  %s12 = sld [smem:[#allocation0]]
  $region98: #{tpu_custom_call.1} parent=0
    _
  %s14 = ssub.s32 1, %s12
  %s15 = scalar_select 0, %s14, %s12
  $region1: #{tpu_custom_call.1} parent=0
    #allocation2 [shape = 'u8[4096]{0}', space=vmem, size = 0x1000, scoped, tag = 'input window, operand 0, single buffered']
    #allocation3 [shape = 's32[1]{0}', space=sflag, size = 0x4, scoped, tag = 'scoped memory for tpu_custom_call.1']
    #allocation4 [shape = 's32[1]{0}', space=sflag, size = 0x4, scoped, tag = 'scoped memory for tpu_custom_call.1']
    #allocation5 [shape = 'u8[262144]{0}', space=vmem, size = 0x40000, scoped, tag = 'input window, operand 1, single buffered']
    #allocation6 [shape = 's32[1]{0}', space=sflag, size = 0x4, scoped, tag = 'scoped memory for tpu_custom_call.1']
    #allocation7 [shape = 'u8[4096]{0}', space=vmem, size = 0x1000, scoped, tag = 'input window, operand 2, single buffered']
    #allocation8 [shape = 'u8[2097152]{0}', space=vmem, size = 0x200000, scoped, tag = 'input window, operand 3, single buffered']
    #allocation9 [shape = 's32[1]{0}', space=sflag, size = 0x4, scoped, tag = 'scoped memory for tpu_custom_call.1']
    #allocation10 [shape = 'u8[4096]{0}', space=vmem, size = 0x1000, scoped, tag = 'input window, operand 4, single buffered']
    #allocation11 [shape = 'u8[2097152]{0}', space=vmem, size = 0x200000, scoped, tag = 'input window, operand 5, single buffered']
    #allocation12 [shape = 's32[1]{0}', space=sflag, size = 0x4, scoped, tag = 'scoped memory for tpu_custom_call.1']
    #allocation13 [shape = 'u8[4096]{0}', space=vmem, size = 0x1000, scoped, tag = 'input window, operand 6, single buffered']
    #allocation14 [shape = 'u8[2097152]{0}', space=vmem, size = 0x200000, scoped, tag = 'input window, operand 7, single buffered']
    #allocation15 [shape = 's32[1]{0}', space=sflag, size = 0x4, scoped, tag = 'scoped memory for tpu_custom_call.1']
    #allocation16 [shape = 'u8[4096]{0}', space=vmem, size = 0x1000, scoped, tag = 'input window, operand 8, single buffered']
    #allocation17 [shape = 'u8[262144]{0}', space=vmem, size = 0x40000, scoped, tag = 'input window, operand 9, single buffered']
    #allocation18 [shape = 's32[1]{0}', space=sflag, size = 0x4, scoped, tag = 'scoped memory for tpu_custom_call.1']
    #allocation19 [shape = 'u8[512]{0}', space=vmem, size = 0x400, scoped, tag = 'input window, operand 10, single buffered']
    #allocation20 [shape = 'u8[8192]{0}', space=vmem, size = 0x2000, scoped, tag = 'output window, operand 0, single buffered']
    %16 = vsyncpa [#allocation3], 0
    %17 = vsyncpa [#allocation6], 0
    %18 = vsyncpa [#allocation9], 0
    %19 = vsyncpa [#allocation12], 0
    %20 = vsyncpa [#allocation15], 0
    %21 = vsyncpa [#allocation18], 0
    %22 = vsyncpa [#allocation4], 0
    // Predicated region
    $region2: #{tpu_custom_call.1} parent=1 // pred_check
      _
    $region3: #{tpu_custom_call.1} parent=1 // pred_check_branch
      %24 = sbr.rel (0) target = $region5
    $region4: #{tpu_custom_call.1} parent=1 // pred_region
      %s26 = ssub.s32 128, 128
      %27 = vsyncadd [#allocation3], %s26
      %s28 = sshll.u32 [#allocation2], 4
      %s29 = int_to_ptr.vmem [resolvable:$true] %s28
      %34 = dma.hbm_to_vmem [thread:$0]  %s0, 128, %s29, [#allocation3], 64, 64, 4
    $region5: #{tpu_custom_call.1} parent=1 // pred_fallthru
      _
    // Predicated region
    $region6: #{tpu_custom_call.1} parent=1 // pred_check
      _
    $region7: #{tpu_custom_call.1} parent=1 // pred_check_branch
      %36 = sbr.rel (0) target = $region9
    $region8: #{tpu_custom_call.1} parent=1 // pred_region
      %s38 = ssub.s32 8192, 8192
      %39 = vsyncadd [#allocation6], %s38
      %s40 = sshll.u32 [#allocation5], 4
      %s41 = int_to_ptr.vmem [resolvable:$true] %s40
      %46 = dma.hbm_to_vmem [thread:$0]  %s1, 8192, %s41, [#allocation6], 512, 512, 32
    $region9: #{tpu_custom_call.1} parent=1 // pred_fallthru
      _
    // Predicated region
    $region10: #{tpu_custom_call.1} parent=1 // pred_check
      _
    $region11: #{tpu_custom_call.1} parent=1 // pred_check_branch
      %48 = sbr.rel (0) target = $region13
    $region12: #{tpu_custom_call.1} parent=1 // pred_region
      %s50 = ssub.s32 128, 128
      %51 = vsyncadd [#allocation6], %s50
      %s53 = sshll.u32 [#allocation7], 4
      %s54 = int_to_ptr.vmem [resolvable:$true] %s53
      %56 = dma.hbm_to_vmem [thread:$0]  %s2, 128, %s54, [#allocation6]
    $region13: #{tpu_custom_call.1} parent=1 // pred_fallthru
      _
    // Predicated region
    $region14: #{tpu_custom_call.1} parent=1 // pred_check
      _
    $region15: #{tpu_custom_call.1} parent=1 // pred_check_branch
      %58 = sbr.rel (0) target = $region17
    $region16: #{tpu_custom_call.1} parent=1 // pred_region
      %s60 = ssub.s32 65536, 65536
      %61 = vsyncadd [#allocation9], %s60
      %s62 = sshll.u32 [#allocation8], 4
      %s63 = int_to_ptr.vmem [resolvable:$true] %s62
      %68 = dma.hbm_to_vmem [thread:$0]  %s3, 65536, %s63, [#allocation9], 512, 512, 32
    $region17: #{tpu_custom_call.1} parent=1 // pred_fallthru
      _
    // Predicated region
    $region18: #{tpu_custom_call.1} parent=1 // pred_check
      _
    $region19: #{tpu_custom_call.1} parent=1 // pred_check_branch
      %70 = sbr.rel (0) target = $region21
    $region20: #{tpu_custom_call.1} parent=1 // pred_region
      %s72 = ssub.s32 128, 128
      %73 = vsyncadd [#allocation9], %s72
      %s75 = sshll.u32 [#allocation10], 4
      %s76 = int_to_ptr.vmem [resolvable:$true] %s75
      %78 = dma.hbm_to_vmem [thread:$0]  %s4, 128, %s76, [#allocation9]
    $region21: #{tpu_custom_call.1} parent=1 // pred_fallthru
      _
    // Predicated region
    $region22: #{tpu_custom_call.1} parent=1 // pred_check
      _
    $region23: #{tpu_custom_call.1} parent=1 // pred_check_branch
      %80 = sbr.rel (0) target = $region25
    $region24: #{tpu_custom_call.1} parent=1 // pred_region
      %s82 = ssub.s32 65536, 65536
      %83 = vsyncadd [#allocation12], %s82
      %s84 = sshll.u32 [#allocation11], 4
      %s85 = int_to_ptr.vmem [resolvable:$true] %s84
      %90 = dma.hbm_to_vmem [thread:$0]  %s5, 65536, %s85, [#allocation12], 512, 512, 32
    $region25: #{tpu_custom_call.1} parent=1 // pred_fallthru
      _
    // Predicated region
    $region26: #{tpu_custom_call.1} parent=1 // pred_check
      _
    $region27: #{tpu_custom_call.1} parent=1 // pred_check_branch
      %92 = sbr.rel (0) target = $region29
    $region28: #{tpu_custom_call.1} parent=1 // pred_region
      %s94 = ssub.s32 128, 128
      %95 = vsyncadd [#allocation12], %s94
      %s97 = sshll.u32 [#allocation13], 4
      %s98 = int_to_ptr.vmem [resolvable:$true] %s97
      %100 = dma.hbm_to_vmem [thread:$0]  %s6, 128, %s98, [#allocation12]
    $region29: #{tpu_custom_call.1} parent=1 // pred_fallthru
      _
    // Predicated region
    $region30: #{tpu_custom_call.1} parent=1 // pred_check
      _
    $region31: #{tpu_custom_call.1} parent=1 // pred_check_branch
      %102 = sbr.rel (0) target = $region33
    $region32: #{tpu_custom_call.1} parent=1 // pred_region
      %s104 = ssub.s32 65536, 65536
      %105 = vsyncadd [#allocation15], %s104
      %s106 = sshll.u32 [#allocation14], 4
      %s107 = int_to_ptr.vmem [resolvable:$true] %s106
      %112 = dma.hbm_to_vmem [thread:$0]  %s7, 65536, %s107, [#allocation15], 512, 512, 32
    $region33: #{tpu_custom_call.1} parent=1 // pred_fallthru
      _
    // Predicated region
    $region34: #{tpu_custom_call.1} parent=1 // pred_check
      _
    $region35: #{tpu_custom_call.1} parent=1 // pred_check_branch
      %114 = sbr.rel (0) target = $region37
    $region36: #{tpu_custom_call.1} parent=1 // pred_region
      %s116 = ssub.s32 128, 128
      %117 = vsyncadd [#allocation15], %s116
      %s119 = sshll.u32 [#allocation16], 4
      %s120 = int_to_ptr.vmem [resolvable:$true] %s119
      %122 = dma.hbm_to_vmem [thread:$0]  %s8, 128, %s120, [#allocation15]
    $region37: #{tpu_custom_call.1} parent=1 // pred_fallthru
      _
    // Predicated region
    $region38: #{tpu_custom_call.1} parent=1 // pred_check
      _
    $region39: #{tpu_custom_call.1} parent=1 // pred_check_branch
      %124 = sbr.rel (0) target = $region41
    $region40: #{tpu_custom_call.1} parent=1 // pred_region
      %s126 = ssub.s32 8192, 8192
      %127 = vsyncadd [#allocation18], %s126
      %s128 = sshll.u32 [#allocation17], 4
      %s129 = int_to_ptr.vmem [resolvable:$true] %s128
      %134 = dma.hbm_to_vmem [thread:$0]  %s9, 8192, %s129, [#allocation18], 64, 64, 4
    $region41: #{tpu_custom_call.1} parent=1 // pred_fallthru
      _
    // Predicated region
    $region42: #{tpu_custom_call.1} parent=1 // pred_check
      _
    $region43: #{tpu_custom_call.1} parent=1 // pred_check_branch
      %136 = sbr.rel (0) target = $region45
    $region44: #{tpu_custom_call.1} parent=1 // pred_region
      %s138 = ssub.s32 16, 16
      %139 = vsyncadd [#allocation18], %s138
      %s141 = sshll.u32 [#allocation19], 4
      %s142 = int_to_ptr.vmem [resolvable:$true] %s141
      %144 = dma.hbm_to_vmem [thread:$0]  %s10, 16, %s142, [#allocation18]
    $region45: #{tpu_custom_call.1} parent=1 // pred_fallthru
      _
    // Predicated region
    $region46: #{tpu_custom_call.1} parent=1 // pred_check
      _
    $region47: #{tpu_custom_call.1} parent=1 // pred_check_branch
      %146 = sbr.rel (0) target = $region49
    $region48: #{tpu_custom_call.1} parent=1 // pred_region
      %147 = dma.done [#allocation3], 128
    $region49: #{tpu_custom_call.1} parent=1 // pred_fallthru
      _
    // Predicated region
    $region50: #{tpu_custom_call.1} parent=1 // pred_check
      _
    $region51: #{tpu_custom_call.1} parent=1 // pred_check_branch
      %149 = sbr.rel (0) target = $region53
    $region52: #{tpu_custom_call.1} parent=1 // pred_region
      %150 = dma.done [#allocation6], 8192
    $region53: #{tpu_custom_call.1} parent=1 // pred_fallthru
      _
    // Predicated region
    $region54: #{tpu_custom_call.1} parent=1 // pred_check
      _
    $region55: #{tpu_custom_call.1} parent=1 // pred_check_branch
      %152 = sbr.rel (0) target = $region57
    $region56: #{tpu_custom_call.1} parent=1 // pred_region
      %153 = dma.done [#allocation6], 128
    $region57: #{tpu_custom_call.1} parent=1 // pred_fallthru
      _
    // Predicated region
    $region58: #{tpu_custom_call.1} parent=1 // pred_check
      _
    $region59: #{tpu_custom_call.1} parent=1 // pred_check_branch
      %155 = sbr.rel (0) target = $region61
    $region60: #{tpu_custom_call.1} parent=1 // pred_region
      %156 = dma.done [#allocation9], 65536
    $region61: #{tpu_custom_call.1} parent=1 // pred_fallthru
      _
    // Predicated region
    $region62: #{tpu_custom_call.1} parent=1 // pred_check
      _
    $region63: #{tpu_custom_call.1} parent=1 // pred_check_branch
      %158 = sbr.rel (0) target = $region65
    $region64: #{tpu_custom_call.1} parent=1 // pred_region
      %159 = dma.done [#allocation9], 128
    $region65: #{tpu_custom_call.1} parent=1 // pred_fallthru
      _
    // Predicated region
    $region66: #{tpu_custom_call.1} parent=1 // pred_check
      _
    $region67: #{tpu_custom_call.1} parent=1 // pred_check_branch
      %161 = sbr.rel (0) target = $region69
    $region68: #{tpu_custom_call.1} parent=1 // pred_region
      %162 = dma.done [#allocation12], 65536
    $region69: #{tpu_custom_call.1} parent=1 // pred_fallthru
      _
    // Predicated region
    $region70: #{tpu_custom_call.1} parent=1 // pred_check
      _
    $region71: #{tpu_custom_call.1} parent=1 // pred_check_branch
      %164 = sbr.rel (0) target = $region73
    $region72: #{tpu_custom_call.1} parent=1 // pred_region
      %165 = dma.done [#allocation12], 128
    $region73: #{tpu_custom_call.1} parent=1 // pred_fallthru
      _
    // Predicated region
    $region74: #{tpu_custom_call.1} parent=1 // pred_check
      _
    $region75: #{tpu_custom_call.1} parent=1 // pred_check_branch
      %167 = sbr.rel (0) target = $region77
    $region76: #{tpu_custom_call.1} parent=1 // pred_region
      %168 = dma.done [#allocation15], 65536
    $region77: #{tpu_custom_call.1} parent=1 // pred_fallthru
      _
    // Predicated region
    $region78: #{tpu_custom_call.1} parent=1 // pred_check
      _
    $region79: #{tpu_custom_call.1} parent=1 // pred_check_branch
      %170 = sbr.rel (0) target = $region81
    $region80: #{tpu_custom_call.1} parent=1 // pred_region
      %171 = dma.done [#allocation15], 128
    $region81: #{tpu_custom_call.1} parent=1 // pred_fallthru
      _
    // Predicated region
    $region82: #{tpu_custom_call.1} parent=1 // pred_check
      _
    $region83: #{tpu_custom_call.1} parent=1 // pred_check_branch
      %173 = sbr.rel (0) target = $region85
    $region84: #{tpu_custom_call.1} parent=1 // pred_region
      %174 = dma.done [#allocation18], 8192
    $region85: #{tpu_custom_call.1} parent=1 // pred_fallthru
      _
    // Predicated region
    $region86: #{tpu_custom_call.1} parent=1 // pred_check
      _
    $region87: #{tpu_custom_call.1} parent=1 // pred_check_branch
      %176 = sbr.rel (0) target = $region89
    $region88: #{tpu_custom_call.1} parent=1 // pred_region
      %177 = dma.done [#allocation18], 16
    $region89: #{tpu_custom_call.1} parent=1 // pred_fallthru
      _
    %v179 = vld [vmem:[#allocation2] sm:$0xf]
    %v180 = vld [vmem:[#allocation2 + $0x4] sm:$0xf]
    %v181 = vld [vmem:[#allocation5] sm:$0xff]
    %v182 = vld [vmem:[#allocation5 + $0x8] sm:$0xff]
    %v183 = vld [vmem:[#allocation5 + $0x10] sm:$0xff]
    %v184 = vld [vmem:[#allocation5 + $0x18] sm:$0xff]
    %v185 = vld [vmem:[#allocation5 + $0x20] sm:$0xff]
    %v186 = vld [vmem:[#allocation5 + $0x28] sm:$0xff]
    %v187 = vld [vmem:[#allocation5 + $0x30] sm:$0xff]
    %v188 = vld [vmem:[#allocation5 + $0x38] sm:$0xff]
    %v189 = vld [vmem:[#allocation5 + $0x40] sm:$0xff]
    %v190 = vld [vmem:[#allocation5 + $0x48] sm:$0xff]
    %v191 = vld [vmem:[#allocation5 + $0x50] sm:$0xff]
    %v192 = vld [vmem:[#allocation5 + $0x58] sm:$0xff]
    %v193 = vld [vmem:[#allocation5 + $0x60] sm:$0xff]
    %v194 = vld [vmem:[#allocation5 + $0x68] sm:$0xff]
    %v195 = vld [vmem:[#allocation5 + $0x70] sm:$0xff]
    %v196 = vld [vmem:[#allocation5 + $0x78] sm:$0xff]
    %v197 = vld [vmem:[#allocation5 + $0x80] sm:$0xff]
    %v198 = vld [vmem:[#allocation5 + $0x88] sm:$0xff]
    %v199 = vld [vmem:[#allocation5 + $0x90] sm:$0xff]
    %v200 = vld [vmem:[#allocation5 + $0x98] sm:$0xff]
    %v201 = vld [vmem:[#allocation5 + $0xa0] sm:$0xff]
    %v202 = vld [vmem:[#allocation5 + $0xa8] sm:$0xff]
    %v203 = vld [vmem:[#allocation5 + $0xb0] sm:$0xff]
    %v204 = vld [vmem:[#allocation5 + $0xb8] sm:$0xff]
    %v205 = vld [vmem:[#allocation5 + $0xc0] sm:$0xff]
    %v206 = vld [vmem:[#allocation5 + $0xc8] sm:$0xff]
    %v207 = vld [vmem:[#allocation5 + $0xd0] sm:$0xff]
    %v208 = vld [vmem:[#allocation5 + $0xd8] sm:$0xff]
    %v209 = vld [vmem:[#allocation5 + $0xe0] sm:$0xff]
    %v210 = vld [vmem:[#allocation5 + $0xe8] sm:$0xff]
    %v211 = vld [vmem:[#allocation5 + $0xf0] sm:$0xff]
    %v212 = vld [vmem:[#allocation5 + $0xf8] sm:$0xff]
    %v213 = vld [vmem:[#allocation5 + $0x100] sm:$0xff]
    %v214 = vld [vmem:[#allocation5 + $0x108] sm:$0xff]
    %v215 = vld [vmem:[#allocation5 + $0x110] sm:$0xff]
    %v216 = vld [vmem:[#allocation5 + $0x118] sm:$0xff]
    %v217 = vld [vmem:[#allocation5 + $0x120] sm:$0xff]
    %v218 = vld [vmem:[#allocation5 + $0x128] sm:$0xff]
    %v219 = vld [vmem:[#allocation5 + $0x130] sm:$0xff]
    %v220 = vld [vmem:[#allocation5 + $0x138] sm:$0xff]
    %v221 = vld [vmem:[#allocation5 + $0x140] sm:$0xff]
    %v222 = vld [vmem:[#allocation5 + $0x148] sm:$0xff]
    %v223 = vld [vmem:[#allocation5 + $0x150] sm:$0xff]
    %v224 = vld [vmem:[#allocation5 + $0x158] sm:$0xff]
    %v225 = vld [vmem:[#allocation5 + $0x160] sm:$0xff]
    %v226 = vld [vmem:[#allocation5 + $0x168] sm:$0xff]
    %v227 = vld [vmem:[#allocation5 + $0x170] sm:$0xff]
    %v228 = vld [vmem:[#allocation5 + $0x178] sm:$0xff]
    %v229 = vld [vmem:[#allocation5 + $0x180] sm:$0xff]
    %v230 = vld [vmem:[#allocation5 + $0x188] sm:$0xff]
    %v231 = vld [vmem:[#allocation5 + $0x190] sm:$0xff]
    %v232 = vld [vmem:[#allocation5 + $0x198] sm:$0xff]
    %v233 = vld [vmem:[#allocation5 + $0x1a0] sm:$0xff]
    %v234 = vld [vmem:[#allocation5 + $0x1a8] sm:$0xff]
    %v235 = vld [vmem:[#allocation5 + $0x1b0] sm:$0xff]
    %v236 = vld [vmem:[#allocation5 + $0x1b8] sm:$0xff]
    %v237 = vld [vmem:[#allocation5 + $0x1c0] sm:$0xff]
    %v238 = vld [vmem:[#allocation5 + $0x1c8] sm:$0xff]
    %v239 = vld [vmem:[#allocation5 + $0x1d0] sm:$0xff]
    %v240 = vld [vmem:[#allocation5 + $0x1d8] sm:$0xff]
    %v241 = vld [vmem:[#allocation5 + $0x1e0] sm:$0xff]
    %v242 = vld [vmem:[#allocation5 + $0x1e8] sm:$0xff]
    %v243 = vld [vmem:[#allocation5 + $0x1f0] sm:$0xff]
    %v244 = vld [vmem:[#allocation5 + $0x1f8] sm:$0xff]
    %v245 = vld [vmem:[#allocation7] sm:$0xff]
    %v247 = vlaneseq
    %v248 = vshrl.u32 %v247, 7
    %v249 = vsub.s32 0, %v248
    %v250 = vrot.slane %v245, %v249
    %v251 = vlaneseq
    %v252 = vshrl.u32 %v251, 7
    %v253 = vsub.s32 1, %v252
    %v254 = vrot.slane %v245, %v253
    %v255 = vlaneseq
    %v256 = vshrl.u32 %v255, 7
    %v257 = vsub.s32 2, %v256
    %v258 = vrot.slane %v245, %v257
    %v259 = vlaneseq
    %v260 = vshrl.u32 %v259, 7
    %v261 = vsub.s32 3, %v260
    %v262 = vrot.slane %v245, %v261
    %v263 = vlaneseq
    %v264 = vshrl.u32 %v263, 7
    %v265 = vsub.s32 4, %v264
    %v266 = vrot.slane %v245, %v265
    %v267 = vlaneseq
    %v268 = vshrl.u32 %v267, 7
    %v269 = vsub.s32 5, %v268
    %v270 = vrot.slane %v245, %v269
    %v271 = vlaneseq
    %v272 = vshrl.u32 %v271, 7
    %v273 = vsub.s32 6, %v272
    %v274 = vrot.slane %v245, %v273
    %v275 = vlaneseq
    %v276 = vshrl.u32 %v275, 7
    %v277 = vsub.s32 7, %v276
    %v278 = vrot.slane %v245, %v277
    %v289 = vunpack.c.l.b16 %v179
    %v290 = vunpack.c.l.b16 %v180
    %v291 = vpack.c.b16 %v290, %v289
    %v357 = vunpack.c.l.b16 %v181
    %v358 = vunpack.c.h.b16 %v181
    %v359 = vunpack.c.l.b16 %v182
    %v360 = vunpack.c.h.b16 %v182
    %v361 = vunpack.c.l.b16 %v183
    %v362 = vunpack.c.h.b16 %v183
    %v363 = vunpack.c.l.b16 %v184
    %v364 = vunpack.c.h.b16 %v184
    %v365 = vunpack.c.l.b16 %v185
    %v366 = vunpack.c.h.b16 %v185
    %v367 = vunpack.c.l.b16 %v186
    %v368 = vunpack.c.h.b16 %v186
    %v369 = vunpack.c.l.b16 %v187
    %v370 = vunpack.c.h.b16 %v187
    %v371 = vunpack.c.l.b16 %v188
    %v372 = vunpack.c.h.b16 %v188
    %v373 = vunpack.c.l.b16 %v189
    %v374 = vunpack.c.h.b16 %v189
    %v375 = vunpack.c.l.b16 %v190
    %v376 = vunpack.c.h.b16 %v190
    %v377 = vunpack.c.l.b16 %v191
    %v378 = vunpack.c.h.b16 %v191
    %v379 = vunpack.c.l.b16 %v192
    %v380 = vunpack.c.h.b16 %v192
    %v381 = vunpack.c.l.b16 %v193
    %v382 = vunpack.c.h.b16 %v193
    %v383 = vunpack.c.l.b16 %v194
    %v384 = vunpack.c.h.b16 %v194
    %v385 = vunpack.c.l.b16 %v195
    %v386 = vunpack.c.h.b16 %v195
    %v387 = vunpack.c.l.b16 %v196
    %v388 = vunpack.c.h.b16 %v196
    %v389 = vunpack.c.l.b16 %v197
    %v390 = vunpack.c.h.b16 %v197
    %v391 = vunpack.c.l.b16 %v198
    %v392 = vunpack.c.h.b16 %v198
    %v393 = vunpack.c.l.b16 %v199
    %v394 = vunpack.c.h.b16 %v199
    %v395 = vunpack.c.l.b16 %v200
    %v396 = vunpack.c.h.b16 %v200
    %v397 = vunpack.c.l.b16 %v201
    %v398 = vunpack.c.h.b16 %v201
    %v399 = vunpack.c.l.b16 %v202
    %v400 = vunpack.c.h.b16 %v202
    %v401 = vunpack.c.l.b16 %v203
    %v402 = vunpack.c.h.b16 %v203
    %v403 = vunpack.c.l.b16 %v204
    %v404 = vunpack.c.h.b16 %v204
    %v405 = vunpack.c.l.b16 %v205
    %v406 = vunpack.c.h.b16 %v205
    %v407 = vunpack.c.l.b16 %v206
    %v408 = vunpack.c.h.b16 %v206
    %v409 = vunpack.c.l.b16 %v207
    %v410 = vunpack.c.h.b16 %v207
    %v411 = vunpack.c.l.b16 %v208
    %v412 = vunpack.c.h.b16 %v208
    %v413 = vunpack.c.l.b16 %v209
    %v414 = vunpack.c.h.b16 %v209
    %v415 = vunpack.c.l.b16 %v210
    %v416 = vunpack.c.h.b16 %v210
    %v417 = vunpack.c.l.b16 %v211
    %v418 = vunpack.c.h.b16 %v211
    %v419 = vunpack.c.l.b16 %v212
    %v420 = vunpack.c.h.b16 %v212
    %v421 = vunpack.c.l.b16 %v213
    %v422 = vunpack.c.h.b16 %v213
    %v423 = vunpack.c.l.b16 %v214
    %v424 = vunpack.c.h.b16 %v214
    %v425 = vunpack.c.l.b16 %v215
    %v426 = vunpack.c.h.b16 %v215
    %v427 = vunpack.c.l.b16 %v216
    %v428 = vunpack.c.h.b16 %v216
    %v429 = vunpack.c.l.b16 %v217
    %v430 = vunpack.c.h.b16 %v217
    %v431 = vunpack.c.l.b16 %v218
    %v432 = vunpack.c.h.b16 %v218
    %v433 = vunpack.c.l.b16 %v219
    %v434 = vunpack.c.h.b16 %v219
    %v435 = vunpack.c.l.b16 %v220
    %v436 = vunpack.c.h.b16 %v220
    %v437 = vunpack.c.l.b16 %v221
    %v438 = vunpack.c.h.b16 %v221
    %v439 = vunpack.c.l.b16 %v222
    %v440 = vunpack.c.h.b16 %v222
    %v441 = vunpack.c.l.b16 %v223
    %v442 = vunpack.c.h.b16 %v223
    %v443 = vunpack.c.l.b16 %v224
    %v444 = vunpack.c.h.b16 %v224
    %v445 = vunpack.c.l.b16 %v225
    %v446 = vunpack.c.h.b16 %v225
    %v447 = vunpack.c.l.b16 %v226
    %v448 = vunpack.c.h.b16 %v226
    %v449 = vunpack.c.l.b16 %v227
    %v450 = vunpack.c.h.b16 %v227
    %v451 = vunpack.c.l.b16 %v228
    %v452 = vunpack.c.h.b16 %v228
    %v453 = vunpack.c.l.b16 %v229
    %v454 = vunpack.c.h.b16 %v229
    %v455 = vunpack.c.l.b16 %v230
    %v456 = vunpack.c.h.b16 %v230
    %v457 = vunpack.c.l.b16 %v231
    %v458 = vunpack.c.h.b16 %v231
    %v459 = vunpack.c.l.b16 %v232
    %v460 = vunpack.c.h.b16 %v232
    %v461 = vunpack.c.l.b16 %v233
    %v462 = vunpack.c.h.b16 %v233
    %v463 = vunpack.c.l.b16 %v234
    %v464 = vunpack.c.h.b16 %v234
    %v465 = vunpack.c.l.b16 %v235
    %v466 = vunpack.c.h.b16 %v235
    %v467 = vunpack.c.l.b16 %v236
    %v468 = vunpack.c.h.b16 %v236
    %v469 = vunpack.c.l.b16 %v237
    %v470 = vunpack.c.h.b16 %v237
    %v471 = vunpack.c.l.b16 %v238
    %v472 = vunpack.c.h.b16 %v238
    %v473 = vunpack.c.l.b16 %v239
    %v474 = vunpack.c.h.b16 %v239
    %v475 = vunpack.c.l.b16 %v240
    %v476 = vunpack.c.h.b16 %v240
    %v477 = vunpack.c.l.b16 %v241
    %v478 = vunpack.c.h.b16 %v241
    %v479 = vunpack.c.l.b16 %v242
    %v480 = vunpack.c.h.b16 %v242
    %v481 = vunpack.c.l.b16 %v243
    %v482 = vunpack.c.h.b16 %v243
    %v483 = vunpack.c.l.b16 %v244
    %v484 = vunpack.c.h.b16 %v244
    %v485 = vpack.c.b16 %v365, %v357
    %v486 = vpack.c.b16 %v366, %v358
    %v487 = vpack.c.b16 %v367, %v359
    %v488 = vpack.c.b16 %v368, %v360
    %v489 = vpack.c.b16 %v369, %v361
    %v490 = vpack.c.b16 %v370, %v362
    %v491 = vpack.c.b16 %v371, %v363
    %v492 = vpack.c.b16 %v372, %v364
    %v493 = vpack.c.b16 %v381, %v373
    %v494 = vpack.c.b16 %v382, %v374
    %v495 = vpack.c.b16 %v383, %v375
    %v496 = vpack.c.b16 %v384, %v376
    %v497 = vpack.c.b16 %v385, %v377
    %v498 = vpack.c.b16 %v386, %v378
    %v499 = vpack.c.b16 %v387, %v379
    %v500 = vpack.c.b16 %v388, %v380
    %v501 = vpack.c.b16 %v397, %v389
    %v502 = vpack.c.b16 %v398, %v390
    %v503 = vpack.c.b16 %v399, %v391
    %v504 = vpack.c.b16 %v400, %v392
    %v505 = vpack.c.b16 %v401, %v393
    %v506 = vpack.c.b16 %v402, %v394
    %v507 = vpack.c.b16 %v403, %v395
    %v508 = vpack.c.b16 %v404, %v396
    %v509 = vpack.c.b16 %v413, %v405
    %v510 = vpack.c.b16 %v414, %v406
    %v511 = vpack.c.b16 %v415, %v407
    %v512 = vpack.c.b16 %v416, %v408
    %v513 = vpack.c.b16 %v417, %v409
    %v514 = vpack.c.b16 %v418, %v410
    %v515 = vpack.c.b16 %v419, %v411
    %v516 = vpack.c.b16 %v420, %v412
    %v517 = vpack.c.b16 %v429, %v421
    %v518 = vpack.c.b16 %v430, %v422
    %v519 = vpack.c.b16 %v431, %v423
    %v520 = vpack.c.b16 %v432, %v424
    %v521 = vpack.c.b16 %v433, %v425
    %v522 = vpack.c.b16 %v434, %v426
    %v523 = vpack.c.b16 %v435, %v427
    %v524 = vpack.c.b16 %v436, %v428
    %v525 = vpack.c.b16 %v445, %v437
    %v526 = vpack.c.b16 %v446, %v438
    %v527 = vpack.c.b16 %v447, %v439
    %v528 = vpack.c.b16 %v448, %v440
    %v529 = vpack.c.b16 %v449, %v441
    %v530 = vpack.c.b16 %v450, %v442
    %v531 = vpack.c.b16 %v451, %v443
    %v532 = vpack.c.b16 %v452, %v444
    %v533 = vpack.c.b16 %v461, %v453
    %v534 = vpack.c.b16 %v462, %v454
    %v535 = vpack.c.b16 %v463, %v455
    %v536 = vpack.c.b16 %v464, %v456
    %v537 = vpack.c.b16 %v465, %v457
    %v538 = vpack.c.b16 %v466, %v458
    %v539 = vpack.c.b16 %v467, %v459
    %v540 = vpack.c.b16 %v468, %v460
    %v541 = vpack.c.b16 %v477, %v469
    %v542 = vpack.c.b16 %v478, %v470
    %v543 = vpack.c.b16 %v479, %v471
    %v544 = vpack.c.b16 %v480, %v472
    %v545 = vpack.c.b16 %v481, %v473
    %v546 = vpack.c.b16 %v482, %v474
    %v547 = vpack.c.b16 %v483, %v475
    %v548 = vpack.c.b16 %v484, %v476
    %613 = vmatprep.subr.bf16.mxu0 %v486
    %614 = vmatpush1.bf16.msra.mxu0 %v485
    %615 = vmatprep.subr.bf16.mxu0 %v494
    %616 = vmatpush1.bf16.msra.mxu0 %v493
    %617 = vmatprep.subr.bf16.mxu0 %v502
    %618 = vmatpush1.bf16.msra.mxu0 %v501
    %619 = vmatprep.subr.bf16.mxu0 %v510
    %620 = vmatpush1.bf16.msra.mxu0 %v509
    %621 = vmatprep.subr.bf16.mxu0 %v518
    %622 = vmatpush1.bf16.msra.mxu0 %v517
    %623 = vmatprep.subr.bf16.mxu0 %v526
    %624 = vmatpush1.bf16.msra.mxu0 %v525
    %625 = vmatprep.subr.bf16.mxu0 %v534
    %626 = vmatpush1.bf16.msra.mxu0 %v533
    %627 = vmatprep.subr.bf16.mxu0 %v542
    %628 = vmatpush1.bf16.msra.mxu0 %v541
    %629 = vmatprep.subr.bf16.mxu0 0
    %630 = vmatpush1.bf16.msra.mxu0 0
    %631 = vmatprep.subr.bf16.mxu0 0
    %632 = vmatpush1.bf16.msra.mxu0 0
    %633 = vmatprep.subr.bf16.mxu0 0
    %634 = vmatpush1.bf16.msra.mxu0 0
    %635 = vmatprep.subr.bf16.mxu0 0
    %636 = vmatpush1.bf16.msra.mxu0 0
    %637 = vmatprep.subr.bf16.mxu0 0
    %638 = vmatpush1.bf16.msra.mxu0 0
    %639 = vmatprep.subr.bf16.mxu0 0
    %640 = vmatpush1.bf16.msra.mxu0 0
    %641 = vmatprep.subr.bf16.mxu0 0
    %642 = vmatpush1.bf16.msra.mxu0 0
    %643 = vmatprep.subr.bf16.mxu0 0
    %644 = vmatpush1.bf16.msra.mxu0 0
    %645 = vmatprep.mubr.bf16.mxu0 0
    %646 = vmatmul.mubr.bf16.gmra.mrb[0].mxu0 %v291
    %v647 = vpop.f32.mrb[0].mxu0
    %v648 = vadd.f32 %v250, %v647
    %v649 = vpop.f32.mrb[0].mxu0
    %v650 = vadd.f32 %v254, %v649
    %v651 = vpop.f32.mrb[0].mxu0
    %v652 = vadd.f32 %v250, %v651
    %v653 = vpop.f32.mrb[0].mxu0
    %v654 = vadd.f32 %v254, %v653
    %655 = vdwg.mxu0
    %656 = vmatprep.subr.bf16.mxu0 %v488
    %657 = vmatpush1.bf16.msra.mxu0 %v487
    %658 = vmatprep.subr.bf16.mxu0 %v496
    %659 = vmatpush1.bf16.msra.mxu0 %v495
    %660 = vmatprep.subr.bf16.mxu0 %v504
    %661 = vmatpush1.bf16.msra.mxu0 %v503
    %662 = vmatprep.subr.bf16.mxu0 %v512
    %663 = vmatpush1.bf16.msra.mxu0 %v511
    %664 = vmatprep.subr.bf16.mxu0 %v520
    %665 = vmatpush1.bf16.msra.mxu0 %v519
    %666 = vmatprep.subr.bf16.mxu0 %v528
    %667 = vmatpush1.bf16.msra.mxu0 %v527
    %668 = vmatprep.subr.bf16.mxu0 %v536
    %669 = vmatpush1.bf16.msra.mxu0 %v535
    %670 = vmatprep.subr.bf16.mxu0 %v544
    %671 = vmatpush1.bf16.msra.mxu0 %v543
    %672 = vmatprep.subr.bf16.mxu0 0
    %673 = vmatpush1.bf16.msra.mxu0 0
    %674 = vmatprep.subr.bf16.mxu0 0
    %675 = vmatpush1.bf16.msra.mxu0 0
    %676 = vmatprep.subr.bf16.mxu0 0
    %677 = vmatpush1.bf16.msra.mxu0 0
    %678 = vmatprep.subr.bf16.mxu0 0
    %679 = vmatpush1.bf16.msra.mxu0 0
    %680 = vmatprep.subr.bf16.mxu0 0
    %681 = vmatpush1.bf16.msra.mxu0 0
    %682 = vmatprep.subr.bf16.mxu0 0
    %683 = vmatpush1.bf16.msra.mxu0 0
    %684 = vmatprep.subr.bf16.mxu0 0
    %685 = vmatpush1.bf16.msra.mxu0 0
    %686 = vmatprep.subr.bf16.mxu0 0
    %687 = vmatpush1.bf16.msra.mxu0 0
    %688 = vmatprep.mubr.bf16.mxu0 0
    %689 = vmatmul.mubr.bf16.gmra.mrb[0].mxu0 %v291
    %v690 = vpop.f32.mrb[0].mxu0
    %v691 = vadd.f32 %v258, %v690
    %v692 = vpop.f32.mrb[0].mxu0
    %v693 = vadd.f32 %v262, %v692
    %v694 = vpop.f32.mrb[0].mxu0
    %v695 = vadd.f32 %v258, %v694
    %v696 = vpop.f32.mrb[0].mxu0
    %v697 = vadd.f32 %v262, %v696
    %698 = vdwg.mxu0
    %699 = vmatprep.subr.bf16.mxu0 %v490
    %700 = vmatpush1.bf16.msra.mxu0 %v489
    %701 = vmatprep.subr.bf16.mxu0 %v498
    %702 = vmatpush1.bf16.msra.mxu0 %v497
    %703 = vmatprep.subr.bf16.mxu0 %v506
    %704 = vmatpush1.bf16.msra.mxu0 %v505
    %705 = vmatprep.subr.bf16.mxu0 %v514
    %706 = vmatpush1.bf16.msra.mxu0 %v513
    %707 = vmatprep.subr.bf16.mxu0 %v522
    %708 = vmatpush1.bf16.msra.mxu0 %v521
    %709 = vmatprep.subr.bf16.mxu0 %v530
    %710 = vmatpush1.bf16.msra.mxu0 %v529
    %711 = vmatprep.subr.bf16.mxu0 %v538
    %712 = vmatpush1.bf16.msra.mxu0 %v537
    %713 = vmatprep.subr.bf16.mxu0 %v546
    %714 = vmatpush1.bf16.msra.mxu0 %v545
    %715 = vmatprep.subr.bf16.mxu0 0
    %716 = vmatpush1.bf16.msra.mxu0 0
    %717 = vmatprep.subr.bf16.mxu0 0
    %718 = vmatpush1.bf16.msra.mxu0 0
    %719 = vmatprep.subr.bf16.mxu0 0
    %720 = vmatpush1.bf16.msra.mxu0 0
    %721 = vmatprep.subr.bf16.mxu0 0
    %722 = vmatpush1.bf16.msra.mxu0 0
    %723 = vmatprep.subr.bf16.mxu0 0
    %724 = vmatpush1.bf16.msra.mxu0 0
    %725 = vmatprep.subr.bf16.mxu0 0
    %726 = vmatpush1.bf16.msra.mxu0 0
    %727 = vmatprep.subr.bf16.mxu0 0
    %728 = vmatpush1.bf16.msra.mxu0 0
    %729 = vmatprep.subr.bf16.mxu0 0
    %730 = vmatpush1.bf16.msra.mxu0 0
    %731 = vmatprep.mubr.bf16.mxu0 0
    %732 = vmatmul.mubr.bf16.gmra.mrb[0].mxu0 %v291
    %v733 = vpop.f32.mrb[0].mxu0
    %v734 = vadd.f32 %v266, %v733
    %v735 = vpop.f32.mrb[0].mxu0
    %v736 = vadd.f32 %v270, %v735
    %v737 = vpop.f32.mrb[0].mxu0
    %v738 = vadd.f32 %v266, %v737
    %v739 = vpop.f32.mrb[0].mxu0
    %v740 = vadd.f32 %v270, %v739
    %741 = vdwg.mxu0
    %742 = vmatprep.subr.bf16.mxu0 %v492
    %743 = vmatpush1.bf16.msra.mxu0 %v491
    %744 = vmatprep.subr.bf16.mxu0 %v500
    %745 = vmatpush1.bf16.msra.mxu0 %v499
    %746 = vmatprep.subr.bf16.mxu0 %v508
    %747 = vmatpush1.bf16.msra.mxu0 %v507
    %748 = vmatprep.subr.bf16.mxu0 %v516
    %749 = vmatpush1.bf16.msra.mxu0 %v515
    %750 = vmatprep.subr.bf16.mxu0 %v524
    %751 = vmatpush1.bf16.msra.mxu0 %v523
    %752 = vmatprep.subr.bf16.mxu0 %v532
    %753 = vmatpush1.bf16.msra.mxu0 %v531
    %754 = vmatprep.subr.bf16.mxu0 %v540
    %755 = vmatpush1.bf16.msra.mxu0 %v539
    %756 = vmatprep.subr.bf16.mxu0 %v548
    %757 = vmatpush1.bf16.msra.mxu0 %v547
    %758 = vmatprep.subr.bf16.mxu0 0
    %759 = vmatpush1.bf16.msra.mxu0 0
    %760 = vmatprep.subr.bf16.mxu0 0
    %761 = vmatpush1.bf16.msra.mxu0 0
    %762 = vmatprep.subr.bf16.mxu0 0
    %763 = vmatpush1.bf16.msra.mxu0 0
    %764 = vmatprep.subr.bf16.mxu0 0
    %765 = vmatpush1.bf16.msra.mxu0 0
    %766 = vmatprep.subr.bf16.mxu0 0
    %767 = vmatpush1.bf16.msra.mxu0 0
    %768 = vmatprep.subr.bf16.mxu0 0
    %769 = vmatpush1.bf16.msra.mxu0 0
    %770 = vmatprep.subr.bf16.mxu0 0
    %771 = vmatpush1.bf16.msra.mxu0 0
    %772 = vmatprep.subr.bf16.mxu0 0
    %773 = vmatpush1.bf16.msra.mxu0 0
    %774 = vmatprep.mubr.bf16.mxu0 0
    %775 = vmatmul.mubr.bf16.gmra.mrb[0].mxu0 %v291
    %v776 = vpop.f32.mrb[0].mxu0
    %v777 = vadd.f32 %v274, %v776
    %v778 = vpop.f32.mrb[0].mxu0
    %v779 = vadd.f32 %v278, %v778
    %v780 = vpop.f32.mrb[0].mxu0
    %v781 = vadd.f32 %v274, %v780
    %v782 = vpop.f32.mrb[0].mxu0
    %v783 = vadd.f32 %v278, %v782
    %784 = vdwg.mxu0
    %v785 = vmax.f32 %v648, 0.0
    %v786 = vmax.f32 %v650, 0.0
    %v787 = vmax.f32 %v691, 0.0
    %v788 = vmax.f32 %v693, 0.0
    %v789 = vmax.f32 %v734, 0.0
    %v790 = vmax.f32 %v736, 0.0
    %v791 = vmax.f32 %v777, 0.0
    %v792 = vmax.f32 %v779, 0.0
    %v793 = vmax.f32 %v652, 0.0
    %v794 = vmax.f32 %v654, 0.0
    %v795 = vmax.f32 %v695, 0.0
    %v796 = vmax.f32 %v697, 0.0
    %v797 = vmax.f32 %v738, 0.0
    %v798 = vmax.f32 %v740, 0.0
    %v799 = vmax.f32 %v781, 0.0
    %v800 = vmax.f32 %v783, 0.0
    %v801 = vpack.c.bf16 %v793, %v785
    %v802 = vpack.c.bf16 %v794, %v786
    %v803 = vpack.c.bf16 %v795, %v787
    %v804 = vpack.c.bf16 %v796, %v788
    %v805 = vpack.c.bf16 %v797, %v789
    %v806 = vpack.c.bf16 %v798, %v790
    %v807 = vpack.c.bf16 %v799, %v791
    %v808 = vpack.c.bf16 %v800, %v792
    %v809 = vld [vmem:[#allocation8] sm:$0xff]
    %v810 = vld [vmem:[#allocation8 + $0x8] sm:$0xff]
    %v811 = vld [vmem:[#allocation8 + $0x10] sm:$0xff]
    %v812 = vld [vmem:[#allocation8 + $0x18] sm:$0xff]
    %v813 = vld [vmem:[#allocation8 + $0x20] sm:$0xff]
    %v814 = vld [vmem:[#allocation8 + $0x28] sm:$0xff]
    %v815 = vld [vmem:[#allocation8 + $0x30] sm:$0xff]
    %v816 = vld [vmem:[#allocation8 + $0x38] sm:$0xff]
    %v817 = vld [vmem:[#allocation8 + $0x40] sm:$0xff]
    %v818 = vld [vmem:[#allocation8 + $0x48] sm:$0xff]
    %v819 = vld [vmem:[#allocation8 + $0x50] sm:$0xff]
    %v820 = vld [vmem:[#allocation8 + $0x58] sm:$0xff]
    %v821 = vld [vmem:[#allocation8 + $0x60] sm:$0xff]
    %v822 = vld [vmem:[#allocation8 + $0x68] sm:$0xff]
    %v823 = vld [vmem:[#allocation8 + $0x70] sm:$0xff]
    %v824 = vld [vmem:[#allocation8 + $0x78] sm:$0xff]
    %v825 = vld [vmem:[#allocation8 + $0x80] sm:$0xff]
    %v826 = vld [vmem:[#allocation8 + $0x88] sm:$0xff]
    %v827 = vld [vmem:[#allocation8 + $0x90] sm:$0xff]
    %v828 = vld [vmem:[#allocation8 + $0x98] sm:$0xff]
    %v829 = vld [vmem:[#allocation8 + $0xa0] sm:$0xff]
    %v830 = vld [vmem:[#allocation8 + $0xa8] sm:$0xff]
    %v831 = vld [vmem:[#allocation8 + $0xb0] sm:$0xff]
    %v832 = vld [vmem:[#allocation8 + $0xb8] sm:$0xff]
    %v833 = vld [vmem:[#allocation8 + $0xc0] sm:$0xff]
    %v834 = vld [vmem:[#allocation8 + $0xc8] sm:$0xff]
    %v835 = vld [vmem:[#allocation8 + $0xd0] sm:$0xff]
    %v836 = vld [vmem:[#allocation8 + $0xd8] sm:$0xff]
    %v837 = vld [vmem:[#allocation8 + $0xe0] sm:$0xff]
    %v838 = vld [vmem:[#allocation8 + $0xe8] sm:$0xff]
    %v839 = vld [vmem:[#allocation8 + $0xf0] sm:$0xff]
    %v840 = vld [vmem:[#allocation8 + $0xf8] sm:$0xff]
    %v841 = vld [vmem:[#allocation8 + $0x100] sm:$0xff]
    %v842 = vld [vmem:[#allocation8 + $0x108] sm:$0xff]
    %v843 = vld [vmem:[#allocation8 + $0x110] sm:$0xff]
    %v844 = vld [vmem:[#allocation8 + $0x118] sm:$0xff]
    %v845 = vld [vmem:[#allocation8 + $0x120] sm:$0xff]
    %v846 = vld [vmem:[#allocation8 + $0x128] sm:$0xff]
    %v847 = vld [vmem:[#allocation8 + $0x130] sm:$0xff]
    %v848 = vld [vmem:[#allocation8 + $0x138] sm:$0xff]
    %v849 = vld [vmem:[#allocation8 + $0x140] sm:$0xff]
    %v850 = vld [vmem:[#allocation8 + $0x148] sm:$0xff]
    %v851 = vld [vmem:[#allocation8 + $0x150] sm:$0xff]
    %v852 = vld [vmem:[#allocation8 + $0x158] sm:$0xff]
    %v853 = vld [vmem:[#allocation8 + $0x160] sm:$0xff]
    %v854 = vld [vmem:[#allocation8 + $0x168] sm:$0xff]
    %v855 = vld [vmem:[#allocation8 + $0x170] sm:$0xff]
    %v856 = vld [vmem:[#allocation8 + $0x178] sm:$0xff]
    %v857 = vld [vmem:[#allocation8 + $0x180] sm:$0xff]
    %v858 = vld [vmem:[#allocation8 + $0x188] sm:$0xff]
    %v859 = vld [vmem:[#allocation8 + $0x190] sm:$0xff]
    %v860 = vld [vmem:[#allocation8 + $0x198] sm:$0xff]
    %v861 = vld [vmem:[#allocation8 + $0x1a0] sm:$0xff]
    %v862 = vld [vmem:[#allocation8 + $0x1a8] sm:$0xff]
    %v863 = vld [vmem:[#allocation8 + $0x1b0] sm:$0xff]
    %v864 = vld [vmem:[#allocation8 + $0x1b8] sm:$0xff]
    %v865 = vld [vmem:[#allocation8 + $0x1c0] sm:$0xff]
    %v866 = vld [vmem:[#allocation8 + $0x1c8] sm:$0xff]
    %v867 = vld [vmem:[#allocation8 + $0x1d0] sm:$0xff]
    %v868 = vld [vmem:[#allocation8 + $0x1d8] sm:$0xff]
    %v869 = vld [vmem:[#allocation8 + $0x1e0] sm:$0xff]
    %v870 = vld [vmem:[#allocation8 + $0x1e8] sm:$0xff]
    %v871 = vld [vmem:[#allocation8 + $0x1f0] sm:$0xff]
    %v872 = vld [vmem:[#allocation8 + $0x1f8] sm:$0xff]
    %v873 = vld [vmem:[#allocation8 + $0x200] sm:$0xff]
    %v874 = vld [vmem:[#allocation8 + $0x208] sm:$0xff]
    %v875 = vld [vmem:[#allocation8 + $0x210] sm:$0xff]
    %v876 = vld [vmem:[#allocation8 + $0x218] sm:$0xff]
    %v877 = vld [vmem:[#allocation8 + $0x220] sm:$0xff]
    %v878 = vld [vmem:[#allocation8 + $0x228] sm:$0xff]
    %v879 = vld [vmem:[#allocation8 + $0x230] sm:$0xff]
    %v880 = vld [vmem:[#allocation8 + $0x238] sm:$0xff]
    %v881 = vld [vmem:[#allocation8 + $0x240] sm:$0xff]
    %v882 = vld [vmem:[#allocation8 + $0x248] sm:$0xff]
    %v883 = vld [vmem:[#allocation8 + $0x250] sm:$0xff]
    %v884 = vld [vmem:[#allocation8 + $0x258] sm:$0xff]
    %v885 = vld [vmem:[#allocation8 + $0x260] sm:$0xff]
    %v886 = vld [vmem:[#allocation8 + $0x268] sm:$0xff]
    %v887 = vld [vmem:[#allocation8 + $0x270] sm:$0xff]
    %v888 = vld [vmem:[#allocation8 + $0x278] sm:$0xff]
    %v889 = vld [vmem:[#allocation8 + $0x280] sm:$0xff]
    %v890 = vld [vmem:[#allocation8 + $0x288] sm:$0xff]
    %v891 = vld [vmem:[#allocation8 + $0x290] sm:$0xff]
    %v892 = vld [vmem:[#allocation8 + $0x298] sm:$0xff]
    %v893 = vld [vmem:[#allocation8 + $0x2a0] sm:$0xff]
    %v894 = vld [vmem:[#allocation8 + $0x2a8] sm:$0xff]
    %v895 = vld [vmem:[#allocation8 + $0x2b0] sm:$0xff]
    %v896 = vld [vmem:[#allocation8 + $0x2b8] sm:$0xff]
    %v897 = vld [vmem:[#allocation8 + $0x2c0] sm:$0xff]
    %v898 = vld [vmem:[#allocation8 + $0x2c8] sm:$0xff]
    %v899 = vld [vmem:[#allocation8 + $0x2d0] sm:$0xff]
    %v900 = vld [vmem:[#allocation8 + $0x2d8] sm:$0xff]
    %v901 = vld [vmem:[#allocation8 + $0x2e0] sm:$0xff]
    %v902 = vld [vmem:[#allocation8 + $0x2e8] sm:$0xff]
    %v903 = vld [vmem:[#allocation8 + $0x2f0] sm:$0xff]
    %v904 = vld [vmem:[#allocation8 + $0x2f8] sm:$0xff]
    %v905 = vld [vmem:[#allocation8 + $0x300] sm:$0xff]
    %v906 = vld [vmem:[#allocation8 + $0x308] sm:$0xff]
    %v907 = vld [vmem:[#allocation8 + $0x310] sm:$0xff]
    %v908 = vld [vmem:[#allocation8 + $0x318] sm:$0xff]
    %v909 = vld [vmem:[#allocation8 + $0x320] sm:$0xff]
    %v910 = vld [vmem:[#allocation8 + $0x328] sm:$0xff]
    %v911 = vld [vmem:[#allocation8 + $0x330] sm:$0xff]
    %v912 = vld [vmem:[#allocation8 + $0x338] sm:$0xff]
    %v913 = vld [vmem:[#allocation8 + $0x340] sm:$0xff]
    %v914 = vld [vmem:[#allocation8 + $0x348] sm:$0xff]
    %v915 = vld [vmem:[#allocation8 + $0x350] sm:$0xff]
    %v916 = vld [vmem:[#allocation8 + $0x358] sm:$0xff]
    %v917 = vld [vmem:[#allocation8 + $0x360] sm:$0xff]
    %v918 = vld [vmem:[#allocation8 + $0x368] sm:$0xff]
    %v919 = vld [vmem:[#allocation8 + $0x370] sm:$0xff]
    %v920 = vld [vmem:[#allocation8 + $0x378] sm:$0xff]
    %v921 = vld [vmem:[#allocation8 + $0x380] sm:$0xff]
    %v922 = vld [vmem:[#allocation8 + $0x388] sm:$0xff]
    %v923 = vld [vmem:[#allocation8 + $0x390] sm:$0xff]
    %v924 = vld [vmem:[#allocation8 + $0x398] sm:$0xff]
    %v925 = vld [vmem:[#allocation8 + $0x3a0] sm:$0xff]
    %v926 = vld [vmem:[#allocation8 + $0x3a8] sm:$0xff]
    %v927 = vld [vmem:[#allocation8 + $0x3b0] sm:$0xff]
    %v928 = vld [vmem:[#allocation8 + $0x3b8] sm:$0xff]
    %v929 = vld [vmem:[#allocation8 + $0x3c0] sm:$0xff]
    %v930 = vld [vmem:[#allocation8 + $0x3c8] sm:$0xff]
    %v931 = vld [vmem:[#allocation8 + $0x3d0] sm:$0xff]
    %v932 = vld [vmem:[#allocation8 + $0x3d8] sm:$0xff]
    %v933 = vld [vmem:[#allocation8 + $0x3e0] sm:$0xff]
    %v934 = vld [vmem:[#allocation8 + $0x3e8] sm:$0xff]
    %v935 = vld [vmem:[#allocation8 + $0x3f0] sm:$0xff]
    %v936 = vld [vmem:[#allocation8 + $0x3f8] sm:$0xff]
    %v937 = vld [vmem:[#allocation8 + $0x400] sm:$0xff]
    %v938 = vld [vmem:[#allocation8 + $0x408] sm:$0xff]
    %v939 = vld [vmem:[#allocation8 + $0x410] sm:$0xff]
    %v940 = vld [vmem:[#allocation8 + $0x418] sm:$0xff]
    %v941 = vld [vmem:[#allocation8 + $0x420] sm:$0xff]
    %v942 = vld [vmem:[#allocation8 + $0x428] sm:$0xff]
    %v943 = vld [vmem:[#allocation8 + $0x430] sm:$0xff]
    %v944 = vld [vmem:[#allocation8 + $0x438] sm:$0xff]
    %v945 = vld [vmem:[#allocation8 + $0x440] sm:$0xff]
    %v946 = vld [vmem:[#allocation8 + $0x448] sm:$0xff]
    %v947 = vld [vmem:[#allocation8 + $0x450] sm:$0xff]
    %v948 = vld [vmem:[#allocation8 + $0x458] sm:$0xff]
    %v949 = vld [vmem:[#allocation8 + $0x460] sm:$0xff]
    %v950 = vld [vmem:[#allocation8 + $0x468] sm:$0xff]
    %v951 = vld [vmem:[#allocation8 + $0x470] sm:$0xff]
    %v952 = vld [vmem:[#allocation8 + $0x478] sm:$0xff]
    %v953 = vld [vmem:[#allocation8 + $0x480] sm:$0xff]
    %v954 = vld [vmem:[#allocation8 + $0x488] sm:$0xff]
    %v955 = vld [vmem:[#allocation8 + $0x490] sm:$0xff]
    %v956 = vld [vmem:[#allocation8 + $0x498] sm:$0xff]
    %v957 = vld [vmem:[#allocation8 + $0x4a0] sm:$0xff]
    %v958 = vld [vmem:[#allocation8 + $0x4a8] sm:$0xff]
    %v959 = vld [vmem:[#allocation8 + $0x4b0] sm:$0xff]
    %v960 = vld [vmem:[#allocation8 + $0x4b8] sm:$0xff]
    %v961 = vld [vmem:[#allocation8 + $0x4c0] sm:$0xff]
    %v962 = vld [vmem:[#allocation8 + $0x4c8] sm:$0xff]
    %v963 = vld [vmem:[#allocation8 + $0x4d0] sm:$0xff]
    %v964 = vld [vmem:[#allocation8 + $0x4d8] sm:$0xff]
    %v965 = vld [vmem:[#allocation8 + $0x4e0] sm:$0xff]
    %v966 = vld [vmem:[#allocation8 + $0x4e8] sm:$0xff]
    %v967 = vld [vmem:[#allocation8 + $0x4f0] sm:$0xff]
    %v968 = vld [vmem:[#allocation8 + $0x4f8] sm:$0xff]
    %v969 = vld [vmem:[#allocation8 + $0x500] sm:$0xff]
    %v970 = vld [vmem:[#allocation8 + $0x508] sm:$0xff]
    %v971 = vld [vmem:[#allocation8 + $0x510] sm:$0xff]
    %v972 = vld [vmem:[#allocation8 + $0x518] sm:$0xff]
    %v973 = vld [vmem:[#allocation8 + $0x520] sm:$0xff]
    %v974 = vld [vmem:[#allocation8 + $0x528] sm:$0xff]
    %v975 = vld [vmem:[#allocation8 + $0x530] sm:$0xff]
    %v976 = vld [vmem:[#allocation8 + $0x538] sm:$0xff]
    %v977 = vld [vmem:[#allocation8 + $0x540] sm:$0xff]
    %v978 = vld [vmem:[#allocation8 + $0x548] sm:$0xff]
    %v979 = vld [vmem:[#allocation8 + $0x550] sm:$0xff]
    %v980 = vld [vmem:[#allocation8 + $0x558] sm:$0xff]
    %v981 = vld [vmem:[#allocation8 + $0x560] sm:$0xff]
    %v982 = vld [vmem:[#allocation8 + $0x568] sm:$0xff]
    %v983 = vld [vmem:[#allocation8 + $0x570] sm:$0xff]
    %v984 = vld [vmem:[#allocation8 + $0x578] sm:$0xff]
    %v985 = vld [vmem:[#allocation8 + $0x580] sm:$0xff]
    %v986 = vld [vmem:[#allocation8 + $0x588] sm:$0xff]
    %v987 = vld [vmem:[#allocation8 + $0x590] sm:$0xff]
    %v988 = vld [vmem:[#allocation8 + $0x598] sm:$0xff]
    %v989 = vld [vmem:[#allocation8 + $0x5a0] sm:$0xff]
    %v990 = vld [vmem:[#allocation8 + $0x5a8] sm:$0xff]
    %v991 = vld [vmem:[#allocation8 + $0x5b0] sm:$0xff]
    %v992 = vld [vmem:[#allocation8 + $0x5b8] sm:$0xff]
    %v993 = vld [vmem:[#allocation8 + $0x5c0] sm:$0xff]
    %v994 = vld [vmem:[#allocation8 + $0x5c8] sm:$0xff]
    %v995 = vld [vmem:[#allocation8 + $0x5d0] sm:$0xff]
    %v996 = vld [vmem:[#allocation8 + $0x5d8] sm:$0xff]
    %v997 = vld [vmem:[#allocation8 + $0x5e0] sm:$0xff]
    %v998 = vld [vmem:[#allocation8 + $0x5e8] sm:$0xff]
    %v999 = vld [vmem:[#allocation8 + $0x5f0] sm:$0xff]
    %v1000 = vld [vmem:[#allocation8 + $0x5f8] sm:$0xff]
    %v1001 = vld [vmem:[#allocation8 + $0x600] sm:$0xff]
    %v1002 = vld [vmem:[#allocation8 + $0x608] sm:$0xff]
    %v1003 = vld [vmem:[#allocation8 + $0x610] sm:$0xff]
    %v1004 = vld [vmem:[#allocation8 + $0x618] sm:$0xff]
    %v1005 = vld [vmem:[#allocation8 + $0x620] sm:$0xff]
    %v1006 = vld [vmem:[#allocation8 + $0x628] sm:$0xff]
    %v1007 = vld [vmem:[#allocation8 + $0x630] sm:$0xff]
    %v1008 = vld [vmem:[#allocation8 + $0x638] sm:$0xff]
    %v1009 = vld [vmem:[#allocation8 + $0x640] sm:$0xff]
    %v1010 = vld [vmem:[#allocation8 + $0x648] sm:$0xff]
    %v1011 = vld [vmem:[#allocation8 + $0x650] sm:$0xff]
    %v1012 = vld [vmem:[#allocation8 + $0x658] sm:$0xff]
    %v1013 = vld [vmem:[#allocation8 + $0x660] sm:$0xff]
    %v1014 = vld [vmem:[#allocation8 + $0x668] sm:$0xff]
    %v1015 = vld [vmem:[#allocation8 + $0x670] sm:$0xff]
    %v1016 = vld [vmem:[#allocation8 + $0x678] sm:$0xff]
    %v1017 = vld [vmem:[#allocation8 + $0x680] sm:$0xff]
    %v1018 = vld [vmem:[#allocation8 + $0x688] sm:$0xff]
    %v1019 = vld [vmem:[#allocation8 + $0x690] sm:$0xff]
    %v1020 = vld [vmem:[#allocation8 + $0x698] sm:$0xff]
    %v1021 = vld [vmem:[#allocation8 + $0x6a0] sm:$0xff]
    %v1022 = vld [vmem:[#allocation8 + $0x6a8] sm:$0xff]
    %v1023 = vld [vmem:[#allocation8 + $0x6b0] sm:$0xff]
    %v1024 = vld [vmem:[#allocation8 + $0x6b8] sm:$0xff]
    %v1025 = vld [vmem:[#allocation8 + $0x6c0] sm:$0xff]
    %v1026 = vld [vmem:[#allocation8 + $0x6c8] sm:$0xff]
    %v1027 = vld [vmem:[#allocation8 + $0x6d0] sm:$0xff]
    %v1028 = vld [vmem:[#allocation8 + $0x6d8] sm:$0xff]
    %v1029 = vld [vmem:[#allocation8 + $0x6e0] sm:$0xff]
    %v1030 = vld [vmem:[#allocation8 + $0x6e8] sm:$0xff]
    %v1031 = vld [vmem:[#allocation8 + $0x6f0] sm:$0xff]
    %v1032 = vld [vmem:[#allocation8 + $0x6f8] sm:$0xff]
    %v1033 = vld [vmem:[#allocation8 + $0x700] sm:$0xff]
    %v1034 = vld [vmem:[#allocation8 + $0x708] sm:$0xff]
    %v1035 = vld [vmem:[#allocation8 + $0x710] sm:$0xff]
    %v1036 = vld [vmem:[#allocation8 + $0x718] sm:$0xff]
    %v1037 = vld [vmem:[#allocation8 + $0x720] sm:$0xff]
    %v1038 = vld [vmem:[#allocation8 + $0x728] sm:$0xff]
    %v1039 = vld [vmem:[#allocation8 + $0x730] sm:$0xff]
    %v1040 = vld [vmem:[#allocation8 + $0x738] sm:$0xff]
    %v1041 = vld [vmem:[#allocation8 + $0x740] sm:$0xff]
    %v1042 = vld [vmem:[#allocation8 + $0x748] sm:$0xff]
    %v1043 = vld [vmem:[#allocation8 + $0x750] sm:$0xff]
    %v1044 = vld [vmem:[#allocation8 + $0x758] sm:$0xff]
    %v1045 = vld [vmem:[#allocation8 + $0x760] sm:$0xff]
    %v1046 = vld [vmem:[#allocation8 + $0x768] sm:$0xff]
    %v1047 = vld [vmem:[#allocation8 + $0x770] sm:$0xff]
    %v1048 = vld [vmem:[#allocation8 + $0x778] sm:$0xff]
    %v1049 = vld [vmem:[#allocation8 + $0x780] sm:$0xff]
    %v1050 = vld [vmem:[#allocation8 + $0x788] sm:$0xff]
    %v1051 = vld [vmem:[#allocation8 + $0x790] sm:$0xff]
    %v1052 = vld [vmem:[#allocation8 + $0x798] sm:$0xff]
    %v1053 = vld [vmem:[#allocation8 + $0x7a0] sm:$0xff]
    %v1054 = vld [vmem:[#allocation8 + $0x7a8] sm:$0xff]
    %v1055 = vld [vmem:[#allocation8 + $0x7b0] sm:$0xff]
    %v1056 = vld [vmem:[#allocation8 + $0x7b8] sm:$0xff]
    %v1057 = vld [vmem:[#allocation8 + $0x7c0] sm:$0xff]
    %v1058 = vld [vmem:[#allocation8 + $0x7c8] sm:$0xff]
    %v1059 = vld [vmem:[#allocation8 + $0x7d0] sm:$0xff]
    %v1060 = vld [vmem:[#allocation8 + $0x7d8] sm:$0xff]
    %v1061 = vld [vmem:[#allocation8 + $0x7e0] sm:$0xff]
    %v1062 = vld [vmem:[#allocation8 + $0x7e8] sm:$0xff]
    %v1063 = vld [vmem:[#allocation8 + $0x7f0] sm:$0xff]
    %v1064 = vld [vmem:[#allocation8 + $0x7f8] sm:$0xff]
    %v1065 = vld [vmem:[#allocation8 + $0x800] sm:$0xff]
    %v1066 = vld [vmem:[#allocation8 + $0x808] sm:$0xff]
    %v1067 = vld [vmem:[#allocation8 + $0x810] sm:$0xff]
    %v1068 = vld [vmem:[#allocation8 + $0x818] sm:$0xff]
    %v1069 = vld [vmem:[#allocation8 + $0x820] sm:$0xff]
    %v1070 = vld [vmem:[#allocation8 + $0x828] sm:$0xff]
    %v1071 = vld [vmem:[#allocation8 + $0x830] sm:$0xff]
    %v1072 = vld [vmem:[#allocation8 + $0x838] sm:$0xff]
    %v1073 = vld [vmem:[#allocation8 + $0x840] sm:$0xff]
    %v1074 = vld [vmem:[#allocation8 + $0x848] sm:$0xff]
    %v1075 = vld [vmem:[#allocation8 + $0x850] sm:$0xff]
    %v1076 = vld [vmem:[#allocation8 + $0x858] sm:$0xff]
    %v1077 = vld [vmem:[#allocation8 + $0x860] sm:$0xff]
    %v1078 = vld [vmem:[#allocation8 + $0x868] sm:$0xff]
    %v1079 = vld [vmem:[#allocation8 + $0x870] sm:$0xff]
    %v1080 = vld [vmem:[#allocation8 + $0x878] sm:$0xff]
    %v1081 = vld [vmem:[#allocation8 + $0x880] sm:$0xff]
    %v1082 = vld [vmem:[#allocation8 + $0x888] sm:$0xff]
    %v1083 = vld [vmem:[#allocation8 + $0x890] sm:$0xff]
    %v1084 = vld [vmem:[#allocation8 + $0x898] sm:$0xff]
    %v1085 = vld [vmem:[#allocation8 + $0x8a0] sm:$0xff]
    %v1086 = vld [vmem:[#allocation8 + $0x8a8] sm:$0xff]
    %v1087 = vld [vmem:[#allocation8 + $0x8b0] sm:$0xff]
    %v1088 = vld [vmem:[#allocation8 + $0x8b8] sm:$0xff]
    %v1089 = vld [vmem:[#allocation8 + $0x8c0] sm:$0xff]
    %v1090 = vld [vmem:[#allocation8 + $0x8c8] sm:$0xff]
    %v1091 = vld [vmem:[#allocation8 + $0x8d0] sm:$0xff]
    %v1092 = vld [vmem:[#allocation8 + $0x8d8] sm:$0xff]
    %v1093 = vld [vmem:[#allocation8 + $0x8e0] sm:$0xff]
    %v1094 = vld [vmem:[#allocation8 + $0x8e8] sm:$0xff]
    %v1095 = vld [vmem:[#allocation8 + $0x8f0] sm:$0xff]
    %v1096 = vld [vmem:[#allocation8 + $0x8f8] sm:$0xff]
    %v1097 = vld [vmem:[#allocation8 + $0x900] sm:$0xff]
    %v1098 = vld [vmem:[#allocation8 + $0x908] sm:$0xff]
    %v1099 = vld [vmem:[#allocation8 + $0x910] sm:$0xff]
    %v1100 = vld [vmem:[#allocation8 + $0x918] sm:$0xff]
    %v1101 = vld [vmem:[#allocation8 + $0x920] sm:$0xff]
    %v1102 = vld [vmem:[#allocation8 + $0x928] sm:$0xff]
    %v1103 = vld [vmem:[#allocation8 + $0x930] sm:$0xff]
    %v1104 = vld [vmem:[#allocation8 + $0x938] sm:$0xff]
    %v1105 = vld [vmem:[#allocation8 + $0x940] sm:$0xff]
    %v1106 = vld [vmem:[#allocation8 + $0x948] sm:$0xff]
    %v1107 = vld [vmem:[#allocation8 + $0x950] sm:$0xff]
    %v1108 = vld [vmem:[#allocation8 + $0x958] sm:$0xff]
    %v1109 = vld [vmem:[#allocation8 + $0x960] sm:$0xff]
    %v1110 = vld [vmem:[#allocation8 + $0x968] sm:$0xff]
    %v1111 = vld [vmem:[#allocation8 + $0x970] sm:$0xff]
    %v1112 = vld [vmem:[#allocation8 + $0x978] sm:$0xff]
    %v1113 = vld [vmem:[#allocation8 + $0x980] sm:$0xff]
    %v1114 = vld [vmem:[#allocation8 + $0x988] sm:$0xff]
    %v1115 = vld [vmem:[#allocation8 + $0x990] sm:$0xff]
    %v1116 = vld [vmem:[#allocation8 + $0x998] sm:$0xff]
    %v1117 = vld [vmem:[#allocation8 + $0x9a0] sm:$0xff]
    %v1118 = vld [vmem:[#allocation8 + $0x9a8] sm:$0xff]
    %v1119 = vld [vmem:[#allocation8 + $0x9b0] sm:$0xff]
    %v1120 = vld [vmem:[#allocation8 + $0x9b8] sm:$0xff]
    %v1121 = vld [vmem:[#allocation8 + $0x9c0] sm:$0xff]
    %v1122 = vld [vmem:[#allocation8 + $0x9c8] sm:$0xff]
    %v1123 = vld [vmem:[#allocation8 + $0x9d0] sm:$0xff]
    %v1124 = vld [vmem:[#allocation8 + $0x9d8] sm:$0xff]
    %v1125 = vld [vmem:[#allocation8 + $0x9e0] sm:$0xff]
    %v1126 = vld [vmem:[#allocation8 + $0x9e8] sm:$0xff]
    %v1127 = vld [vmem:[#allocation8 + $0x9f0] sm:$0xff]
    %v1128 = vld [vmem:[#allocation8 + $0x9f8] sm:$0xff]
    %v1129 = vld [vmem:[#allocation8 + $0xa00] sm:$0xff]
    %v1130 = vld [vmem:[#allocation8 + $0xa08] sm:$0xff]
    %v1131 = vld [vmem:[#allocation8 + $0xa10] sm:$0xff]
    %v1132 = vld [vmem:[#allocation8 + $0xa18] sm:$0xff]
    %v1133 = vld [vmem:[#allocation8 + $0xa20] sm:$0xff]
    %v1134 = vld [vmem:[#allocation8 + $0xa28] sm:$0xff]
    %v1135 = vld [vmem:[#allocation8 + $0xa30] sm:$0xff]
    %v1136 = vld [vmem:[#allocation8 + $0xa38] sm:$0xff]
    %v1137 = vld [vmem:[#allocation8 + $0xa40] sm:$0xff]
    %v1138 = vld [vmem:[#allocation8 + $0xa48] sm:$0xff]
    %v1139 = vld [vmem:[#allocation8 + $0xa50] sm:$0xff]
    %v1140 = vld [vmem:[#allocation8 + $0xa58] sm:$0xff]
    %v1141 = vld [vmem:[#allocation8 + $0xa60] sm:$0xff]
    %v1142 = vld [vmem:[#allocation8 + $0xa68] sm:$0xff]
    %v1143 = vld [vmem:[#allocation8 + $0xa70] sm:$0xff]
    %v1144 = vld [vmem:[#allocation8 + $0xa78] sm:$0xff]
    %v1145 = vld [vmem:[#allocation8 + $0xa80] sm:$0xff]
    %v1146 = vld [vmem:[#allocation8 + $0xa88] sm:$0xff]
    %v1147 = vld [vmem:[#allocation8 + $0xa90] sm:$0xff]
    %v1148 = vld [vmem:[#allocation8 + $0xa98] sm:$0xff]
    %v1149 = vld [vmem:[#allocation8 + $0xaa0] sm:$0xff]
    %v1150 = vld [vmem:[#allocation8 + $0xaa8] sm:$0xff]
    %v1151 = vld [vmem:[#allocation8 + $0xab0] sm:$0xff]
    %v1152 = vld [vmem:[#allocation8 + $0xab8] sm:$0xff]
    %v1153 = vld [vmem:[#allocation8 + $0xac0] sm:$0xff]
    %v1154 = vld [vmem:[#allocation8 + $0xac8] sm:$0xff]
    %v1155 = vld [vmem:[#allocation8 + $0xad0] sm:$0xff]
    %v1156 = vld [vmem:[#allocation8 + $0xad8] sm:$0xff]
    %v1157 = vld [vmem:[#allocation8 + $0xae0] sm:$0xff]
    %v1158 = vld [vmem:[#allocation8 + $0xae8] sm:$0xff]
    %v1159 = vld [vmem:[#allocation8 + $0xaf0] sm:$0xff]
    %v1160 = vld [vmem:[#allocation8 + $0xaf8] sm:$0xff]
    %v1161 = vld [vmem:[#allocation8 + $0xb00] sm:$0xff]
    %v1162 = vld [vmem:[#allocation8 + $0xb08] sm:$0xff]
    %v1163 = vld [vmem:[#allocation8 + $0xb10] sm:$0xff]
    %v1164 = vld [vmem:[#allocation8 + $0xb18] sm:$0xff]
    %v1165 = vld [vmem:[#allocation8 + $0xb20] sm:$0xff]
    %v1166 = vld [vmem:[#allocation8 + $0xb28] sm:$0xff]
    %v1167 = vld [vmem:[#allocation8 + $0xb30] sm:$0xff]
    %v1168 = vld [vmem:[#allocation8 + $0xb38] sm:$0xff]
    %v1169 = vld [vmem:[#allocation8 + $0xb40] sm:$0xff]
    %v1170 = vld [vmem:[#allocation8 + $0xb48] sm:$0xff]
    %v1171 = vld [vmem:[#allocation8 + $0xb50] sm:$0xff]
    %v1172 = vld [vmem:[#allocation8 + $0xb58] sm:$0xff]
    %v1173 = vld [vmem:[#allocation8 + $0xb60] sm:$0xff]
    %v1174 = vld [vmem:[#allocation8 + $0xb68] sm:$0xff]
    %v1175 = vld [vmem:[#allocation8 + $0xb70] sm:$0xff]
    %v1176 = vld [vmem:[#allocation8 + $0xb78] sm:$0xff]
    %v1177 = vld [vmem:[#allocation8 + $0xb80] sm:$0xff]
    %v1178 = vld [vmem:[#allocation8 + $0xb88] sm:$0xff]
    %v1179 = vld [vmem:[#allocation8 + $0xb90] sm:$0xff]
    %v1180 = vld [vmem:[#allocation8 + $0xb98] sm:$0xff]
    %v1181 = vld [vmem:[#allocation8 + $0xba0] sm:$0xff]
    %v1182 = vld [vmem:[#allocation8 + $0xba8] sm:$0xff]
    %v1183 = vld [vmem:[#allocation8 + $0xbb0] sm:$0xff]
    %v1184 = vld [vmem:[#allocation8 + $0xbb8] sm:$0xff]
    %v1185 = vld [vmem:[#allocation8 + $0xbc0] sm:$0xff]
    %v1186 = vld [vmem:[#allocation8 + $0xbc8] sm:$0xff]
    %v1187 = vld [vmem:[#allocation8 + $0xbd0] sm:$0xff]
    %v1188 = vld [vmem:[#allocation8 + $0xbd8] sm:$0xff]
    %v1189 = vld [vmem:[#allocation8 + $0xbe0] sm:$0xff]
    %v1190 = vld [vmem:[#allocation8 + $0xbe8] sm:$0xff]
    %v1191 = vld [vmem:[#allocation8 + $0xbf0] sm:$0xff]
    %v1192 = vld [vmem:[#allocation8 + $0xbf8] sm:$0xff]
    %v1193 = vld [vmem:[#allocation8 + $0xc00] sm:$0xff]
    %v1194 = vld [vmem:[#allocation8 + $0xc08] sm:$0xff]
    %v1195 = vld [vmem:[#allocation8 + $0xc10] sm:$0xff]
    %v1196 = vld [vmem:[#allocation8 + $0xc18] sm:$0xff]
    %v1197 = vld [vmem:[#allocation8 + $0xc20] sm:$0xff]
    %v1198 = vld [vmem:[#allocation8 + $0xc28] sm:$0xff]
    %v1199 = vld [vmem:[#allocation8 + $0xc30] sm:$0xff]
    %v1200 = vld [vmem:[#allocation8 + $0xc38] sm:$0xff]
    %v1201 = vld [vmem:[#allocation8 + $0xc40] sm:$0xff]
    %v1202 = vld [vmem:[#allocation8 + $0xc48] sm:$0xff]
    %v1203 = vld [vmem:[#allocation8 + $0xc50] sm:$0xff]
    %v1204 = vld [vmem:[#allocation8 + $0xc58] sm:$0xff]
    %v1205 = vld [vmem:[#allocation8 + $0xc60] sm:$0xff]
    %v1206 = vld [vmem:[#allocation8 + $0xc68] sm:$0xff]
    %v1207 = vld [vmem:[#allocation8 + $0xc70] sm:$0xff]
    %v1208 = vld [vmem:[#allocation8 + $0xc78] sm:$0xff]
    %v1209 = vld [vmem:[#allocation8 + $0xc80] sm:$0xff]
    %v1210 = vld [vmem:[#allocation8 + $0xc88] sm:$0xff]
    %v1211 = vld [vmem:[#allocation8 + $0xc90] sm:$0xff]
    %v1212 = vld [vmem:[#allocation8 + $0xc98] sm:$0xff]
    %v1213 = vld [vmem:[#allocation8 + $0xca0] sm:$0xff]
    %v1214 = vld [vmem:[#allocation8 + $0xca8] sm:$0xff]
    %v1215 = vld [vmem:[#allocation8 + $0xcb0] sm:$0xff]
    %v1216 = vld [vmem:[#allocation8 + $0xcb8] sm:$0xff]
    %v1217 = vld [vmem:[#allocation8 + $0xcc0] sm:$0xff]
    %v1218 = vld [vmem:[#allocation8 + $0xcc8] sm:$0xff]
    %v1219 = vld [vmem:[#allocation8 + $0xcd0] sm:$0xff]
    %v1220 = vld [vmem:[#allocation8 + $0xcd8] sm:$0xff]
    %v1221 = vld [vmem:[#allocation8 + $0xce0] sm:$0xff]
    %v1222 = vld [vmem:[#allocation8 + $0xce8] sm:$0xff]
    %v1223 = vld [vmem:[#allocation8 + $0xcf0] sm:$0xff]
    %v1224 = vld [vmem:[#allocation8 + $0xcf8] sm:$0xff]
    %v1225 = vld [vmem:[#allocation8 + $0xd00] sm:$0xff]
    %v1226 = vld [vmem:[#allocation8 + $0xd08] sm:$0xff]
    %v1227 = vld [vmem:[#allocation8 + $0xd10] sm:$0xff]
    %v1228 = vld [vmem:[#allocation8 + $0xd18] sm:$0xff]
    %v1229 = vld [vmem:[#allocation8 + $0xd20] sm:$0xff]
    %v1230 = vld [vmem:[#allocation8 + $0xd28] sm:$0xff]
    %v1231 = vld [vmem:[#allocation8 + $0xd30] sm:$0xff]
    %v1232 = vld [vmem:[#allocation8 + $0xd38] sm:$0xff]
    %v1233 = vld [vmem:[#allocation8 + $0xd40] sm:$0xff]
    %v1234 = vld [vmem:[#allocation8 + $0xd48] sm:$0xff]
    %v1235 = vld [vmem:[#allocation8 + $0xd50] sm:$0xff]
    %v1236 = vld [vmem:[#allocation8 + $0xd58] sm:$0xff]
    %v1237 = vld [vmem:[#allocation8 + $0xd60] sm:$0xff]
    %v1238 = vld [vmem:[#allocation8 + $0xd68] sm:$0xff]
    %v1239 = vld [vmem:[#allocation8 + $0xd70] sm:$0xff]
    %v1240 = vld [vmem:[#allocation8 + $0xd78] sm:$0xff]
    %v1241 = vld [vmem:[#allocation8 + $0xd80] sm:$0xff]
    %v1242 = vld [vmem:[#allocation8 + $0xd88] sm:$0xff]
    %v1243 = vld [vmem:[#allocation8 + $0xd90] sm:$0xff]
    %v1244 = vld [vmem:[#allocation8 + $0xd98] sm:$0xff]
    %v1245 = vld [vmem:[#allocation8 + $0xda0] sm:$0xff]
    %v1246 = vld [vmem:[#allocation8 + $0xda8] sm:$0xff]
    %v1247 = vld [vmem:[#allocation8 + $0xdb0] sm:$0xff]
    %v1248 = vld [vmem:[#allocation8 + $0xdb8] sm:$0xff]
    %v1249 = vld [vmem:[#allocation8 + $0xdc0] sm:$0xff]
    %v1250 = vld [vmem:[#allocation8 + $0xdc8] sm:$0xff]
    %v1251 = vld [vmem:[#allocation8 + $0xdd0] sm:$0xff]
    %v1252 = vld [vmem:[#allocation8 + $0xdd8] sm:$0xff]
    %v1253 = vld [vmem:[#allocation8 + $0xde0] sm:$0xff]
    %v1254 = vld [vmem:[#allocation8 + $0xde8] sm:$0xff]
    %v1255 = vld [vmem:[#allocation8 + $0xdf0] sm:$0xff]
    %v1256 = vld [vmem:[#allocation8 + $0xdf8] sm:$0xff]
    %v1257 = vld [vmem:[#allocation8 + $0xe00] sm:$0xff]
    %v1258 = vld [vmem:[#allocation8 + $0xe08] sm:$0xff]
    %v1259 = vld [vmem:[#allocation8 + $0xe10] sm:$0xff]
    %v1260 = vld [vmem:[#allocation8 + $0xe18] sm:$0xff]
    %v1261 = vld [vmem:[#allocation8 + $0xe20] sm:$0xff]
    %v1262 = vld [vmem:[#allocation8 + $0xe28] sm:$0xff]
    %v1263 = vld [vmem:[#allocation8 + $0xe30] sm:$0xff]
    %v1264 = vld [vmem:[#allocation8 + $0xe38] sm:$0xff]
    %v1265 = vld [vmem:[#allocation8 + $0xe40] sm:$0xff]
    %v1266 = vld [vmem:[#allocation8 + $0xe48] sm:$0xff]
    %v1267 = vld [vmem:[#allocation8 + $0xe50] sm:$0xff]
    %v1268 = vld [vmem:[#allocation8 + $0xe58] sm:$0xff]
    %v1269 = vld [vmem:[#allocation8 + $0xe60] sm:$0xff]
    %v1270 = vld [vmem:[#allocation8 + $0xe68] sm:$0xff]
    %v1271 = vld [vmem:[#allocation8 + $0xe70] sm:$0xff]
    %v1272 = vld [vmem:[#allocation8 + $0xe78] sm:$0xff]
    %v1273 = vld [vmem:[#allocation8 + $0xe80] sm:$0xff]
    %v1274 = vld [vmem:[#allocation8 + $0xe88] sm:$0xff]
    %v1275 = vld [vmem:[#allocation8 + $0xe90] sm:$0xff]
    %v1276 = vld [vmem:[#allocation8 + $0xe98] sm:$0xff]
    %v1277 = vld [vmem:[#allocation8 + $0xea0] sm:$0xff]
    %v1278 = vld [vmem:[#allocation8 + $0xea8] sm:$0xff]
    %v1279 = vld [vmem:[#allocation8 + $0xeb0] sm:$0xff]
    %v1280 = vld [vmem:[#allocation8 + $0xeb8] sm:$0xff]
    %v1281 = vld [vmem:[#allocation8 + $0xec0] sm:$0xff]
    %v1282 = vld [vmem:[#allocation8 + $0xec8] sm:$0xff]
    %v1283 = vld [vmem:[#allocation8 + $0xed0] sm:$0xff]
    %v1284 = vld [vmem:[#allocation8 + $0xed8] sm:$0xff]
    %v1285 = vld [vmem:[#allocation8 + $0xee0] sm:$0xff]
    %v1286 = vld [vmem:[#allocation8 + $0xee8] sm:$0xff]
    %v1287 = vld [vmem:[#allocation8 + $0xef0] sm:$0xff]
    %v1288 = vld [vmem:[#allocation8 + $0xef8] sm:$0xff]
    %v1289 = vld [vmem:[#allocation8 + $0xf00] sm:$0xff]
    %v1290 = vld [vmem:[#allocation8 + $0xf08] sm:$0xff]
    %v1291 = vld [vmem:[#allocation8 + $0xf10] sm:$0xff]
    %v1292 = vld [vmem:[#allocation8 + $0xf18] sm:$0xff]
    %v1293 = vld [vmem:[#allocation8 + $0xf20] sm:$0xff]
    %v1294 = vld [vmem:[#allocation8 + $0xf28] sm:$0xff]
    %v1295 = vld [vmem:[#allocation8 + $0xf30] sm:$0xff]
    %v1296 = vld [vmem:[#allocation8 + $0xf38] sm:$0xff]
    %v1297 = vld [vmem:[#allocation8 + $0xf40] sm:$0xff]
    %v1298 = vld [vmem:[#allocation8 + $0xf48] sm:$0xff]
    %v1299 = vld [vmem:[#allocation8 + $0xf50] sm:$0xff]
    %v1300 = vld [vmem:[#allocation8 + $0xf58] sm:$0xff]
    %v1301 = vld [vmem:[#allocation8 + $0xf60] sm:$0xff]
    %v1302 = vld [vmem:[#allocation8 + $0xf68] sm:$0xff]
    %v1303 = vld [vmem:[#allocation8 + $0xf70] sm:$0xff]
    %v1304 = vld [vmem:[#allocation8 + $0xf78] sm:$0xff]
    %v1305 = vld [vmem:[#allocation8 + $0xf80] sm:$0xff]
    %v1306 = vld [vmem:[#allocation8 + $0xf88] sm:$0xff]
    %v1307 = vld [vmem:[#allocation8 + $0xf90] sm:$0xff]
    %v1308 = vld [vmem:[#allocation8 + $0xf98] sm:$0xff]
    %v1309 = vld [vmem:[#allocation8 + $0xfa0] sm:$0xff]
    %v1310 = vld [vmem:[#allocation8 + $0xfa8] sm:$0xff]
    %v1311 = vld [vmem:[#allocation8 + $0xfb0] sm:$0xff]
    %v1312 = vld [vmem:[#allocation8 + $0xfb8] sm:$0xff]
    %v1313 = vld [vmem:[#allocation8 + $0xfc0] sm:$0xff]
    %v1314 = vld [vmem:[#allocation8 + $0xfc8] sm:$0xff]
    %v1315 = vld [vmem:[#allocation8 + $0xfd0] sm:$0xff]
    %v1316 = vld [vmem:[#allocation8 + $0xfd8] sm:$0xff]
    %v1317 = vld [vmem:[#allocation8 + $0xfe0] sm:$0xff]
    %v1318 = vld [vmem:[#allocation8 + $0xfe8] sm:$0xff]
    %v1319 = vld [vmem:[#allocation8 + $0xff0] sm:$0xff]
    %v1320 = vld [vmem:[#allocation8 + $0xff8] sm:$0xff]
    %v1321 = vld [vmem:[#allocation10] sm:$0xff]
    %v1323 = vlaneseq
    %v1324 = vshrl.u32 %v1323, 7
    %v1325 = vsub.s32 0, %v1324
    %v1326 = vrot.slane %v1321, %v1325
    %v1327 = vlaneseq
    %v1328 = vshrl.u32 %v1327, 7
    %v1329 = vsub.s32 1, %v1328
    %v1330 = vrot.slane %v1321, %v1329
    %v1331 = vlaneseq
    %v1332 = vshrl.u32 %v1331, 7
    %v1333 = vsub.s32 2, %v1332
    %v1334 = vrot.slane %v1321, %v1333
    %v1335 = vlaneseq
    %v1336 = vshrl.u32 %v1335, 7
    %v1337 = vsub.s32 3, %v1336
    %v1338 = vrot.slane %v1321, %v1337
    %v1339 = vlaneseq
    %v1340 = vshrl.u32 %v1339, 7
    %v1341 = vsub.s32 4, %v1340
    %v1342 = vrot.slane %v1321, %v1341
    %v1343 = vlaneseq
    %v1344 = vshrl.u32 %v1343, 7
    %v1345 = vsub.s32 5, %v1344
    %v1346 = vrot.slane %v1321, %v1345
    %v1347 = vlaneseq
    %v1348 = vshrl.u32 %v1347, 7
    %v1349 = vsub.s32 6, %v1348
    %v1350 = vrot.slane %v1321, %v1349
    %v1351 = vlaneseq
    %v1352 = vshrl.u32 %v1351, 7
    %v1353 = vsub.s32 7, %v1352
    %v1354 = vrot.slane %v1321, %v1353
    %v1875 = vunpack.c.l.b16 %v809
    %v1876 = vunpack.c.h.b16 %v809
    %v1877 = vunpack.c.l.b16 %v810
    %v1878 = vunpack.c.h.b16 %v810
    %v1879 = vunpack.c.l.b16 %v811
    %v1880 = vunpack.c.h.b16 %v811
    %v1881 = vunpack.c.l.b16 %v812
    %v1882 = vunpack.c.h.b16 %v812
    %v1883 = vunpack.c.l.b16 %v813
    %v1884 = vunpack.c.h.b16 %v813
    %v1885 = vunpack.c.l.b16 %v814
    %v1886 = vunpack.c.h.b16 %v814
    %v1887 = vunpack.c.l.b16 %v815
    %v1888 = vunpack.c.h.b16 %v815
    %v1889 = vunpack.c.l.b16 %v816
    %v1890 = vunpack.c.h.b16 %v816
    %v1891 = vunpack.c.l.b16 %v817
    %v1892 = vunpack.c.h.b16 %v817
    %v1893 = vunpack.c.l.b16 %v818
    %v1894 = vunpack.c.h.b16 %v818
    %v1895 = vunpack.c.l.b16 %v819
    %v1896 = vunpack.c.h.b16 %v819
    %v1897 = vunpack.c.l.b16 %v820
    %v1898 = vunpack.c.h.b16 %v820
    %v1899 = vunpack.c.l.b16 %v821
    %v1900 = vunpack.c.h.b16 %v821
    %v1901 = vunpack.c.l.b16 %v822
    %v1902 = vunpack.c.h.b16 %v822
    %v1903 = vunpack.c.l.b16 %v823
    %v1904 = vunpack.c.h.b16 %v823
    %v1905 = vunpack.c.l.b16 %v824
    %v1906 = vunpack.c.h.b16 %v824
    %v1907 = vunpack.c.l.b16 %v825
    %v1908 = vunpack.c.h.b16 %v825
    %v1909 = vunpack.c.l.b16 %v826
    %v1910 = vunpack.c.h.b16 %v826
    %v1911 = vunpack.c.l.b16 %v827
    %v1912 = vunpack.c.h.b16 %v827
    %v1913 = vunpack.c.l.b16 %v828
    %v1914 = vunpack.c.h.b16 %v828
    %v1915 = vunpack.c.l.b16 %v829
    %v1916 = vunpack.c.h.b16 %v829
    %v1917 = vunpack.c.l.b16 %v830
    %v1918 = vunpack.c.h.b16 %v830
    %v1919 = vunpack.c.l.b16 %v831
    %v1920 = vunpack.c.h.b16 %v831
    %v1921 = vunpack.c.l.b16 %v832
    %v1922 = vunpack.c.h.b16 %v832
    %v1923 = vunpack.c.l.b16 %v833
    %v1924 = vunpack.c.h.b16 %v833
    %v1925 = vunpack.c.l.b16 %v834
    %v1926 = vunpack.c.h.b16 %v834
    %v1927 = vunpack.c.l.b16 %v835
    %v1928 = vunpack.c.h.b16 %v835
    %v1929 = vunpack.c.l.b16 %v836
    %v1930 = vunpack.c.h.b16 %v836
    %v1931 = vunpack.c.l.b16 %v837
    %v1932 = vunpack.c.h.b16 %v837
    %v1933 = vunpack.c.l.b16 %v838
    %v1934 = vunpack.c.h.b16 %v838
    %v1935 = vunpack.c.l.b16 %v839
    %v1936 = vunpack.c.h.b16 %v839
    %v1937 = vunpack.c.l.b16 %v840
    %v1938 = vunpack.c.h.b16 %v840
    %v1939 = vunpack.c.l.b16 %v841
    %v1940 = vunpack.c.h.b16 %v841
    %v1941 = vunpack.c.l.b16 %v842
    %v1942 = vunpack.c.h.b16 %v842
    %v1943 = vunpack.c.l.b16 %v843
    %v1944 = vunpack.c.h.b16 %v843
    %v1945 = vunpack.c.l.b16 %v844
    %v1946 = vunpack.c.h.b16 %v844
    %v1947 = vunpack.c.l.b16 %v845
    %v1948 = vunpack.c.h.b16 %v845
    %v1949 = vunpack.c.l.b16 %v846
    %v1950 = vunpack.c.h.b16 %v846
    %v1951 = vunpack.c.l.b16 %v847
    %v1952 = vunpack.c.h.b16 %v847
    %v1953 = vunpack.c.l.b16 %v848
    %v1954 = vunpack.c.h.b16 %v848
    %v1955 = vunpack.c.l.b16 %v849
    %v1956 = vunpack.c.h.b16 %v849
    %v1957 = vunpack.c.l.b16 %v850
    %v1958 = vunpack.c.h.b16 %v850
    %v1959 = vunpack.c.l.b16 %v851
    %v1960 = vunpack.c.h.b16 %v851
    %v1961 = vunpack.c.l.b16 %v852
    %v1962 = vunpack.c.h.b16 %v852
    %v1963 = vunpack.c.l.b16 %v853
    %v1964 = vunpack.c.h.b16 %v853
    %v1965 = vunpack.c.l.b16 %v854
    %v1966 = vunpack.c.h.b16 %v854
    %v1967 = vunpack.c.l.b16 %v855
    %v1968 = vunpack.c.h.b16 %v855
    %v1969 = vunpack.c.l.b16 %v856
    %v1970 = vunpack.c.h.b16 %v856
    %v1971 = vunpack.c.l.b16 %v857
    %v1972 = vunpack.c.h.b16 %v857
    %v1973 = vunpack.c.l.b16 %v858
    %v1974 = vunpack.c.h.b16 %v858
    %v1975 = vunpack.c.l.b16 %v859
    %v1976 = vunpack.c.h.b16 %v859
    %v1977 = vunpack.c.l.b16 %v860
    %v1978 = vunpack.c.h.b16 %v860
    %v1979 = vunpack.c.l.b16 %v861
    %v1980 = vunpack.c.h.b16 %v861
    %v1981 = vunpack.c.l.b16 %v862
    %v1982 = vunpack.c.h.b16 %v862
    %v1983 = vunpack.c.l.b16 %v863
    %v1984 = vunpack.c.h.b16 %v863
    %v1985 = vunpack.c.l.b16 %v864
    %v1986 = vunpack.c.h.b16 %v864
    %v1987 = vunpack.c.l.b16 %v865
    %v1988 = vunpack.c.h.b16 %v865
    %v1989 = vunpack.c.l.b16 %v866
    %v1990 = vunpack.c.h.b16 %v866
    %v1991 = vunpack.c.l.b16 %v867
    %v1992 = vunpack.c.h.b16 %v867
    %v1993 = vunpack.c.l.b16 %v868
    %v1994 = vunpack.c.h.b16 %v868
    %v1995 = vunpack.c.l.b16 %v869
    %v1996 = vunpack.c.h.b16 %v869
    %v1997 = vunpack.c.l.b16 %v870
    %v1998 = vunpack.c.h.b16 %v870
    %v1999 = vunpack.c.l.b16 %v871
    %v2000 = vunpack.c.h.b16 %v871
    %v2001 = vunpack.c.l.b16 %v872
    %v2002 = vunpack.c.h.b16 %v872
    %v2003 = vunpack.c.l.b16 %v873
    %v2004 = vunpack.c.h.b16 %v873
    %v2005 = vunpack.c.l.b16 %v874
    %v2006 = vunpack.c.h.b16 %v874
    %v2007 = vunpack.c.l.b16 %v875
    %v2008 = vunpack.c.h.b16 %v875
    %v2009 = vunpack.c.l.b16 %v876
    %v2010 = vunpack.c.h.b16 %v876
    %v2011 = vunpack.c.l.b16 %v877
    %v2012 = vunpack.c.h.b16 %v877
    %v2013 = vunpack.c.l.b16 %v878
    %v2014 = vunpack.c.h.b16 %v878
    %v2015 = vunpack.c.l.b16 %v879
    %v2016 = vunpack.c.h.b16 %v879
    %v2017 = vunpack.c.l.b16 %v880
    %v2018 = vunpack.c.h.b16 %v880
    %v2019 = vunpack.c.l.b16 %v881
    %v2020 = vunpack.c.h.b16 %v881
    %v2021 = vunpack.c.l.b16 %v882
    %v2022 = vunpack.c.h.b16 %v882
    %v2023 = vunpack.c.l.b16 %v883
    %v2024 = vunpack.c.h.b16 %v883
    %v2025 = vunpack.c.l.b16 %v884
    %v2026 = vunpack.c.h.b16 %v884
    %v2027 = vunpack.c.l.b16 %v885
    %v2028 = vunpack.c.h.b16 %v885
    %v2029 = vunpack.c.l.b16 %v886
    %v2030 = vunpack.c.h.b16 %v886
    %v2031 = vunpack.c.l.b16 %v887
    %v2032 = vunpack.c.h.b16 %v887
    %v2033 = vunpack.c.l.b16 %v888
    %v2034 = vunpack.c.h.b16 %v888
    %v2035 = vunpack.c.l.b16 %v889
    %v2036 = vunpack.c.h.b16 %v889
    %v2037 = vunpack.c.l.b16 %v890
    %v2038 = vunpack.c.h.b16 %v890
    %v2039 = vunpack.c.l.b16 %v891
    %v2040 = vunpack.c.h.b16 %v891
    %v2041 = vunpack.c.l.b16 %v892
    %v2042 = vunpack.c.h.b16 %v892
    %v2043 = vunpack.c.l.b16 %v893
    %v2044 = vunpack.c.h.b16 %v893
    %v2045 = vunpack.c.l.b16 %v894
    %v2046 = vunpack.c.h.b16 %v894
    %v2047 = vunpack.c.l.b16 %v895
    %v2048 = vunpack.c.h.b16 %v895
    %v2049 = vunpack.c.l.b16 %v896
    %v2050 = vunpack.c.h.b16 %v896
    %v2051 = vunpack.c.l.b16 %v897
    %v2052 = vunpack.c.h.b16 %v897
    %v2053 = vunpack.c.l.b16 %v898
    %v2054 = vunpack.c.h.b16 %v898
    %v2055 = vunpack.c.l.b16 %v899
    %v2056 = vunpack.c.h.b16 %v899
    %v2057 = vunpack.c.l.b16 %v900
    %v2058 = vunpack.c.h.b16 %v900
    %v2059 = vunpack.c.l.b16 %v901
    %v2060 = vunpack.c.h.b16 %v901
    %v2061 = vunpack.c.l.b16 %v902
    %v2062 = vunpack.c.h.b16 %v902
    %v2063 = vunpack.c.l.b16 %v903
    %v2064 = vunpack.c.h.b16 %v903
    %v2065 = vunpack.c.l.b16 %v904
    %v2066 = vunpack.c.h.b16 %v904
    %v2067 = vunpack.c.l.b16 %v905
    %v2068 = vunpack.c.h.b16 %v905
    %v2069 = vunpack.c.l.b16 %v906
    %v2070 = vunpack.c.h.b16 %v906
    %v2071 = vunpack.c.l.b16 %v907
    %v2072 = vunpack.c.h.b16 %v907
    %v2073 = vunpack.c.l.b16 %v908
    %v2074 = vunpack.c.h.b16 %v908
    %v2075 = vunpack.c.l.b16 %v909
    %v2076 = vunpack.c.h.b16 %v909
    %v2077 = vunpack.c.l.b16 %v910
    %v2078 = vunpack.c.h.b16 %v910
    %v2079 = vunpack.c.l.b16 %v911
    %v2080 = vunpack.c.h.b16 %v911
    %v2081 = vunpack.c.l.b16 %v912
    %v2082 = vunpack.c.h.b16 %v912
    %v2083 = vunpack.c.l.b16 %v913
    %v2084 = vunpack.c.h.b16 %v913
    %v2085 = vunpack.c.l.b16 %v914
    %v2086 = vunpack.c.h.b16 %v914
    %v2087 = vunpack.c.l.b16 %v915
    %v2088 = vunpack.c.h.b16 %v915
    %v2089 = vunpack.c.l.b16 %v916
    %v2090 = vunpack.c.h.b16 %v916
    %v2091 = vunpack.c.l.b16 %v917
    %v2092 = vunpack.c.h.b16 %v917
    %v2093 = vunpack.c.l.b16 %v918
    %v2094 = vunpack.c.h.b16 %v918
    %v2095 = vunpack.c.l.b16 %v919
    %v2096 = vunpack.c.h.b16 %v919
    %v2097 = vunpack.c.l.b16 %v920
    %v2098 = vunpack.c.h.b16 %v920
    %v2099 = vunpack.c.l.b16 %v921
    %v2100 = vunpack.c.h.b16 %v921
    %v2101 = vunpack.c.l.b16 %v922
    %v2102 = vunpack.c.h.b16 %v922
    %v2103 = vunpack.c.l.b16 %v923
    %v2104 = vunpack.c.h.b16 %v923
    %v2105 = vunpack.c.l.b16 %v924
    %v2106 = vunpack.c.h.b16 %v924
    %v2107 = vunpack.c.l.b16 %v925
    %v2108 = vunpack.c.h.b16 %v925
    %v2109 = vunpack.c.l.b16 %v926
    %v2110 = vunpack.c.h.b16 %v926
    %v2111 = vunpack.c.l.b16 %v927
    %v2112 = vunpack.c.h.b16 %v927
    %v2113 = vunpack.c.l.b16 %v928
    %v2114 = vunpack.c.h.b16 %v928
    %v2115 = vunpack.c.l.b16 %v929
    %v2116 = vunpack.c.h.b16 %v929
    %v2117 = vunpack.c.l.b16 %v930
    %v2118 = vunpack.c.h.b16 %v930
    %v2119 = vunpack.c.l.b16 %v931
    %v2120 = vunpack.c.h.b16 %v931
    %v2121 = vunpack.c.l.b16 %v932
    %v2122 = vunpack.c.h.b16 %v932
    %v2123 = vunpack.c.l.b16 %v933
    %v2124 = vunpack.c.h.b16 %v933
    %v2125 = vunpack.c.l.b16 %v934
    %v2126 = vunpack.c.h.b16 %v934
    %v2127 = vunpack.c.l.b16 %v935
    %v2128 = vunpack.c.h.b16 %v935
    %v2129 = vunpack.c.l.b16 %v936
    %v2130 = vunpack.c.h.b16 %v936
    %v2131 = vunpack.c.l.b16 %v937
    %v2132 = vunpack.c.h.b16 %v937
    %v2133 = vunpack.c.l.b16 %v938
    %v2134 = vunpack.c.h.b16 %v938
    %v2135 = vunpack.c.l.b16 %v939
    %v2136 = vunpack.c.h.b16 %v939
    %v2137 = vunpack.c.l.b16 %v940
    %v2138 = vunpack.c.h.b16 %v940
    %v2139 = vunpack.c.l.b16 %v941
    %v2140 = vunpack.c.h.b16 %v941
    %v2141 = vunpack.c.l.b16 %v942
    %v2142 = vunpack.c.h.b16 %v942
    %v2143 = vunpack.c.l.b16 %v943
    %v2144 = vunpack.c.h.b16 %v943
    %v2145 = vunpack.c.l.b16 %v944
    %v2146 = vunpack.c.h.b16 %v944
    %v2147 = vunpack.c.l.b16 %v945
    %v2148 = vunpack.c.h.b16 %v945
    %v2149 = vunpack.c.l.b16 %v946
    %v2150 = vunpack.c.h.b16 %v946
    %v2151 = vunpack.c.l.b16 %v947
    %v2152 = vunpack.c.h.b16 %v947
    %v2153 = vunpack.c.l.b16 %v948
    %v2154 = vunpack.c.h.b16 %v948
    %v2155 = vunpack.c.l.b16 %v949
    %v2156 = vunpack.c.h.b16 %v949
    %v2157 = vunpack.c.l.b16 %v950
    %v2158 = vunpack.c.h.b16 %v950
    %v2159 = vunpack.c.l.b16 %v951
    %v2160 = vunpack.c.h.b16 %v951
    %v2161 = vunpack.c.l.b16 %v952
    %v2162 = vunpack.c.h.b16 %v952
    %v2163 = vunpack.c.l.b16 %v953
    %v2164 = vunpack.c.h.b16 %v953
    %v2165 = vunpack.c.l.b16 %v954
    %v2166 = vunpack.c.h.b16 %v954
    %v2167 = vunpack.c.l.b16 %v955
    %v2168 = vunpack.c.h.b16 %v955
    %v2169 = vunpack.c.l.b16 %v956
    %v2170 = vunpack.c.h.b16 %v956
    %v2171 = vunpack.c.l.b16 %v957
    %v2172 = vunpack.c.h.b16 %v957
    %v2173 = vunpack.c.l.b16 %v958
    %v2174 = vunpack.c.h.b16 %v958
    %v2175 = vunpack.c.l.b16 %v959
    %v2176 = vunpack.c.h.b16 %v959
    %v2177 = vunpack.c.l.b16 %v960
    %v2178 = vunpack.c.h.b16 %v960
    %v2179 = vunpack.c.l.b16 %v961
    %v2180 = vunpack.c.h.b16 %v961
    %v2181 = vunpack.c.l.b16 %v962
    %v2182 = vunpack.c.h.b16 %v962
    %v2183 = vunpack.c.l.b16 %v963
    %v2184 = vunpack.c.h.b16 %v963
    %v2185 = vunpack.c.l.b16 %v964
    %v2186 = vunpack.c.h.b16 %v964
    %v2187 = vunpack.c.l.b16 %v965
    %v2188 = vunpack.c.h.b16 %v965
    %v2189 = vunpack.c.l.b16 %v966
    %v2190 = vunpack.c.h.b16 %v966
    %v2191 = vunpack.c.l.b16 %v967
    %v2192 = vunpack.c.h.b16 %v967
    %v2193 = vunpack.c.l.b16 %v968
    %v2194 = vunpack.c.h.b16 %v968
    %v2195 = vunpack.c.l.b16 %v969
    %v2196 = vunpack.c.h.b16 %v969
    %v2197 = vunpack.c.l.b16 %v970
    %v2198 = vunpack.c.h.b16 %v970
    %v2199 = vunpack.c.l.b16 %v971
    %v2200 = vunpack.c.h.b16 %v971
    %v2201 = vunpack.c.l.b16 %v972
    %v2202 = vunpack.c.h.b16 %v972
    %v2203 = vunpack.c.l.b16 %v973
    %v2204 = vunpack.c.h.b16 %v973
    %v2205 = vunpack.c.l.b16 %v974
    %v2206 = vunpack.c.h.b16 %v974
    %v2207 = vunpack.c.l.b16 %v975
    %v2208 = vunpack.c.h.b16 %v975
    %v2209 = vunpack.c.l.b16 %v976
    %v2210 = vunpack.c.h.b16 %v976
    %v2211 = vunpack.c.l.b16 %v977
    %v2212 = vunpack.c.h.b16 %v977
    %v2213 = vunpack.c.l.b16 %v978
    %v2214 = vunpack.c.h.b16 %v978
    %v2215 = vunpack.c.l.b16 %v979
    %v2216 = vunpack.c.h.b16 %v979
    %v2217 = vunpack.c.l.b16 %v980
    %v2218 = vunpack.c.h.b16 %v980
    %v2219 = vunpack.c.l.b16 %v981
    %v2220 = vunpack.c.h.b16 %v981
    %v2221 = vunpack.c.l.b16 %v982
    %v2222 = vunpack.c.h.b16 %v982
    %v2223 = vunpack.c.l.b16 %v983
    %v2224 = vunpack.c.h.b16 %v983
    %v2225 = vunpack.c.l.b16 %v984
    %v2226 = vunpack.c.h.b16 %v984
    %v2227 = vunpack.c.l.b16 %v985
    %v2228 = vunpack.c.h.b16 %v985
    %v2229 = vunpack.c.l.b16 %v986
    %v2230 = vunpack.c.h.b16 %v986
    %v2231 = vunpack.c.l.b16 %v987
    %v2232 = vunpack.c.h.b16 %v987
    %v2233 = vunpack.c.l.b16 %v988
    %v2234 = vunpack.c.h.b16 %v988
    %v2235 = vunpack.c.l.b16 %v989
    %v2236 = vunpack.c.h.b16 %v989
    %v2237 = vunpack.c.l.b16 %v990
    %v2238 = vunpack.c.h.b16 %v990
    %v2239 = vunpack.c.l.b16 %v991
    %v2240 = vunpack.c.h.b16 %v991
    %v2241 = vunpack.c.l.b16 %v992
    %v2242 = vunpack.c.h.b16 %v992
    %v2243 = vunpack.c.l.b16 %v993
    %v2244 = vunpack.c.h.b16 %v993
    %v2245 = vunpack.c.l.b16 %v994
    %v2246 = vunpack.c.h.b16 %v994
    %v2247 = vunpack.c.l.b16 %v995
    %v2248 = vunpack.c.h.b16 %v995
    %v2249 = vunpack.c.l.b16 %v996
    %v2250 = vunpack.c.h.b16 %v996
    %v2251 = vunpack.c.l.b16 %v997
    %v2252 = vunpack.c.h.b16 %v997
    %v2253 = vunpack.c.l.b16 %v998
    %v2254 = vunpack.c.h.b16 %v998
    %v2255 = vunpack.c.l.b16 %v999
    %v2256 = vunpack.c.h.b16 %v999
    %v2257 = vunpack.c.l.b16 %v1000
    %v2258 = vunpack.c.h.b16 %v1000
    %v2259 = vunpack.c.l.b16 %v1001
    %v2260 = vunpack.c.h.b16 %v1001
    %v2261 = vunpack.c.l.b16 %v1002
    %v2262 = vunpack.c.h.b16 %v1002
    %v2263 = vunpack.c.l.b16 %v1003
    %v2264 = vunpack.c.h.b16 %v1003
    %v2265 = vunpack.c.l.b16 %v1004
    %v2266 = vunpack.c.h.b16 %v1004
    %v2267 = vunpack.c.l.b16 %v1005
    %v2268 = vunpack.c.h.b16 %v1005
    %v2269 = vunpack.c.l.b16 %v1006
    %v2270 = vunpack.c.h.b16 %v1006
    %v2271 = vunpack.c.l.b16 %v1007
    %v2272 = vunpack.c.h.b16 %v1007
    %v2273 = vunpack.c.l.b16 %v1008
    %v2274 = vunpack.c.h.b16 %v1008
    %v2275 = vunpack.c.l.b16 %v1009
    %v2276 = vunpack.c.h.b16 %v1009
    %v2277 = vunpack.c.l.b16 %v1010
    %v2278 = vunpack.c.h.b16 %v1010
    %v2279 = vunpack.c.l.b16 %v1011
    %v2280 = vunpack.c.h.b16 %v1011
    %v2281 = vunpack.c.l.b16 %v1012
    %v2282 = vunpack.c.h.b16 %v1012
    %v2283 = vunpack.c.l.b16 %v1013
    %v2284 = vunpack.c.h.b16 %v1013
    %v2285 = vunpack.c.l.b16 %v1014
    %v2286 = vunpack.c.h.b16 %v1014
    %v2287 = vunpack.c.l.b16 %v1015
    %v2288 = vunpack.c.h.b16 %v1015
    %v2289 = vunpack.c.l.b16 %v1016
    %v2290 = vunpack.c.h.b16 %v1016
    %v2291 = vunpack.c.l.b16 %v1017
    %v2292 = vunpack.c.h.b16 %v1017
    %v2293 = vunpack.c.l.b16 %v1018
    %v2294 = vunpack.c.h.b16 %v1018
    %v2295 = vunpack.c.l.b16 %v1019
    %v2296 = vunpack.c.h.b16 %v1019
    %v2297 = vunpack.c.l.b16 %v1020
    %v2298 = vunpack.c.h.b16 %v1020
    %v2299 = vunpack.c.l.b16 %v1021
    %v2300 = vunpack.c.h.b16 %v1021
    %v2301 = vunpack.c.l.b16 %v1022
    %v2302 = vunpack.c.h.b16 %v1022
    %v2303 = vunpack.c.l.b16 %v1023
    %v2304 = vunpack.c.h.b16 %v1023
    %v2305 = vunpack.c.l.b16 %v1024
    %v2306 = vunpack.c.h.b16 %v1024
    %v2307 = vunpack.c.l.b16 %v1025
    %v2308 = vunpack.c.h.b16 %v1025
    %v2309 = vunpack.c.l.b16 %v1026
    %v2310 = vunpack.c.h.b16 %v1026
    %v2311 = vunpack.c.l.b16 %v1027
    %v2312 = vunpack.c.h.b16 %v1027
    %v2313 = vunpack.c.l.b16 %v1028
    %v2314 = vunpack.c.h.b16 %v1028
    %v2315 = vunpack.c.l.b16 %v1029
    %v2316 = vunpack.c.h.b16 %v1029
    %v2317 = vunpack.c.l.b16 %v1030
    %v2318 = vunpack.c.h.b16 %v1030
    %v2319 = vunpack.c.l.b16 %v1031
    %v2320 = vunpack.c.h.b16 %v1031
    %v2321 = vunpack.c.l.b16 %v1032
    %v2322 = vunpack.c.h.b16 %v1032
    %v2323 = vunpack.c.l.b16 %v1033
    %v2324 = vunpack.c.h.b16 %v1033
    %v2325 = vunpack.c.l.b16 %v1034
    %v2326 = vunpack.c.h.b16 %v1034
    %v2327 = vunpack.c.l.b16 %v1035
    %v2328 = vunpack.c.h.b16 %v1035
    %v2329 = vunpack.c.l.b16 %v1036
    %v2330 = vunpack.c.h.b16 %v1036
    %v2331 = vunpack.c.l.b16 %v1037
    %v2332 = vunpack.c.h.b16 %v1037
    %v2333 = vunpack.c.l.b16 %v1038
    %v2334 = vunpack.c.h.b16 %v1038
    %v2335 = vunpack.c.l.b16 %v1039
    %v2336 = vunpack.c.h.b16 %v1039
    %v2337 = vunpack.c.l.b16 %v1040
    %v2338 = vunpack.c.h.b16 %v1040
    %v2339 = vunpack.c.l.b16 %v1041
    %v2340 = vunpack.c.h.b16 %v1041
    %v2341 = vunpack.c.l.b16 %v1042
    %v2342 = vunpack.c.h.b16 %v1042
    %v2343 = vunpack.c.l.b16 %v1043
    %v2344 = vunpack.c.h.b16 %v1043
    %v2345 = vunpack.c.l.b16 %v1044
    %v2346 = vunpack.c.h.b16 %v1044
    %v2347 = vunpack.c.l.b16 %v1045
    %v2348 = vunpack.c.h.b16 %v1045
    %v2349 = vunpack.c.l.b16 %v1046
    %v2350 = vunpack.c.h.b16 %v1046
    %v2351 = vunpack.c.l.b16 %v1047
    %v2352 = vunpack.c.h.b16 %v1047
    %v2353 = vunpack.c.l.b16 %v1048
    %v2354 = vunpack.c.h.b16 %v1048
    %v2355 = vunpack.c.l.b16 %v1049
    %v2356 = vunpack.c.h.b16 %v1049
    %v2357 = vunpack.c.l.b16 %v1050
    %v2358 = vunpack.c.h.b16 %v1050
    %v2359 = vunpack.c.l.b16 %v1051
    %v2360 = vunpack.c.h.b16 %v1051
    %v2361 = vunpack.c.l.b16 %v1052
    %v2362 = vunpack.c.h.b16 %v1052
    %v2363 = vunpack.c.l.b16 %v1053
    %v2364 = vunpack.c.h.b16 %v1053
    %v2365 = vunpack.c.l.b16 %v1054
    %v2366 = vunpack.c.h.b16 %v1054
    %v2367 = vunpack.c.l.b16 %v1055
    %v2368 = vunpack.c.h.b16 %v1055
    %v2369 = vunpack.c.l.b16 %v1056
    %v2370 = vunpack.c.h.b16 %v1056
    %v2371 = vunpack.c.l.b16 %v1057
    %v2372 = vunpack.c.h.b16 %v1057
    %v2373 = vunpack.c.l.b16 %v1058
    %v2374 = vunpack.c.h.b16 %v1058
    %v2375 = vunpack.c.l.b16 %v1059
    %v2376 = vunpack.c.h.b16 %v1059
    %v2377 = vunpack.c.l.b16 %v1060
    %v2378 = vunpack.c.h.b16 %v1060
    %v2379 = vunpack.c.l.b16 %v1061
    %v2380 = vunpack.c.h.b16 %v1061
    %v2381 = vunpack.c.l.b16 %v1062
    %v2382 = vunpack.c.h.b16 %v1062
    %v2383 = vunpack.c.l.b16 %v1063
    %v2384 = vunpack.c.h.b16 %v1063
    %v2385 = vunpack.c.l.b16 %v1064
    %v2386 = vunpack.c.h.b16 %v1064
    %v2387 = vunpack.c.l.b16 %v1065
    %v2388 = vunpack.c.h.b16 %v1065
    %v2389 = vunpack.c.l.b16 %v1066
    %v2390 = vunpack.c.h.b16 %v1066
    %v2391 = vunpack.c.l.b16 %v1067
    %v2392 = vunpack.c.h.b16 %v1067
    %v2393 = vunpack.c.l.b16 %v1068
    %v2394 = vunpack.c.h.b16 %v1068
    %v2395 = vunpack.c.l.b16 %v1069
    %v2396 = vunpack.c.h.b16 %v1069
    %v2397 = vunpack.c.l.b16 %v1070
    %v2398 = vunpack.c.h.b16 %v1070
    %v2399 = vunpack.c.l.b16 %v1071
    %v2400 = vunpack.c.h.b16 %v1071
    %v2401 = vunpack.c.l.b16 %v1072
    %v2402 = vunpack.c.h.b16 %v1072
    %v2403 = vunpack.c.l.b16 %v1073
    %v2404 = vunpack.c.h.b16 %v1073
    %v2405 = vunpack.c.l.b16 %v1074
    %v2406 = vunpack.c.h.b16 %v1074
    %v2407 = vunpack.c.l.b16 %v1075
    %v2408 = vunpack.c.h.b16 %v1075
    %v2409 = vunpack.c.l.b16 %v1076
    %v2410 = vunpack.c.h.b16 %v1076
    %v2411 = vunpack.c.l.b16 %v1077
    %v2412 = vunpack.c.h.b16 %v1077
    %v2413 = vunpack.c.l.b16 %v1078
    %v2414 = vunpack.c.h.b16 %v1078
    %v2415 = vunpack.c.l.b16 %v1079
    %v2416 = vunpack.c.h.b16 %v1079
    %v2417 = vunpack.c.l.b16 %v1080
    %v2418 = vunpack.c.h.b16 %v1080
    %v2419 = vunpack.c.l.b16 %v1081
    %v2420 = vunpack.c.h.b16 %v1081
    %v2421 = vunpack.c.l.b16 %v1082
    %v2422 = vunpack.c.h.b16 %v1082
    %v2423 = vunpack.c.l.b16 %v1083
    %v2424 = vunpack.c.h.b16 %v1083
    %v2425 = vunpack.c.l.b16 %v1084
    %v2426 = vunpack.c.h.b16 %v1084
    %v2427 = vunpack.c.l.b16 %v1085
    %v2428 = vunpack.c.h.b16 %v1085
    %v2429 = vunpack.c.l.b16 %v1086
    %v2430 = vunpack.c.h.b16 %v1086
    %v2431 = vunpack.c.l.b16 %v1087
    %v2432 = vunpack.c.h.b16 %v1087
    %v2433 = vunpack.c.l.b16 %v1088
    %v2434 = vunpack.c.h.b16 %v1088
    %v2435 = vunpack.c.l.b16 %v1089
    %v2436 = vunpack.c.h.b16 %v1089
    %v2437 = vunpack.c.l.b16 %v1090
    %v2438 = vunpack.c.h.b16 %v1090
    %v2439 = vunpack.c.l.b16 %v1091
    %v2440 = vunpack.c.h.b16 %v1091
    %v2441 = vunpack.c.l.b16 %v1092
    %v2442 = vunpack.c.h.b16 %v1092
    %v2443 = vunpack.c.l.b16 %v1093
    %v2444 = vunpack.c.h.b16 %v1093
    %v2445 = vunpack.c.l.b16 %v1094
    %v2446 = vunpack.c.h.b16 %v1094
    %v2447 = vunpack.c.l.b16 %v1095
    %v2448 = vunpack.c.h.b16 %v1095
    %v2449 = vunpack.c.l.b16 %v1096
    %v2450 = vunpack.c.h.b16 %v1096
    %v2451 = vunpack.c.l.b16 %v1097
    %v2452 = vunpack.c.h.b16 %v1097
    %v2453 = vunpack.c.l.b16 %v1098
    %v2454 = vunpack.c.h.b16 %v1098
    %v2455 = vunpack.c.l.b16 %v1099
    %v2456 = vunpack.c.h.b16 %v1099
    %v2457 = vunpack.c.l.b16 %v1100
    %v2458 = vunpack.c.h.b16 %v1100
    %v2459 = vunpack.c.l.b16 %v1101
    %v2460 = vunpack.c.h.b16 %v1101
    %v2461 = vunpack.c.l.b16 %v1102
    %v2462 = vunpack.c.h.b16 %v1102
    %v2463 = vunpack.c.l.b16 %v1103
    %v2464 = vunpack.c.h.b16 %v1103
    %v2465 = vunpack.c.l.b16 %v1104
    %v2466 = vunpack.c.h.b16 %v1104
    %v2467 = vunpack.c.l.b16 %v1105
    %v2468 = vunpack.c.h.b16 %v1105
    %v2469 = vunpack.c.l.b16 %v1106
    %v2470 = vunpack.c.h.b16 %v1106
    %v2471 = vunpack.c.l.b16 %v1107
    %v2472 = vunpack.c.h.b16 %v1107
    %v2473 = vunpack.c.l.b16 %v1108
    %v2474 = vunpack.c.h.b16 %v1108
    %v2475 = vunpack.c.l.b16 %v1109
    %v2476 = vunpack.c.h.b16 %v1109
    %v2477 = vunpack.c.l.b16 %v1110
    %v2478 = vunpack.c.h.b16 %v1110
    %v2479 = vunpack.c.l.b16 %v1111
    %v2480 = vunpack.c.h.b16 %v1111
    %v2481 = vunpack.c.l.b16 %v1112
    %v2482 = vunpack.c.h.b16 %v1112
    %v2483 = vunpack.c.l.b16 %v1113
    %v2484 = vunpack.c.h.b16 %v1113
    %v2485 = vunpack.c.l.b16 %v1114
    %v2486 = vunpack.c.h.b16 %v1114
    %v2487 = vunpack.c.l.b16 %v1115
    %v2488 = vunpack.c.h.b16 %v1115
    %v2489 = vunpack.c.l.b16 %v1116
    %v2490 = vunpack.c.h.b16 %v1116
    %v2491 = vunpack.c.l.b16 %v1117
    %v2492 = vunpack.c.h.b16 %v1117
    %v2493 = vunpack.c.l.b16 %v1118
    %v2494 = vunpack.c.h.b16 %v1118
    %v2495 = vunpack.c.l.b16 %v1119
    %v2496 = vunpack.c.h.b16 %v1119
    %v2497 = vunpack.c.l.b16 %v1120
    %v2498 = vunpack.c.h.b16 %v1120
    %v2499 = vunpack.c.l.b16 %v1121
    %v2500 = vunpack.c.h.b16 %v1121
    %v2501 = vunpack.c.l.b16 %v1122
    %v2502 = vunpack.c.h.b16 %v1122
    %v2503 = vunpack.c.l.b16 %v1123
    %v2504 = vunpack.c.h.b16 %v1123
    %v2505 = vunpack.c.l.b16 %v1124
    %v2506 = vunpack.c.h.b16 %v1124
    %v2507 = vunpack.c.l.b16 %v1125
    %v2508 = vunpack.c.h.b16 %v1125
    %v2509 = vunpack.c.l.b16 %v1126
    %v2510 = vunpack.c.h.b16 %v1126
    %v2511 = vunpack.c.l.b16 %v1127
    %v2512 = vunpack.c.h.b16 %v1127
    %v2513 = vunpack.c.l.b16 %v1128
    %v2514 = vunpack.c.h.b16 %v1128
    %v2515 = vunpack.c.l.b16 %v1129
    %v2516 = vunpack.c.h.b16 %v1129
    %v2517 = vunpack.c.l.b16 %v1130
    %v2518 = vunpack.c.h.b16 %v1130
    %v2519 = vunpack.c.l.b16 %v1131
    %v2520 = vunpack.c.h.b16 %v1131
    %v2521 = vunpack.c.l.b16 %v1132
    %v2522 = vunpack.c.h.b16 %v1132
    %v2523 = vunpack.c.l.b16 %v1133
    %v2524 = vunpack.c.h.b16 %v1133
    %v2525 = vunpack.c.l.b16 %v1134
    %v2526 = vunpack.c.h.b16 %v1134
    %v2527 = vunpack.c.l.b16 %v1135
    %v2528 = vunpack.c.h.b16 %v1135
    %v2529 = vunpack.c.l.b16 %v1136
    %v2530 = vunpack.c.h.b16 %v1136
    %v2531 = vunpack.c.l.b16 %v1137
    %v2532 = vunpack.c.h.b16 %v1137
    %v2533 = vunpack.c.l.b16 %v1138
    %v2534 = vunpack.c.h.b16 %v1138
    %v2535 = vunpack.c.l.b16 %v1139
    %v2536 = vunpack.c.h.b16 %v1139
    %v2537 = vunpack.c.l.b16 %v1140
    %v2538 = vunpack.c.h.b16 %v1140
    %v2539 = vunpack.c.l.b16 %v1141
    %v2540 = vunpack.c.h.b16 %v1141
    %v2541 = vunpack.c.l.b16 %v1142
    %v2542 = vunpack.c.h.b16 %v1142
    %v2543 = vunpack.c.l.b16 %v1143
    %v2544 = vunpack.c.h.b16 %v1143
    %v2545 = vunpack.c.l.b16 %v1144
    %v2546 = vunpack.c.h.b16 %v1144
    %v2547 = vunpack.c.l.b16 %v1145
    %v2548 = vunpack.c.h.b16 %v1145
    %v2549 = vunpack.c.l.b16 %v1146
    %v2550 = vunpack.c.h.b16 %v1146
    %v2551 = vunpack.c.l.b16 %v1147
    %v2552 = vunpack.c.h.b16 %v1147
    %v2553 = vunpack.c.l.b16 %v1148
    %v2554 = vunpack.c.h.b16 %v1148
    %v2555 = vunpack.c.l.b16 %v1149
    %v2556 = vunpack.c.h.b16 %v1149
    %v2557 = vunpack.c.l.b16 %v1150
    %v2558 = vunpack.c.h.b16 %v1150
    %v2559 = vunpack.c.l.b16 %v1151
    %v2560 = vunpack.c.h.b16 %v1151
    %v2561 = vunpack.c.l.b16 %v1152
    %v2562 = vunpack.c.h.b16 %v1152
    %v2563 = vunpack.c.l.b16 %v1153
    %v2564 = vunpack.c.h.b16 %v1153
    %v2565 = vunpack.c.l.b16 %v1154
    %v2566 = vunpack.c.h.b16 %v1154
    %v2567 = vunpack.c.l.b16 %v1155
    %v2568 = vunpack.c.h.b16 %v1155
    %v2569 = vunpack.c.l.b16 %v1156
    %v2570 = vunpack.c.h.b16 %v1156
    %v2571 = vunpack.c.l.b16 %v1157
    %v2572 = vunpack.c.h.b16 %v1157
    %v2573 = vunpack.c.l.b16 %v1158
    %v2574 = vunpack.c.h.b16 %v1158
    %v2575 = vunpack.c.l.b16 %v1159
    %v2576 = vunpack.c.h.b16 %v1159
    %v2577 = vunpack.c.l.b16 %v1160
    %v2578 = vunpack.c.h.b16 %v1160
    %v2579 = vunpack.c.l.b16 %v1161
    %v2580 = vunpack.c.h.b16 %v1161
    %v2581 = vunpack.c.l.b16 %v1162
    %v2582 = vunpack.c.h.b16 %v1162
    %v2583 = vunpack.c.l.b16 %v1163
    %v2584 = vunpack.c.h.b16 %v1163
    %v2585 = vunpack.c.l.b16 %v1164
    %v2586 = vunpack.c.h.b16 %v1164
    %v2587 = vunpack.c.l.b16 %v1165
    %v2588 = vunpack.c.h.b16 %v1165
    %v2589 = vunpack.c.l.b16 %v1166
    %v2590 = vunpack.c.h.b16 %v1166
    %v2591 = vunpack.c.l.b16 %v1167
    %v2592 = vunpack.c.h.b16 %v1167
    %v2593 = vunpack.c.l.b16 %v1168
    %v2594 = vunpack.c.h.b16 %v1168
    %v2595 = vunpack.c.l.b16 %v1169
    %v2596 = vunpack.c.h.b16 %v1169
    %v2597 = vunpack.c.l.b16 %v1170
    %v2598 = vunpack.c.h.b16 %v1170
    %v2599 = vunpack.c.l.b16 %v1171
    %v2600 = vunpack.c.h.b16 %v1171
    %v2601 = vunpack.c.l.b16 %v1172
    %v2602 = vunpack.c.h.b16 %v1172
    %v2603 = vunpack.c.l.b16 %v1173
    %v2604 = vunpack.c.h.b16 %v1173
    %v2605 = vunpack.c.l.b16 %v1174
    %v2606 = vunpack.c.h.b16 %v1174
    %v2607 = vunpack.c.l.b16 %v1175
    %v2608 = vunpack.c.h.b16 %v1175
    %v2609 = vunpack.c.l.b16 %v1176
    %v2610 = vunpack.c.h.b16 %v1176
    %v2611 = vunpack.c.l.b16 %v1177
    %v2612 = vunpack.c.h.b16 %v1177
    %v2613 = vunpack.c.l.b16 %v1178
    %v2614 = vunpack.c.h.b16 %v1178
    %v2615 = vunpack.c.l.b16 %v1179
    %v2616 = vunpack.c.h.b16 %v1179
    %v2617 = vunpack.c.l.b16 %v1180
    %v2618 = vunpack.c.h.b16 %v1180
    %v2619 = vunpack.c.l.b16 %v1181
    %v2620 = vunpack.c.h.b16 %v1181
    %v2621 = vunpack.c.l.b16 %v1182
    %v2622 = vunpack.c.h.b16 %v1182
    %v2623 = vunpack.c.l.b16 %v1183
    %v2624 = vunpack.c.h.b16 %v1183
    %v2625 = vunpack.c.l.b16 %v1184
    %v2626 = vunpack.c.h.b16 %v1184
    %v2627 = vunpack.c.l.b16 %v1185
    %v2628 = vunpack.c.h.b16 %v1185
    %v2629 = vunpack.c.l.b16 %v1186
    %v2630 = vunpack.c.h.b16 %v1186
    %v2631 = vunpack.c.l.b16 %v1187
    %v2632 = vunpack.c.h.b16 %v1187
    %v2633 = vunpack.c.l.b16 %v1188
    %v2634 = vunpack.c.h.b16 %v1188
    %v2635 = vunpack.c.l.b16 %v1189
    %v2636 = vunpack.c.h.b16 %v1189
    %v2637 = vunpack.c.l.b16 %v1190
    %v2638 = vunpack.c.h.b16 %v1190
    %v2639 = vunpack.c.l.b16 %v1191
    %v2640 = vunpack.c.h.b16 %v1191
    %v2641 = vunpack.c.l.b16 %v1192
    %v2642 = vunpack.c.h.b16 %v1192
    %v2643 = vunpack.c.l.b16 %v1193
    %v2644 = vunpack.c.h.b16 %v1193
    %v2645 = vunpack.c.l.b16 %v1194
    %v2646 = vunpack.c.h.b16 %v1194
    %v2647 = vunpack.c.l.b16 %v1195
    %v2648 = vunpack.c.h.b16 %v1195
    %v2649 = vunpack.c.l.b16 %v1196
    %v2650 = vunpack.c.h.b16 %v1196
    %v2651 = vunpack.c.l.b16 %v1197
    %v2652 = vunpack.c.h.b16 %v1197
    %v2653 = vunpack.c.l.b16 %v1198
    %v2654 = vunpack.c.h.b16 %v1198
    %v2655 = vunpack.c.l.b16 %v1199
    %v2656 = vunpack.c.h.b16 %v1199
    %v2657 = vunpack.c.l.b16 %v1200
    %v2658 = vunpack.c.h.b16 %v1200
    %v2659 = vunpack.c.l.b16 %v1201
    %v2660 = vunpack.c.h.b16 %v1201
    %v2661 = vunpack.c.l.b16 %v1202
    %v2662 = vunpack.c.h.b16 %v1202
    %v2663 = vunpack.c.l.b16 %v1203
    %v2664 = vunpack.c.h.b16 %v1203
    %v2665 = vunpack.c.l.b16 %v1204
    %v2666 = vunpack.c.h.b16 %v1204
    %v2667 = vunpack.c.l.b16 %v1205
    %v2668 = vunpack.c.h.b16 %v1205
    %v2669 = vunpack.c.l.b16 %v1206
    %v2670 = vunpack.c.h.b16 %v1206
    %v2671 = vunpack.c.l.b16 %v1207
    %v2672 = vunpack.c.h.b16 %v1207
    %v2673 = vunpack.c.l.b16 %v1208
    %v2674 = vunpack.c.h.b16 %v1208
    %v2675 = vunpack.c.l.b16 %v1209
    %v2676 = vunpack.c.h.b16 %v1209
    %v2677 = vunpack.c.l.b16 %v1210
    %v2678 = vunpack.c.h.b16 %v1210
    %v2679 = vunpack.c.l.b16 %v1211
    %v2680 = vunpack.c.h.b16 %v1211
    %v2681 = vunpack.c.l.b16 %v1212
    %v2682 = vunpack.c.h.b16 %v1212
    %v2683 = vunpack.c.l.b16 %v1213
    %v2684 = vunpack.c.h.b16 %v1213
    %v2685 = vunpack.c.l.b16 %v1214
    %v2686 = vunpack.c.h.b16 %v1214
    %v2687 = vunpack.c.l.b16 %v1215
    %v2688 = vunpack.c.h.b16 %v1215
    %v2689 = vunpack.c.l.b16 %v1216
    %v2690 = vunpack.c.h.b16 %v1216
    %v2691 = vunpack.c.l.b16 %v1217
    %v2692 = vunpack.c.h.b16 %v1217
    %v2693 = vunpack.c.l.b16 %v1218
    %v2694 = vunpack.c.h.b16 %v1218
    %v2695 = vunpack.c.l.b16 %v1219
    %v2696 = vunpack.c.h.b16 %v1219
    %v2697 = vunpack.c.l.b16 %v1220
    %v2698 = vunpack.c.h.b16 %v1220
    %v2699 = vunpack.c.l.b16 %v1221
    %v2700 = vunpack.c.h.b16 %v1221
    %v2701 = vunpack.c.l.b16 %v1222
    %v2702 = vunpack.c.h.b16 %v1222
    %v2703 = vunpack.c.l.b16 %v1223
    %v2704 = vunpack.c.h.b16 %v1223
    %v2705 = vunpack.c.l.b16 %v1224
    %v2706 = vunpack.c.h.b16 %v1224
    %v2707 = vunpack.c.l.b16 %v1225
    %v2708 = vunpack.c.h.b16 %v1225
    %v2709 = vunpack.c.l.b16 %v1226
    %v2710 = vunpack.c.h.b16 %v1226
    %v2711 = vunpack.c.l.b16 %v1227
    %v2712 = vunpack.c.h.b16 %v1227
    %v2713 = vunpack.c.l.b16 %v1228
    %v2714 = vunpack.c.h.b16 %v1228
    %v2715 = vunpack.c.l.b16 %v1229
    %v2716 = vunpack.c.h.b16 %v1229
    %v2717 = vunpack.c.l.b16 %v1230
    %v2718 = vunpack.c.h.b16 %v1230
    %v2719 = vunpack.c.l.b16 %v1231
    %v2720 = vunpack.c.h.b16 %v1231
    %v2721 = vunpack.c.l.b16 %v1232
    %v2722 = vunpack.c.h.b16 %v1232
    %v2723 = vunpack.c.l.b16 %v1233
    %v2724 = vunpack.c.h.b16 %v1233
    %v2725 = vunpack.c.l.b16 %v1234
    %v2726 = vunpack.c.h.b16 %v1234
    %v2727 = vunpack.c.l.b16 %v1235
    %v2728 = vunpack.c.h.b16 %v1235
    %v2729 = vunpack.c.l.b16 %v1236
    %v2730 = vunpack.c.h.b16 %v1236
    %v2731 = vunpack.c.l.b16 %v1237
    %v2732 = vunpack.c.h.b16 %v1237
    %v2733 = vunpack.c.l.b16 %v1238
    %v2734 = vunpack.c.h.b16 %v1238
    %v2735 = vunpack.c.l.b16 %v1239
    %v2736 = vunpack.c.h.b16 %v1239
    %v2737 = vunpack.c.l.b16 %v1240
    %v2738 = vunpack.c.h.b16 %v1240
    %v2739 = vunpack.c.l.b16 %v1241
    %v2740 = vunpack.c.h.b16 %v1241
    %v2741 = vunpack.c.l.b16 %v1242
    %v2742 = vunpack.c.h.b16 %v1242
    %v2743 = vunpack.c.l.b16 %v1243
    %v2744 = vunpack.c.h.b16 %v1243
    %v2745 = vunpack.c.l.b16 %v1244
    %v2746 = vunpack.c.h.b16 %v1244
    %v2747 = vunpack.c.l.b16 %v1245
    %v2748 = vunpack.c.h.b16 %v1245
    %v2749 = vunpack.c.l.b16 %v1246
    %v2750 = vunpack.c.h.b16 %v1246
    %v2751 = vunpack.c.l.b16 %v1247
    %v2752 = vunpack.c.h.b16 %v1247
    %v2753 = vunpack.c.l.b16 %v1248
    %v2754 = vunpack.c.h.b16 %v1248
    %v2755 = vunpack.c.l.b16 %v1249
    %v2756 = vunpack.c.h.b16 %v1249
    %v2757 = vunpack.c.l.b16 %v1250
    %v2758 = vunpack.c.h.b16 %v1250
    %v2759 = vunpack.c.l.b16 %v1251
    %v2760 = vunpack.c.h.b16 %v1251
    %v2761 = vunpack.c.l.b16 %v1252
    %v2762 = vunpack.c.h.b16 %v1252
    %v2763 = vunpack.c.l.b16 %v1253
    %v2764 = vunpack.c.h.b16 %v1253
    %v2765 = vunpack.c.l.b16 %v1254
    %v2766 = vunpack.c.h.b16 %v1254
    %v2767 = vunpack.c.l.b16 %v1255
    %v2768 = vunpack.c.h.b16 %v1255
    %v2769 = vunpack.c.l.b16 %v1256
    %v2770 = vunpack.c.h.b16 %v1256
    %v2771 = vunpack.c.l.b16 %v1257
    %v2772 = vunpack.c.h.b16 %v1257
    %v2773 = vunpack.c.l.b16 %v1258
    %v2774 = vunpack.c.h.b16 %v1258
    %v2775 = vunpack.c.l.b16 %v1259
    %v2776 = vunpack.c.h.b16 %v1259
    %v2777 = vunpack.c.l.b16 %v1260
    %v2778 = vunpack.c.h.b16 %v1260
    %v2779 = vunpack.c.l.b16 %v1261
    %v2780 = vunpack.c.h.b16 %v1261
    %v2781 = vunpack.c.l.b16 %v1262
    %v2782 = vunpack.c.h.b16 %v1262
    %v2783 = vunpack.c.l.b16 %v1263
    %v2784 = vunpack.c.h.b16 %v1263
    %v2785 = vunpack.c.l.b16 %v1264
    %v2786 = vunpack.c.h.b16 %v1264
    %v2787 = vunpack.c.l.b16 %v1265
    %v2788 = vunpack.c.h.b16 %v1265
    %v2789 = vunpack.c.l.b16 %v1266
    %v2790 = vunpack.c.h.b16 %v1266
    %v2791 = vunpack.c.l.b16 %v1267
    %v2792 = vunpack.c.h.b16 %v1267
    %v2793 = vunpack.c.l.b16 %v1268
    %v2794 = vunpack.c.h.b16 %v1268
    %v2795 = vunpack.c.l.b16 %v1269
    %v2796 = vunpack.c.h.b16 %v1269
    %v2797 = vunpack.c.l.b16 %v1270
    %v2798 = vunpack.c.h.b16 %v1270
    %v2799 = vunpack.c.l.b16 %v1271
    %v2800 = vunpack.c.h.b16 %v1271
    %v2801 = vunpack.c.l.b16 %v1272
    %v2802 = vunpack.c.h.b16 %v1272
    %v2803 = vunpack.c.l.b16 %v1273
    %v2804 = vunpack.c.h.b16 %v1273
    %v2805 = vunpack.c.l.b16 %v1274
    %v2806 = vunpack.c.h.b16 %v1274
    %v2807 = vunpack.c.l.b16 %v1275
    %v2808 = vunpack.c.h.b16 %v1275
    %v2809 = vunpack.c.l.b16 %v1276
    %v2810 = vunpack.c.h.b16 %v1276
    %v2811 = vunpack.c.l.b16 %v1277
    %v2812 = vunpack.c.h.b16 %v1277
    %v2813 = vunpack.c.l.b16 %v1278
    %v2814 = vunpack.c.h.b16 %v1278
    %v2815 = vunpack.c.l.b16 %v1279
    %v2816 = vunpack.c.h.b16 %v1279
    %v2817 = vunpack.c.l.b16 %v1280
    %v2818 = vunpack.c.h.b16 %v1280
    %v2819 = vunpack.c.l.b16 %v1281
    %v2820 = vunpack.c.h.b16 %v1281
    %v2821 = vunpack.c.l.b16 %v1282
    %v2822 = vunpack.c.h.b16 %v1282
    %v2823 = vunpack.c.l.b16 %v1283
    %v2824 = vunpack.c.h.b16 %v1283
    %v2825 = vunpack.c.l.b16 %v1284
    %v2826 = vunpack.c.h.b16 %v1284
    %v2827 = vunpack.c.l.b16 %v1285
    %v2828 = vunpack.c.h.b16 %v1285
    %v2829 = vunpack.c.l.b16 %v1286
    %v2830 = vunpack.c.h.b16 %v1286
    %v2831 = vunpack.c.l.b16 %v1287
    %v2832 = vunpack.c.h.b16 %v1287
    %v2833 = vunpack.c.l.b16 %v1288
    %v2834 = vunpack.c.h.b16 %v1288
    %v2835 = vunpack.c.l.b16 %v1289
    %v2836 = vunpack.c.h.b16 %v1289
    %v2837 = vunpack.c.l.b16 %v1290
    %v2838 = vunpack.c.h.b16 %v1290
    %v2839 = vunpack.c.l.b16 %v1291
    %v2840 = vunpack.c.h.b16 %v1291
    %v2841 = vunpack.c.l.b16 %v1292
    %v2842 = vunpack.c.h.b16 %v1292
    %v2843 = vunpack.c.l.b16 %v1293
    %v2844 = vunpack.c.h.b16 %v1293
    %v2845 = vunpack.c.l.b16 %v1294
    %v2846 = vunpack.c.h.b16 %v1294
    %v2847 = vunpack.c.l.b16 %v1295
    %v2848 = vunpack.c.h.b16 %v1295
    %v2849 = vunpack.c.l.b16 %v1296
    %v2850 = vunpack.c.h.b16 %v1296
    %v2851 = vunpack.c.l.b16 %v1297
    %v2852 = vunpack.c.h.b16 %v1297
    %v2853 = vunpack.c.l.b16 %v1298
    %v2854 = vunpack.c.h.b16 %v1298
    %v2855 = vunpack.c.l.b16 %v1299
    %v2856 = vunpack.c.h.b16 %v1299
    %v2857 = vunpack.c.l.b16 %v1300
    %v2858 = vunpack.c.h.b16 %v1300
    %v2859 = vunpack.c.l.b16 %v1301
    %v2860 = vunpack.c.h.b16 %v1301
    %v2861 = vunpack.c.l.b16 %v1302
    %v2862 = vunpack.c.h.b16 %v1302
    %v2863 = vunpack.c.l.b16 %v1303
    %v2864 = vunpack.c.h.b16 %v1303
    %v2865 = vunpack.c.l.b16 %v1304
    %v2866 = vunpack.c.h.b16 %v1304
    %v2867 = vunpack.c.l.b16 %v1305
    %v2868 = vunpack.c.h.b16 %v1305
    %v2869 = vunpack.c.l.b16 %v1306
    %v2870 = vunpack.c.h.b16 %v1306
    %v2871 = vunpack.c.l.b16 %v1307
    %v2872 = vunpack.c.h.b16 %v1307
    %v2873 = vunpack.c.l.b16 %v1308
    %v2874 = vunpack.c.h.b16 %v1308
    %v2875 = vunpack.c.l.b16 %v1309
    %v2876 = vunpack.c.h.b16 %v1309
    %v2877 = vunpack.c.l.b16 %v1310
    %v2878 = vunpack.c.h.b16 %v1310
    %v2879 = vunpack.c.l.b16 %v1311
    %v2880 = vunpack.c.h.b16 %v1311
    %v2881 = vunpack.c.l.b16 %v1312
    %v2882 = vunpack.c.h.b16 %v1312
    %v2883 = vunpack.c.l.b16 %v1313
    %v2884 = vunpack.c.h.b16 %v1313
    %v2885 = vunpack.c.l.b16 %v1314
    %v2886 = vunpack.c.h.b16 %v1314
    %v2887 = vunpack.c.l.b16 %v1315
    %v2888 = vunpack.c.h.b16 %v1315
    %v2889 = vunpack.c.l.b16 %v1316
    %v2890 = vunpack.c.h.b16 %v1316
    %v2891 = vunpack.c.l.b16 %v1317
    %v2892 = vunpack.c.h.b16 %v1317
    %v2893 = vunpack.c.l.b16 %v1318
    %v2894 = vunpack.c.h.b16 %v1318
    %v2895 = vunpack.c.l.b16 %v1319
    %v2896 = vunpack.c.h.b16 %v1319
    %v2897 = vunpack.c.l.b16 %v1320
    %v2898 = vunpack.c.h.b16 %v1320
    %v2899 = vpack.c.b16 %v1883, %v1875
    %v2900 = vpack.c.b16 %v1884, %v1876
    %v2901 = vpack.c.b16 %v1885, %v1877
    %v2902 = vpack.c.b16 %v1886, %v1878
    %v2903 = vpack.c.b16 %v1887, %v1879
    %v2904 = vpack.c.b16 %v1888, %v1880
    %v2905 = vpack.c.b16 %v1889, %v1881
    %v2906 = vpack.c.b16 %v1890, %v1882
    %v2907 = vpack.c.b16 %v1899, %v1891
    %v2908 = vpack.c.b16 %v1900, %v1892
    %v2909 = vpack.c.b16 %v1901, %v1893
    %v2910 = vpack.c.b16 %v1902, %v1894
    %v2911 = vpack.c.b16 %v1903, %v1895
    %v2912 = vpack.c.b16 %v1904, %v1896
    %v2913 = vpack.c.b16 %v1905, %v1897
    %v2914 = vpack.c.b16 %v1906, %v1898
    %v2915 = vpack.c.b16 %v1915, %v1907
    %v2916 = vpack.c.b16 %v1916, %v1908
    %v2917 = vpack.c.b16 %v1917, %v1909
    %v2918 = vpack.c.b16 %v1918, %v1910
    %v2919 = vpack.c.b16 %v1919, %v1911
    %v2920 = vpack.c.b16 %v1920, %v1912
    %v2921 = vpack.c.b16 %v1921, %v1913
    %v2922 = vpack.c.b16 %v1922, %v1914
    %v2923 = vpack.c.b16 %v1931, %v1923
    %v2924 = vpack.c.b16 %v1932, %v1924
    %v2925 = vpack.c.b16 %v1933, %v1925
    %v2926 = vpack.c.b16 %v1934, %v1926
    %v2927 = vpack.c.b16 %v1935, %v1927
    %v2928 = vpack.c.b16 %v1936, %v1928
    %v2929 = vpack.c.b16 %v1937, %v1929
    %v2930 = vpack.c.b16 %v1938, %v1930
    %v2931 = vpack.c.b16 %v1947, %v1939
    %v2932 = vpack.c.b16 %v1948, %v1940
    %v2933 = vpack.c.b16 %v1949, %v1941
    %v2934 = vpack.c.b16 %v1950, %v1942
    %v2935 = vpack.c.b16 %v1951, %v1943
    %v2936 = vpack.c.b16 %v1952, %v1944
    %v2937 = vpack.c.b16 %v1953, %v1945
    %v2938 = vpack.c.b16 %v1954, %v1946
    %v2939 = vpack.c.b16 %v1963, %v1955
    %v2940 = vpack.c.b16 %v1964, %v1956
    %v2941 = vpack.c.b16 %v1965, %v1957
    %v2942 = vpack.c.b16 %v1966, %v1958
    %v2943 = vpack.c.b16 %v1967, %v1959
    %v2944 = vpack.c.b16 %v1968, %v1960
    %v2945 = vpack.c.b16 %v1969, %v1961
    %v2946 = vpack.c.b16 %v1970, %v1962
    %v2947 = vpack.c.b16 %v1979, %v1971
    %v2948 = vpack.c.b16 %v1980, %v1972
    %v2949 = vpack.c.b16 %v1981, %v1973
    %v2950 = vpack.c.b16 %v1982, %v1974
    %v2951 = vpack.c.b16 %v1983, %v1975
    %v2952 = vpack.c.b16 %v1984, %v1976
    %v2953 = vpack.c.b16 %v1985, %v1977
    %v2954 = vpack.c.b16 %v1986, %v1978
    %v2955 = vpack.c.b16 %v1995, %v1987
    %v2956 = vpack.c.b16 %v1996, %v1988
    %v2957 = vpack.c.b16 %v1997, %v1989
    %v2958 = vpack.c.b16 %v1998, %v1990
    %v2959 = vpack.c.b16 %v1999, %v1991
    %v2960 = vpack.c.b16 %v2000, %v1992
    %v2961 = vpack.c.b16 %v2001, %v1993
    %v2962 = vpack.c.b16 %v2002, %v1994
    %v2963 = vpack.c.b16 %v2011, %v2003
    %v2964 = vpack.c.b16 %v2012, %v2004
    %v2965 = vpack.c.b16 %v2013, %v2005
    %v2966 = vpack.c.b16 %v2014, %v2006
    %v2967 = vpack.c.b16 %v2015, %v2007
    %v2968 = vpack.c.b16 %v2016, %v2008
    %v2969 = vpack.c.b16 %v2017, %v2009
    %v2970 = vpack.c.b16 %v2018, %v2010
    %v2971 = vpack.c.b16 %v2027, %v2019
    %v2972 = vpack.c.b16 %v2028, %v2020
    %v2973 = vpack.c.b16 %v2029, %v2021
    %v2974 = vpack.c.b16 %v2030, %v2022
    %v2975 = vpack.c.b16 %v2031, %v2023
    %v2976 = vpack.c.b16 %v2032, %v2024
    %v2977 = vpack.c.b16 %v2033, %v2025
    %v2978 = vpack.c.b16 %v2034, %v2026
    %v2979 = vpack.c.b16 %v2043, %v2035
    %v2980 = vpack.c.b16 %v2044, %v2036
    %v2981 = vpack.c.b16 %v2045, %v2037
    %v2982 = vpack.c.b16 %v2046, %v2038
    %v2983 = vpack.c.b16 %v2047, %v2039
    %v2984 = vpack.c.b16 %v2048, %v2040
    %v2985 = vpack.c.b16 %v2049, %v2041
    %v2986 = vpack.c.b16 %v2050, %v2042
    %v2987 = vpack.c.b16 %v2059, %v2051
    %v2988 = vpack.c.b16 %v2060, %v2052
    %v2989 = vpack.c.b16 %v2061, %v2053
    %v2990 = vpack.c.b16 %v2062, %v2054
    %v2991 = vpack.c.b16 %v2063, %v2055
    %v2992 = vpack.c.b16 %v2064, %v2056
    %v2993 = vpack.c.b16 %v2065, %v2057
    %v2994 = vpack.c.b16 %v2066, %v2058
    %v2995 = vpack.c.b16 %v2075, %v2067
    %v2996 = vpack.c.b16 %v2076, %v2068
    %v2997 = vpack.c.b16 %v2077, %v2069
    %v2998 = vpack.c.b16 %v2078, %v2070
    %v2999 = vpack.c.b16 %v2079, %v2071
    %v3000 = vpack.c.b16 %v2080, %v2072
    %v3001 = vpack.c.b16 %v2081, %v2073
    %v3002 = vpack.c.b16 %v2082, %v2074
    %v3003 = vpack.c.b16 %v2091, %v2083
    %v3004 = vpack.c.b16 %v2092, %v2084
    %v3005 = vpack.c.b16 %v2093, %v2085
    %v3006 = vpack.c.b16 %v2094, %v2086
    %v3007 = vpack.c.b16 %v2095, %v2087
    %v3008 = vpack.c.b16 %v2096, %v2088
    %v3009 = vpack.c.b16 %v2097, %v2089
    %v3010 = vpack.c.b16 %v2098, %v2090
    %v3011 = vpack.c.b16 %v2107, %v2099
    %v3012 = vpack.c.b16 %v2108, %v2100
    %v3013 = vpack.c.b16 %v2109, %v2101
    %v3014 = vpack.c.b16 %v2110, %v2102
    %v3015 = vpack.c.b16 %v2111, %v2103
    %v3016 = vpack.c.b16 %v2112, %v2104
    %v3017 = vpack.c.b16 %v2113, %v2105
    %v3018 = vpack.c.b16 %v2114, %v2106
    %v3019 = vpack.c.b16 %v2123, %v2115
    %v3020 = vpack.c.b16 %v2124, %v2116
    %v3021 = vpack.c.b16 %v2125, %v2117
    %v3022 = vpack.c.b16 %v2126, %v2118
    %v3023 = vpack.c.b16 %v2127, %v2119
    %v3024 = vpack.c.b16 %v2128, %v2120
    %v3025 = vpack.c.b16 %v2129, %v2121
    %v3026 = vpack.c.b16 %v2130, %v2122
    %v3027 = vpack.c.b16 %v2139, %v2131
    %v3028 = vpack.c.b16 %v2140, %v2132
    %v3029 = vpack.c.b16 %v2141, %v2133
    %v3030 = vpack.c.b16 %v2142, %v2134
    %v3031 = vpack.c.b16 %v2143, %v2135
    %v3032 = vpack.c.b16 %v2144, %v2136
    %v3033 = vpack.c.b16 %v2145, %v2137
    %v3034 = vpack.c.b16 %v2146, %v2138
    %v3035 = vpack.c.b16 %v2155, %v2147
    %v3036 = vpack.c.b16 %v2156, %v2148
    %v3037 = vpack.c.b16 %v2157, %v2149
    %v3038 = vpack.c.b16 %v2158, %v2150
    %v3039 = vpack.c.b16 %v2159, %v2151
    %v3040 = vpack.c.b16 %v2160, %v2152
    %v3041 = vpack.c.b16 %v2161, %v2153
    %v3042 = vpack.c.b16 %v2162, %v2154
    %v3043 = vpack.c.b16 %v2171, %v2163
    %v3044 = vpack.c.b16 %v2172, %v2164
    %v3045 = vpack.c.b16 %v2173, %v2165
    %v3046 = vpack.c.b16 %v2174, %v2166
    %v3047 = vpack.c.b16 %v2175, %v2167
    %v3048 = vpack.c.b16 %v2176, %v2168
    %v3049 = vpack.c.b16 %v2177, %v2169
    %v3050 = vpack.c.b16 %v2178, %v2170
    %v3051 = vpack.c.b16 %v2187, %v2179
    %v3052 = vpack.c.b16 %v2188, %v2180
    %v3053 = vpack.c.b16 %v2189, %v2181
    %v3054 = vpack.c.b16 %v2190, %v2182
    %v3055 = vpack.c.b16 %v2191, %v2183
    %v3056 = vpack.c.b16 %v2192, %v2184
    %v3057 = vpack.c.b16 %v2193, %v2185
    %v3058 = vpack.c.b16 %v2194, %v2186
    %v3059 = vpack.c.b16 %v2203, %v2195
    %v3060 = vpack.c.b16 %v2204, %v2196
    %v3061 = vpack.c.b16 %v2205, %v2197
    %v3062 = vpack.c.b16 %v2206, %v2198
    %v3063 = vpack.c.b16 %v2207, %v2199
    %v3064 = vpack.c.b16 %v2208, %v2200
    %v3065 = vpack.c.b16 %v2209, %v2201
    %v3066 = vpack.c.b16 %v2210, %v2202
    %v3067 = vpack.c.b16 %v2219, %v2211
    %v3068 = vpack.c.b16 %v2220, %v2212
    %v3069 = vpack.c.b16 %v2221, %v2213
    %v3070 = vpack.c.b16 %v2222, %v2214
    %v3071 = vpack.c.b16 %v2223, %v2215
    %v3072 = vpack.c.b16 %v2224, %v2216
    %v3073 = vpack.c.b16 %v2225, %v2217
    %v3074 = vpack.c.b16 %v2226, %v2218
    %v3075 = vpack.c.b16 %v2235, %v2227
    %v3076 = vpack.c.b16 %v2236, %v2228
    %v3077 = vpack.c.b16 %v2237, %v2229
    %v3078 = vpack.c.b16 %v2238, %v2230
    %v3079 = vpack.c.b16 %v2239, %v2231
    %v3080 = vpack.c.b16 %v2240, %v2232
    %v3081 = vpack.c.b16 %v2241, %v2233
    %v3082 = vpack.c.b16 %v2242, %v2234
    %v3083 = vpack.c.b16 %v2251, %v2243
    %v3084 = vpack.c.b16 %v2252, %v2244
    %v3085 = vpack.c.b16 %v2253, %v2245
    %v3086 = vpack.c.b16 %v2254, %v2246
    %v3087 = vpack.c.b16 %v2255, %v2247
    %v3088 = vpack.c.b16 %v2256, %v2248
    %v3089 = vpack.c.b16 %v2257, %v2249
    %v3090 = vpack.c.b16 %v2258, %v2250
    %v3091 = vpack.c.b16 %v2267, %v2259
    %v3092 = vpack.c.b16 %v2268, %v2260
    %v3093 = vpack.c.b16 %v2269, %v2261
    %v3094 = vpack.c.b16 %v2270, %v2262
    %v3095 = vpack.c.b16 %v2271, %v2263
    %v3096 = vpack.c.b16 %v2272, %v2264
    %v3097 = vpack.c.b16 %v2273, %v2265
    %v3098 = vpack.c.b16 %v2274, %v2266
    %v3099 = vpack.c.b16 %v2283, %v2275
    %v3100 = vpack.c.b16 %v2284, %v2276
    %v3101 = vpack.c.b16 %v2285, %v2277
    %v3102 = vpack.c.b16 %v2286, %v2278
    %v3103 = vpack.c.b16 %v2287, %v2279
    %v3104 = vpack.c.b16 %v2288, %v2280
    %v3105 = vpack.c.b16 %v2289, %v2281
    %v3106 = vpack.c.b16 %v2290, %v2282
    %v3107 = vpack.c.b16 %v2299, %v2291
    %v3108 = vpack.c.b16 %v2300, %v2292
    %v3109 = vpack.c.b16 %v2301, %v2293
    %v3110 = vpack.c.b16 %v2302, %v2294
    %v3111 = vpack.c.b16 %v2303, %v2295
    %v3112 = vpack.c.b16 %v2304, %v2296
    %v3113 = vpack.c.b16 %v2305, %v2297
    %v3114 = vpack.c.b16 %v2306, %v2298
    %v3115 = vpack.c.b16 %v2315, %v2307
    %v3116 = vpack.c.b16 %v2316, %v2308
    %v3117 = vpack.c.b16 %v2317, %v2309
    %v3118 = vpack.c.b16 %v2318, %v2310
    %v3119 = vpack.c.b16 %v2319, %v2311
    %v3120 = vpack.c.b16 %v2320, %v2312
    %v3121 = vpack.c.b16 %v2321, %v2313
    %v3122 = vpack.c.b16 %v2322, %v2314
    %v3123 = vpack.c.b16 %v2331, %v2323
    %v3124 = vpack.c.b16 %v2332, %v2324
    %v3125 = vpack.c.b16 %v2333, %v2325
    %v3126 = vpack.c.b16 %v2334, %v2326
    %v3127 = vpack.c.b16 %v2335, %v2327
    %v3128 = vpack.c.b16 %v2336, %v2328
    %v3129 = vpack.c.b16 %v2337, %v2329
    %v3130 = vpack.c.b16 %v2338, %v2330
    %v3131 = vpack.c.b16 %v2347, %v2339
    %v3132 = vpack.c.b16 %v2348, %v2340
    %v3133 = vpack.c.b16 %v2349, %v2341
    %v3134 = vpack.c.b16 %v2350, %v2342
    %v3135 = vpack.c.b16 %v2351, %v2343
    %v3136 = vpack.c.b16 %v2352, %v2344
    %v3137 = vpack.c.b16 %v2353, %v2345
    %v3138 = vpack.c.b16 %v2354, %v2346
    %v3139 = vpack.c.b16 %v2363, %v2355
    %v3140 = vpack.c.b16 %v2364, %v2356
    %v3141 = vpack.c.b16 %v2365, %v2357
    %v3142 = vpack.c.b16 %v2366, %v2358
    %v3143 = vpack.c.b16 %v2367, %v2359
    %v3144 = vpack.c.b16 %v2368, %v2360
    %v3145 = vpack.c.b16 %v2369, %v2361
    %v3146 = vpack.c.b16 %v2370, %v2362
    %v3147 = vpack.c.b16 %v2379, %v2371
    %v3148 = vpack.c.b16 %v2380, %v2372
    %v3149 = vpack.c.b16 %v2381, %v2373
    %v3150 = vpack.c.b16 %v2382, %v2374
    %v3151 = vpack.c.b16 %v2383, %v2375
    %v3152 = vpack.c.b16 %v2384, %v2376
    %v3153 = vpack.c.b16 %v2385, %v2377
    %v3154 = vpack.c.b16 %v2386, %v2378
    %v3155 = vpack.c.b16 %v2395, %v2387
    %v3156 = vpack.c.b16 %v2396, %v2388
    %v3157 = vpack.c.b16 %v2397, %v2389
    %v3158 = vpack.c.b16 %v2398, %v2390
    %v3159 = vpack.c.b16 %v2399, %v2391
    %v3160 = vpack.c.b16 %v2400, %v2392
    %v3161 = vpack.c.b16 %v2401, %v2393
    %v3162 = vpack.c.b16 %v2402, %v2394
    %v3163 = vpack.c.b16 %v2411, %v2403
    %v3164 = vpack.c.b16 %v2412, %v2404
    %v3165 = vpack.c.b16 %v2413, %v2405
    %v3166 = vpack.c.b16 %v2414, %v2406
    %v3167 = vpack.c.b16 %v2415, %v2407
    %v3168 = vpack.c.b16 %v2416, %v2408
    %v3169 = vpack.c.b16 %v2417, %v2409
    %v3170 = vpack.c.b16 %v2418, %v2410
    %v3171 = vpack.c.b16 %v2427, %v2419
    %v3172 = vpack.c.b16 %v2428, %v2420
    %v3173 = vpack.c.b16 %v2429, %v2421
    %v3174 = vpack.c.b16 %v2430, %v2422
    %v3175 = vpack.c.b16 %v2431, %v2423
    %v3176 = vpack.c.b16 %v2432, %v2424
    %v3177 = vpack.c.b16 %v2433, %v2425
    %v3178 = vpack.c.b16 %v2434, %v2426
    %v3179 = vpack.c.b16 %v2443, %v2435
    %v3180 = vpack.c.b16 %v2444, %v2436
    %v3181 = vpack.c.b16 %v2445, %v2437
    %v3182 = vpack.c.b16 %v2446, %v2438
    %v3183 = vpack.c.b16 %v2447, %v2439
    %v3184 = vpack.c.b16 %v2448, %v2440
    %v3185 = vpack.c.b16 %v2449, %v2441
    %v3186 = vpack.c.b16 %v2450, %v2442
    %v3187 = vpack.c.b16 %v2459, %v2451
    %v3188 = vpack.c.b16 %v2460, %v2452
    %v3189 = vpack.c.b16 %v2461, %v2453
    %v3190 = vpack.c.b16 %v2462, %v2454
    %v3191 = vpack.c.b16 %v2463, %v2455
    %v3192 = vpack.c.b16 %v2464, %v2456
    %v3193 = vpack.c.b16 %v2465, %v2457
    %v3194 = vpack.c.b16 %v2466, %v2458
    %v3195 = vpack.c.b16 %v2475, %v2467
    %v3196 = vpack.c.b16 %v2476, %v2468
    %v3197 = vpack.c.b16 %v2477, %v2469
    %v3198 = vpack.c.b16 %v2478, %v2470
    %v3199 = vpack.c.b16 %v2479, %v2471
    %v3200 = vpack.c.b16 %v2480, %v2472
    %v3201 = vpack.c.b16 %v2481, %v2473
    %v3202 = vpack.c.b16 %v2482, %v2474
    %v3203 = vpack.c.b16 %v2491, %v2483
    %v3204 = vpack.c.b16 %v2492, %v2484
    %v3205 = vpack.c.b16 %v2493, %v2485
    %v3206 = vpack.c.b16 %v2494, %v2486
    %v3207 = vpack.c.b16 %v2495, %v2487
    %v3208 = vpack.c.b16 %v2496, %v2488
    %v3209 = vpack.c.b16 %v2497, %v2489
    %v3210 = vpack.c.b16 %v2498, %v2490
    %v3211 = vpack.c.b16 %v2507, %v2499
    %v3212 = vpack.c.b16 %v2508, %v2500
    %v3213 = vpack.c.b16 %v2509, %v2501
    %v3214 = vpack.c.b16 %v2510, %v2502
    %v3215 = vpack.c.b16 %v2511, %v2503
    %v3216 = vpack.c.b16 %v2512, %v2504
    %v3217 = vpack.c.b16 %v2513, %v2505
    %v3218 = vpack.c.b16 %v2514, %v2506
    %v3219 = vpack.c.b16 %v2523, %v2515
    %v3220 = vpack.c.b16 %v2524, %v2516
    %v3221 = vpack.c.b16 %v2525, %v2517
    %v3222 = vpack.c.b16 %v2526, %v2518
    %v3223 = vpack.c.b16 %v2527, %v2519
    %v3224 = vpack.c.b16 %v2528, %v2520
    %v3225 = vpack.c.b16 %v2529, %v2521
    %v3226 = vpack.c.b16 %v2530, %v2522
    %v3227 = vpack.c.b16 %v2539, %v2531
    %v3228 = vpack.c.b16 %v2540, %v2532
    %v3229 = vpack.c.b16 %v2541, %v2533
    %v3230 = vpack.c.b16 %v2542, %v2534
    %v3231 = vpack.c.b16 %v2543, %v2535
    %v3232 = vpack.c.b16 %v2544, %v2536
    %v3233 = vpack.c.b16 %v2545, %v2537
    %v3234 = vpack.c.b16 %v2546, %v2538
    %v3235 = vpack.c.b16 %v2555, %v2547
    %v3236 = vpack.c.b16 %v2556, %v2548
    %v3237 = vpack.c.b16 %v2557, %v2549
    %v3238 = vpack.c.b16 %v2558, %v2550
    %v3239 = vpack.c.b16 %v2559, %v2551
    %v3240 = vpack.c.b16 %v2560, %v2552
    %v3241 = vpack.c.b16 %v2561, %v2553
    %v3242 = vpack.c.b16 %v2562, %v2554
    %v3243 = vpack.c.b16 %v2571, %v2563
    %v3244 = vpack.c.b16 %v2572, %v2564
    %v3245 = vpack.c.b16 %v2573, %v2565
    %v3246 = vpack.c.b16 %v2574, %v2566
    %v3247 = vpack.c.b16 %v2575, %v2567
    %v3248 = vpack.c.b16 %v2576, %v2568
    %v3249 = vpack.c.b16 %v2577, %v2569
    %v3250 = vpack.c.b16 %v2578, %v2570
    %v3251 = vpack.c.b16 %v2587, %v2579
    %v3252 = vpack.c.b16 %v2588, %v2580
    %v3253 = vpack.c.b16 %v2589, %v2581
    %v3254 = vpack.c.b16 %v2590, %v2582
    %v3255 = vpack.c.b16 %v2591, %v2583
    %v3256 = vpack.c.b16 %v2592, %v2584
    %v3257 = vpack.c.b16 %v2593, %v2585
    %v3258 = vpack.c.b16 %v2594, %v2586
    %v3259 = vpack.c.b16 %v2603, %v2595
    %v3260 = vpack.c.b16 %v2604, %v2596
    %v3261 = vpack.c.b16 %v2605, %v2597
    %v3262 = vpack.c.b16 %v2606, %v2598
    %v3263 = vpack.c.b16 %v2607, %v2599
    %v3264 = vpack.c.b16 %v2608, %v2600
    %v3265 = vpack.c.b16 %v2609, %v2601
    %v3266 = vpack.c.b16 %v2610, %v2602
    %v3267 = vpack.c.b16 %v2619, %v2611
    %v3268 = vpack.c.b16 %v2620, %v2612
    %v3269 = vpack.c.b16 %v2621, %v2613
    %v3270 = vpack.c.b16 %v2622, %v2614
    %v3271 = vpack.c.b16 %v2623, %v2615
    %v3272 = vpack.c.b16 %v2624, %v2616
    %v3273 = vpack.c.b16 %v2625, %v2617
    %v3274 = vpack.c.b16 %v2626, %v2618
    %v3275 = vpack.c.b16 %v2635, %v2627
    %v3276 = vpack.c.b16 %v2636, %v2628
    %v3277 = vpack.c.b16 %v2637, %v2629
    %v3278 = vpack.c.b16 %v2638, %v2630
    %v3279 = vpack.c.b16 %v2639, %v2631
    %v3280 = vpack.c.b16 %v2640, %v2632
    %v3281 = vpack.c.b16 %v2641, %v2633
    %v3282 = vpack.c.b16 %v2642, %v2634
    %v3283 = vpack.c.b16 %v2651, %v2643
    %v3284 = vpack.c.b16 %v2652, %v2644
    %v3285 = vpack.c.b16 %v2653, %v2645
    %v3286 = vpack.c.b16 %v2654, %v2646
    %v3287 = vpack.c.b16 %v2655, %v2647
    %v3288 = vpack.c.b16 %v2656, %v2648
    %v3289 = vpack.c.b16 %v2657, %v2649
    %v3290 = vpack.c.b16 %v2658, %v2650
    %v3291 = vpack.c.b16 %v2667, %v2659
    %v3292 = vpack.c.b16 %v2668, %v2660
    %v3293 = vpack.c.b16 %v2669, %v2661
    %v3294 = vpack.c.b16 %v2670, %v2662
    %v3295 = vpack.c.b16 %v2671, %v2663
    %v3296 = vpack.c.b16 %v2672, %v2664
    %v3297 = vpack.c.b16 %v2673, %v2665
    %v3298 = vpack.c.b16 %v2674, %v2666
    %v3299 = vpack.c.b16 %v2683, %v2675
    %v3300 = vpack.c.b16 %v2684, %v2676
    %v3301 = vpack.c.b16 %v2685, %v2677
    %v3302 = vpack.c.b16 %v2686, %v2678
    %v3303 = vpack.c.b16 %v2687, %v2679
    %v3304 = vpack.c.b16 %v2688, %v2680
    %v3305 = vpack.c.b16 %v2689, %v2681
    %v3306 = vpack.c.b16 %v2690, %v2682
    %v3307 = vpack.c.b16 %v2699, %v2691
    %v3308 = vpack.c.b16 %v2700, %v2692
    %v3309 = vpack.c.b16 %v2701, %v2693
    %v3310 = vpack.c.b16 %v2702, %v2694
    %v3311 = vpack.c.b16 %v2703, %v2695
    %v3312 = vpack.c.b16 %v2704, %v2696
    %v3313 = vpack.c.b16 %v2705, %v2697
    %v3314 = vpack.c.b16 %v2706, %v2698
    %v3315 = vpack.c.b16 %v2715, %v2707
    %v3316 = vpack.c.b16 %v2716, %v2708
    %v3317 = vpack.c.b16 %v2717, %v2709
    %v3318 = vpack.c.b16 %v2718, %v2710
    %v3319 = vpack.c.b16 %v2719, %v2711
    %v3320 = vpack.c.b16 %v2720, %v2712
    %v3321 = vpack.c.b16 %v2721, %v2713
    %v3322 = vpack.c.b16 %v2722, %v2714
    %v3323 = vpack.c.b16 %v2731, %v2723
    %v3324 = vpack.c.b16 %v2732, %v2724
    %v3325 = vpack.c.b16 %v2733, %v2725
    %v3326 = vpack.c.b16 %v2734, %v2726
    %v3327 = vpack.c.b16 %v2735, %v2727
    %v3328 = vpack.c.b16 %v2736, %v2728
    %v3329 = vpack.c.b16 %v2737, %v2729
    %v3330 = vpack.c.b16 %v2738, %v2730
    %v3331 = vpack.c.b16 %v2747, %v2739
    %v3332 = vpack.c.b16 %v2748, %v2740
    %v3333 = vpack.c.b16 %v2749, %v2741
    %v3334 = vpack.c.b16 %v2750, %v2742
    %v3335 = vpack.c.b16 %v2751, %v2743
    %v3336 = vpack.c.b16 %v2752, %v2744
    %v3337 = vpack.c.b16 %v2753, %v2745
    %v3338 = vpack.c.b16 %v2754, %v2746
    %v3339 = vpack.c.b16 %v2763, %v2755
    %v3340 = vpack.c.b16 %v2764, %v2756
    %v3341 = vpack.c.b16 %v2765, %v2757
    %v3342 = vpack.c.b16 %v2766, %v2758
    %v3343 = vpack.c.b16 %v2767, %v2759
    %v3344 = vpack.c.b16 %v2768, %v2760
    %v3345 = vpack.c.b16 %v2769, %v2761
    %v3346 = vpack.c.b16 %v2770, %v2762
    %v3347 = vpack.c.b16 %v2779, %v2771
    %v3348 = vpack.c.b16 %v2780, %v2772
    %v3349 = vpack.c.b16 %v2781, %v2773
    %v3350 = vpack.c.b16 %v2782, %v2774
    %v3351 = vpack.c.b16 %v2783, %v2775
    %v3352 = vpack.c.b16 %v2784, %v2776
    %v3353 = vpack.c.b16 %v2785, %v2777
    %v3354 = vpack.c.b16 %v2786, %v2778
    %v3355 = vpack.c.b16 %v2795, %v2787
    %v3356 = vpack.c.b16 %v2796, %v2788
    %v3357 = vpack.c.b16 %v2797, %v2789
    %v3358 = vpack.c.b16 %v2798, %v2790
    %v3359 = vpack.c.b16 %v2799, %v2791
    %v3360 = vpack.c.b16 %v2800, %v2792
    %v3361 = vpack.c.b16 %v2801, %v2793
    %v3362 = vpack.c.b16 %v2802, %v2794
    %v3363 = vpack.c.b16 %v2811, %v2803
    %v3364 = vpack.c.b16 %v2812, %v2804
    %v3365 = vpack.c.b16 %v2813, %v2805
    %v3366 = vpack.c.b16 %v2814, %v2806
    %v3367 = vpack.c.b16 %v2815, %v2807
    %v3368 = vpack.c.b16 %v2816, %v2808
    %v3369 = vpack.c.b16 %v2817, %v2809
    %v3370 = vpack.c.b16 %v2818, %v2810
    %v3371 = vpack.c.b16 %v2827, %v2819
    %v3372 = vpack.c.b16 %v2828, %v2820
    %v3373 = vpack.c.b16 %v2829, %v2821
    %v3374 = vpack.c.b16 %v2830, %v2822
    %v3375 = vpack.c.b16 %v2831, %v2823
    %v3376 = vpack.c.b16 %v2832, %v2824
    %v3377 = vpack.c.b16 %v2833, %v2825
    %v3378 = vpack.c.b16 %v2834, %v2826
    %v3379 = vpack.c.b16 %v2843, %v2835
    %v3380 = vpack.c.b16 %v2844, %v2836
    %v3381 = vpack.c.b16 %v2845, %v2837
    %v3382 = vpack.c.b16 %v2846, %v2838
    %v3383 = vpack.c.b16 %v2847, %v2839
    %v3384 = vpack.c.b16 %v2848, %v2840
    %v3385 = vpack.c.b16 %v2849, %v2841
    %v3386 = vpack.c.b16 %v2850, %v2842
    %v3387 = vpack.c.b16 %v2859, %v2851
    %v3388 = vpack.c.b16 %v2860, %v2852
    %v3389 = vpack.c.b16 %v2861, %v2853
    %v3390 = vpack.c.b16 %v2862, %v2854
    %v3391 = vpack.c.b16 %v2863, %v2855
    %v3392 = vpack.c.b16 %v2864, %v2856
    %v3393 = vpack.c.b16 %v2865, %v2857
    %v3394 = vpack.c.b16 %v2866, %v2858
    %v3395 = vpack.c.b16 %v2875, %v2867
    %v3396 = vpack.c.b16 %v2876, %v2868
    %v3397 = vpack.c.b16 %v2877, %v2869
    %v3398 = vpack.c.b16 %v2878, %v2870
    %v3399 = vpack.c.b16 %v2879, %v2871
    %v3400 = vpack.c.b16 %v2880, %v2872
    %v3401 = vpack.c.b16 %v2881, %v2873
    %v3402 = vpack.c.b16 %v2882, %v2874
    %v3403 = vpack.c.b16 %v2891, %v2883
    %v3404 = vpack.c.b16 %v2892, %v2884
    %v3405 = vpack.c.b16 %v2893, %v2885
    %v3406 = vpack.c.b16 %v2894, %v2886
    %v3407 = vpack.c.b16 %v2895, %v2887
    %v3408 = vpack.c.b16 %v2896, %v2888
    %v3409 = vpack.c.b16 %v2897, %v2889
    %v3410 = vpack.c.b16 %v2898, %v2890
    %3923 = vmatprep.subr.bf16.mxu0 %v2900
    %3924 = vmatpush1.bf16.msra.mxu0 %v2899
    %3925 = vmatprep.subr.bf16.mxu0 %v2908
    %3926 = vmatpush1.bf16.msra.mxu0 %v2907
    %3927 = vmatprep.subr.bf16.mxu0 %v2916
    %3928 = vmatpush1.bf16.msra.mxu0 %v2915
    %3929 = vmatprep.subr.bf16.mxu0 %v2924
    %3930 = vmatpush1.bf16.msra.mxu0 %v2923
    %3931 = vmatprep.subr.bf16.mxu0 %v2932
    %3932 = vmatpush1.bf16.msra.mxu0 %v2931
    %3933 = vmatprep.subr.bf16.mxu0 %v2940
    %3934 = vmatpush1.bf16.msra.mxu0 %v2939
    %3935 = vmatprep.subr.bf16.mxu0 %v2948
    %3936 = vmatpush1.bf16.msra.mxu0 %v2947
    %3937 = vmatprep.subr.bf16.mxu0 %v2956
    %3938 = vmatpush1.bf16.msra.mxu0 %v2955
    %3939 = vmatprep.subr.bf16.mxu0 %v2964
    %3940 = vmatpush1.bf16.msra.mxu0 %v2963
    %3941 = vmatprep.subr.bf16.mxu0 %v2972
    %3942 = vmatpush1.bf16.msra.mxu0 %v2971
    %3943 = vmatprep.subr.bf16.mxu0 %v2980
    %3944 = vmatpush1.bf16.msra.mxu0 %v2979
    %3945 = vmatprep.subr.bf16.mxu0 %v2988
    %3946 = vmatpush1.bf16.msra.mxu0 %v2987
    %3947 = vmatprep.subr.bf16.mxu0 %v2996
    %3948 = vmatpush1.bf16.msra.mxu0 %v2995
    %3949 = vmatprep.subr.bf16.mxu0 %v3004
    %3950 = vmatpush1.bf16.msra.mxu0 %v3003
    %3951 = vmatprep.subr.bf16.mxu0 %v3012
    %3952 = vmatpush1.bf16.msra.mxu0 %v3011
    %3953 = vmatprep.subr.bf16.mxu0 %v3020
    %3954 = vmatpush1.bf16.msra.mxu0 %v3019
    %3955 = vmatprep.mubr.bf16.mxu0 %v802
    %3956 = vmatmul.mubr.bf16.gmra.mrb[0].mxu0 %v801
    %v3957 = vpop.f32.mrb[0].mxu0
    %v3958 = vadd.f32 %v1326, %v3957
    %v3959 = vpop.f32.mrb[0].mxu0
    %v3960 = vadd.f32 %v1330, %v3959
    %v3961 = vpop.f32.mrb[0].mxu0
    %v3962 = vadd.f32 %v1326, %v3961
    %v3963 = vpop.f32.mrb[0].mxu0
    %v3964 = vadd.f32 %v1330, %v3963
    %3965 = vdwg.mxu0
    %3966 = vmatprep.subr.bf16.mxu0 %v3028
    %3967 = vmatpush1.bf16.msra.mxu0 %v3027
    %3968 = vmatprep.subr.bf16.mxu0 %v3036
    %3969 = vmatpush1.bf16.msra.mxu0 %v3035
    %3970 = vmatprep.subr.bf16.mxu0 %v3044
    %3971 = vmatpush1.bf16.msra.mxu0 %v3043
    %3972 = vmatprep.subr.bf16.mxu0 %v3052
    %3973 = vmatpush1.bf16.msra.mxu0 %v3051
    %3974 = vmatprep.subr.bf16.mxu0 %v3060
    %3975 = vmatpush1.bf16.msra.mxu0 %v3059
    %3976 = vmatprep.subr.bf16.mxu0 %v3068
    %3977 = vmatpush1.bf16.msra.mxu0 %v3067
    %3978 = vmatprep.subr.bf16.mxu0 %v3076
    %3979 = vmatpush1.bf16.msra.mxu0 %v3075
    %3980 = vmatprep.subr.bf16.mxu0 %v3084
    %3981 = vmatpush1.bf16.msra.mxu0 %v3083
    %3982 = vmatprep.subr.bf16.mxu0 %v3092
    %3983 = vmatpush1.bf16.msra.mxu0 %v3091
    %3984 = vmatprep.subr.bf16.mxu0 %v3100
    %3985 = vmatpush1.bf16.msra.mxu0 %v3099
    %3986 = vmatprep.subr.bf16.mxu0 %v3108
    %3987 = vmatpush1.bf16.msra.mxu0 %v3107
    %3988 = vmatprep.subr.bf16.mxu0 %v3116
    %3989 = vmatpush1.bf16.msra.mxu0 %v3115
    %3990 = vmatprep.subr.bf16.mxu0 %v3124
    %3991 = vmatpush1.bf16.msra.mxu0 %v3123
    %3992 = vmatprep.subr.bf16.mxu0 %v3132
    %3993 = vmatpush1.bf16.msra.mxu0 %v3131
    %3994 = vmatprep.subr.bf16.mxu0 %v3140
    %3995 = vmatpush1.bf16.msra.mxu0 %v3139
    %3996 = vmatprep.subr.bf16.mxu0 %v3148
    %3997 = vmatpush1.bf16.msra.mxu0 %v3147
    %3998 = vmatprep.mubr.bf16.mxu0 %v804
    %3999 = vmatmul.mubr.bf16.gmra.mrb[0].mxu0 %v803
    %v4000 = vpop.f32.mrb[0].mxu0
    %v4001 = vadd.f32 %v3958, %v4000
    %v4002 = vpop.f32.mrb[0].mxu0
    %v4003 = vadd.f32 %v3960, %v4002
    %v4004 = vpop.f32.mrb[0].mxu0
    %v4005 = vadd.f32 %v3962, %v4004
    %v4006 = vpop.f32.mrb[0].mxu0
    %v4007 = vadd.f32 %v3964, %v4006
    %4008 = vdwg.mxu0
    %4009 = vmatprep.subr.bf16.mxu0 %v3156
    %4010 = vmatpush1.bf16.msra.mxu0 %v3155
    %4011 = vmatprep.subr.bf16.mxu0 %v3164
    %4012 = vmatpush1.bf16.msra.mxu0 %v3163
    %4013 = vmatprep.subr.bf16.mxu0 %v3172
    %4014 = vmatpush1.bf16.msra.mxu0 %v3171
    %4015 = vmatprep.subr.bf16.mxu0 %v3180
    %4016 = vmatpush1.bf16.msra.mxu0 %v3179
    %4017 = vmatprep.subr.bf16.mxu0 %v3188
    %4018 = vmatpush1.bf16.msra.mxu0 %v3187
    %4019 = vmatprep.subr.bf16.mxu0 %v3196
    %4020 = vmatpush1.bf16.msra.mxu0 %v3195
    %4021 = vmatprep.subr.bf16.mxu0 %v3204
    %4022 = vmatpush1.bf16.msra.mxu0 %v3203
    %4023 = vmatprep.subr.bf16.mxu0 %v3212
    %4024 = vmatpush1.bf16.msra.mxu0 %v3211
    %4025 = vmatprep.subr.bf16.mxu0 %v3220
    %4026 = vmatpush1.bf16.msra.mxu0 %v3219
    %4027 = vmatprep.subr.bf16.mxu0 %v3228
    %4028 = vmatpush1.bf16.msra.mxu0 %v3227
    %4029 = vmatprep.subr.bf16.mxu0 %v3236
    %4030 = vmatpush1.bf16.msra.mxu0 %v3235
    %4031 = vmatprep.subr.bf16.mxu0 %v3244
    %4032 = vmatpush1.bf16.msra.mxu0 %v3243
    %4033 = vmatprep.subr.bf16.mxu0 %v3252
    %4034 = vmatpush1.bf16.msra.mxu0 %v3251
    %4035 = vmatprep.subr.bf16.mxu0 %v3260
    %4036 = vmatpush1.bf16.msra.mxu0 %v3259
    %4037 = vmatprep.subr.bf16.mxu0 %v3268
    %4038 = vmatpush1.bf16.msra.mxu0 %v3267
    %4039 = vmatprep.subr.bf16.mxu0 %v3276
    %4040 = vmatpush1.bf16.msra.mxu0 %v3275
    %4041 = vmatprep.mubr.bf16.mxu0 %v806
    %4042 = vmatmul.mubr.bf16.gmra.mrb[0].mxu0 %v805
    %v4043 = vpop.f32.mrb[0].mxu0
    %v4044 = vadd.f32 %v4001, %v4043
    %v4045 = vpop.f32.mrb[0].mxu0
    %v4046 = vadd.f32 %v4003, %v4045
    %v4047 = vpop.f32.mrb[0].mxu0
    %v4048 = vadd.f32 %v4005, %v4047
    %v4049 = vpop.f32.mrb[0].mxu0
    %v4050 = vadd.f32 %v4007, %v4049
    %4051 = vdwg.mxu0
    %4052 = vmatprep.subr.bf16.mxu0 %v3284
    %4053 = vmatpush1.bf16.msra.mxu0 %v3283
    %4054 = vmatprep.subr.bf16.mxu0 %v3292
    %4055 = vmatpush1.bf16.msra.mxu0 %v3291
    %4056 = vmatprep.subr.bf16.mxu0 %v3300
    %4057 = vmatpush1.bf16.msra.mxu0 %v3299
    %4058 = vmatprep.subr.bf16.mxu0 %v3308
    %4059 = vmatpush1.bf16.msra.mxu0 %v3307
    %4060 = vmatprep.subr.bf16.mxu0 %v3316
    %4061 = vmatpush1.bf16.msra.mxu0 %v3315
    %4062 = vmatprep.subr.bf16.mxu0 %v3324
    %4063 = vmatpush1.bf16.msra.mxu0 %v3323
    %4064 = vmatprep.subr.bf16.mxu0 %v3332
    %4065 = vmatpush1.bf16.msra.mxu0 %v3331
    %4066 = vmatprep.subr.bf16.mxu0 %v3340
    %4067 = vmatpush1.bf16.msra.mxu0 %v3339
    %4068 = vmatprep.subr.bf16.mxu0 %v3348
    %4069 = vmatpush1.bf16.msra.mxu0 %v3347
    %4070 = vmatprep.subr.bf16.mxu0 %v3356
    %4071 = vmatpush1.bf16.msra.mxu0 %v3355
    %4072 = vmatprep.subr.bf16.mxu0 %v3364
    %4073 = vmatpush1.bf16.msra.mxu0 %v3363
    %4074 = vmatprep.subr.bf16.mxu0 %v3372
    %4075 = vmatpush1.bf16.msra.mxu0 %v3371
    %4076 = vmatprep.subr.bf16.mxu0 %v3380
    %4077 = vmatpush1.bf16.msra.mxu0 %v3379
    %4078 = vmatprep.subr.bf16.mxu0 %v3388
    %4079 = vmatpush1.bf16.msra.mxu0 %v3387
    %4080 = vmatprep.subr.bf16.mxu0 %v3396
    %4081 = vmatpush1.bf16.msra.mxu0 %v3395
    %4082 = vmatprep.subr.bf16.mxu0 %v3404
    %4083 = vmatpush1.bf16.msra.mxu0 %v3403
    %4084 = vmatprep.mubr.bf16.mxu0 %v808
    %4085 = vmatmul.mubr.bf16.gmra.mrb[0].mxu0 %v807
    %v4086 = vpop.f32.mrb[0].mxu0
    %v4087 = vadd.f32 %v4044, %v4086
    %v4088 = vpop.f32.mrb[0].mxu0
    %v4089 = vadd.f32 %v4046, %v4088
    %v4090 = vpop.f32.mrb[0].mxu0
    %v4091 = vadd.f32 %v4048, %v4090
    %v4092 = vpop.f32.mrb[0].mxu0
    %v4093 = vadd.f32 %v4050, %v4092
    %4094 = vdwg.mxu0
    %4095 = vmatprep.subr.bf16.mxu0 %v2902
    %4096 = vmatpush1.bf16.msra.mxu0 %v2901
    %4097 = vmatprep.subr.bf16.mxu0 %v2910
    %4098 = vmatpush1.bf16.msra.mxu0 %v2909
    %4099 = vmatprep.subr.bf16.mxu0 %v2918
    %4100 = vmatpush1.bf16.msra.mxu0 %v2917
    %4101 = vmatprep.subr.bf16.mxu0 %v2926
    %4102 = vmatpush1.bf16.msra.mxu0 %v2925
    %4103 = vmatprep.subr.bf16.mxu0 %v2934
    %4104 = vmatpush1.bf16.msra.mxu0 %v2933
    %4105 = vmatprep.subr.bf16.mxu0 %v2942
    %4106 = vmatpush1.bf16.msra.mxu0 %v2941
    %4107 = vmatprep.subr.bf16.mxu0 %v2950
    %4108 = vmatpush1.bf16.msra.mxu0 %v2949
    %4109 = vmatprep.subr.bf16.mxu0 %v2958
    %4110 = vmatpush1.bf16.msra.mxu0 %v2957
    %4111 = vmatprep.subr.bf16.mxu0 %v2966
    %4112 = vmatpush1.bf16.msra.mxu0 %v2965
    %4113 = vmatprep.subr.bf16.mxu0 %v2974
    %4114 = vmatpush1.bf16.msra.mxu0 %v2973
    %4115 = vmatprep.subr.bf16.mxu0 %v2982
    %4116 = vmatpush1.bf16.msra.mxu0 %v2981
    %4117 = vmatprep.subr.bf16.mxu0 %v2990
    %4118 = vmatpush1.bf16.msra.mxu0 %v2989
    %4119 = vmatprep.subr.bf16.mxu0 %v2998
    %4120 = vmatpush1.bf16.msra.mxu0 %v2997
    %4121 = vmatprep.subr.bf16.mxu0 %v3006
    %4122 = vmatpush1.bf16.msra.mxu0 %v3005
    %4123 = vmatprep.subr.bf16.mxu0 %v3014
    %4124 = vmatpush1.bf16.msra.mxu0 %v3013
    %4125 = vmatprep.subr.bf16.mxu0 %v3022
    %4126 = vmatpush1.bf16.msra.mxu0 %v3021
    %4127 = vmatprep.mubr.bf16.mxu0 %v802
    %4128 = vmatmul.mubr.bf16.gmra.mrb[0].mxu0 %v801
    %v4129 = vpop.f32.mrb[0].mxu0
    %v4130 = vadd.f32 %v1334, %v4129
    %v4131 = vpop.f32.mrb[0].mxu0
    %v4132 = vadd.f32 %v1338, %v4131
    %v4133 = vpop.f32.mrb[0].mxu0
    %v4134 = vadd.f32 %v1334, %v4133
    %v4135 = vpop.f32.mrb[0].mxu0
    %v4136 = vadd.f32 %v1338, %v4135
    %4137 = vdwg.mxu0
    %4138 = vmatprep.subr.bf16.mxu0 %v3030
    %4139 = vmatpush1.bf16.msra.mxu0 %v3029
    %4140 = vmatprep.subr.bf16.mxu0 %v3038
    %4141 = vmatpush1.bf16.msra.mxu0 %v3037
    %4142 = vmatprep.subr.bf16.mxu0 %v3046
    %4143 = vmatpush1.bf16.msra.mxu0 %v3045
    %4144 = vmatprep.subr.bf16.mxu0 %v3054
    %4145 = vmatpush1.bf16.msra.mxu0 %v3053
    %4146 = vmatprep.subr.bf16.mxu0 %v3062
    %4147 = vmatpush1.bf16.msra.mxu0 %v3061
    %4148 = vmatprep.subr.bf16.mxu0 %v3070
    %4149 = vmatpush1.bf16.msra.mxu0 %v3069
    %4150 = vmatprep.subr.bf16.mxu0 %v3078
    %4151 = vmatpush1.bf16.msra.mxu0 %v3077
    %4152 = vmatprep.subr.bf16.mxu0 %v3086
    %4153 = vmatpush1.bf16.msra.mxu0 %v3085
    %4154 = vmatprep.subr.bf16.mxu0 %v3094
    %4155 = vmatpush1.bf16.msra.mxu0 %v3093
    %4156 = vmatprep.subr.bf16.mxu0 %v3102
    %4157 = vmatpush1.bf16.msra.mxu0 %v3101
    %4158 = vmatprep.subr.bf16.mxu0 %v3110
    %4159 = vmatpush1.bf16.msra.mxu0 %v3109
    %4160 = vmatprep.subr.bf16.mxu0 %v3118
    %4161 = vmatpush1.bf16.msra.mxu0 %v3117
    %4162 = vmatprep.subr.bf16.mxu0 %v3126
    %4163 = vmatpush1.bf16.msra.mxu0 %v3125
    %4164 = vmatprep.subr.bf16.mxu0 %v3134
    %4165 = vmatpush1.bf16.msra.mxu0 %v3133
    %4166 = vmatprep.subr.bf16.mxu0 %v3142
    %4167 = vmatpush1.bf16.msra.mxu0 %v3141
    %4168 = vmatprep.subr.bf16.mxu0 %v3150
    %4169 = vmatpush1.bf16.msra.mxu0 %v3149
    %4170 = vmatprep.mubr.bf16.mxu0 %v804
    %4171 = vmatmul.mubr.bf16.gmra.mrb[0].mxu0 %v803
    %v4172 = vpop.f32.mrb[0].mxu0
    %v4173 = vadd.f32 %v4130, %v4172
    %v4174 = vpop.f32.mrb[0].mxu0
    %v4175 = vadd.f32 %v4132, %v4174
    %v4176 = vpop.f32.mrb[0].mxu0
    %v4177 = vadd.f32 %v4134, %v4176
    %v4178 = vpop.f32.mrb[0].mxu0
    %v4179 = vadd.f32 %v4136, %v4178
    %4180 = vdwg.mxu0
    %4181 = vmatprep.subr.bf16.mxu0 %v3158
    %4182 = vmatpush1.bf16.msra.mxu0 %v3157
    %4183 = vmatprep.subr.bf16.mxu0 %v3166
    %4184 = vmatpush1.bf16.msra.mxu0 %v3165
    %4185 = vmatprep.subr.bf16.mxu0 %v3174
    %4186 = vmatpush1.bf16.msra.mxu0 %v3173
    %4187 = vmatprep.subr.bf16.mxu0 %v3182
    %4188 = vmatpush1.bf16.msra.mxu0 %v3181
    %4189 = vmatprep.subr.bf16.mxu0 %v3190
    %4190 = vmatpush1.bf16.msra.mxu0 %v3189
    %4191 = vmatprep.subr.bf16.mxu0 %v3198
    %4192 = vmatpush1.bf16.msra.mxu0 %v3197
    %4193 = vmatprep.subr.bf16.mxu0 %v3206
    %4194 = vmatpush1.bf16.msra.mxu0 %v3205
    %4195 = vmatprep.subr.bf16.mxu0 %v3214
    %4196 = vmatpush1.bf16.msra.mxu0 %v3213
    %4197 = vmatprep.subr.bf16.mxu0 %v3222
    %4198 = vmatpush1.bf16.msra.mxu0 %v3221
    %4199 = vmatprep.subr.bf16.mxu0 %v3230
    %4200 = vmatpush1.bf16.msra.mxu0 %v3229
    %4201 = vmatprep.subr.bf16.mxu0 %v3238
    %4202 = vmatpush1.bf16.msra.mxu0 %v3237
    %4203 = vmatprep.subr.bf16.mxu0 %v3246
    %4204 = vmatpush1.bf16.msra.mxu0 %v3245
    %4205 = vmatprep.subr.bf16.mxu0 %v3254
    %4206 = vmatpush1.bf16.msra.mxu0 %v3253
    %4207 = vmatprep.subr.bf16.mxu0 %v3262
    %4208 = vmatpush1.bf16.msra.mxu0 %v3261
    %4209 = vmatprep.subr.bf16.mxu0 %v3270
    %4210 = vmatpush1.bf16.msra.mxu0 %v3269
    %4211 = vmatprep.subr.bf16.mxu0 %v3278
    %4212 = vmatpush1.bf16.msra.mxu0 %v3277
    %4213 = vmatprep.mubr.bf16.mxu0 %v806
    %4214 = vmatmul.mubr.bf16.gmra.mrb[0].mxu0 %v805
    %v4215 = vpop.f32.mrb[0].mxu0
    %v4216 = vadd.f32 %v4173, %v4215
    %v4217 = vpop.f32.mrb[0].mxu0
    %v4218 = vadd.f32 %v4175, %v4217
    %v4219 = vpop.f32.mrb[0].mxu0
    %v4220 = vadd.f32 %v4177, %v4219
    %v4221 = vpop.f32.mrb[0].mxu0
    %v4222 = vadd.f32 %v4179, %v4221
    %4223 = vdwg.mxu0
    %4224 = vmatprep.subr.bf16.mxu0 %v3286
    %4225 = vmatpush1.bf16.msra.mxu0 %v3285
    %4226 = vmatprep.subr.bf16.mxu0 %v3294
    %4227 = vmatpush1.bf16.msra.mxu0 %v3293
    %4228 = vmatprep.subr.bf16.mxu0 %v3302
    %4229 = vmatpush1.bf16.msra.mxu0 %v3301
    %4230 = vmatprep.subr.bf16.mxu0 %v3310
    %4231 = vmatpush1.bf16.msra.mxu0 %v3309
    %4232 = vmatprep.subr.bf16.mxu0 %v3318
    %4233 = vmatpush1.bf16.msra.mxu0 %v3317
    %4234 = vmatprep.subr.bf16.mxu0 %v3326
    %4235 = vmatpush1.bf16.msra.mxu0 %v3325
    %4236 = vmatprep.subr.bf16.mxu0 %v3334
    %4237 = vmatpush1.bf16.msra.mxu0 %v3333
    %4238 = vmatprep.subr.bf16.mxu0 %v3342
    %4239 = vmatpush1.bf16.msra.mxu0 %v3341
    %4240 = vmatprep.subr.bf16.mxu0 %v3350
    %4241 = vmatpush1.bf16.msra.mxu0 %v3349
    %4242 = vmatprep.subr.bf16.mxu0 %v3358
    %4243 = vmatpush1.bf16.msra.mxu0 %v3357
    %4244 = vmatprep.subr.bf16.mxu0 %v3366
    %4245 = vmatpush1.bf16.msra.mxu0 %v3365
    %4246 = vmatprep.subr.bf16.mxu0 %v3374
    %4247 = vmatpush1.bf16.msra.mxu0 %v3373
    %4248 = vmatprep.subr.bf16.mxu0 %v3382
    %4249 = vmatpush1.bf16.msra.mxu0 %v3381
    %4250 = vmatprep.subr.bf16.mxu0 %v3390
    %4251 = vmatpush1.bf16.msra.mxu0 %v3389
    %4252 = vmatprep.subr.bf16.mxu0 %v3398
    %4253 = vmatpush1.bf16.msra.mxu0 %v3397
    %4254 = vmatprep.subr.bf16.mxu0 %v3406
    %4255 = vmatpush1.bf16.msra.mxu0 %v3405
    %4256 = vmatprep.mubr.bf16.mxu0 %v808
    %4257 = vmatmul.mubr.bf16.gmra.mrb[0].mxu0 %v807
    %v4258 = vpop.f32.mrb[0].mxu0
    %v4259 = vadd.f32 %v4216, %v4258
    %v4260 = vpop.f32.mrb[0].mxu0
    %v4261 = vadd.f32 %v4218, %v4260
    %v4262 = vpop.f32.mrb[0].mxu0
    %v4263 = vadd.f32 %v4220, %v4262
    %v4264 = vpop.f32.mrb[0].mxu0
    %v4265 = vadd.f32 %v4222, %v4264
    %4266 = vdwg.mxu0
    %4267 = vmatprep.subr.bf16.mxu0 %v2904
    %4268 = vmatpush1.bf16.msra.mxu0 %v2903
    %4269 = vmatprep.subr.bf16.mxu0 %v2912
    %4270 = vmatpush1.bf16.msra.mxu0 %v2911
    %4271 = vmatprep.subr.bf16.mxu0 %v2920
    %4272 = vmatpush1.bf16.msra.mxu0 %v2919
    %4273 = vmatprep.subr.bf16.mxu0 %v2928
    %4274 = vmatpush1.bf16.msra.mxu0 %v2927
    %4275 = vmatprep.subr.bf16.mxu0 %v2936
    %4276 = vmatpush1.bf16.msra.mxu0 %v2935
    %4277 = vmatprep.subr.bf16.mxu0 %v2944
    %4278 = vmatpush1.bf16.msra.mxu0 %v2943
    %4279 = vmatprep.subr.bf16.mxu0 %v2952
    %4280 = vmatpush1.bf16.msra.mxu0 %v2951
    %4281 = vmatprep.subr.bf16.mxu0 %v2960
    %4282 = vmatpush1.bf16.msra.mxu0 %v2959
    %4283 = vmatprep.subr.bf16.mxu0 %v2968
    %4284 = vmatpush1.bf16.msra.mxu0 %v2967
    %4285 = vmatprep.subr.bf16.mxu0 %v2976
    %4286 = vmatpush1.bf16.msra.mxu0 %v2975
    %4287 = vmatprep.subr.bf16.mxu0 %v2984
    %4288 = vmatpush1.bf16.msra.mxu0 %v2983
    %4289 = vmatprep.subr.bf16.mxu0 %v2992
    %4290 = vmatpush1.bf16.msra.mxu0 %v2991
    %4291 = vmatprep.subr.bf16.mxu0 %v3000
    %4292 = vmatpush1.bf16.msra.mxu0 %v2999
    %4293 = vmatprep.subr.bf16.mxu0 %v3008
    %4294 = vmatpush1.bf16.msra.mxu0 %v3007
    %4295 = vmatprep.subr.bf16.mxu0 %v3016
    %4296 = vmatpush1.bf16.msra.mxu0 %v3015
    %4297 = vmatprep.subr.bf16.mxu0 %v3024
    %4298 = vmatpush1.bf16.msra.mxu0 %v3023
    %4299 = vmatprep.mubr.bf16.mxu0 %v802
    %4300 = vmatmul.mubr.bf16.gmra.mrb[0].mxu0 %v801
    %v4301 = vpop.f32.mrb[0].mxu0
    %v4302 = vadd.f32 %v1342, %v4301
    %v4303 = vpop.f32.mrb[0].mxu0
    %v4304 = vadd.f32 %v1346, %v4303
    %v4305 = vpop.f32.mrb[0].mxu0
    %v4306 = vadd.f32 %v1342, %v4305
    %v4307 = vpop.f32.mrb[0].mxu0
    %v4308 = vadd.f32 %v1346, %v4307
    %4309 = vdwg.mxu0
    %4310 = vmatprep.subr.bf16.mxu0 %v3032
    %4311 = vmatpush1.bf16.msra.mxu0 %v3031
    %4312 = vmatprep.subr.bf16.mxu0 %v3040
    %4313 = vmatpush1.bf16.msra.mxu0 %v3039
    %4314 = vmatprep.subr.bf16.mxu0 %v3048
    %4315 = vmatpush1.bf16.msra.mxu0 %v3047
    %4316 = vmatprep.subr.bf16.mxu0 %v3056
    %4317 = vmatpush1.bf16.msra.mxu0 %v3055
    %4318 = vmatprep.subr.bf16.mxu0 %v3064
    %4319 = vmatpush1.bf16.msra.mxu0 %v3063
    %4320 = vmatprep.subr.bf16.mxu0 %v3072
    %4321 = vmatpush1.bf16.msra.mxu0 %v3071
    %4322 = vmatprep.subr.bf16.mxu0 %v3080
    %4323 = vmatpush1.bf16.msra.mxu0 %v3079
    %4324 = vmatprep.subr.bf16.mxu0 %v3088
    %4325 = vmatpush1.bf16.msra.mxu0 %v3087
    %4326 = vmatprep.subr.bf16.mxu0 %v3096
    %4327 = vmatpush1.bf16.msra.mxu0 %v3095
    %4328 = vmatprep.subr.bf16.mxu0 %v3104
    %4329 = vmatpush1.bf16.msra.mxu0 %v3103
    %4330 = vmatprep.subr.bf16.mxu0 %v3112
    %4331 = vmatpush1.bf16.msra.mxu0 %v3111
    %4332 = vmatprep.subr.bf16.mxu0 %v3120
    %4333 = vmatpush1.bf16.msra.mxu0 %v3119
    %4334 = vmatprep.subr.bf16.mxu0 %v3128
    %4335 = vmatpush1.bf16.msra.mxu0 %v3127
    %4336 = vmatprep.subr.bf16.mxu0 %v3136
    %4337 = vmatpush1.bf16.msra.mxu0 %v3135
    %4338 = vmatprep.subr.bf16.mxu0 %v3144
    %4339 = vmatpush1.bf16.msra.mxu0 %v3143
    %4340 = vmatprep.subr.bf16.mxu0 %v3152
    %4341 = vmatpush1.bf16.msra.mxu0 %v3151
    %4342 = vmatprep.mubr.bf16.mxu0 %v804
    %4343 = vmatmul.mubr.bf16.gmra.mrb[0].mxu0 %v803
    %v4344 = vpop.f32.mrb[0].mxu0
    %v4345 = vadd.f32 %v4302, %v4344
    %v4346 = vpop.f32.mrb[0].mxu0
    %v4347 = vadd.f32 %v4304, %v4346
    %v4348 = vpop.f32.mrb[0].mxu0
    %v4349 = vadd.f32 %v4306, %v4348
    %v4350 = vpop.f32.mrb[0].mxu0
    %v4351 = vadd.f32 %v4308, %v4350
    %4352 = vdwg.mxu0
    %4353 = vmatprep.subr.bf16.mxu0 %v3160
    %4354 = vmatpush1.bf16.msra.mxu0 %v3159
    %4355 = vmatprep.subr.bf16.mxu0 %v3168
    %4356 = vmatpush1.bf16.msra.mxu0 %v3167
    %4357 = vmatprep.subr.bf16.mxu0 %v3176
    %4358 = vmatpush1.bf16.msra.mxu0 %v3175
    %4359 = vmatprep.subr.bf16.mxu0 %v3184
    %4360 = vmatpush1.bf16.msra.mxu0 %v3183
    %4361 = vmatprep.subr.bf16.mxu0 %v3192
    %4362 = vmatpush1.bf16.msra.mxu0 %v3191
    %4363 = vmatprep.subr.bf16.mxu0 %v3200
    %4364 = vmatpush1.bf16.msra.mxu0 %v3199
    %4365 = vmatprep.subr.bf16.mxu0 %v3208
    %4366 = vmatpush1.bf16.msra.mxu0 %v3207
    %4367 = vmatprep.subr.bf16.mxu0 %v3216
    %4368 = vmatpush1.bf16.msra.mxu0 %v3215
    %4369 = vmatprep.subr.bf16.mxu0 %v3224
    %4370 = vmatpush1.bf16.msra.mxu0 %v3223
    %4371 = vmatprep.subr.bf16.mxu0 %v3232
    %4372 = vmatpush1.bf16.msra.mxu0 %v3231
    %4373 = vmatprep.subr.bf16.mxu0 %v3240
    %4374 = vmatpush1.bf16.msra.mxu0 %v3239
    %4375 = vmatprep.subr.bf16.mxu0 %v3248
    %4376 = vmatpush1.bf16.msra.mxu0 %v3247
    %4377 = vmatprep.subr.bf16.mxu0 %v3256
    %4378 = vmatpush1.bf16.msra.mxu0 %v3255
    %4379 = vmatprep.subr.bf16.mxu0 %v3264
    %4380 = vmatpush1.bf16.msra.mxu0 %v3263
    %4381 = vmatprep.subr.bf16.mxu0 %v3272
    %4382 = vmatpush1.bf16.msra.mxu0 %v3271
    %4383 = vmatprep.subr.bf16.mxu0 %v3280
    %4384 = vmatpush1.bf16.msra.mxu0 %v3279
    %4385 = vmatprep.mubr.bf16.mxu0 %v806
    %4386 = vmatmul.mubr.bf16.gmra.mrb[0].mxu0 %v805
    %v4387 = vpop.f32.mrb[0].mxu0
    %v4388 = vadd.f32 %v4345, %v4387
    %v4389 = vpop.f32.mrb[0].mxu0
    %v4390 = vadd.f32 %v4347, %v4389
    %v4391 = vpop.f32.mrb[0].mxu0
    %v4392 = vadd.f32 %v4349, %v4391
    %v4393 = vpop.f32.mrb[0].mxu0
    %v4394 = vadd.f32 %v4351, %v4393
    %4395 = vdwg.mxu0
    %4396 = vmatprep.subr.bf16.mxu0 %v3288
    %4397 = vmatpush1.bf16.msra.mxu0 %v3287
    %4398 = vmatprep.subr.bf16.mxu0 %v3296
    %4399 = vmatpush1.bf16.msra.mxu0 %v3295
    %4400 = vmatprep.subr.bf16.mxu0 %v3304
    %4401 = vmatpush1.bf16.msra.mxu0 %v3303
    %4402 = vmatprep.subr.bf16.mxu0 %v3312
    %4403 = vmatpush1.bf16.msra.mxu0 %v3311
    %4404 = vmatprep.subr.bf16.mxu0 %v3320
    %4405 = vmatpush1.bf16.msra.mxu0 %v3319
    %4406 = vmatprep.subr.bf16.mxu0 %v3328
    %4407 = vmatpush1.bf16.msra.mxu0 %v3327
    %4408 = vmatprep.subr.bf16.mxu0 %v3336
    %4409 = vmatpush1.bf16.msra.mxu0 %v3335
    %4410 = vmatprep.subr.bf16.mxu0 %v3344
    %4411 = vmatpush1.bf16.msra.mxu0 %v3343
    %4412 = vmatprep.subr.bf16.mxu0 %v3352
    %4413 = vmatpush1.bf16.msra.mxu0 %v3351
    %4414 = vmatprep.subr.bf16.mxu0 %v3360
    %4415 = vmatpush1.bf16.msra.mxu0 %v3359
    %4416 = vmatprep.subr.bf16.mxu0 %v3368
    %4417 = vmatpush1.bf16.msra.mxu0 %v3367
    %4418 = vmatprep.subr.bf16.mxu0 %v3376
    %4419 = vmatpush1.bf16.msra.mxu0 %v3375
    %4420 = vmatprep.subr.bf16.mxu0 %v3384
    %4421 = vmatpush1.bf16.msra.mxu0 %v3383
    %4422 = vmatprep.subr.bf16.mxu0 %v3392
    %4423 = vmatpush1.bf16.msra.mxu0 %v3391
    %4424 = vmatprep.subr.bf16.mxu0 %v3400
    %4425 = vmatpush1.bf16.msra.mxu0 %v3399
    %4426 = vmatprep.subr.bf16.mxu0 %v3408
    %4427 = vmatpush1.bf16.msra.mxu0 %v3407
    %4428 = vmatprep.mubr.bf16.mxu0 %v808
    %4429 = vmatmul.mubr.bf16.gmra.mrb[0].mxu0 %v807
    %v4430 = vpop.f32.mrb[0].mxu0
    %v4431 = vadd.f32 %v4388, %v4430
    %v4432 = vpop.f32.mrb[0].mxu0
    %v4433 = vadd.f32 %v4390, %v4432
    %v4434 = vpop.f32.mrb[0].mxu0
    %v4435 = vadd.f32 %v4392, %v4434
    %v4436 = vpop.f32.mrb[0].mxu0
    %v4437 = vadd.f32 %v4394, %v4436
    %4438 = vdwg.mxu0
    %4439 = vmatprep.subr.bf16.mxu0 %v2906
    %4440 = vmatpush1.bf16.msra.mxu0 %v2905
    %4441 = vmatprep.subr.bf16.mxu0 %v2914
    %4442 = vmatpush1.bf16.msra.mxu0 %v2913
    %4443 = vmatprep.subr.bf16.mxu0 %v2922
    %4444 = vmatpush1.bf16.msra.mxu0 %v2921
    %4445 = vmatprep.subr.bf16.mxu0 %v2930
    %4446 = vmatpush1.bf16.msra.mxu0 %v2929
    %4447 = vmatprep.subr.bf16.mxu0 %v2938
    %4448 = vmatpush1.bf16.msra.mxu0 %v2937
    %4449 = vmatprep.subr.bf16.mxu0 %v2946
    %4450 = vmatpush1.bf16.msra.mxu0 %v2945
    %4451 = vmatprep.subr.bf16.mxu0 %v2954
    %4452 = vmatpush1.bf16.msra.mxu0 %v2953
    %4453 = vmatprep.subr.bf16.mxu0 %v2962
    %4454 = vmatpush1.bf16.msra.mxu0 %v2961
    %4455 = vmatprep.subr.bf16.mxu0 %v2970
    %4456 = vmatpush1.bf16.msra.mxu0 %v2969
    %4457 = vmatprep.subr.bf16.mxu0 %v2978
    %4458 = vmatpush1.bf16.msra.mxu0 %v2977
    %4459 = vmatprep.subr.bf16.mxu0 %v2986
    %4460 = vmatpush1.bf16.msra.mxu0 %v2985
    %4461 = vmatprep.subr.bf16.mxu0 %v2994
    %4462 = vmatpush1.bf16.msra.mxu0 %v2993
    %4463 = vmatprep.subr.bf16.mxu0 %v3002
    %4464 = vmatpush1.bf16.msra.mxu0 %v3001
    %4465 = vmatprep.subr.bf16.mxu0 %v3010
    %4466 = vmatpush1.bf16.msra.mxu0 %v3009
    %4467 = vmatprep.subr.bf16.mxu0 %v3018
    %4468 = vmatpush1.bf16.msra.mxu0 %v3017
    %4469 = vmatprep.subr.bf16.mxu0 %v3026
    %4470 = vmatpush1.bf16.msra.mxu0 %v3025
    %4471 = vmatprep.mubr.bf16.mxu0 %v802
    %4472 = vmatmul.mubr.bf16.gmra.mrb[0].mxu0 %v801
    %v4473 = vpop.f32.mrb[0].mxu0
    %v4474 = vadd.f32 %v1350, %v4473
    %v4475 = vpop.f32.mrb[0].mxu0
    %v4476 = vadd.f32 %v1354, %v4475
    %v4477 = vpop.f32.mrb[0].mxu0
    %v4478 = vadd.f32 %v1350, %v4477
    %v4479 = vpop.f32.mrb[0].mxu0
    %v4480 = vadd.f32 %v1354, %v4479
    %4481 = vdwg.mxu0
    %4482 = vmatprep.subr.bf16.mxu0 %v3034
    %4483 = vmatpush1.bf16.msra.mxu0 %v3033
    %4484 = vmatprep.subr.bf16.mxu0 %v3042
    %4485 = vmatpush1.bf16.msra.mxu0 %v3041
    %4486 = vmatprep.subr.bf16.mxu0 %v3050
    %4487 = vmatpush1.bf16.msra.mxu0 %v3049
    %4488 = vmatprep.subr.bf16.mxu0 %v3058
    %4489 = vmatpush1.bf16.msra.mxu0 %v3057
    %4490 = vmatprep.subr.bf16.mxu0 %v3066
    %4491 = vmatpush1.bf16.msra.mxu0 %v3065
    %4492 = vmatprep.subr.bf16.mxu0 %v3074
    %4493 = vmatpush1.bf16.msra.mxu0 %v3073
    %4494 = vmatprep.subr.bf16.mxu0 %v3082
    %4495 = vmatpush1.bf16.msra.mxu0 %v3081
    %4496 = vmatprep.subr.bf16.mxu0 %v3090
    %4497 = vmatpush1.bf16.msra.mxu0 %v3089
    %4498 = vmatprep.subr.bf16.mxu0 %v3098
    %4499 = vmatpush1.bf16.msra.mxu0 %v3097
    %4500 = vmatprep.subr.bf16.mxu0 %v3106
    %4501 = vmatpush1.bf16.msra.mxu0 %v3105
    %4502 = vmatprep.subr.bf16.mxu0 %v3114
    %4503 = vmatpush1.bf16.msra.mxu0 %v3113
    %4504 = vmatprep.subr.bf16.mxu0 %v3122
    %4505 = vmatpush1.bf16.msra.mxu0 %v3121
    %4506 = vmatprep.subr.bf16.mxu0 %v3130
    %4507 = vmatpush1.bf16.msra.mxu0 %v3129
    %4508 = vmatprep.subr.bf16.mxu0 %v3138
    %4509 = vmatpush1.bf16.msra.mxu0 %v3137
    %4510 = vmatprep.subr.bf16.mxu0 %v3146
    %4511 = vmatpush1.bf16.msra.mxu0 %v3145
    %4512 = vmatprep.subr.bf16.mxu0 %v3154
    %4513 = vmatpush1.bf16.msra.mxu0 %v3153
    %4514 = vmatprep.mubr.bf16.mxu0 %v804
    %4515 = vmatmul.mubr.bf16.gmra.mrb[0].mxu0 %v803
    %v4516 = vpop.f32.mrb[0].mxu0
    %v4517 = vadd.f32 %v4474, %v4516
    %v4518 = vpop.f32.mrb[0].mxu0
    %v4519 = vadd.f32 %v4476, %v4518
    %v4520 = vpop.f32.mrb[0].mxu0
    %v4521 = vadd.f32 %v4478, %v4520
    %v4522 = vpop.f32.mrb[0].mxu0
    %v4523 = vadd.f32 %v4480, %v4522
    %4524 = vdwg.mxu0
    %4525 = vmatprep.subr.bf16.mxu0 %v3162
    %4526 = vmatpush1.bf16.msra.mxu0 %v3161
    %4527 = vmatprep.subr.bf16.mxu0 %v3170
    %4528 = vmatpush1.bf16.msra.mxu0 %v3169
    %4529 = vmatprep.subr.bf16.mxu0 %v3178
    %4530 = vmatpush1.bf16.msra.mxu0 %v3177
    %4531 = vmatprep.subr.bf16.mxu0 %v3186
    %4532 = vmatpush1.bf16.msra.mxu0 %v3185
    %4533 = vmatprep.subr.bf16.mxu0 %v3194
    %4534 = vmatpush1.bf16.msra.mxu0 %v3193
    %4535 = vmatprep.subr.bf16.mxu0 %v3202
    %4536 = vmatpush1.bf16.msra.mxu0 %v3201
    %4537 = vmatprep.subr.bf16.mxu0 %v3210
    %4538 = vmatpush1.bf16.msra.mxu0 %v3209
    %4539 = vmatprep.subr.bf16.mxu0 %v3218
    %4540 = vmatpush1.bf16.msra.mxu0 %v3217
    %4541 = vmatprep.subr.bf16.mxu0 %v3226
    %4542 = vmatpush1.bf16.msra.mxu0 %v3225
    %4543 = vmatprep.subr.bf16.mxu0 %v3234
    %4544 = vmatpush1.bf16.msra.mxu0 %v3233
    %4545 = vmatprep.subr.bf16.mxu0 %v3242
    %4546 = vmatpush1.bf16.msra.mxu0 %v3241
    %4547 = vmatprep.subr.bf16.mxu0 %v3250
    %4548 = vmatpush1.bf16.msra.mxu0 %v3249
    %4549 = vmatprep.subr.bf16.mxu0 %v3258
    %4550 = vmatpush1.bf16.msra.mxu0 %v3257
    %4551 = vmatprep.subr.bf16.mxu0 %v3266
    %4552 = vmatpush1.bf16.msra.mxu0 %v3265
    %4553 = vmatprep.subr.bf16.mxu0 %v3274
    %4554 = vmatpush1.bf16.msra.mxu0 %v3273
    %4555 = vmatprep.subr.bf16.mxu0 %v3282
    %4556 = vmatpush1.bf16.msra.mxu0 %v3281
    %4557 = vmatprep.mubr.bf16.mxu0 %v806
    %4558 = vmatmul.mubr.bf16.gmra.mrb[0].mxu0 %v805
    %v4559 = vpop.f32.mrb[0].mxu0
    %v4560 = vadd.f32 %v4517, %v4559
    %v4561 = vpop.f32.mrb[0].mxu0
    %v4562 = vadd.f32 %v4519, %v4561
    %v4563 = vpop.f32.mrb[0].mxu0
    %v4564 = vadd.f32 %v4521, %v4563
    %v4565 = vpop.f32.mrb[0].mxu0
    %v4566 = vadd.f32 %v4523, %v4565
    %4567 = vdwg.mxu0
    %4568 = vmatprep.subr.bf16.mxu0 %v3290
    %4569 = vmatpush1.bf16.msra.mxu0 %v3289
    %4570 = vmatprep.subr.bf16.mxu0 %v3298
    %4571 = vmatpush1.bf16.msra.mxu0 %v3297
    %4572 = vmatprep.subr.bf16.mxu0 %v3306
    %4573 = vmatpush1.bf16.msra.mxu0 %v3305
    %4574 = vmatprep.subr.bf16.mxu0 %v3314
    %4575 = vmatpush1.bf16.msra.mxu0 %v3313
    %4576 = vmatprep.subr.bf16.mxu0 %v3322
    %4577 = vmatpush1.bf16.msra.mxu0 %v3321
    %4578 = vmatprep.subr.bf16.mxu0 %v3330
    %4579 = vmatpush1.bf16.msra.mxu0 %v3329
    %4580 = vmatprep.subr.bf16.mxu0 %v3338
    %4581 = vmatpush1.bf16.msra.mxu0 %v3337
    %4582 = vmatprep.subr.bf16.mxu0 %v3346
    %4583 = vmatpush1.bf16.msra.mxu0 %v3345
    %4584 = vmatprep.subr.bf16.mxu0 %v3354
    %4585 = vmatpush1.bf16.msra.mxu0 %v3353
    %4586 = vmatprep.subr.bf16.mxu0 %v3362
    %4587 = vmatpush1.bf16.msra.mxu0 %v3361
    %4588 = vmatprep.subr.bf16.mxu0 %v3370
    %4589 = vmatpush1.bf16.msra.mxu0 %v3369
    %4590 = vmatprep.subr.bf16.mxu0 %v3378
    %4591 = vmatpush1.bf16.msra.mxu0 %v3377
    %4592 = vmatprep.subr.bf16.mxu0 %v3386
    %4593 = vmatpush1.bf16.msra.mxu0 %v3385
    %4594 = vmatprep.subr.bf16.mxu0 %v3394
    %4595 = vmatpush1.bf16.msra.mxu0 %v3393
    %4596 = vmatprep.subr.bf16.mxu0 %v3402
    %4597 = vmatpush1.bf16.msra.mxu0 %v3401
    %4598 = vmatprep.subr.bf16.mxu0 %v3410
    %4599 = vmatpush1.bf16.msra.mxu0 %v3409
    %4600 = vmatprep.mubr.bf16.mxu0 %v808
    %4601 = vmatmul.mubr.bf16.gmra.mrb[0].mxu0 %v807
    %v4602 = vpop.f32.mrb[0].mxu0
    %v4603 = vadd.f32 %v4560, %v4602
    %v4604 = vpop.f32.mrb[0].mxu0
    %v4605 = vadd.f32 %v4562, %v4604
    %v4606 = vpop.f32.mrb[0].mxu0
    %v4607 = vadd.f32 %v4564, %v4606
    %v4608 = vpop.f32.mrb[0].mxu0
    %v4609 = vadd.f32 %v4566, %v4608
    %4610 = vdwg.mxu0
    %v4611 = vmax.f32 %v4087, 0.0
    %v4612 = vmax.f32 %v4089, 0.0
    %v4613 = vmax.f32 %v4259, 0.0
    %v4614 = vmax.f32 %v4261, 0.0
    %v4615 = vmax.f32 %v4431, 0.0
    %v4616 = vmax.f32 %v4433, 0.0
    %v4617 = vmax.f32 %v4603, 0.0
    %v4618 = vmax.f32 %v4605, 0.0
    %v4619 = vmax.f32 %v4091, 0.0
    %v4620 = vmax.f32 %v4093, 0.0
    %v4621 = vmax.f32 %v4263, 0.0
    %v4622 = vmax.f32 %v4265, 0.0
    %v4623 = vmax.f32 %v4435, 0.0
    %v4624 = vmax.f32 %v4437, 0.0
    %v4625 = vmax.f32 %v4607, 0.0
    %v4626 = vmax.f32 %v4609, 0.0
    %v4627 = vpack.c.bf16 %v4619, %v4611
    %v4628 = vpack.c.bf16 %v4620, %v4612
    %v4629 = vpack.c.bf16 %v4621, %v4613
    %v4630 = vpack.c.bf16 %v4622, %v4614
    %v4631 = vpack.c.bf16 %v4623, %v4615
    %v4632 = vpack.c.bf16 %v4624, %v4616
    %v4633 = vpack.c.bf16 %v4625, %v4617
    %v4634 = vpack.c.bf16 %v4626, %v4618
    %v4635 = vld [vmem:[#allocation11] sm:$0xff]
    %v4636 = vld [vmem:[#allocation11 + $0x8] sm:$0xff]
    %v4637 = vld [vmem:[#allocation11 + $0x10] sm:$0xff]
    %v4638 = vld [vmem:[#allocation11 + $0x18] sm:$0xff]
    %v4639 = vld [vmem:[#allocation11 + $0x20] sm:$0xff]
    %v4640 = vld [vmem:[#allocation11 + $0x28] sm:$0xff]
    %v4641 = vld [vmem:[#allocation11 + $0x30] sm:$0xff]
    %v4642 = vld [vmem:[#allocation11 + $0x38] sm:$0xff]
    %v4643 = vld [vmem:[#allocation11 + $0x40] sm:$0xff]
    %v4644 = vld [vmem:[#allocation11 + $0x48] sm:$0xff]
    %v4645 = vld [vmem:[#allocation11 + $0x50] sm:$0xff]
    %v4646 = vld [vmem:[#allocation11 + $0x58] sm:$0xff]
    %v4647 = vld [vmem:[#allocation11 + $0x60] sm:$0xff]
    %v4648 = vld [vmem:[#allocation11 + $0x68] sm:$0xff]
    %v4649 = vld [vmem:[#allocation11 + $0x70] sm:$0xff]
    %v4650 = vld [vmem:[#allocation11 + $0x78] sm:$0xff]
    %v4651 = vld [vmem:[#allocation11 + $0x80] sm:$0xff]
    %v4652 = vld [vmem:[#allocation11 + $0x88] sm:$0xff]
    %v4653 = vld [vmem:[#allocation11 + $0x90] sm:$0xff]
    %v4654 = vld [vmem:[#allocation11 + $0x98] sm:$0xff]
    %v4655 = vld [vmem:[#allocation11 + $0xa0] sm:$0xff]
    %v4656 = vld [vmem:[#allocation11 + $0xa8] sm:$0xff]
    %v4657 = vld [vmem:[#allocation11 + $0xb0] sm:$0xff]
    %v4658 = vld [vmem:[#allocation11 + $0xb8] sm:$0xff]
    %v4659 = vld [vmem:[#allocation11 + $0xc0] sm:$0xff]
    %v4660 = vld [vmem:[#allocation11 + $0xc8] sm:$0xff]
    %v4661 = vld [vmem:[#allocation11 + $0xd0] sm:$0xff]
    %v4662 = vld [vmem:[#allocation11 + $0xd8] sm:$0xff]
    %v4663 = vld [vmem:[#allocation11 + $0xe0] sm:$0xff]
    %v4664 = vld [vmem:[#allocation11 + $0xe8] sm:$0xff]
    %v4665 = vld [vmem:[#allocation11 + $0xf0] sm:$0xff]
    %v4666 = vld [vmem:[#allocation11 + $0xf8] sm:$0xff]
    %v4667 = vld [vmem:[#allocation11 + $0x100] sm:$0xff]
    %v4668 = vld [vmem:[#allocation11 + $0x108] sm:$0xff]
    %v4669 = vld [vmem:[#allocation11 + $0x110] sm:$0xff]
    %v4670 = vld [vmem:[#allocation11 + $0x118] sm:$0xff]
    %v4671 = vld [vmem:[#allocation11 + $0x120] sm:$0xff]
    %v4672 = vld [vmem:[#allocation11 + $0x128] sm:$0xff]
    %v4673 = vld [vmem:[#allocation11 + $0x130] sm:$0xff]
    %v4674 = vld [vmem:[#allocation11 + $0x138] sm:$0xff]
    %v4675 = vld [vmem:[#allocation11 + $0x140] sm:$0xff]
    %v4676 = vld [vmem:[#allocation11 + $0x148] sm:$0xff]
    %v4677 = vld [vmem:[#allocation11 + $0x150] sm:$0xff]
    %v4678 = vld [vmem:[#allocation11 + $0x158] sm:$0xff]
    %v4679 = vld [vmem:[#allocation11 + $0x160] sm:$0xff]
    %v4680 = vld [vmem:[#allocation11 + $0x168] sm:$0xff]
    %v4681 = vld [vmem:[#allocation11 + $0x170] sm:$0xff]
    %v4682 = vld [vmem:[#allocation11 + $0x178] sm:$0xff]
    %v4683 = vld [vmem:[#allocation11 + $0x180] sm:$0xff]
    %v4684 = vld [vmem:[#allocation11 + $0x188] sm:$0xff]
    %v4685 = vld [vmem:[#allocation11 + $0x190] sm:$0xff]
    %v4686 = vld [vmem:[#allocation11 + $0x198] sm:$0xff]
    %v4687 = vld [vmem:[#allocation11 + $0x1a0] sm:$0xff]
    %v4688 = vld [vmem:[#allocation11 + $0x1a8] sm:$0xff]
    %v4689 = vld [vmem:[#allocation11 + $0x1b0] sm:$0xff]
    %v4690 = vld [vmem:[#allocation11 + $0x1b8] sm:$0xff]
    %v4691 = vld [vmem:[#allocation11 + $0x1c0] sm:$0xff]
    %v4692 = vld [vmem:[#allocation11 + $0x1c8] sm:$0xff]
    %v4693 = vld [vmem:[#allocation11 + $0x1d0] sm:$0xff]
    %v4694 = vld [vmem:[#allocation11 + $0x1d8] sm:$0xff]
    %v4695 = vld [vmem:[#allocation11 + $0x1e0] sm:$0xff]
    %v4696 = vld [vmem:[#allocation11 + $0x1e8] sm:$0xff]
    %v4697 = vld [vmem:[#allocation11 + $0x1f0] sm:$0xff]
    %v4698 = vld [vmem:[#allocation11 + $0x1f8] sm:$0xff]
    %v4699 = vld [vmem:[#allocation11 + $0x200] sm:$0xff]
    %v4700 = vld [vmem:[#allocation11 + $0x208] sm:$0xff]
    %v4701 = vld [vmem:[#allocation11 + $0x210] sm:$0xff]
    %v4702 = vld [vmem:[#allocation11 + $0x218] sm:$0xff]
    %v4703 = vld [vmem:[#allocation11 + $0x220] sm:$0xff]
    %v4704 = vld [vmem:[#allocation11 + $0x228] sm:$0xff]
    %v4705 = vld [vmem:[#allocation11 + $0x230] sm:$0xff]
    %v4706 = vld [vmem:[#allocation11 + $0x238] sm:$0xff]
    %v4707 = vld [vmem:[#allocation11 + $0x240] sm:$0xff]
    %v4708 = vld [vmem:[#allocation11 + $0x248] sm:$0xff]
    %v4709 = vld [vmem:[#allocation11 + $0x250] sm:$0xff]
    %v4710 = vld [vmem:[#allocation11 + $0x258] sm:$0xff]
    %v4711 = vld [vmem:[#allocation11 + $0x260] sm:$0xff]
    %v4712 = vld [vmem:[#allocation11 + $0x268] sm:$0xff]
    %v4713 = vld [vmem:[#allocation11 + $0x270] sm:$0xff]
    %v4714 = vld [vmem:[#allocation11 + $0x278] sm:$0xff]
    %v4715 = vld [vmem:[#allocation11 + $0x280] sm:$0xff]
    %v4716 = vld [vmem:[#allocation11 + $0x288] sm:$0xff]
    %v4717 = vld [vmem:[#allocation11 + $0x290] sm:$0xff]
    %v4718 = vld [vmem:[#allocation11 + $0x298] sm:$0xff]
    %v4719 = vld [vmem:[#allocation11 + $0x2a0] sm:$0xff]
    %v4720 = vld [vmem:[#allocation11 + $0x2a8] sm:$0xff]
    %v4721 = vld [vmem:[#allocation11 + $0x2b0] sm:$0xff]
    %v4722 = vld [vmem:[#allocation11 + $0x2b8] sm:$0xff]
    %v4723 = vld [vmem:[#allocation11 + $0x2c0] sm:$0xff]
    %v4724 = vld [vmem:[#allocation11 + $0x2c8] sm:$0xff]
    %v4725 = vld [vmem:[#allocation11 + $0x2d0] sm:$0xff]
    %v4726 = vld [vmem:[#allocation11 + $0x2d8] sm:$0xff]
    %v4727 = vld [vmem:[#allocation11 + $0x2e0] sm:$0xff]
    %v4728 = vld [vmem:[#allocation11 + $0x2e8] sm:$0xff]
    %v4729 = vld [vmem:[#allocation11 + $0x2f0] sm:$0xff]
    %v4730 = vld [vmem:[#allocation11 + $0x2f8] sm:$0xff]
    %v4731 = vld [vmem:[#allocation11 + $0x300] sm:$0xff]
    %v4732 = vld [vmem:[#allocation11 + $0x308] sm:$0xff]
    %v4733 = vld [vmem:[#allocation11 + $0x310] sm:$0xff]
    %v4734 = vld [vmem:[#allocation11 + $0x318] sm:$0xff]
    %v4735 = vld [vmem:[#allocation11 + $0x320] sm:$0xff]
    %v4736 = vld [vmem:[#allocation11 + $0x328] sm:$0xff]
    %v4737 = vld [vmem:[#allocation11 + $0x330] sm:$0xff]
    %v4738 = vld [vmem:[#allocation11 + $0x338] sm:$0xff]
    %v4739 = vld [vmem:[#allocation11 + $0x340] sm:$0xff]
    %v4740 = vld [vmem:[#allocation11 + $0x348] sm:$0xff]
    %v4741 = vld [vmem:[#allocation11 + $0x350] sm:$0xff]
    %v4742 = vld [vmem:[#allocation11 + $0x358] sm:$0xff]
    %v4743 = vld [vmem:[#allocation11 + $0x360] sm:$0xff]
    %v4744 = vld [vmem:[#allocation11 + $0x368] sm:$0xff]
    %v4745 = vld [vmem:[#allocation11 + $0x370] sm:$0xff]
    %v4746 = vld [vmem:[#allocation11 + $0x378] sm:$0xff]
    %v4747 = vld [vmem:[#allocation11 + $0x380] sm:$0xff]
    %v4748 = vld [vmem:[#allocation11 + $0x388] sm:$0xff]
    %v4749 = vld [vmem:[#allocation11 + $0x390] sm:$0xff]
    %v4750 = vld [vmem:[#allocation11 + $0x398] sm:$0xff]
    %v4751 = vld [vmem:[#allocation11 + $0x3a0] sm:$0xff]
    %v4752 = vld [vmem:[#allocation11 + $0x3a8] sm:$0xff]
    %v4753 = vld [vmem:[#allocation11 + $0x3b0] sm:$0xff]
    %v4754 = vld [vmem:[#allocation11 + $0x3b8] sm:$0xff]
    %v4755 = vld [vmem:[#allocation11 + $0x3c0] sm:$0xff]
    %v4756 = vld [vmem:[#allocation11 + $0x3c8] sm:$0xff]
    %v4757 = vld [vmem:[#allocation11 + $0x3d0] sm:$0xff]
    %v4758 = vld [vmem:[#allocation11 + $0x3d8] sm:$0xff]
    %v4759 = vld [vmem:[#allocation11 + $0x3e0] sm:$0xff]
    %v4760 = vld [vmem:[#allocation11 + $0x3e8] sm:$0xff]
    %v4761 = vld [vmem:[#allocation11 + $0x3f0] sm:$0xff]
    %v4762 = vld [vmem:[#allocation11 + $0x3f8] sm:$0xff]
    %v4763 = vld [vmem:[#allocation11 + $0x400] sm:$0xff]
    %v4764 = vld [vmem:[#allocation11 + $0x408] sm:$0xff]
    %v4765 = vld [vmem:[#allocation11 + $0x410] sm:$0xff]
    %v4766 = vld [vmem:[#allocation11 + $0x418] sm:$0xff]
    %v4767 = vld [vmem:[#allocation11 + $0x420] sm:$0xff]
    %v4768 = vld [vmem:[#allocation11 + $0x428] sm:$0xff]
    %v4769 = vld [vmem:[#allocation11 + $0x430] sm:$0xff]
    %v4770 = vld [vmem:[#allocation11 + $0x438] sm:$0xff]
    %v4771 = vld [vmem:[#allocation11 + $0x440] sm:$0xff]
    %v4772 = vld [vmem:[#allocation11 + $0x448] sm:$0xff]
    %v4773 = vld [vmem:[#allocation11 + $0x450] sm:$0xff]
    %v4774 = vld [vmem:[#allocation11 + $0x458] sm:$0xff]
    %v4775 = vld [vmem:[#allocation11 + $0x460] sm:$0xff]
    %v4776 = vld [vmem:[#allocation11 + $0x468] sm:$0xff]
    %v4777 = vld [vmem:[#allocation11 + $0x470] sm:$0xff]
    %v4778 = vld [vmem:[#allocation11 + $0x478] sm:$0xff]
    %v4779 = vld [vmem:[#allocation11 + $0x480] sm:$0xff]
    %v4780 = vld [vmem:[#allocation11 + $0x488] sm:$0xff]
    %v4781 = vld [vmem:[#allocation11 + $0x490] sm:$0xff]
    %v4782 = vld [vmem:[#allocation11 + $0x498] sm:$0xff]
    %v4783 = vld [vmem:[#allocation11 + $0x4a0] sm:$0xff]
    %v4784 = vld [vmem:[#allocation11 + $0x4a8] sm:$0xff]
    %v4785 = vld [vmem:[#allocation11 + $0x4b0] sm:$0xff]
    %v4786 = vld [vmem:[#allocation11 + $0x4b8] sm:$0xff]
    %v4787 = vld [vmem:[#allocation11 + $0x4c0] sm:$0xff]
    %v4788 = vld [vmem:[#allocation11 + $0x4c8] sm:$0xff]
    %v4789 = vld [vmem:[#allocation11 + $0x4d0] sm:$0xff]
    %v4790 = vld [vmem:[#allocation11 + $0x4d8] sm:$0xff]
    %v4791 = vld [vmem:[#allocation11 + $0x4e0] sm:$0xff]
    %v4792 = vld [vmem:[#allocation11 + $0x4e8] sm:$0xff]
    %v4793 = vld [vmem:[#allocation11 + $0x4f0] sm:$0xff]
    %v4794 = vld [vmem:[#allocation11 + $0x4f8] sm:$0xff]
    %v4795 = vld [vmem:[#allocation11 + $0x500] sm:$0xff]
    %v4796 = vld [vmem:[#allocation11 + $0x508] sm:$0xff]
    %v4797 = vld [vmem:[#allocation11 + $0x510] sm:$0xff]
    %v4798 = vld [vmem:[#allocation11 + $0x518] sm:$0xff]
    %v4799 = vld [vmem:[#allocation11 + $0x520] sm:$0xff]
    %v4800 = vld [vmem:[#allocation11 + $0x528] sm:$0xff]
    %v4801 = vld [vmem:[#allocation11 + $0x530] sm:$0xff]
    %v4802 = vld [vmem:[#allocation11 + $0x538] sm:$0xff]
    %v4803 = vld [vmem:[#allocation11 + $0x540] sm:$0xff]
    %v4804 = vld [vmem:[#allocation11 + $0x548] sm:$0xff]
    %v4805 = vld [vmem:[#allocation11 + $0x550] sm:$0xff]
    %v4806 = vld [vmem:[#allocation11 + $0x558] sm:$0xff]
    %v4807 = vld [vmem:[#allocation11 + $0x560] sm:$0xff]
    %v4808 = vld [vmem:[#allocation11 + $0x568] sm:$0xff]
    %v4809 = vld [vmem:[#allocation11 + $0x570] sm:$0xff]
    %v4810 = vld [vmem:[#allocation11 + $0x578] sm:$0xff]
    %v4811 = vld [vmem:[#allocation11 + $0x580] sm:$0xff]
    %v4812 = vld [vmem:[#allocation11 + $0x588] sm:$0xff]
    %v4813 = vld [vmem:[#allocation11 + $0x590] sm:$0xff]
    %v4814 = vld [vmem:[#allocation11 + $0x598] sm:$0xff]
    %v4815 = vld [vmem:[#allocation11 + $0x5a0] sm:$0xff]
    %v4816 = vld [vmem:[#allocation11 + $0x5a8] sm:$0xff]
    %v4817 = vld [vmem:[#allocation11 + $0x5b0] sm:$0xff]
    %v4818 = vld [vmem:[#allocation11 + $0x5b8] sm:$0xff]
    %v4819 = vld [vmem:[#allocation11 + $0x5c0] sm:$0xff]
    %v4820 = vld [vmem:[#allocation11 + $0x5c8] sm:$0xff]
    %v4821 = vld [vmem:[#allocation11 + $0x5d0] sm:$0xff]
    %v4822 = vld [vmem:[#allocation11 + $0x5d8] sm:$0xff]
    %v4823 = vld [vmem:[#allocation11 + $0x5e0] sm:$0xff]
    %v4824 = vld [vmem:[#allocation11 + $0x5e8] sm:$0xff]
    %v4825 = vld [vmem:[#allocation11 + $0x5f0] sm:$0xff]
    %v4826 = vld [vmem:[#allocation11 + $0x5f8] sm:$0xff]
    %v4827 = vld [vmem:[#allocation11 + $0x600] sm:$0xff]
    %v4828 = vld [vmem:[#allocation11 + $0x608] sm:$0xff]
    %v4829 = vld [vmem:[#allocation11 + $0x610] sm:$0xff]
    %v4830 = vld [vmem:[#allocation11 + $0x618] sm:$0xff]
    %v4831 = vld [vmem:[#allocation11 + $0x620] sm:$0xff]
    %v4832 = vld [vmem:[#allocation11 + $0x628] sm:$0xff]
    %v4833 = vld [vmem:[#allocation11 + $0x630] sm:$0xff]
    %v4834 = vld [vmem:[#allocation11 + $0x638] sm:$0xff]
    %v4835 = vld [vmem:[#allocation11 + $0x640] sm:$0xff]
    %v4836 = vld [vmem:[#allocation11 + $0x648] sm:$0xff]
    %v4837 = vld [vmem:[#allocation11 + $0x650] sm:$0xff]
    %v4838 = vld [vmem:[#allocation11 + $0x658] sm:$0xff]
    %v4839 = vld [vmem:[#allocation11 + $0x660] sm:$0xff]
    %v4840 = vld [vmem:[#allocation11 + $0x668] sm:$0xff]
    %v4841 = vld [vmem:[#allocation11 + $0x670] sm:$0xff]
    %v4842 = vld [vmem:[#allocation11 + $0x678] sm:$0xff]
    %v4843 = vld [vmem:[#allocation11 + $0x680] sm:$0xff]
    %v4844 = vld [vmem:[#allocation11 + $0x688] sm:$0xff]
    %v4845 = vld [vmem:[#allocation11 + $0x690] sm:$0xff]
    %v4846 = vld [vmem:[#allocation11 + $0x698] sm:$0xff]
    %v4847 = vld [vmem:[#allocation11 + $0x6a0] sm:$0xff]
    %v4848 = vld [vmem:[#allocation11 + $0x6a8] sm:$0xff]
    %v4849 = vld [vmem:[#allocation11 + $0x6b0] sm:$0xff]
    %v4850 = vld [vmem:[#allocation11 + $0x6b8] sm:$0xff]
    %v4851 = vld [vmem:[#allocation11 + $0x6c0] sm:$0xff]
    %v4852 = vld [vmem:[#allocation11 + $0x6c8] sm:$0xff]
    %v4853 = vld [vmem:[#allocation11 + $0x6d0] sm:$0xff]
    %v4854 = vld [vmem:[#allocation11 + $0x6d8] sm:$0xff]
    %v4855 = vld [vmem:[#allocation11 + $0x6e0] sm:$0xff]
    %v4856 = vld [vmem:[#allocation11 + $0x6e8] sm:$0xff]
    %v4857 = vld [vmem:[#allocation11 + $0x6f0] sm:$0xff]
    %v4858 = vld [vmem:[#allocation11 + $0x6f8] sm:$0xff]
    %v4859 = vld [vmem:[#allocation11 + $0x700] sm:$0xff]
    %v4860 = vld [vmem:[#allocation11 + $0x708] sm:$0xff]
    %v4861 = vld [vmem:[#allocation11 + $0x710] sm:$0xff]
    %v4862 = vld [vmem:[#allocation11 + $0x718] sm:$0xff]
    %v4863 = vld [vmem:[#allocation11 + $0x720] sm:$0xff]
    %v4864 = vld [vmem:[#allocation11 + $0x728] sm:$0xff]
    %v4865 = vld [vmem:[#allocation11 + $0x730] sm:$0xff]
    %v4866 = vld [vmem:[#allocation11 + $0x738] sm:$0xff]
    %v4867 = vld [vmem:[#allocation11 + $0x740] sm:$0xff]
    %v4868 = vld [vmem:[#allocation11 + $0x748] sm:$0xff]
    %v4869 = vld [vmem:[#allocation11 + $0x750] sm:$0xff]
    %v4870 = vld [vmem:[#allocation11 + $0x758] sm:$0xff]
    %v4871 = vld [vmem:[#allocation11 + $0x760] sm:$0xff]
    %v4872 = vld [vmem:[#allocation11 + $0x768] sm:$0xff]
    %v4873 = vld [vmem:[#allocation11 + $0x770] sm:$0xff]
    %v4874 = vld [vmem:[#allocation11 + $0x778] sm:$0xff]
    %v4875 = vld [vmem:[#allocation11 + $0x780] sm:$0xff]
    %v4876 = vld [vmem:[#allocation11 + $0x788] sm:$0xff]
    %v4877 = vld [vmem:[#allocation11 + $0x790] sm:$0xff]
    %v4878 = vld [vmem:[#allocation11 + $0x798] sm:$0xff]
    %v4879 = vld [vmem:[#allocation11 + $0x7a0] sm:$0xff]
    %v4880 = vld [vmem:[#allocation11 + $0x7a8] sm:$0xff]
    %v4881 = vld [vmem:[#allocation11 + $0x7b0] sm:$0xff]
    %v4882 = vld [vmem:[#allocation11 + $0x7b8] sm:$0xff]
    %v4883 = vld [vmem:[#allocation11 + $0x7c0] sm:$0xff]
    %v4884 = vld [vmem:[#allocation11 + $0x7c8] sm:$0xff]
    %v4885 = vld [vmem:[#allocation11 + $0x7d0] sm:$0xff]
    %v4886 = vld [vmem:[#allocation11 + $0x7d8] sm:$0xff]
    %v4887 = vld [vmem:[#allocation11 + $0x7e0] sm:$0xff]
    %v4888 = vld [vmem:[#allocation11 + $0x7e8] sm:$0xff]
    %v4889 = vld [vmem:[#allocation11 + $0x7f0] sm:$0xff]
    %v4890 = vld [vmem:[#allocation11 + $0x7f8] sm:$0xff]
    %v4891 = vld [vmem:[#allocation11 + $0x800] sm:$0xff]
    %v4892 = vld [vmem:[#allocation11 + $0x808] sm:$0xff]
    %v4893 = vld [vmem:[#allocation11 + $0x810] sm:$0xff]
    %v4894 = vld [vmem:[#allocation11 + $0x818] sm:$0xff]
    %v4895 = vld [vmem:[#allocation11 + $0x820] sm:$0xff]
    %v4896 = vld [vmem:[#allocation11 + $0x828] sm:$0xff]
    %v4897 = vld [vmem:[#allocation11 + $0x830] sm:$0xff]
    %v4898 = vld [vmem:[#allocation11 + $0x838] sm:$0xff]
    %v4899 = vld [vmem:[#allocation11 + $0x840] sm:$0xff]
    %v4900 = vld [vmem:[#allocation11 + $0x848] sm:$0xff]
    %v4901 = vld [vmem:[#allocation11 + $0x850] sm:$0xff]
    %v4902 = vld [vmem:[#allocation11 + $0x858] sm:$0xff]
    %v4903 = vld [vmem:[#allocation11 + $0x860] sm:$0xff]
    %v4904 = vld [vmem:[#allocation11 + $0x868] sm:$0xff]
    %v4905 = vld [vmem:[#allocation11 + $0x870] sm:$0xff]
    %v4906 = vld [vmem:[#allocation11 + $0x878] sm:$0xff]
    %v4907 = vld [vmem:[#allocation11 + $0x880] sm:$0xff]
    %v4908 = vld [vmem:[#allocation11 + $0x888] sm:$0xff]
    %v4909 = vld [vmem:[#allocation11 + $0x890] sm:$0xff]
    %v4910 = vld [vmem:[#allocation11 + $0x898] sm:$0xff]
    %v4911 = vld [vmem:[#allocation11 + $0x8a0] sm:$0xff]
    %v4912 = vld [vmem:[#allocation11 + $0x8a8] sm:$0xff]
    %v4913 = vld [vmem:[#allocation11 + $0x8b0] sm:$0xff]
    %v4914 = vld [vmem:[#allocation11 + $0x8b8] sm:$0xff]
    %v4915 = vld [vmem:[#allocation11 + $0x8c0] sm:$0xff]
    %v4916 = vld [vmem:[#allocation11 + $0x8c8] sm:$0xff]
    %v4917 = vld [vmem:[#allocation11 + $0x8d0] sm:$0xff]
    %v4918 = vld [vmem:[#allocation11 + $0x8d8] sm:$0xff]
    %v4919 = vld [vmem:[#allocation11 + $0x8e0] sm:$0xff]
    %v4920 = vld [vmem:[#allocation11 + $0x8e8] sm:$0xff]
    %v4921 = vld [vmem:[#allocation11 + $0x8f0] sm:$0xff]
    %v4922 = vld [vmem:[#allocation11 + $0x8f8] sm:$0xff]
    %v4923 = vld [vmem:[#allocation11 + $0x900] sm:$0xff]
    %v4924 = vld [vmem:[#allocation11 + $0x908] sm:$0xff]
    %v4925 = vld [vmem:[#allocation11 + $0x910] sm:$0xff]
    %v4926 = vld [vmem:[#allocation11 + $0x918] sm:$0xff]
    %v4927 = vld [vmem:[#allocation11 + $0x920] sm:$0xff]
    %v4928 = vld [vmem:[#allocation11 + $0x928] sm:$0xff]
    %v4929 = vld [vmem:[#allocation11 + $0x930] sm:$0xff]
    %v4930 = vld [vmem:[#allocation11 + $0x938] sm:$0xff]
    %v4931 = vld [vmem:[#allocation11 + $0x940] sm:$0xff]
    %v4932 = vld [vmem:[#allocation11 + $0x948] sm:$0xff]
    %v4933 = vld [vmem:[#allocation11 + $0x950] sm:$0xff]
    %v4934 = vld [vmem:[#allocation11 + $0x958] sm:$0xff]
    %v4935 = vld [vmem:[#allocation11 + $0x960] sm:$0xff]
    %v4936 = vld [vmem:[#allocation11 + $0x968] sm:$0xff]
    %v4937 = vld [vmem:[#allocation11 + $0x970] sm:$0xff]
    %v4938 = vld [vmem:[#allocation11 + $0x978] sm:$0xff]
    %v4939 = vld [vmem:[#allocation11 + $0x980] sm:$0xff]
    %v4940 = vld [vmem:[#allocation11 + $0x988] sm:$0xff]
    %v4941 = vld [vmem:[#allocation11 + $0x990] sm:$0xff]
    %v4942 = vld [vmem:[#allocation11 + $0x998] sm:$0xff]
    %v4943 = vld [vmem:[#allocation11 + $0x9a0] sm:$0xff]
    %v4944 = vld [vmem:[#allocation11 + $0x9a8] sm:$0xff]
    %v4945 = vld [vmem:[#allocation11 + $0x9b0] sm:$0xff]
    %v4946 = vld [vmem:[#allocation11 + $0x9b8] sm:$0xff]
    %v4947 = vld [vmem:[#allocation11 + $0x9c0] sm:$0xff]
    %v4948 = vld [vmem:[#allocation11 + $0x9c8] sm:$0xff]
    %v4949 = vld [vmem:[#allocation11 + $0x9d0] sm:$0xff]
    %v4950 = vld [vmem:[#allocation11 + $0x9d8] sm:$0xff]
    %v4951 = vld [vmem:[#allocation11 + $0x9e0] sm:$0xff]
    %v4952 = vld [vmem:[#allocation11 + $0x9e8] sm:$0xff]
    %v4953 = vld [vmem:[#allocation11 + $0x9f0] sm:$0xff]
    %v4954 = vld [vmem:[#allocation11 + $0x9f8] sm:$0xff]
    %v4955 = vld [vmem:[#allocation11 + $0xa00] sm:$0xff]
    %v4956 = vld [vmem:[#allocation11 + $0xa08] sm:$0xff]
    %v4957 = vld [vmem:[#allocation11 + $0xa10] sm:$0xff]
    %v4958 = vld [vmem:[#allocation11 + $0xa18] sm:$0xff]
    %v4959 = vld [vmem:[#allocation11 + $0xa20] sm:$0xff]
    %v4960 = vld [vmem:[#allocation11 + $0xa28] sm:$0xff]
    %v4961 = vld [vmem:[#allocation11 + $0xa30] sm:$0xff]
    %v4962 = vld [vmem:[#allocation11 + $0xa38] sm:$0xff]
    %v4963 = vld [vmem:[#allocation11 + $0xa40] sm:$0xff]
    %v4964 = vld [vmem:[#allocation11 + $0xa48] sm:$0xff]
    %v4965 = vld [vmem:[#allocation11 + $0xa50] sm:$0xff]
    %v4966 = vld [vmem:[#allocation11 + $0xa58] sm:$0xff]
    %v4967 = vld [vmem:[#allocation11 + $0xa60] sm:$0xff]
    %v4968 = vld [vmem:[#allocation11 + $0xa68] sm:$0xff]
    %v4969 = vld [vmem:[#allocation11 + $0xa70] sm:$0xff]
    %v4970 = vld [vmem:[#allocation11 + $0xa78] sm:$0xff]
    %v4971 = vld [vmem:[#allocation11 + $0xa80] sm:$0xff]
    %v4972 = vld [vmem:[#allocation11 + $0xa88] sm:$0xff]
    %v4973 = vld [vmem:[#allocation11 + $0xa90] sm:$0xff]
    %v4974 = vld [vmem:[#allocation11 + $0xa98] sm:$0xff]
    %v4975 = vld [vmem:[#allocation11 + $0xaa0] sm:$0xff]
    %v4976 = vld [vmem:[#allocation11 + $0xaa8] sm:$0xff]
    %v4977 = vld [vmem:[#allocation11 + $0xab0] sm:$0xff]
    %v4978 = vld [vmem:[#allocation11 + $0xab8] sm:$0xff]
    %v4979 = vld [vmem:[#allocation11 + $0xac0] sm:$0xff]
    %v4980 = vld [vmem:[#allocation11 + $0xac8] sm:$0xff]
    %v4981 = vld [vmem:[#allocation11 + $0xad0] sm:$0xff]
    %v4982 = vld [vmem:[#allocation11 + $0xad8] sm:$0xff]
    %v4983 = vld [vmem:[#allocation11 + $0xae0] sm:$0xff]
    %v4984 = vld [vmem:[#allocation11 + $0xae8] sm:$0xff]
    %v4985 = vld [vmem:[#allocation11 + $0xaf0] sm:$0xff]
    %v4986 = vld [vmem:[#allocation11 + $0xaf8] sm:$0xff]
    %v4987 = vld [vmem:[#allocation11 + $0xb00] sm:$0xff]
    %v4988 = vld [vmem:[#allocation11 + $0xb08] sm:$0xff]
    %v4989 = vld [vmem:[#allocation11 + $0xb10] sm:$0xff]
    %v4990 = vld [vmem:[#allocation11 + $0xb18] sm:$0xff]
    %v4991 = vld [vmem:[#allocation11 + $0xb20] sm:$0xff]
    %v4992 = vld [vmem:[#allocation11 + $0xb28] sm:$0xff]
    %v4993 = vld [vmem:[#allocation11 + $0xb30] sm:$0xff]
    %v4994 = vld [vmem:[#allocation11 + $0xb38] sm:$0xff]
    %v4995 = vld [vmem:[#allocation11 + $0xb40] sm:$0xff]
    %v4996 = vld [vmem:[#allocation11 + $0xb48] sm:$0xff]
    %v4997 = vld [vmem:[#allocation11 + $0xb50] sm:$0xff]
    %v4998 = vld [vmem:[#allocation11 + $0xb58] sm:$0xff]
    %v4999 = vld [vmem:[#allocation11 + $0xb60] sm:$0xff]
    %v5000 = vld [vmem:[#allocation11 + $0xb68] sm:$0xff]
    %v5001 = vld [vmem:[#allocation11 + $0xb70] sm:$0xff]
    %v5002 = vld [vmem:[#allocation11 + $0xb78] sm:$0xff]
    %v5003 = vld [vmem:[#allocation11 + $0xb80] sm:$0xff]
    %v5004 = vld [vmem:[#allocation11 + $0xb88] sm:$0xff]
    %v5005 = vld [vmem:[#allocation11 + $0xb90] sm:$0xff]
    %v5006 = vld [vmem:[#allocation11 + $0xb98] sm:$0xff]
    %v5007 = vld [vmem:[#allocation11 + $0xba0] sm:$0xff]
    %v5008 = vld [vmem:[#allocation11 + $0xba8] sm:$0xff]
    %v5009 = vld [vmem:[#allocation11 + $0xbb0] sm:$0xff]
    %v5010 = vld [vmem:[#allocation11 + $0xbb8] sm:$0xff]
    %v5011 = vld [vmem:[#allocation11 + $0xbc0] sm:$0xff]
    %v5012 = vld [vmem:[#allocation11 + $0xbc8] sm:$0xff]
    %v5013 = vld [vmem:[#allocation11 + $0xbd0] sm:$0xff]
    %v5014 = vld [vmem:[#allocation11 + $0xbd8] sm:$0xff]
    %v5015 = vld [vmem:[#allocation11 + $0xbe0] sm:$0xff]
    %v5016 = vld [vmem:[#allocation11 + $0xbe8] sm:$0xff]
    %v5017 = vld [vmem:[#allocation11 + $0xbf0] sm:$0xff]
    %v5018 = vld [vmem:[#allocation11 + $0xbf8] sm:$0xff]
    %v5019 = vld [vmem:[#allocation11 + $0xc00] sm:$0xff]
    %v5020 = vld [vmem:[#allocation11 + $0xc08] sm:$0xff]
    %v5021 = vld [vmem:[#allocation11 + $0xc10] sm:$0xff]
    %v5022 = vld [vmem:[#allocation11 + $0xc18] sm:$0xff]
    %v5023 = vld [vmem:[#allocation11 + $0xc20] sm:$0xff]
    %v5024 = vld [vmem:[#allocation11 + $0xc28] sm:$0xff]
    %v5025 = vld [vmem:[#allocation11 + $0xc30] sm:$0xff]
    %v5026 = vld [vmem:[#allocation11 + $0xc38] sm:$0xff]
    %v5027 = vld [vmem:[#allocation11 + $0xc40] sm:$0xff]
    %v5028 = vld [vmem:[#allocation11 + $0xc48] sm:$0xff]
    %v5029 = vld [vmem:[#allocation11 + $0xc50] sm:$0xff]
    %v5030 = vld [vmem:[#allocation11 + $0xc58] sm:$0xff]
    %v5031 = vld [vmem:[#allocation11 + $0xc60] sm:$0xff]
    %v5032 = vld [vmem:[#allocation11 + $0xc68] sm:$0xff]
    %v5033 = vld [vmem:[#allocation11 + $0xc70] sm:$0xff]
    %v5034 = vld [vmem:[#allocation11 + $0xc78] sm:$0xff]
    %v5035 = vld [vmem:[#allocation11 + $0xc80] sm:$0xff]
    %v5036 = vld [vmem:[#allocation11 + $0xc88] sm:$0xff]
    %v5037 = vld [vmem:[#allocation11 + $0xc90] sm:$0xff]
    %v5038 = vld [vmem:[#allocation11 + $0xc98] sm:$0xff]
    %v5039 = vld [vmem:[#allocation11 + $0xca0] sm:$0xff]
    %v5040 = vld [vmem:[#allocation11 + $0xca8] sm:$0xff]
    %v5041 = vld [vmem:[#allocation11 + $0xcb0] sm:$0xff]
    %v5042 = vld [vmem:[#allocation11 + $0xcb8] sm:$0xff]
    %v5043 = vld [vmem:[#allocation11 + $0xcc0] sm:$0xff]
    %v5044 = vld [vmem:[#allocation11 + $0xcc8] sm:$0xff]
    %v5045 = vld [vmem:[#allocation11 + $0xcd0] sm:$0xff]
    %v5046 = vld [vmem:[#allocation11 + $0xcd8] sm:$0xff]
    %v5047 = vld [vmem:[#allocation11 + $0xce0] sm:$0xff]
    %v5048 = vld [vmem:[#allocation11 + $0xce8] sm:$0xff]
    %v5049 = vld [vmem:[#allocation11 + $0xcf0] sm:$0xff]
    %v5050 = vld [vmem:[#allocation11 + $0xcf8] sm:$0xff]
    %v5051 = vld [vmem:[#allocation11 + $0xd00] sm:$0xff]
    %v5052 = vld [vmem:[#allocation11 + $0xd08] sm:$0xff]
    %v5053 = vld [vmem:[#allocation11 + $0xd10] sm:$0xff]
    %v5054 = vld [vmem:[#allocation11 + $0xd18] sm:$0xff]
    %v5055 = vld [vmem:[#allocation11 + $0xd20] sm:$0xff]
    %v5056 = vld [vmem:[#allocation11 + $0xd28] sm:$0xff]
    %v5057 = vld [vmem:[#allocation11 + $0xd30] sm:$0xff]
    %v5058 = vld [vmem:[#allocation11 + $0xd38] sm:$0xff]
    %v5059 = vld [vmem:[#allocation11 + $0xd40] sm:$0xff]
    %v5060 = vld [vmem:[#allocation11 + $0xd48] sm:$0xff]
    %v5061 = vld [vmem:[#allocation11 + $0xd50] sm:$0xff]
    %v5062 = vld [vmem:[#allocation11 + $0xd58] sm:$0xff]
    %v5063 = vld [vmem:[#allocation11 + $0xd60] sm:$0xff]
    %v5064 = vld [vmem:[#allocation11 + $0xd68] sm:$0xff]
    %v5065 = vld [vmem:[#allocation11 + $0xd70] sm:$0xff]
    %v5066 = vld [vmem:[#allocation11 + $0xd78] sm:$0xff]
    %v5067 = vld [vmem:[#allocation11 + $0xd80] sm:$0xff]
    %v5068 = vld [vmem:[#allocation11 + $0xd88] sm:$0xff]
    %v5069 = vld [vmem:[#allocation11 + $0xd90] sm:$0xff]
    %v5070 = vld [vmem:[#allocation11 + $0xd98] sm:$0xff]
    %v5071 = vld [vmem:[#allocation11 + $0xda0] sm:$0xff]
    %v5072 = vld [vmem:[#allocation11 + $0xda8] sm:$0xff]
    %v5073 = vld [vmem:[#allocation11 + $0xdb0] sm:$0xff]
    %v5074 = vld [vmem:[#allocation11 + $0xdb8] sm:$0xff]
    %v5075 = vld [vmem:[#allocation11 + $0xdc0] sm:$0xff]
    %v5076 = vld [vmem:[#allocation11 + $0xdc8] sm:$0xff]
    %v5077 = vld [vmem:[#allocation11 + $0xdd0] sm:$0xff]
    %v5078 = vld [vmem:[#allocation11 + $0xdd8] sm:$0xff]
    %v5079 = vld [vmem:[#allocation11 + $0xde0] sm:$0xff]
    %v5080 = vld [vmem:[#allocation11 + $0xde8] sm:$0xff]
    %v5081 = vld [vmem:[#allocation11 + $0xdf0] sm:$0xff]
    %v5082 = vld [vmem:[#allocation11 + $0xdf8] sm:$0xff]
    %v5083 = vld [vmem:[#allocation11 + $0xe00] sm:$0xff]
    %v5084 = vld [vmem:[#allocation11 + $0xe08] sm:$0xff]
    %v5085 = vld [vmem:[#allocation11 + $0xe10] sm:$0xff]
    %v5086 = vld [vmem:[#allocation11 + $0xe18] sm:$0xff]
    %v5087 = vld [vmem:[#allocation11 + $0xe20] sm:$0xff]
    %v5088 = vld [vmem:[#allocation11 + $0xe28] sm:$0xff]
    %v5089 = vld [vmem:[#allocation11 + $0xe30] sm:$0xff]
    %v5090 = vld [vmem:[#allocation11 + $0xe38] sm:$0xff]
    %v5091 = vld [vmem:[#allocation11 + $0xe40] sm:$0xff]
    %v5092 = vld [vmem:[#allocation11 + $0xe48] sm:$0xff]
    %v5093 = vld [vmem:[#allocation11 + $0xe50] sm:$0xff]
    %v5094 = vld [vmem:[#allocation11 + $0xe58] sm:$0xff]
    %v5095 = vld [vmem:[#allocation11 + $0xe60] sm:$0xff]
    %v5096 = vld [vmem:[#allocation11 + $0xe68] sm:$0xff]
    %v5097 = vld [vmem:[#allocation11 + $0xe70] sm:$0xff]
    %v5098 = vld [vmem:[#allocation11 + $0xe78] sm:$0xff]
    %v5099 = vld [vmem:[#allocation11 + $0xe80] sm:$0xff]
    %v5100 = vld [vmem:[#allocation11 + $0xe88] sm:$0xff]
    %v5101 = vld [vmem:[#allocation11 + $0xe90] sm:$0xff]
    %v5102 = vld [vmem:[#allocation11 + $0xe98] sm:$0xff]
    %v5103 = vld [vmem:[#allocation11 + $0xea0] sm:$0xff]
    %v5104 = vld [vmem:[#allocation11 + $0xea8] sm:$0xff]
    %v5105 = vld [vmem:[#allocation11 + $0xeb0] sm:$0xff]
    %v5106 = vld [vmem:[#allocation11 + $0xeb8] sm:$0xff]
    %v5107 = vld [vmem:[#allocation11 + $0xec0] sm:$0xff]
    %v5108 = vld [vmem:[#allocation11 + $0xec8] sm:$0xff]
    %v5109 = vld [vmem:[#allocation11 + $0xed0] sm:$0xff]
    %v5110 = vld [vmem:[#allocation11 + $0xed8] sm:$0xff]
    %v5111 = vld [vmem:[#allocation11 + $0xee0] sm:$0xff]
    %v5112 = vld [vmem:[#allocation11 + $0xee8] sm:$0xff]
    %v5113 = vld [vmem:[#allocation11 + $0xef0] sm:$0xff]
    %v5114 = vld [vmem:[#allocation11 + $0xef8] sm:$0xff]
    %v5115 = vld [vmem:[#allocation11 + $0xf00] sm:$0xff]
    %v5116 = vld [vmem:[#allocation11 + $0xf08] sm:$0xff]
    %v5117 = vld [vmem:[#allocation11 + $0xf10] sm:$0xff]
    %v5118 = vld [vmem:[#allocation11 + $0xf18] sm:$0xff]
    %v5119 = vld [vmem:[#allocation11 + $0xf20] sm:$0xff]
    %v5120 = vld [vmem:[#allocation11 + $0xf28] sm:$0xff]
    %v5121 = vld [vmem:[#allocation11 + $0xf30] sm:$0xff]
    %v5122 = vld [vmem:[#allocation11 + $0xf38] sm:$0xff]
    %v5123 = vld [vmem:[#allocation11 + $0xf40] sm:$0xff]
    %v5124 = vld [vmem:[#allocation11 + $0xf48] sm:$0xff]
    %v5125 = vld [vmem:[#allocation11 + $0xf50] sm:$0xff]
    %v5126 = vld [vmem:[#allocation11 + $0xf58] sm:$0xff]
    %v5127 = vld [vmem:[#allocation11 + $0xf60] sm:$0xff]
    %v5128 = vld [vmem:[#allocation11 + $0xf68] sm:$0xff]
    %v5129 = vld [vmem:[#allocation11 + $0xf70] sm:$0xff]
    %v5130 = vld [vmem:[#allocation11 + $0xf78] sm:$0xff]
    %v5131 = vld [vmem:[#allocation11 + $0xf80] sm:$0xff]
    %v5132 = vld [vmem:[#allocation11 + $0xf88] sm:$0xff]
    %v5133 = vld [vmem:[#allocation11 + $0xf90] sm:$0xff]
    %v5134 = vld [vmem:[#allocation11 + $0xf98] sm:$0xff]
    %v5135 = vld [vmem:[#allocation11 + $0xfa0] sm:$0xff]
    %v5136 = vld [vmem:[#allocation11 + $0xfa8] sm:$0xff]
    %v5137 = vld [vmem:[#allocation11 + $0xfb0] sm:$0xff]
    %v5138 = vld [vmem:[#allocation11 + $0xfb8] sm:$0xff]
    %v5139 = vld [vmem:[#allocation11 + $0xfc0] sm:$0xff]
    %v5140 = vld [vmem:[#allocation11 + $0xfc8] sm:$0xff]
    %v5141 = vld [vmem:[#allocation11 + $0xfd0] sm:$0xff]
    %v5142 = vld [vmem:[#allocation11 + $0xfd8] sm:$0xff]
    %v5143 = vld [vmem:[#allocation11 + $0xfe0] sm:$0xff]
    %v5144 = vld [vmem:[#allocation11 + $0xfe8] sm:$0xff]
    %v5145 = vld [vmem:[#allocation11 + $0xff0] sm:$0xff]
    %v5146 = vld [vmem:[#allocation11 + $0xff8] sm:$0xff]
    %v5147 = vld [vmem:[#allocation13] sm:$0xff]
    %v5149 = vlaneseq
    %v5150 = vshrl.u32 %v5149, 7
    %v5151 = vsub.s32 0, %v5150
    %v5152 = vrot.slane %v5147, %v5151
    %v5153 = vlaneseq
    %v5154 = vshrl.u32 %v5153, 7
    %v5155 = vsub.s32 1, %v5154
    %v5156 = vrot.slane %v5147, %v5155
    %v5157 = vlaneseq
    %v5158 = vshrl.u32 %v5157, 7
    %v5159 = vsub.s32 2, %v5158
    %v5160 = vrot.slane %v5147, %v5159
    %v5161 = vlaneseq
    %v5162 = vshrl.u32 %v5161, 7
    %v5163 = vsub.s32 3, %v5162
    %v5164 = vrot.slane %v5147, %v5163
    %v5165 = vlaneseq
    %v5166 = vshrl.u32 %v5165, 7
    %v5167 = vsub.s32 4, %v5166
    %v5168 = vrot.slane %v5147, %v5167
    %v5169 = vlaneseq
    %v5170 = vshrl.u32 %v5169, 7
    %v5171 = vsub.s32 5, %v5170
    %v5172 = vrot.slane %v5147, %v5171
    %v5173 = vlaneseq
    %v5174 = vshrl.u32 %v5173, 7
    %v5175 = vsub.s32 6, %v5174
    %v5176 = vrot.slane %v5147, %v5175
    %v5177 = vlaneseq
    %v5178 = vshrl.u32 %v5177, 7
    %v5179 = vsub.s32 7, %v5178
    %v5180 = vrot.slane %v5147, %v5179
    %v5701 = vunpack.c.l.b16 %v4635
    %v5702 = vunpack.c.h.b16 %v4635
    %v5703 = vunpack.c.l.b16 %v4636
    %v5704 = vunpack.c.h.b16 %v4636
    %v5705 = vunpack.c.l.b16 %v4637
    %v5706 = vunpack.c.h.b16 %v4637
    %v5707 = vunpack.c.l.b16 %v4638
    %v5708 = vunpack.c.h.b16 %v4638
    %v5709 = vunpack.c.l.b16 %v4639
    %v5710 = vunpack.c.h.b16 %v4639
    %v5711 = vunpack.c.l.b16 %v4640
    %v5712 = vunpack.c.h.b16 %v4640
    %v5713 = vunpack.c.l.b16 %v4641
    %v5714 = vunpack.c.h.b16 %v4641
    %v5715 = vunpack.c.l.b16 %v4642
    %v5716 = vunpack.c.h.b16 %v4642
    %v5717 = vunpack.c.l.b16 %v4643
    %v5718 = vunpack.c.h.b16 %v4643
    %v5719 = vunpack.c.l.b16 %v4644
    %v5720 = vunpack.c.h.b16 %v4644
    %v5721 = vunpack.c.l.b16 %v4645
    %v5722 = vunpack.c.h.b16 %v4645
    %v5723 = vunpack.c.l.b16 %v4646
    %v5724 = vunpack.c.h.b16 %v4646
    %v5725 = vunpack.c.l.b16 %v4647
    %v5726 = vunpack.c.h.b16 %v4647
    %v5727 = vunpack.c.l.b16 %v4648
    %v5728 = vunpack.c.h.b16 %v4648
    %v5729 = vunpack.c.l.b16 %v4649
    %v5730 = vunpack.c.h.b16 %v4649
    %v5731 = vunpack.c.l.b16 %v4650
    %v5732 = vunpack.c.h.b16 %v4650
    %v5733 = vunpack.c.l.b16 %v4651
    %v5734 = vunpack.c.h.b16 %v4651
    %v5735 = vunpack.c.l.b16 %v4652
    %v5736 = vunpack.c.h.b16 %v4652
    %v5737 = vunpack.c.l.b16 %v4653
    %v5738 = vunpack.c.h.b16 %v4653
    %v5739 = vunpack.c.l.b16 %v4654
    %v5740 = vunpack.c.h.b16 %v4654
    %v5741 = vunpack.c.l.b16 %v4655
    %v5742 = vunpack.c.h.b16 %v4655
    %v5743 = vunpack.c.l.b16 %v4656
    %v5744 = vunpack.c.h.b16 %v4656
    %v5745 = vunpack.c.l.b16 %v4657
    %v5746 = vunpack.c.h.b16 %v4657
    %v5747 = vunpack.c.l.b16 %v4658
    %v5748 = vunpack.c.h.b16 %v4658
    %v5749 = vunpack.c.l.b16 %v4659
    %v5750 = vunpack.c.h.b16 %v4659
    %v5751 = vunpack.c.l.b16 %v4660
    %v5752 = vunpack.c.h.b16 %v4660
    %v5753 = vunpack.c.l.b16 %v4661
    %v5754 = vunpack.c.h.b16 %v4661
    %v5755 = vunpack.c.l.b16 %v4662
    %v5756 = vunpack.c.h.b16 %v4662
    %v5757 = vunpack.c.l.b16 %v4663
    %v5758 = vunpack.c.h.b16 %v4663
    %v5759 = vunpack.c.l.b16 %v4664
    %v5760 = vunpack.c.h.b16 %v4664
    %v5761 = vunpack.c.l.b16 %v4665
    %v5762 = vunpack.c.h.b16 %v4665
    %v5763 = vunpack.c.l.b16 %v4666
    %v5764 = vunpack.c.h.b16 %v4666
    %v5765 = vunpack.c.l.b16 %v4667
    %v5766 = vunpack.c.h.b16 %v4667
    %v5767 = vunpack.c.l.b16 %v4668
    %v5768 = vunpack.c.h.b16 %v4668
    %v5769 = vunpack.c.l.b16 %v4669
    %v5770 = vunpack.c.h.b16 %v4669
    %v5771 = vunpack.c.l.b16 %v4670
    %v5772 = vunpack.c.h.b16 %v4670
    %v5773 = vunpack.c.l.b16 %v4671
    %v5774 = vunpack.c.h.b16 %v4671
    %v5775 = vunpack.c.l.b16 %v4672
    %v5776 = vunpack.c.h.b16 %v4672
    %v5777 = vunpack.c.l.b16 %v4673
    %v5778 = vunpack.c.h.b16 %v4673
    %v5779 = vunpack.c.l.b16 %v4674
    %v5780 = vunpack.c.h.b16 %v4674
    %v5781 = vunpack.c.l.b16 %v4675
    %v5782 = vunpack.c.h.b16 %v4675
    %v5783 = vunpack.c.l.b16 %v4676
    %v5784 = vunpack.c.h.b16 %v4676
    %v5785 = vunpack.c.l.b16 %v4677
    %v5786 = vunpack.c.h.b16 %v4677
    %v5787 = vunpack.c.l.b16 %v4678
    %v5788 = vunpack.c.h.b16 %v4678
    %v5789 = vunpack.c.l.b16 %v4679
    %v5790 = vunpack.c.h.b16 %v4679
    %v5791 = vunpack.c.l.b16 %v4680
    %v5792 = vunpack.c.h.b16 %v4680
    %v5793 = vunpack.c.l.b16 %v4681
    %v5794 = vunpack.c.h.b16 %v4681
    %v5795 = vunpack.c.l.b16 %v4682
    %v5796 = vunpack.c.h.b16 %v4682
    %v5797 = vunpack.c.l.b16 %v4683
    %v5798 = vunpack.c.h.b16 %v4683
    %v5799 = vunpack.c.l.b16 %v4684
    %v5800 = vunpack.c.h.b16 %v4684
    %v5801 = vunpack.c.l.b16 %v4685
    %v5802 = vunpack.c.h.b16 %v4685
    %v5803 = vunpack.c.l.b16 %v4686
    %v5804 = vunpack.c.h.b16 %v4686
    %v5805 = vunpack.c.l.b16 %v4687
    %v5806 = vunpack.c.h.b16 %v4687
    %v5807 = vunpack.c.l.b16 %v4688
    %v5808 = vunpack.c.h.b16 %v4688
    %v5809 = vunpack.c.l.b16 %v4689
    %v5810 = vunpack.c.h.b16 %v4689
    %v5811 = vunpack.c.l.b16 %v4690
    %v5812 = vunpack.c.h.b16 %v4690
    %v5813 = vunpack.c.l.b16 %v4691
    %v5814 = vunpack.c.h.b16 %v4691
    %v5815 = vunpack.c.l.b16 %v4692
    %v5816 = vunpack.c.h.b16 %v4692
    %v5817 = vunpack.c.l.b16 %v4693
    %v5818 = vunpack.c.h.b16 %v4693
    %v5819 = vunpack.c.l.b16 %v4694
    %v5820 = vunpack.c.h.b16 %v4694
    %v5821 = vunpack.c.l.b16 %v4695
    %v5822 = vunpack.c.h.b16 %v4695
    %v5823 = vunpack.c.l.b16 %v4696
    %v5824 = vunpack.c.h.b16 %v4696
    %v5825 = vunpack.c.l.b16 %v4697
    %v5826 = vunpack.c.h.b16 %v4697
    %v5827 = vunpack.c.l.b16 %v4698
    %v5828 = vunpack.c.h.b16 %v4698
    %v5829 = vunpack.c.l.b16 %v4699
    %v5830 = vunpack.c.h.b16 %v4699
    %v5831 = vunpack.c.l.b16 %v4700
    %v5832 = vunpack.c.h.b16 %v4700
    %v5833 = vunpack.c.l.b16 %v4701
    %v5834 = vunpack.c.h.b16 %v4701
    %v5835 = vunpack.c.l.b16 %v4702
    %v5836 = vunpack.c.h.b16 %v4702
    %v5837 = vunpack.c.l.b16 %v4703
    %v5838 = vunpack.c.h.b16 %v4703
    %v5839 = vunpack.c.l.b16 %v4704
    %v5840 = vunpack.c.h.b16 %v4704
    %v5841 = vunpack.c.l.b16 %v4705
    %v5842 = vunpack.c.h.b16 %v4705
    %v5843 = vunpack.c.l.b16 %v4706
    %v5844 = vunpack.c.h.b16 %v4706
    %v5845 = vunpack.c.l.b16 %v4707
    %v5846 = vunpack.c.h.b16 %v4707
    %v5847 = vunpack.c.l.b16 %v4708
    %v5848 = vunpack.c.h.b16 %v4708
    %v5849 = vunpack.c.l.b16 %v4709
    %v5850 = vunpack.c.h.b16 %v4709
    %v5851 = vunpack.c.l.b16 %v4710
    %v5852 = vunpack.c.h.b16 %v4710
    %v5853 = vunpack.c.l.b16 %v4711
    %v5854 = vunpack.c.h.b16 %v4711
    %v5855 = vunpack.c.l.b16 %v4712
    %v5856 = vunpack.c.h.b16 %v4712
    %v5857 = vunpack.c.l.b16 %v4713
    %v5858 = vunpack.c.h.b16 %v4713
    %v5859 = vunpack.c.l.b16 %v4714
    %v5860 = vunpack.c.h.b16 %v4714
    %v5861 = vunpack.c.l.b16 %v4715
    %v5862 = vunpack.c.h.b16 %v4715
    %v5863 = vunpack.c.l.b16 %v4716
    %v5864 = vunpack.c.h.b16 %v4716
    %v5865 = vunpack.c.l.b16 %v4717
    %v5866 = vunpack.c.h.b16 %v4717
    %v5867 = vunpack.c.l.b16 %v4718
    %v5868 = vunpack.c.h.b16 %v4718
    %v5869 = vunpack.c.l.b16 %v4719
    %v5870 = vunpack.c.h.b16 %v4719
    %v5871 = vunpack.c.l.b16 %v4720
    %v5872 = vunpack.c.h.b16 %v4720
    %v5873 = vunpack.c.l.b16 %v4721
    %v5874 = vunpack.c.h.b16 %v4721
    %v5875 = vunpack.c.l.b16 %v4722
    %v5876 = vunpack.c.h.b16 %v4722
    %v5877 = vunpack.c.l.b16 %v4723
    %v5878 = vunpack.c.h.b16 %v4723
    %v5879 = vunpack.c.l.b16 %v4724
    %v5880 = vunpack.c.h.b16 %v4724
    %v5881 = vunpack.c.l.b16 %v4725
    %v5882 = vunpack.c.h.b16 %v4725
    %v5883 = vunpack.c.l.b16 %v4726
    %v5884 = vunpack.c.h.b16 %v4726
    %v5885 = vunpack.c.l.b16 %v4727
    %v5886 = vunpack.c.h.b16 %v4727
    %v5887 = vunpack.c.l.b16 %v4728
    %v5888 = vunpack.c.h.b16 %v4728
    %v5889 = vunpack.c.l.b16 %v4729
    %v5890 = vunpack.c.h.b16 %v4729
    %v5891 = vunpack.c.l.b16 %v4730
    %v5892 = vunpack.c.h.b16 %v4730
    %v5893 = vunpack.c.l.b16 %v4731
    %v5894 = vunpack.c.h.b16 %v4731
    %v5895 = vunpack.c.l.b16 %v4732
    %v5896 = vunpack.c.h.b16 %v4732
    %v5897 = vunpack.c.l.b16 %v4733
    %v5898 = vunpack.c.h.b16 %v4733
    %v5899 = vunpack.c.l.b16 %v4734
    %v5900 = vunpack.c.h.b16 %v4734
    %v5901 = vunpack.c.l.b16 %v4735
    %v5902 = vunpack.c.h.b16 %v4735
    %v5903 = vunpack.c.l.b16 %v4736
    %v5904 = vunpack.c.h.b16 %v4736
    %v5905 = vunpack.c.l.b16 %v4737
    %v5906 = vunpack.c.h.b16 %v4737
    %v5907 = vunpack.c.l.b16 %v4738
    %v5908 = vunpack.c.h.b16 %v4738
    %v5909 = vunpack.c.l.b16 %v4739
    %v5910 = vunpack.c.h.b16 %v4739
    %v5911 = vunpack.c.l.b16 %v4740
    %v5912 = vunpack.c.h.b16 %v4740
    %v5913 = vunpack.c.l.b16 %v4741
    %v5914 = vunpack.c.h.b16 %v4741
    %v5915 = vunpack.c.l.b16 %v4742
    %v5916 = vunpack.c.h.b16 %v4742
    %v5917 = vunpack.c.l.b16 %v4743
    %v5918 = vunpack.c.h.b16 %v4743
    %v5919 = vunpack.c.l.b16 %v4744
    %v5920 = vunpack.c.h.b16 %v4744
    %v5921 = vunpack.c.l.b16 %v4745
    %v5922 = vunpack.c.h.b16 %v4745
    %v5923 = vunpack.c.l.b16 %v4746
    %v5924 = vunpack.c.h.b16 %v4746
    %v5925 = vunpack.c.l.b16 %v4747
    %v5926 = vunpack.c.h.b16 %v4747
    %v5927 = vunpack.c.l.b16 %v4748
    %v5928 = vunpack.c.h.b16 %v4748
    %v5929 = vunpack.c.l.b16 %v4749
    %v5930 = vunpack.c.h.b16 %v4749
    %v5931 = vunpack.c.l.b16 %v4750
    %v5932 = vunpack.c.h.b16 %v4750
    %v5933 = vunpack.c.l.b16 %v4751
    %v5934 = vunpack.c.h.b16 %v4751
    %v5935 = vunpack.c.l.b16 %v4752
    %v5936 = vunpack.c.h.b16 %v4752
    %v5937 = vunpack.c.l.b16 %v4753
    %v5938 = vunpack.c.h.b16 %v4753
    %v5939 = vunpack.c.l.b16 %v4754
    %v5940 = vunpack.c.h.b16 %v4754
    %v5941 = vunpack.c.l.b16 %v4755
    %v5942 = vunpack.c.h.b16 %v4755
    %v5943 = vunpack.c.l.b16 %v4756
    %v5944 = vunpack.c.h.b16 %v4756
    %v5945 = vunpack.c.l.b16 %v4757
    %v5946 = vunpack.c.h.b16 %v4757
    %v5947 = vunpack.c.l.b16 %v4758
    %v5948 = vunpack.c.h.b16 %v4758
    %v5949 = vunpack.c.l.b16 %v4759
    %v5950 = vunpack.c.h.b16 %v4759
    %v5951 = vunpack.c.l.b16 %v4760
    %v5952 = vunpack.c.h.b16 %v4760
    %v5953 = vunpack.c.l.b16 %v4761
    %v5954 = vunpack.c.h.b16 %v4761
    %v5955 = vunpack.c.l.b16 %v4762
    %v5956 = vunpack.c.h.b16 %v4762
    %v5957 = vunpack.c.l.b16 %v4763
    %v5958 = vunpack.c.h.b16 %v4763
    %v5959 = vunpack.c.l.b16 %v4764
    %v5960 = vunpack.c.h.b16 %v4764
    %v5961 = vunpack.c.l.b16 %v4765
    %v5962 = vunpack.c.h.b16 %v4765
    %v5963 = vunpack.c.l.b16 %v4766
    %v5964 = vunpack.c.h.b16 %v4766
    %v5965 = vunpack.c.l.b16 %v4767
    %v5966 = vunpack.c.h.b16 %v4767
    %v5967 = vunpack.c.l.b16 %v4768
    %v5968 = vunpack.c.h.b16 %v4768
    %v5969 = vunpack.c.l.b16 %v4769
    %v5970 = vunpack.c.h.b16 %v4769
    %v5971 = vunpack.c.l.b16 %v4770
    %v5972 = vunpack.c.h.b16 %v4770
    %v5973 = vunpack.c.l.b16 %v4771
    %v5974 = vunpack.c.h.b16 %v4771
    %v5975 = vunpack.c.l.b16 %v4772
    %v5976 = vunpack.c.h.b16 %v4772
    %v5977 = vunpack.c.l.b16 %v4773
    %v5978 = vunpack.c.h.b16 %v4773
    %v5979 = vunpack.c.l.b16 %v4774
    %v5980 = vunpack.c.h.b16 %v4774
    %v5981 = vunpack.c.l.b16 %v4775
    %v5982 = vunpack.c.h.b16 %v4775
    %v5983 = vunpack.c.l.b16 %v4776
    %v5984 = vunpack.c.h.b16 %v4776
    %v5985 = vunpack.c.l.b16 %v4777
    %v5986 = vunpack.c.h.b16 %v4777
    %v5987 = vunpack.c.l.b16 %v4778
    %v5988 = vunpack.c.h.b16 %v4778
    %v5989 = vunpack.c.l.b16 %v4779
    %v5990 = vunpack.c.h.b16 %v4779
    %v5991 = vunpack.c.l.b16 %v4780
    %v5992 = vunpack.c.h.b16 %v4780
    %v5993 = vunpack.c.l.b16 %v4781
    %v5994 = vunpack.c.h.b16 %v4781
    %v5995 = vunpack.c.l.b16 %v4782
    %v5996 = vunpack.c.h.b16 %v4782
    %v5997 = vunpack.c.l.b16 %v4783
    %v5998 = vunpack.c.h.b16 %v4783
    %v5999 = vunpack.c.l.b16 %v4784
    %v6000 = vunpack.c.h.b16 %v4784
    %v6001 = vunpack.c.l.b16 %v4785
    %v6002 = vunpack.c.h.b16 %v4785
    %v6003 = vunpack.c.l.b16 %v4786
    %v6004 = vunpack.c.h.b16 %v4786
    %v6005 = vunpack.c.l.b16 %v4787
    %v6006 = vunpack.c.h.b16 %v4787
    %v6007 = vunpack.c.l.b16 %v4788
    %v6008 = vunpack.c.h.b16 %v4788
    %v6009 = vunpack.c.l.b16 %v4789
    %v6010 = vunpack.c.h.b16 %v4789
    %v6011 = vunpack.c.l.b16 %v4790
    %v6012 = vunpack.c.h.b16 %v4790
    %v6013 = vunpack.c.l.b16 %v4791
    %v6014 = vunpack.c.h.b16 %v4791
    %v6015 = vunpack.c.l.b16 %v4792
    %v6016 = vunpack.c.h.b16 %v4792
    %v6017 = vunpack.c.l.b16 %v4793
    %v6018 = vunpack.c.h.b16 %v4793
    %v6019 = vunpack.c.l.b16 %v4794
    %v6020 = vunpack.c.h.b16 %v4794
    %v6021 = vunpack.c.l.b16 %v4795
    %v6022 = vunpack.c.h.b16 %v4795
    %v6023 = vunpack.c.l.b16 %v4796
    %v6024 = vunpack.c.h.b16 %v4796
    %v6025 = vunpack.c.l.b16 %v4797
    %v6026 = vunpack.c.h.b16 %v4797
    %v6027 = vunpack.c.l.b16 %v4798
    %v6028 = vunpack.c.h.b16 %v4798
    %v6029 = vunpack.c.l.b16 %v4799
    %v6030 = vunpack.c.h.b16 %v4799
    %v6031 = vunpack.c.l.b16 %v4800
    %v6032 = vunpack.c.h.b16 %v4800
    %v6033 = vunpack.c.l.b16 %v4801
    %v6034 = vunpack.c.h.b16 %v4801
    %v6035 = vunpack.c.l.b16 %v4802
    %v6036 = vunpack.c.h.b16 %v4802
    %v6037 = vunpack.c.l.b16 %v4803
    %v6038 = vunpack.c.h.b16 %v4803
    %v6039 = vunpack.c.l.b16 %v4804
    %v6040 = vunpack.c.h.b16 %v4804
    %v6041 = vunpack.c.l.b16 %v4805
    %v6042 = vunpack.c.h.b16 %v4805
    %v6043 = vunpack.c.l.b16 %v4806
    %v6044 = vunpack.c.h.b16 %v4806
    %v6045 = vunpack.c.l.b16 %v4807
    %v6046 = vunpack.c.h.b16 %v4807
    %v6047 = vunpack.c.l.b16 %v4808
    %v6048 = vunpack.c.h.b16 %v4808
    %v6049 = vunpack.c.l.b16 %v4809
    %v6050 = vunpack.c.h.b16 %v4809
    %v6051 = vunpack.c.l.b16 %v4810
    %v6052 = vunpack.c.h.b16 %v4810
    %v6053 = vunpack.c.l.b16 %v4811
    %v6054 = vunpack.c.h.b16 %v4811
    %v6055 = vunpack.c.l.b16 %v4812
    %v6056 = vunpack.c.h.b16 %v4812
    %v6057 = vunpack.c.l.b16 %v4813
    %v6058 = vunpack.c.h.b16 %v4813
    %v6059 = vunpack.c.l.b16 %v4814
    %v6060 = vunpack.c.h.b16 %v4814
    %v6061 = vunpack.c.l.b16 %v4815
    %v6062 = vunpack.c.h.b16 %v4815
    %v6063 = vunpack.c.l.b16 %v4816
    %v6064 = vunpack.c.h.b16 %v4816
    %v6065 = vunpack.c.l.b16 %v4817
    %v6066 = vunpack.c.h.b16 %v4817
    %v6067 = vunpack.c.l.b16 %v4818
    %v6068 = vunpack.c.h.b16 %v4818
    %v6069 = vunpack.c.l.b16 %v4819
    %v6070 = vunpack.c.h.b16 %v4819
    %v6071 = vunpack.c.l.b16 %v4820
    %v6072 = vunpack.c.h.b16 %v4820
    %v6073 = vunpack.c.l.b16 %v4821
    %v6074 = vunpack.c.h.b16 %v4821
    %v6075 = vunpack.c.l.b16 %v4822
    %v6076 = vunpack.c.h.b16 %v4822
    %v6077 = vunpack.c.l.b16 %v4823
    %v6078 = vunpack.c.h.b16 %v4823
    %v6079 = vunpack.c.l.b16 %v4824
    %v6080 = vunpack.c.h.b16 %v4824
    %v6081 = vunpack.c.l.b16 %v4825
    %v6082 = vunpack.c.h.b16 %v4825
    %v6083 = vunpack.c.l.b16 %v4826
    %v6084 = vunpack.c.h.b16 %v4826
    %v6085 = vunpack.c.l.b16 %v4827
    %v6086 = vunpack.c.h.b16 %v4827
    %v6087 = vunpack.c.l.b16 %v4828
    %v6088 = vunpack.c.h.b16 %v4828
    %v6089 = vunpack.c.l.b16 %v4829
    %v6090 = vunpack.c.h.b16 %v4829
    %v6091 = vunpack.c.l.b16 %v4830
    %v6092 = vunpack.c.h.b16 %v4830
    %v6093 = vunpack.c.l.b16 %v4831
    %v6094 = vunpack.c.h.b16 %v4831
    %v6095 = vunpack.c.l.b16 %v4832
    %v6096 = vunpack.c.h.b16 %v4832
    %v6097 = vunpack.c.l.b16 %v4833
    %v6098 = vunpack.c.h.b16 %v4833
    %v6099 = vunpack.c.l.b16 %v4834
    %v6100 = vunpack.c.h.b16 %v4834
    %v6101 = vunpack.c.l.b16 %v4835
    %v6102 = vunpack.c.h.b16 %v4835
    %v6103 = vunpack.c.l.b16 %v4836
    %v6104 = vunpack.c.h.b16 %v4836
    %v6105 = vunpack.c.l.b16 %v4837
    %v6106 = vunpack.c.h.b16 %v4837
    %v6107 = vunpack.c.l.b16 %v4838
    %v6108 = vunpack.c.h.b16 %v4838
    %v6109 = vunpack.c.l.b16 %v4839
    %v6110 = vunpack.c.h.b16 %v4839
    %v6111 = vunpack.c.l.b16 %v4840
    %v6112 = vunpack.c.h.b16 %v4840
    %v6113 = vunpack.c.l.b16 %v4841
    %v6114 = vunpack.c.h.b16 %v4841
    %v6115 = vunpack.c.l.b16 %v4842
    %v6116 = vunpack.c.h.b16 %v4842
    %v6117 = vunpack.c.l.b16 %v4843
    %v6118 = vunpack.c.h.b16 %v4843
    %v6119 = vunpack.c.l.b16 %v4844
    %v6120 = vunpack.c.h.b16 %v4844
    %v6121 = vunpack.c.l.b16 %v4845
    %v6122 = vunpack.c.h.b16 %v4845
    %v6123 = vunpack.c.l.b16 %v4846
    %v6124 = vunpack.c.h.b16 %v4846
    %v6125 = vunpack.c.l.b16 %v4847
    %v6126 = vunpack.c.h.b16 %v4847
    %v6127 = vunpack.c.l.b16 %v4848
    %v6128 = vunpack.c.h.b16 %v4848
    %v6129 = vunpack.c.l.b16 %v4849
    %v6130 = vunpack.c.h.b16 %v4849
    %v6131 = vunpack.c.l.b16 %v4850
    %v6132 = vunpack.c.h.b16 %v4850
    %v6133 = vunpack.c.l.b16 %v4851
    %v6134 = vunpack.c.h.b16 %v4851
    %v6135 = vunpack.c.l.b16 %v4852
    %v6136 = vunpack.c.h.b16 %v4852
    %v6137 = vunpack.c.l.b16 %v4853
    %v6138 = vunpack.c.h.b16 %v4853
    %v6139 = vunpack.c.l.b16 %v4854
    %v6140 = vunpack.c.h.b16 %v4854
    %v6141 = vunpack.c.l.b16 %v4855
    %v6142 = vunpack.c.h.b16 %v4855
    %v6143 = vunpack.c.l.b16 %v4856
    %v6144 = vunpack.c.h.b16 %v4856
    %v6145 = vunpack.c.l.b16 %v4857
    %v6146 = vunpack.c.h.b16 %v4857
    %v6147 = vunpack.c.l.b16 %v4858
    %v6148 = vunpack.c.h.b16 %v4858
    %v6149 = vunpack.c.l.b16 %v4859
    %v6150 = vunpack.c.h.b16 %v4859
    %v6151 = vunpack.c.l.b16 %v4860
    %v6152 = vunpack.c.h.b16 %v4860
    %v6153 = vunpack.c.l.b16 %v4861
    %v6154 = vunpack.c.h.b16 %v4861
    %v6155 = vunpack.c.l.b16 %v4862
    %v6156 = vunpack.c.h.b16 %v4862
    %v6157 = vunpack.c.l.b16 %v4863
    %v6158 = vunpack.c.h.b16 %v4863
    %v6159 = vunpack.c.l.b16 %v4864
    %v6160 = vunpack.c.h.b16 %v4864
    %v6161 = vunpack.c.l.b16 %v4865
    %v6162 = vunpack.c.h.b16 %v4865
    %v6163 = vunpack.c.l.b16 %v4866
    %v6164 = vunpack.c.h.b16 %v4866
    %v6165 = vunpack.c.l.b16 %v4867
    %v6166 = vunpack.c.h.b16 %v4867
    %v6167 = vunpack.c.l.b16 %v4868
    %v6168 = vunpack.c.h.b16 %v4868
    %v6169 = vunpack.c.l.b16 %v4869
    %v6170 = vunpack.c.h.b16 %v4869
    %v6171 = vunpack.c.l.b16 %v4870
    %v6172 = vunpack.c.h.b16 %v4870
    %v6173 = vunpack.c.l.b16 %v4871
    %v6174 = vunpack.c.h.b16 %v4871
    %v6175 = vunpack.c.l.b16 %v4872
    %v6176 = vunpack.c.h.b16 %v4872
    %v6177 = vunpack.c.l.b16 %v4873
    %v6178 = vunpack.c.h.b16 %v4873
    %v6179 = vunpack.c.l.b16 %v4874
    %v6180 = vunpack.c.h.b16 %v4874
    %v6181 = vunpack.c.l.b16 %v4875
    %v6182 = vunpack.c.h.b16 %v4875
    %v6183 = vunpack.c.l.b16 %v4876
    %v6184 = vunpack.c.h.b16 %v4876
    %v6185 = vunpack.c.l.b16 %v4877
    %v6186 = vunpack.c.h.b16 %v4877
    %v6187 = vunpack.c.l.b16 %v4878
    %v6188 = vunpack.c.h.b16 %v4878
    %v6189 = vunpack.c.l.b16 %v4879
    %v6190 = vunpack.c.h.b16 %v4879
    %v6191 = vunpack.c.l.b16 %v4880
    %v6192 = vunpack.c.h.b16 %v4880
    %v6193 = vunpack.c.l.b16 %v4881
    %v6194 = vunpack.c.h.b16 %v4881
    %v6195 = vunpack.c.l.b16 %v4882
    %v6196 = vunpack.c.h.b16 %v4882
    %v6197 = vunpack.c.l.b16 %v4883
    %v6198 = vunpack.c.h.b16 %v4883
    %v6199 = vunpack.c.l.b16 %v4884
    %v6200 = vunpack.c.h.b16 %v4884
    %v6201 = vunpack.c.l.b16 %v4885
    %v6202 = vunpack.c.h.b16 %v4885
    %v6203 = vunpack.c.l.b16 %v4886
    %v6204 = vunpack.c.h.b16 %v4886
    %v6205 = vunpack.c.l.b16 %v4887
    %v6206 = vunpack.c.h.b16 %v4887
    %v6207 = vunpack.c.l.b16 %v4888
    %v6208 = vunpack.c.h.b16 %v4888
    %v6209 = vunpack.c.l.b16 %v4889
    %v6210 = vunpack.c.h.b16 %v4889
    %v6211 = vunpack.c.l.b16 %v4890
    %v6212 = vunpack.c.h.b16 %v4890
    %v6213 = vunpack.c.l.b16 %v4891
    %v6214 = vunpack.c.h.b16 %v4891
    %v6215 = vunpack.c.l.b16 %v4892
    %v6216 = vunpack.c.h.b16 %v4892
    %v6217 = vunpack.c.l.b16 %v4893
    %v6218 = vunpack.c.h.b16 %v4893
    %v6219 = vunpack.c.l.b16 %v4894
    %v6220 = vunpack.c.h.b16 %v4894
    %v6221 = vunpack.c.l.b16 %v4895
    %v6222 = vunpack.c.h.b16 %v4895
    %v6223 = vunpack.c.l.b16 %v4896
    %v6224 = vunpack.c.h.b16 %v4896
    %v6225 = vunpack.c.l.b16 %v4897
    %v6226 = vunpack.c.h.b16 %v4897
    %v6227 = vunpack.c.l.b16 %v4898
    %v6228 = vunpack.c.h.b16 %v4898
    %v6229 = vunpack.c.l.b16 %v4899
    %v6230 = vunpack.c.h.b16 %v4899
    %v6231 = vunpack.c.l.b16 %v4900
    %v6232 = vunpack.c.h.b16 %v4900
    %v6233 = vunpack.c.l.b16 %v4901
    %v6234 = vunpack.c.h.b16 %v4901
    %v6235 = vunpack.c.l.b16 %v4902
    %v6236 = vunpack.c.h.b16 %v4902
    %v6237 = vunpack.c.l.b16 %v4903
    %v6238 = vunpack.c.h.b16 %v4903
    %v6239 = vunpack.c.l.b16 %v4904
    %v6240 = vunpack.c.h.b16 %v4904
    %v6241 = vunpack.c.l.b16 %v4905
    %v6242 = vunpack.c.h.b16 %v4905
    %v6243 = vunpack.c.l.b16 %v4906
    %v6244 = vunpack.c.h.b16 %v4906
    %v6245 = vunpack.c.l.b16 %v4907
    %v6246 = vunpack.c.h.b16 %v4907
    %v6247 = vunpack.c.l.b16 %v4908
    %v6248 = vunpack.c.h.b16 %v4908
    %v6249 = vunpack.c.l.b16 %v4909
    %v6250 = vunpack.c.h.b16 %v4909
    %v6251 = vunpack.c.l.b16 %v4910
    %v6252 = vunpack.c.h.b16 %v4910
    %v6253 = vunpack.c.l.b16 %v4911
    %v6254 = vunpack.c.h.b16 %v4911
    %v6255 = vunpack.c.l.b16 %v4912
    %v6256 = vunpack.c.h.b16 %v4912
    %v6257 = vunpack.c.l.b16 %v4913
    %v6258 = vunpack.c.h.b16 %v4913
    %v6259 = vunpack.c.l.b16 %v4914
    %v6260 = vunpack.c.h.b16 %v4914
    %v6261 = vunpack.c.l.b16 %v4915
    %v6262 = vunpack.c.h.b16 %v4915
    %v6263 = vunpack.c.l.b16 %v4916
    %v6264 = vunpack.c.h.b16 %v4916
    %v6265 = vunpack.c.l.b16 %v4917
    %v6266 = vunpack.c.h.b16 %v4917
    %v6267 = vunpack.c.l.b16 %v4918
    %v6268 = vunpack.c.h.b16 %v4918
    %v6269 = vunpack.c.l.b16 %v4919
    %v6270 = vunpack.c.h.b16 %v4919
    %v6271 = vunpack.c.l.b16 %v4920
    %v6272 = vunpack.c.h.b16 %v4920
    %v6273 = vunpack.c.l.b16 %v4921
    %v6274 = vunpack.c.h.b16 %v4921
    %v6275 = vunpack.c.l.b16 %v4922
    %v6276 = vunpack.c.h.b16 %v4922
    %v6277 = vunpack.c.l.b16 %v4923
    %v6278 = vunpack.c.h.b16 %v4923
    %v6279 = vunpack.c.l.b16 %v4924
    %v6280 = vunpack.c.h.b16 %v4924
    %v6281 = vunpack.c.l.b16 %v4925
    %v6282 = vunpack.c.h.b16 %v4925
    %v6283 = vunpack.c.l.b16 %v4926
    %v6284 = vunpack.c.h.b16 %v4926
    %v6285 = vunpack.c.l.b16 %v4927
    %v6286 = vunpack.c.h.b16 %v4927
    %v6287 = vunpack.c.l.b16 %v4928
    %v6288 = vunpack.c.h.b16 %v4928
    %v6289 = vunpack.c.l.b16 %v4929
    %v6290 = vunpack.c.h.b16 %v4929
    %v6291 = vunpack.c.l.b16 %v4930
    %v6292 = vunpack.c.h.b16 %v4930
    %v6293 = vunpack.c.l.b16 %v4931
    %v6294 = vunpack.c.h.b16 %v4931
    %v6295 = vunpack.c.l.b16 %v4932
    %v6296 = vunpack.c.h.b16 %v4932
    %v6297 = vunpack.c.l.b16 %v4933
    %v6298 = vunpack.c.h.b16 %v4933
    %v6299 = vunpack.c.l.b16 %v4934
    %v6300 = vunpack.c.h.b16 %v4934
    %v6301 = vunpack.c.l.b16 %v4935
    %v6302 = vunpack.c.h.b16 %v4935
    %v6303 = vunpack.c.l.b16 %v4936
    %v6304 = vunpack.c.h.b16 %v4936
    %v6305 = vunpack.c.l.b16 %v4937
    %v6306 = vunpack.c.h.b16 %v4937
    %v6307 = vunpack.c.l.b16 %v4938
    %v6308 = vunpack.c.h.b16 %v4938
    %v6309 = vunpack.c.l.b16 %v4939
    %v6310 = vunpack.c.h.b16 %v4939
    %v6311 = vunpack.c.l.b16 %v4940
    %v6312 = vunpack.c.h.b16 %v4940
    %v6313 = vunpack.c.l.b16 %v4941
    %v6314 = vunpack.c.h.b16 %v4941
    %v6315 = vunpack.c.l.b16 %v4942
    %v6316 = vunpack.c.h.b16 %v4942
    %v6317 = vunpack.c.l.b16 %v4943
    %v6318 = vunpack.c.h.b16 %v4943
    %v6319 = vunpack.c.l.b16 %v4944
    %v6320 = vunpack.c.h.b16 %v4944
    %v6321 = vunpack.c.l.b16 %v4945
    %v6322 = vunpack.c.h.b16 %v4945
    %v6323 = vunpack.c.l.b16 %v4946
    %v6324 = vunpack.c.h.b16 %v4946
    %v6325 = vunpack.c.l.b16 %v4947
    %v6326 = vunpack.c.h.b16 %v4947
    %v6327 = vunpack.c.l.b16 %v4948
    %v6328 = vunpack.c.h.b16 %v4948
    %v6329 = vunpack.c.l.b16 %v4949
    %v6330 = vunpack.c.h.b16 %v4949
    %v6331 = vunpack.c.l.b16 %v4950
    %v6332 = vunpack.c.h.b16 %v4950
    %v6333 = vunpack.c.l.b16 %v4951
    %v6334 = vunpack.c.h.b16 %v4951
    %v6335 = vunpack.c.l.b16 %v4952
    %v6336 = vunpack.c.h.b16 %v4952
    %v6337 = vunpack.c.l.b16 %v4953
    %v6338 = vunpack.c.h.b16 %v4953
    %v6339 = vunpack.c.l.b16 %v4954
    %v6340 = vunpack.c.h.b16 %v4954
    %v6341 = vunpack.c.l.b16 %v4955
    %v6342 = vunpack.c.h.b16 %v4955
    %v6343 = vunpack.c.l.b16 %v4956
    %v6344 = vunpack.c.h.b16 %v4956
    %v6345 = vunpack.c.l.b16 %v4957
    %v6346 = vunpack.c.h.b16 %v4957
    %v6347 = vunpack.c.l.b16 %v4958
    %v6348 = vunpack.c.h.b16 %v4958
    %v6349 = vunpack.c.l.b16 %v4959
    %v6350 = vunpack.c.h.b16 %v4959
    %v6351 = vunpack.c.l.b16 %v4960
    %v6352 = vunpack.c.h.b16 %v4960
    %v6353 = vunpack.c.l.b16 %v4961
    %v6354 = vunpack.c.h.b16 %v4961
    %v6355 = vunpack.c.l.b16 %v4962
    %v6356 = vunpack.c.h.b16 %v4962
    %v6357 = vunpack.c.l.b16 %v4963
    %v6358 = vunpack.c.h.b16 %v4963
    %v6359 = vunpack.c.l.b16 %v4964
    %v6360 = vunpack.c.h.b16 %v4964
    %v6361 = vunpack.c.l.b16 %v4965
    %v6362 = vunpack.c.h.b16 %v4965
    %v6363 = vunpack.c.l.b16 %v4966
    %v6364 = vunpack.c.h.b16 %v4966
    %v6365 = vunpack.c.l.b16 %v4967
    %v6366 = vunpack.c.h.b16 %v4967
    %v6367 = vunpack.c.l.b16 %v4968
    %v6368 = vunpack.c.h.b16 %v4968
    %v6369 = vunpack.c.l.b16 %v4969
    %v6370 = vunpack.c.h.b16 %v4969
    %v6371 = vunpack.c.l.b16 %v4970
    %v6372 = vunpack.c.h.b16 %v4970
    %v6373 = vunpack.c.l.b16 %v4971
    %v6374 = vunpack.c.h.b16 %v4971
    %v6375 = vunpack.c.l.b16 %v4972
    %v6376 = vunpack.c.h.b16 %v4972
    %v6377 = vunpack.c.l.b16 %v4973
    %v6378 = vunpack.c.h.b16 %v4973
    %v6379 = vunpack.c.l.b16 %v4974
    %v6380 = vunpack.c.h.b16 %v4974
    %v6381 = vunpack.c.l.b16 %v4975
    %v6382 = vunpack.c.h.b16 %v4975
    %v6383 = vunpack.c.l.b16 %v4976
    %v6384 = vunpack.c.h.b16 %v4976
    %v6385 = vunpack.c.l.b16 %v4977
    %v6386 = vunpack.c.h.b16 %v4977
    %v6387 = vunpack.c.l.b16 %v4978
    %v6388 = vunpack.c.h.b16 %v4978
    %v6389 = vunpack.c.l.b16 %v4979
    %v6390 = vunpack.c.h.b16 %v4979
    %v6391 = vunpack.c.l.b16 %v4980
    %v6392 = vunpack.c.h.b16 %v4980
    %v6393 = vunpack.c.l.b16 %v4981
    %v6394 = vunpack.c.h.b16 %v4981
    %v6395 = vunpack.c.l.b16 %v4982
    %v6396 = vunpack.c.h.b16 %v4982
    %v6397 = vunpack.c.l.b16 %v4983
    %v6398 = vunpack.c.h.b16 %v4983
    %v6399 = vunpack.c.l.b16 %v4984
    %v6400 = vunpack.c.h.b16 %v4984
    %v6401 = vunpack.c.l.b16 %v4985
    %v6402 = vunpack.c.h.b16 %v4985
    %v6403 = vunpack.c.l.b16 %v4986
    %v6404 = vunpack.c.h.b16 %v4986
    %v6405 = vunpack.c.l.b16 %v4987
    %v6406 = vunpack.c.h.b16 %v4987
    %v6407 = vunpack.c.l.b16 %v4988
    %v6408 = vunpack.c.h.b16 %v4988
    %v6409 = vunpack.c.l.b16 %v4989
    %v6410 = vunpack.c.h.b16 %v4989
    %v6411 = vunpack.c.l.b16 %v4990
    %v6412 = vunpack.c.h.b16 %v4990
    %v6413 = vunpack.c.l.b16 %v4991
    %v6414 = vunpack.c.h.b16 %v4991
    %v6415 = vunpack.c.l.b16 %v4992
    %v6416 = vunpack.c.h.b16 %v4992
    %v6417 = vunpack.c.l.b16 %v4993
    %v6418 = vunpack.c.h.b16 %v4993
    %v6419 = vunpack.c.l.b16 %v4994
    %v6420 = vunpack.c.h.b16 %v4994
    %v6421 = vunpack.c.l.b16 %v4995
    %v6422 = vunpack.c.h.b16 %v4995
    %v6423 = vunpack.c.l.b16 %v4996
    %v6424 = vunpack.c.h.b16 %v4996
    %v6425 = vunpack.c.l.b16 %v4997
    %v6426 = vunpack.c.h.b16 %v4997
    %v6427 = vunpack.c.l.b16 %v4998
    %v6428 = vunpack.c.h.b16 %v4998
    %v6429 = vunpack.c.l.b16 %v4999
    %v6430 = vunpack.c.h.b16 %v4999
    %v6431 = vunpack.c.l.b16 %v5000
    %v6432 = vunpack.c.h.b16 %v5000
    %v6433 = vunpack.c.l.b16 %v5001
    %v6434 = vunpack.c.h.b16 %v5001
    %v6435 = vunpack.c.l.b16 %v5002
    %v6436 = vunpack.c.h.b16 %v5002
    %v6437 = vunpack.c.l.b16 %v5003
    %v6438 = vunpack.c.h.b16 %v5003
    %v6439 = vunpack.c.l.b16 %v5004
    %v6440 = vunpack.c.h.b16 %v5004
    %v6441 = vunpack.c.l.b16 %v5005
    %v6442 = vunpack.c.h.b16 %v5005
    %v6443 = vunpack.c.l.b16 %v5006
    %v6444 = vunpack.c.h.b16 %v5006
    %v6445 = vunpack.c.l.b16 %v5007
    %v6446 = vunpack.c.h.b16 %v5007
    %v6447 = vunpack.c.l.b16 %v5008
    %v6448 = vunpack.c.h.b16 %v5008
    %v6449 = vunpack.c.l.b16 %v5009
    %v6450 = vunpack.c.h.b16 %v5009
    %v6451 = vunpack.c.l.b16 %v5010
    %v6452 = vunpack.c.h.b16 %v5010
    %v6453 = vunpack.c.l.b16 %v5011
    %v6454 = vunpack.c.h.b16 %v5011
    %v6455 = vunpack.c.l.b16 %v5012
    %v6456 = vunpack.c.h.b16 %v5012
    %v6457 = vunpack.c.l.b16 %v5013
    %v6458 = vunpack.c.h.b16 %v5013
    %v6459 = vunpack.c.l.b16 %v5014
    %v6460 = vunpack.c.h.b16 %v5014
    %v6461 = vunpack.c.l.b16 %v5015
    %v6462 = vunpack.c.h.b16 %v5015
    %v6463 = vunpack.c.l.b16 %v5016
    %v6464 = vunpack.c.h.b16 %v5016
    %v6465 = vunpack.c.l.b16 %v5017
    %v6466 = vunpack.c.h.b16 %v5017
    %v6467 = vunpack.c.l.b16 %v5018
    %v6468 = vunpack.c.h.b16 %v5018
    %v6469 = vunpack.c.l.b16 %v5019
    %v6470 = vunpack.c.h.b16 %v5019
    %v6471 = vunpack.c.l.b16 %v5020
    %v6472 = vunpack.c.h.b16 %v5020
    %v6473 = vunpack.c.l.b16 %v5021
    %v6474 = vunpack.c.h.b16 %v5021
    %v6475 = vunpack.c.l.b16 %v5022
    %v6476 = vunpack.c.h.b16 %v5022
    %v6477 = vunpack.c.l.b16 %v5023
    %v6478 = vunpack.c.h.b16 %v5023
    %v6479 = vunpack.c.l.b16 %v5024
    %v6480 = vunpack.c.h.b16 %v5024
    %v6481 = vunpack.c.l.b16 %v5025
    %v6482 = vunpack.c.h.b16 %v5025
    %v6483 = vunpack.c.l.b16 %v5026
    %v6484 = vunpack.c.h.b16 %v5026
    %v6485 = vunpack.c.l.b16 %v5027
    %v6486 = vunpack.c.h.b16 %v5027
    %v6487 = vunpack.c.l.b16 %v5028
    %v6488 = vunpack.c.h.b16 %v5028
    %v6489 = vunpack.c.l.b16 %v5029
    %v6490 = vunpack.c.h.b16 %v5029
    %v6491 = vunpack.c.l.b16 %v5030
    %v6492 = vunpack.c.h.b16 %v5030
    %v6493 = vunpack.c.l.b16 %v5031
    %v6494 = vunpack.c.h.b16 %v5031
    %v6495 = vunpack.c.l.b16 %v5032
    %v6496 = vunpack.c.h.b16 %v5032
    %v6497 = vunpack.c.l.b16 %v5033
    %v6498 = vunpack.c.h.b16 %v5033
    %v6499 = vunpack.c.l.b16 %v5034
    %v6500 = vunpack.c.h.b16 %v5034
    %v6501 = vunpack.c.l.b16 %v5035
    %v6502 = vunpack.c.h.b16 %v5035
    %v6503 = vunpack.c.l.b16 %v5036
    %v6504 = vunpack.c.h.b16 %v5036
    %v6505 = vunpack.c.l.b16 %v5037
    %v6506 = vunpack.c.h.b16 %v5037
    %v6507 = vunpack.c.l.b16 %v5038
    %v6508 = vunpack.c.h.b16 %v5038
    %v6509 = vunpack.c.l.b16 %v5039
    %v6510 = vunpack.c.h.b16 %v5039
    %v6511 = vunpack.c.l.b16 %v5040
    %v6512 = vunpack.c.h.b16 %v5040
    %v6513 = vunpack.c.l.b16 %v5041
    %v6514 = vunpack.c.h.b16 %v5041
    %v6515 = vunpack.c.l.b16 %v5042
    %v6516 = vunpack.c.h.b16 %v5042
    %v6517 = vunpack.c.l.b16 %v5043
    %v6518 = vunpack.c.h.b16 %v5043
    %v6519 = vunpack.c.l.b16 %v5044
    %v6520 = vunpack.c.h.b16 %v5044
    %v6521 = vunpack.c.l.b16 %v5045
    %v6522 = vunpack.c.h.b16 %v5045
    %v6523 = vunpack.c.l.b16 %v5046
    %v6524 = vunpack.c.h.b16 %v5046
    %v6525 = vunpack.c.l.b16 %v5047
    %v6526 = vunpack.c.h.b16 %v5047
    %v6527 = vunpack.c.l.b16 %v5048
    %v6528 = vunpack.c.h.b16 %v5048
    %v6529 = vunpack.c.l.b16 %v5049
    %v6530 = vunpack.c.h.b16 %v5049
    %v6531 = vunpack.c.l.b16 %v5050
    %v6532 = vunpack.c.h.b16 %v5050
    %v6533 = vunpack.c.l.b16 %v5051
    %v6534 = vunpack.c.h.b16 %v5051
    %v6535 = vunpack.c.l.b16 %v5052
    %v6536 = vunpack.c.h.b16 %v5052
    %v6537 = vunpack.c.l.b16 %v5053
    %v6538 = vunpack.c.h.b16 %v5053
    %v6539 = vunpack.c.l.b16 %v5054
    %v6540 = vunpack.c.h.b16 %v5054
    %v6541 = vunpack.c.l.b16 %v5055
    %v6542 = vunpack.c.h.b16 %v5055
    %v6543 = vunpack.c.l.b16 %v5056
    %v6544 = vunpack.c.h.b16 %v5056
    %v6545 = vunpack.c.l.b16 %v5057
    %v6546 = vunpack.c.h.b16 %v5057
    %v6547 = vunpack.c.l.b16 %v5058
    %v6548 = vunpack.c.h.b16 %v5058
    %v6549 = vunpack.c.l.b16 %v5059
    %v6550 = vunpack.c.h.b16 %v5059
    %v6551 = vunpack.c.l.b16 %v5060
    %v6552 = vunpack.c.h.b16 %v5060
    %v6553 = vunpack.c.l.b16 %v5061
    %v6554 = vunpack.c.h.b16 %v5061
    %v6555 = vunpack.c.l.b16 %v5062
    %v6556 = vunpack.c.h.b16 %v5062
    %v6557 = vunpack.c.l.b16 %v5063
    %v6558 = vunpack.c.h.b16 %v5063
    %v6559 = vunpack.c.l.b16 %v5064
    %v6560 = vunpack.c.h.b16 %v5064
    %v6561 = vunpack.c.l.b16 %v5065
    %v6562 = vunpack.c.h.b16 %v5065
    %v6563 = vunpack.c.l.b16 %v5066
    %v6564 = vunpack.c.h.b16 %v5066
    %v6565 = vunpack.c.l.b16 %v5067
    %v6566 = vunpack.c.h.b16 %v5067
    %v6567 = vunpack.c.l.b16 %v5068
    %v6568 = vunpack.c.h.b16 %v5068
    %v6569 = vunpack.c.l.b16 %v5069
    %v6570 = vunpack.c.h.b16 %v5069
    %v6571 = vunpack.c.l.b16 %v5070
    %v6572 = vunpack.c.h.b16 %v5070
    %v6573 = vunpack.c.l.b16 %v5071
    %v6574 = vunpack.c.h.b16 %v5071
    %v6575 = vunpack.c.l.b16 %v5072
    %v6576 = vunpack.c.h.b16 %v5072
    %v6577 = vunpack.c.l.b16 %v5073
    %v6578 = vunpack.c.h.b16 %v5073
    %v6579 = vunpack.c.l.b16 %v5074
    %v6580 = vunpack.c.h.b16 %v5074
    %v6581 = vunpack.c.l.b16 %v5075
    %v6582 = vunpack.c.h.b16 %v5075
    %v6583 = vunpack.c.l.b16 %v5076
    %v6584 = vunpack.c.h.b16 %v5076
    %v6585 = vunpack.c.l.b16 %v5077
    %v6586 = vunpack.c.h.b16 %v5077
    %v6587 = vunpack.c.l.b16 %v5078
    %v6588 = vunpack.c.h.b16 %v5078
    %v6589 = vunpack.c.l.b16 %v5079
    %v6590 = vunpack.c.h.b16 %v5079
    %v6591 = vunpack.c.l.b16 %v5080
    %v6592 = vunpack.c.h.b16 %v5080
    %v6593 = vunpack.c.l.b16 %v5081
    %v6594 = vunpack.c.h.b16 %v5081
    %v6595 = vunpack.c.l.b16 %v5082
    %v6596 = vunpack.c.h.b16 %v5082
    %v6597 = vunpack.c.l.b16 %v5083
    %v6598 = vunpack.c.h.b16 %v5083
    %v6599 = vunpack.c.l.b16 %v5084
    %v6600 = vunpack.c.h.b16 %v5084
    %v6601 = vunpack.c.l.b16 %v5085
    %v6602 = vunpack.c.h.b16 %v5085
    %v6603 = vunpack.c.l.b16 %v5086
    %v6604 = vunpack.c.h.b16 %v5086
    %v6605 = vunpack.c.l.b16 %v5087
    %v6606 = vunpack.c.h.b16 %v5087
    %v6607 = vunpack.c.l.b16 %v5088
    %v6608 = vunpack.c.h.b16 %v5088
    %v6609 = vunpack.c.l.b16 %v5089
    %v6610 = vunpack.c.h.b16 %v5089
    %v6611 = vunpack.c.l.b16 %v5090
    %v6612 = vunpack.c.h.b16 %v5090
    %v6613 = vunpack.c.l.b16 %v5091
    %v6614 = vunpack.c.h.b16 %v5091
    %v6615 = vunpack.c.l.b16 %v5092
    %v6616 = vunpack.c.h.b16 %v5092
    %v6617 = vunpack.c.l.b16 %v5093
    %v6618 = vunpack.c.h.b16 %v5093
    %v6619 = vunpack.c.l.b16 %v5094
    %v6620 = vunpack.c.h.b16 %v5094
    %v6621 = vunpack.c.l.b16 %v5095
    %v6622 = vunpack.c.h.b16 %v5095
    %v6623 = vunpack.c.l.b16 %v5096
    %v6624 = vunpack.c.h.b16 %v5096
    %v6625 = vunpack.c.l.b16 %v5097
    %v6626 = vunpack.c.h.b16 %v5097
    %v6627 = vunpack.c.l.b16 %v5098
    %v6628 = vunpack.c.h.b16 %v5098
    %v6629 = vunpack.c.l.b16 %v5099
    %v6630 = vunpack.c.h.b16 %v5099
    %v6631 = vunpack.c.l.b16 %v5100
    %v6632 = vunpack.c.h.b16 %v5100
    %v6633 = vunpack.c.l.b16 %v5101
    %v6634 = vunpack.c.h.b16 %v5101
    %v6635 = vunpack.c.l.b16 %v5102
    %v6636 = vunpack.c.h.b16 %v5102
    %v6637 = vunpack.c.l.b16 %v5103
    %v6638 = vunpack.c.h.b16 %v5103
    %v6639 = vunpack.c.l.b16 %v5104
    %v6640 = vunpack.c.h.b16 %v5104
    %v6641 = vunpack.c.l.b16 %v5105
    %v6642 = vunpack.c.h.b16 %v5105
    %v6643 = vunpack.c.l.b16 %v5106
    %v6644 = vunpack.c.h.b16 %v5106
    %v6645 = vunpack.c.l.b16 %v5107
    %v6646 = vunpack.c.h.b16 %v5107
    %v6647 = vunpack.c.l.b16 %v5108
    %v6648 = vunpack.c.h.b16 %v5108
    %v6649 = vunpack.c.l.b16 %v5109
    %v6650 = vunpack.c.h.b16 %v5109
    %v6651 = vunpack.c.l.b16 %v5110
    %v6652 = vunpack.c.h.b16 %v5110
    %v6653 = vunpack.c.l.b16 %v5111
    %v6654 = vunpack.c.h.b16 %v5111
    %v6655 = vunpack.c.l.b16 %v5112
    %v6656 = vunpack.c.h.b16 %v5112
    %v6657 = vunpack.c.l.b16 %v5113
    %v6658 = vunpack.c.h.b16 %v5113
    %v6659 = vunpack.c.l.b16 %v5114
    %v6660 = vunpack.c.h.b16 %v5114
    %v6661 = vunpack.c.l.b16 %v5115
    %v6662 = vunpack.c.h.b16 %v5115
    %v6663 = vunpack.c.l.b16 %v5116
    %v6664 = vunpack.c.h.b16 %v5116
    %v6665 = vunpack.c.l.b16 %v5117
    %v6666 = vunpack.c.h.b16 %v5117
    %v6667 = vunpack.c.l.b16 %v5118
    %v6668 = vunpack.c.h.b16 %v5118
    %v6669 = vunpack.c.l.b16 %v5119
    %v6670 = vunpack.c.h.b16 %v5119
    %v6671 = vunpack.c.l.b16 %v5120
    %v6672 = vunpack.c.h.b16 %v5120
    %v6673 = vunpack.c.l.b16 %v5121
    %v6674 = vunpack.c.h.b16 %v5121
    %v6675 = vunpack.c.l.b16 %v5122
    %v6676 = vunpack.c.h.b16 %v5122
    %v6677 = vunpack.c.l.b16 %v5123
    %v6678 = vunpack.c.h.b16 %v5123
    %v6679 = vunpack.c.l.b16 %v5124
    %v6680 = vunpack.c.h.b16 %v5124
    %v6681 = vunpack.c.l.b16 %v5125
    %v6682 = vunpack.c.h.b16 %v5125
    %v6683 = vunpack.c.l.b16 %v5126
    %v6684 = vunpack.c.h.b16 %v5126
    %v6685 = vunpack.c.l.b16 %v5127
    %v6686 = vunpack.c.h.b16 %v5127
    %v6687 = vunpack.c.l.b16 %v5128
    %v6688 = vunpack.c.h.b16 %v5128
    %v6689 = vunpack.c.l.b16 %v5129
    %v6690 = vunpack.c.h.b16 %v5129
    %v6691 = vunpack.c.l.b16 %v5130
    %v6692 = vunpack.c.h.b16 %v5130
    %v6693 = vunpack.c.l.b16 %v5131
    %v6694 = vunpack.c.h.b16 %v5131
    %v6695 = vunpack.c.l.b16 %v5132
    %v6696 = vunpack.c.h.b16 %v5132
    %v6697 = vunpack.c.l.b16 %v5133
    %v6698 = vunpack.c.h.b16 %v5133
    %v6699 = vunpack.c.l.b16 %v5134
    %v6700 = vunpack.c.h.b16 %v5134
    %v6701 = vunpack.c.l.b16 %v5135
    %v6702 = vunpack.c.h.b16 %v5135
    %v6703 = vunpack.c.l.b16 %v5136
    %v6704 = vunpack.c.h.b16 %v5136
    %v6705 = vunpack.c.l.b16 %v5137
    %v6706 = vunpack.c.h.b16 %v5137
    %v6707 = vunpack.c.l.b16 %v5138
    %v6708 = vunpack.c.h.b16 %v5138
    %v6709 = vunpack.c.l.b16 %v5139
    %v6710 = vunpack.c.h.b16 %v5139
    %v6711 = vunpack.c.l.b16 %v5140
    %v6712 = vunpack.c.h.b16 %v5140
    %v6713 = vunpack.c.l.b16 %v5141
    %v6714 = vunpack.c.h.b16 %v5141
    %v6715 = vunpack.c.l.b16 %v5142
    %v6716 = vunpack.c.h.b16 %v5142
    %v6717 = vunpack.c.l.b16 %v5143
    %v6718 = vunpack.c.h.b16 %v5143
    %v6719 = vunpack.c.l.b16 %v5144
    %v6720 = vunpack.c.h.b16 %v5144
    %v6721 = vunpack.c.l.b16 %v5145
    %v6722 = vunpack.c.h.b16 %v5145
    %v6723 = vunpack.c.l.b16 %v5146
    %v6724 = vunpack.c.h.b16 %v5146
    %v6725 = vpack.c.b16 %v5709, %v5701
    %v6726 = vpack.c.b16 %v5710, %v5702
    %v6727 = vpack.c.b16 %v5711, %v5703
    %v6728 = vpack.c.b16 %v5712, %v5704
    %v6729 = vpack.c.b16 %v5713, %v5705
    %v6730 = vpack.c.b16 %v5714, %v5706
    %v6731 = vpack.c.b16 %v5715, %v5707
    %v6732 = vpack.c.b16 %v5716, %v5708
    %v6733 = vpack.c.b16 %v5725, %v5717
    %v6734 = vpack.c.b16 %v5726, %v5718
    %v6735 = vpack.c.b16 %v5727, %v5719
    %v6736 = vpack.c.b16 %v5728, %v5720
    %v6737 = vpack.c.b16 %v5729, %v5721
    %v6738 = vpack.c.b16 %v5730, %v5722
    %v6739 = vpack.c.b16 %v5731, %v5723
    %v6740 = vpack.c.b16 %v5732, %v5724
    %v6741 = vpack.c.b16 %v5741, %v5733
    %v6742 = vpack.c.b16 %v5742, %v5734
    %v6743 = vpack.c.b16 %v5743, %v5735
    %v6744 = vpack.c.b16 %v5744, %v5736
    %v6745 = vpack.c.b16 %v5745, %v5737
    %v6746 = vpack.c.b16 %v5746, %v5738
    %v6747 = vpack.c.b16 %v5747, %v5739
    %v6748 = vpack.c.b16 %v5748, %v5740
    %v6749 = vpack.c.b16 %v5757, %v5749
    %v6750 = vpack.c.b16 %v5758, %v5750
    %v6751 = vpack.c.b16 %v5759, %v5751
    %v6752 = vpack.c.b16 %v5760, %v5752
    %v6753 = vpack.c.b16 %v5761, %v5753
    %v6754 = vpack.c.b16 %v5762, %v5754
    %v6755 = vpack.c.b16 %v5763, %v5755
    %v6756 = vpack.c.b16 %v5764, %v5756
    %v6757 = vpack.c.b16 %v5773, %v5765
    %v6758 = vpack.c.b16 %v5774, %v5766
    %v6759 = vpack.c.b16 %v5775, %v5767
    %v6760 = vpack.c.b16 %v5776, %v5768
    %v6761 = vpack.c.b16 %v5777, %v5769
    %v6762 = vpack.c.b16 %v5778, %v5770
    %v6763 = vpack.c.b16 %v5779, %v5771
    %v6764 = vpack.c.b16 %v5780, %v5772
    %v6765 = vpack.c.b16 %v5789, %v5781
    %v6766 = vpack.c.b16 %v5790, %v5782
    %v6767 = vpack.c.b16 %v5791, %v5783
    %v6768 = vpack.c.b16 %v5792, %v5784
    %v6769 = vpack.c.b16 %v5793, %v5785
    %v6770 = vpack.c.b16 %v5794, %v5786
    %v6771 = vpack.c.b16 %v5795, %v5787
    %v6772 = vpack.c.b16 %v5796, %v5788
    %v6773 = vpack.c.b16 %v5805, %v5797
    %v6774 = vpack.c.b16 %v5806, %v5798
    %v6775 = vpack.c.b16 %v5807, %v5799
    %v6776 = vpack.c.b16 %v5808, %v5800
    %v6777 = vpack.c.b16 %v5809, %v5801
    %v6778 = vpack.c.b16 %v5810, %v5802
    %v6779 = vpack.c.b16 %v5811, %v5803
    %v6780 = vpack.c.b16 %v5812, %v5804
    %v6781 = vpack.c.b16 %v5821, %v5813
    %v6782 = vpack.c.b16 %v5822, %v5814
    %v6783 = vpack.c.b16 %v5823, %v5815
    %v6784 = vpack.c.b16 %v5824, %v5816
    %v6785 = vpack.c.b16 %v5825, %v5817
    %v6786 = vpack.c.b16 %v5826, %v5818
    %v6787 = vpack.c.b16 %v5827, %v5819
    %v6788 = vpack.c.b16 %v5828, %v5820
    %v6789 = vpack.c.b16 %v5837, %v5829
    %v6790 = vpack.c.b16 %v5838, %v5830
    %v6791 = vpack.c.b16 %v5839, %v5831
    %v6792 = vpack.c.b16 %v5840, %v5832
    %v6793 = vpack.c.b16 %v5841, %v5833
    %v6794 = vpack.c.b16 %v5842, %v5834
    %v6795 = vpack.c.b16 %v5843, %v5835
    %v6796 = vpack.c.b16 %v5844, %v5836
    %v6797 = vpack.c.b16 %v5853, %v5845
    %v6798 = vpack.c.b16 %v5854, %v5846
    %v6799 = vpack.c.b16 %v5855, %v5847
    %v6800 = vpack.c.b16 %v5856, %v5848
    %v6801 = vpack.c.b16 %v5857, %v5849
    %v6802 = vpack.c.b16 %v5858, %v5850
    %v6803 = vpack.c.b16 %v5859, %v5851
    %v6804 = vpack.c.b16 %v5860, %v5852
    %v6805 = vpack.c.b16 %v5869, %v5861
    %v6806 = vpack.c.b16 %v5870, %v5862
    %v6807 = vpack.c.b16 %v5871, %v5863
    %v6808 = vpack.c.b16 %v5872, %v5864
    %v6809 = vpack.c.b16 %v5873, %v5865
    %v6810 = vpack.c.b16 %v5874, %v5866
    %v6811 = vpack.c.b16 %v5875, %v5867
    %v6812 = vpack.c.b16 %v5876, %v5868
    %v6813 = vpack.c.b16 %v5885, %v5877
    %v6814 = vpack.c.b16 %v5886, %v5878
    %v6815 = vpack.c.b16 %v5887, %v5879
    %v6816 = vpack.c.b16 %v5888, %v5880
    %v6817 = vpack.c.b16 %v5889, %v5881
    %v6818 = vpack.c.b16 %v5890, %v5882
    %v6819 = vpack.c.b16 %v5891, %v5883
    %v6820 = vpack.c.b16 %v5892, %v5884
    %v6821 = vpack.c.b16 %v5901, %v5893
    %v6822 = vpack.c.b16 %v5902, %v5894
    %v6823 = vpack.c.b16 %v5903, %v5895
    %v6824 = vpack.c.b16 %v5904, %v5896
    %v6825 = vpack.c.b16 %v5905, %v5897
    %v6826 = vpack.c.b16 %v5906, %v5898
    %v6827 = vpack.c.b16 %v5907, %v5899
    %v6828 = vpack.c.b16 %v5908, %v5900
    %v6829 = vpack.c.b16 %v5917, %v5909
    %v6830 = vpack.c.b16 %v5918, %v5910
    %v6831 = vpack.c.b16 %v5919, %v5911
    %v6832 = vpack.c.b16 %v5920, %v5912
    %v6833 = vpack.c.b16 %v5921, %v5913
    %v6834 = vpack.c.b16 %v5922, %v5914
    %v6835 = vpack.c.b16 %v5923, %v5915
    %v6836 = vpack.c.b16 %v5924, %v5916
    %v6837 = vpack.c.b16 %v5933, %v5925
    %v6838 = vpack.c.b16 %v5934, %v5926
    %v6839 = vpack.c.b16 %v5935, %v5927
    %v6840 = vpack.c.b16 %v5936, %v5928
    %v6841 = vpack.c.b16 %v5937, %v5929
    %v6842 = vpack.c.b16 %v5938, %v5930
    %v6843 = vpack.c.b16 %v5939, %v5931
    %v6844 = vpack.c.b16 %v5940, %v5932
    %v6845 = vpack.c.b16 %v5949, %v5941
    %v6846 = vpack.c.b16 %v5950, %v5942
    %v6847 = vpack.c.b16 %v5951, %v5943
    %v6848 = vpack.c.b16 %v5952, %v5944
    %v6849 = vpack.c.b16 %v5953, %v5945
    %v6850 = vpack.c.b16 %v5954, %v5946
    %v6851 = vpack.c.b16 %v5955, %v5947
    %v6852 = vpack.c.b16 %v5956, %v5948
    %v6853 = vpack.c.b16 %v5965, %v5957
    %v6854 = vpack.c.b16 %v5966, %v5958
    %v6855 = vpack.c.b16 %v5967, %v5959
    %v6856 = vpack.c.b16 %v5968, %v5960
    %v6857 = vpack.c.b16 %v5969, %v5961
    %v6858 = vpack.c.b16 %v5970, %v5962
    %v6859 = vpack.c.b16 %v5971, %v5963
    %v6860 = vpack.c.b16 %v5972, %v5964
    %v6861 = vpack.c.b16 %v5981, %v5973
    %v6862 = vpack.c.b16 %v5982, %v5974
    %v6863 = vpack.c.b16 %v5983, %v5975
    %v6864 = vpack.c.b16 %v5984, %v5976
    %v6865 = vpack.c.b16 %v5985, %v5977
    %v6866 = vpack.c.b16 %v5986, %v5978
    %v6867 = vpack.c.b16 %v5987, %v5979
    %v6868 = vpack.c.b16 %v5988, %v5980
    %v6869 = vpack.c.b16 %v5997, %v5989
    %v6870 = vpack.c.b16 %v5998, %v5990
    %v6871 = vpack.c.b16 %v5999, %v5991
    %v6872 = vpack.c.b16 %v6000, %v5992
    %v6873 = vpack.c.b16 %v6001, %v5993
    %v6874 = vpack.c.b16 %v6002, %v5994
    %v6875 = vpack.c.b16 %v6003, %v5995
    %v6876 = vpack.c.b16 %v6004, %v5996
    %v6877 = vpack.c.b16 %v6013, %v6005
    %v6878 = vpack.c.b16 %v6014, %v6006
    %v6879 = vpack.c.b16 %v6015, %v6007
    %v6880 = vpack.c.b16 %v6016, %v6008
    %v6881 = vpack.c.b16 %v6017, %v6009
    %v6882 = vpack.c.b16 %v6018, %v6010
    %v6883 = vpack.c.b16 %v6019, %v6011
    %v6884 = vpack.c.b16 %v6020, %v6012
    %v6885 = vpack.c.b16 %v6029, %v6021
    %v6886 = vpack.c.b16 %v6030, %v6022
    %v6887 = vpack.c.b16 %v6031, %v6023
    %v6888 = vpack.c.b16 %v6032, %v6024
    %v6889 = vpack.c.b16 %v6033, %v6025
    %v6890 = vpack.c.b16 %v6034, %v6026
    %v6891 = vpack.c.b16 %v6035, %v6027
    %v6892 = vpack.c.b16 %v6036, %v6028
    %v6893 = vpack.c.b16 %v6045, %v6037
    %v6894 = vpack.c.b16 %v6046, %v6038
    %v6895 = vpack.c.b16 %v6047, %v6039
    %v6896 = vpack.c.b16 %v6048, %v6040
    %v6897 = vpack.c.b16 %v6049, %v6041
    %v6898 = vpack.c.b16 %v6050, %v6042
    %v6899 = vpack.c.b16 %v6051, %v6043
    %v6900 = vpack.c.b16 %v6052, %v6044
    %v6901 = vpack.c.b16 %v6061, %v6053
    %v6902 = vpack.c.b16 %v6062, %v6054
    %v6903 = vpack.c.b16 %v6063, %v6055
    %v6904 = vpack.c.b16 %v6064, %v6056
    %v6905 = vpack.c.b16 %v6065, %v6057
    %v6906 = vpack.c.b16 %v6066, %v6058
    %v6907 = vpack.c.b16 %v6067, %v6059
    %v6908 = vpack.c.b16 %v6068, %v6060
    %v6909 = vpack.c.b16 %v6077, %v6069
    %v6910 = vpack.c.b16 %v6078, %v6070
    %v6911 = vpack.c.b16 %v6079, %v6071
    %v6912 = vpack.c.b16 %v6080, %v6072
    %v6913 = vpack.c.b16 %v6081, %v6073
    %v6914 = vpack.c.b16 %v6082, %v6074
    %v6915 = vpack.c.b16 %v6083, %v6075
    %v6916 = vpack.c.b16 %v6084, %v6076
    %v6917 = vpack.c.b16 %v6093, %v6085
    %v6918 = vpack.c.b16 %v6094, %v6086
    %v6919 = vpack.c.b16 %v6095, %v6087
    %v6920 = vpack.c.b16 %v6096, %v6088
    %v6921 = vpack.c.b16 %v6097, %v6089
    %v6922 = vpack.c.b16 %v6098, %v6090
    %v6923 = vpack.c.b16 %v6099, %v6091
    %v6924 = vpack.c.b16 %v6100, %v6092
    %v6925 = vpack.c.b16 %v6109, %v6101
    %v6926 = vpack.c.b16 %v6110, %v6102
    %v6927 = vpack.c.b16 %v6111, %v6103
    %v6928 = vpack.c.b16 %v6112, %v6104
    %v6929 = vpack.c.b16 %v6113, %v6105
    %v6930 = vpack.c.b16 %v6114, %v6106
    %v6931 = vpack.c.b16 %v6115, %v6107
    %v6932 = vpack.c.b16 %v6116, %v6108
    %v6933 = vpack.c.b16 %v6125, %v6117
    %v6934 = vpack.c.b16 %v6126, %v6118
    %v6935 = vpack.c.b16 %v6127, %v6119
    %v6936 = vpack.c.b16 %v6128, %v6120
    %v6937 = vpack.c.b16 %v6129, %v6121
    %v6938 = vpack.c.b16 %v6130, %v6122
    %v6939 = vpack.c.b16 %v6131, %v6123
    %v6940 = vpack.c.b16 %v6132, %v6124
    %v6941 = vpack.c.b16 %v6141, %v6133
    %v6942 = vpack.c.b16 %v6142, %v6134
    %v6943 = vpack.c.b16 %v6143, %v6135
    %v6944 = vpack.c.b16 %v6144, %v6136
    %v6945 = vpack.c.b16 %v6145, %v6137
    %v6946 = vpack.c.b16 %v6146, %v6138
    %v6947 = vpack.c.b16 %v6147, %v6139
    %v6948 = vpack.c.b16 %v6148, %v6140
    %v6949 = vpack.c.b16 %v6157, %v6149
    %v6950 = vpack.c.b16 %v6158, %v6150
    %v6951 = vpack.c.b16 %v6159, %v6151
    %v6952 = vpack.c.b16 %v6160, %v6152
    %v6953 = vpack.c.b16 %v6161, %v6153
    %v6954 = vpack.c.b16 %v6162, %v6154
    %v6955 = vpack.c.b16 %v6163, %v6155
    %v6956 = vpack.c.b16 %v6164, %v6156
    %v6957 = vpack.c.b16 %v6173, %v6165
    %v6958 = vpack.c.b16 %v6174, %v6166
    %v6959 = vpack.c.b16 %v6175, %v6167
    %v6960 = vpack.c.b16 %v6176, %v6168
    %v6961 = vpack.c.b16 %v6177, %v6169
    %v6962 = vpack.c.b16 %v6178, %v6170
    %v6963 = vpack.c.b16 %v6179, %v6171
    %v6964 = vpack.c.b16 %v6180, %v6172
    %v6965 = vpack.c.b16 %v6189, %v6181
    %v6966 = vpack.c.b16 %v6190, %v6182
    %v6967 = vpack.c.b16 %v6191, %v6183
    %v6968 = vpack.c.b16 %v6192, %v6184
    %v6969 = vpack.c.b16 %v6193, %v6185
    %v6970 = vpack.c.b16 %v6194, %v6186
    %v6971 = vpack.c.b16 %v6195, %v6187
    %v6972 = vpack.c.b16 %v6196, %v6188
    %v6973 = vpack.c.b16 %v6205, %v6197
    %v6974 = vpack.c.b16 %v6206, %v6198
    %v6975 = vpack.c.b16 %v6207, %v6199
    %v6976 = vpack.c.b16 %v6208, %v6200
    %v6977 = vpack.c.b16 %v6209, %v6201
    %v6978 = vpack.c.b16 %v6210, %v6202
    %v6979 = vpack.c.b16 %v6211, %v6203
    %v6980 = vpack.c.b16 %v6212, %v6204
    %v6981 = vpack.c.b16 %v6221, %v6213
    %v6982 = vpack.c.b16 %v6222, %v6214
    %v6983 = vpack.c.b16 %v6223, %v6215
    %v6984 = vpack.c.b16 %v6224, %v6216
    %v6985 = vpack.c.b16 %v6225, %v6217
    %v6986 = vpack.c.b16 %v6226, %v6218
    %v6987 = vpack.c.b16 %v6227, %v6219
    %v6988 = vpack.c.b16 %v6228, %v6220
    %v6989 = vpack.c.b16 %v6237, %v6229
    %v6990 = vpack.c.b16 %v6238, %v6230
    %v6991 = vpack.c.b16 %v6239, %v6231
    %v6992 = vpack.c.b16 %v6240, %v6232
    %v6993 = vpack.c.b16 %v6241, %v6233
    %v6994 = vpack.c.b16 %v6242, %v6234
    %v6995 = vpack.c.b16 %v6243, %v6235
    %v6996 = vpack.c.b16 %v6244, %v6236
    %v6997 = vpack.c.b16 %v6253, %v6245
    %v6998 = vpack.c.b16 %v6254, %v6246
    %v6999 = vpack.c.b16 %v6255, %v6247
    %v7000 = vpack.c.b16 %v6256, %v6248
    %v7001 = vpack.c.b16 %v6257, %v6249
    %v7002 = vpack.c.b16 %v6258, %v6250
    %v7003 = vpack.c.b16 %v6259, %v6251
    %v7004 = vpack.c.b16 %v6260, %v6252
    %v7005 = vpack.c.b16 %v6269, %v6261
    %v7006 = vpack.c.b16 %v6270, %v6262
    %v7007 = vpack.c.b16 %v6271, %v6263
    %v7008 = vpack.c.b16 %v6272, %v6264
    %v7009 = vpack.c.b16 %v6273, %v6265
    %v7010 = vpack.c.b16 %v6274, %v6266
    %v7011 = vpack.c.b16 %v6275, %v6267
    %v7012 = vpack.c.b16 %v6276, %v6268
    %v7013 = vpack.c.b16 %v6285, %v6277
    %v7014 = vpack.c.b16 %v6286, %v6278
    %v7015 = vpack.c.b16 %v6287, %v6279
    %v7016 = vpack.c.b16 %v6288, %v6280
    %v7017 = vpack.c.b16 %v6289, %v6281
    %v7018 = vpack.c.b16 %v6290, %v6282
    %v7019 = vpack.c.b16 %v6291, %v6283
    %v7020 = vpack.c.b16 %v6292, %v6284
    %v7021 = vpack.c.b16 %v6301, %v6293
    %v7022 = vpack.c.b16 %v6302, %v6294
    %v7023 = vpack.c.b16 %v6303, %v6295
    %v7024 = vpack.c.b16 %v6304, %v6296
    %v7025 = vpack.c.b16 %v6305, %v6297
    %v7026 = vpack.c.b16 %v6306, %v6298
    %v7027 = vpack.c.b16 %v6307, %v6299
    %v7028 = vpack.c.b16 %v6308, %v6300
    %v7029 = vpack.c.b16 %v6317, %v6309
    %v7030 = vpack.c.b16 %v6318, %v6310
    %v7031 = vpack.c.b16 %v6319, %v6311
    %v7032 = vpack.c.b16 %v6320, %v6312
    %v7033 = vpack.c.b16 %v6321, %v6313
    %v7034 = vpack.c.b16 %v6322, %v6314
    %v7035 = vpack.c.b16 %v6323, %v6315
    %v7036 = vpack.c.b16 %v6324, %v6316
    %v7037 = vpack.c.b16 %v6333, %v6325
    %v7038 = vpack.c.b16 %v6334, %v6326
    %v7039 = vpack.c.b16 %v6335, %v6327
    %v7040 = vpack.c.b16 %v6336, %v6328
    %v7041 = vpack.c.b16 %v6337, %v6329
    %v7042 = vpack.c.b16 %v6338, %v6330
    %v7043 = vpack.c.b16 %v6339, %v6331
    %v7044 = vpack.c.b16 %v6340, %v6332
    %v7045 = vpack.c.b16 %v6349, %v6341
    %v7046 = vpack.c.b16 %v6350, %v6342
    %v7047 = vpack.c.b16 %v6351, %v6343
    %v7048 = vpack.c.b16 %v6352, %v6344
    %v7049 = vpack.c.b16 %v6353, %v6345
    %v7050 = vpack.c.b16 %v6354, %v6346
    %v7051 = vpack.c.b16 %v6355, %v6347
    %v7052 = vpack.c.b16 %v6356, %v6348
    %v7053 = vpack.c.b16 %v6365, %v6357
    %v7054 = vpack.c.b16 %v6366, %v6358
    %v7055 = vpack.c.b16 %v6367, %v6359
    %v7056 = vpack.c.b16 %v6368, %v6360
    %v7057 = vpack.c.b16 %v6369, %v6361
    %v7058 = vpack.c.b16 %v6370, %v6362
    %v7059 = vpack.c.b16 %v6371, %v6363
    %v7060 = vpack.c.b16 %v6372, %v6364
    %v7061 = vpack.c.b16 %v6381, %v6373
    %v7062 = vpack.c.b16 %v6382, %v6374
    %v7063 = vpack.c.b16 %v6383, %v6375
    %v7064 = vpack.c.b16 %v6384, %v6376
    %v7065 = vpack.c.b16 %v6385, %v6377
    %v7066 = vpack.c.b16 %v6386, %v6378
    %v7067 = vpack.c.b16 %v6387, %v6379
    %v7068 = vpack.c.b16 %v6388, %v6380
    %v7069 = vpack.c.b16 %v6397, %v6389
    %v7070 = vpack.c.b16 %v6398, %v6390
    %v7071 = vpack.c.b16 %v6399, %v6391
    %v7072 = vpack.c.b16 %v6400, %v6392
    %v7073 = vpack.c.b16 %v6401, %v6393
    %v7074 = vpack.c.b16 %v6402, %v6394
    %v7075 = vpack.c.b16 %v6403, %v6395
    %v7076 = vpack.c.b16 %v6404, %v6396
    %v7077 = vpack.c.b16 %v6413, %v6405
    %v7078 = vpack.c.b16 %v6414, %v6406
    %v7079 = vpack.c.b16 %v6415, %v6407
    %v7080 = vpack.c.b16 %v6416, %v6408
    %v7081 = vpack.c.b16 %v6417, %v6409
    %v7082 = vpack.c.b16 %v6418, %v6410
    %v7083 = vpack.c.b16 %v6419, %v6411
    %v7084 = vpack.c.b16 %v6420, %v6412
    %v7085 = vpack.c.b16 %v6429, %v6421
    %v7086 = vpack.c.b16 %v6430, %v6422
    %v7087 = vpack.c.b16 %v6431, %v6423
    %v7088 = vpack.c.b16 %v6432, %v6424
    %v7089 = vpack.c.b16 %v6433, %v6425
    %v7090 = vpack.c.b16 %v6434, %v6426
    %v7091 = vpack.c.b16 %v6435, %v6427
    %v7092 = vpack.c.b16 %v6436, %v6428
    %v7093 = vpack.c.b16 %v6445, %v6437
    %v7094 = vpack.c.b16 %v6446, %v6438
    %v7095 = vpack.c.b16 %v6447, %v6439
    %v7096 = vpack.c.b16 %v6448, %v6440
    %v7097 = vpack.c.b16 %v6449, %v6441
    %v7098 = vpack.c.b16 %v6450, %v6442
    %v7099 = vpack.c.b16 %v6451, %v6443
    %v7100 = vpack.c.b16 %v6452, %v6444
    %v7101 = vpack.c.b16 %v6461, %v6453
    %v7102 = vpack.c.b16 %v6462, %v6454
    %v7103 = vpack.c.b16 %v6463, %v6455
    %v7104 = vpack.c.b16 %v6464, %v6456
    %v7105 = vpack.c.b16 %v6465, %v6457
    %v7106 = vpack.c.b16 %v6466, %v6458
    %v7107 = vpack.c.b16 %v6467, %v6459
    %v7108 = vpack.c.b16 %v6468, %v6460
    %v7109 = vpack.c.b16 %v6477, %v6469
    %v7110 = vpack.c.b16 %v6478, %v6470
    %v7111 = vpack.c.b16 %v6479, %v6471
    %v7112 = vpack.c.b16 %v6480, %v6472
    %v7113 = vpack.c.b16 %v6481, %v6473
    %v7114 = vpack.c.b16 %v6482, %v6474
    %v7115 = vpack.c.b16 %v6483, %v6475
    %v7116 = vpack.c.b16 %v6484, %v6476
    %v7117 = vpack.c.b16 %v6493, %v6485
    %v7118 = vpack.c.b16 %v6494, %v6486
    %v7119 = vpack.c.b16 %v6495, %v6487
    %v7120 = vpack.c.b16 %v6496, %v6488
    %v7121 = vpack.c.b16 %v6497, %v6489
    %v7122 = vpack.c.b16 %v6498, %v6490
    %v7123 = vpack.c.b16 %v6499, %v6491
    %v7124 = vpack.c.b16 %v6500, %v6492
    %v7125 = vpack.c.b16 %v6509, %v6501
    %v7126 = vpack.c.b16 %v6510, %v6502
    %v7127 = vpack.c.b16 %v6511, %v6503
    %v7128 = vpack.c.b16 %v6512, %v6504
    %v7129 = vpack.c.b16 %v6513, %v6505
    %v7130 = vpack.c.b16 %v6514, %v6506
    %v7131 = vpack.c.b16 %v6515, %v6507
    %v7132 = vpack.c.b16 %v6516, %v6508
    %v7133 = vpack.c.b16 %v6525, %v6517
    %v7134 = vpack.c.b16 %v6526, %v6518
    %v7135 = vpack.c.b16 %v6527, %v6519
    %v7136 = vpack.c.b16 %v6528, %v6520
    %v7137 = vpack.c.b16 %v6529, %v6521
    %v7138 = vpack.c.b16 %v6530, %v6522
    %v7139 = vpack.c.b16 %v6531, %v6523
    %v7140 = vpack.c.b16 %v6532, %v6524
    %v7141 = vpack.c.b16 %v6541, %v6533
    %v7142 = vpack.c.b16 %v6542, %v6534
    %v7143 = vpack.c.b16 %v6543, %v6535
    %v7144 = vpack.c.b16 %v6544, %v6536
    %v7145 = vpack.c.b16 %v6545, %v6537
    %v7146 = vpack.c.b16 %v6546, %v6538
    %v7147 = vpack.c.b16 %v6547, %v6539
    %v7148 = vpack.c.b16 %v6548, %v6540
    %v7149 = vpack.c.b16 %v6557, %v6549
    %v7150 = vpack.c.b16 %v6558, %v6550
    %v7151 = vpack.c.b16 %v6559, %v6551
    %v7152 = vpack.c.b16 %v6560, %v6552
    %v7153 = vpack.c.b16 %v6561, %v6553
    %v7154 = vpack.c.b16 %v6562, %v6554
    %v7155 = vpack.c.b16 %v6563, %v6555
    %v7156 = vpack.c.b16 %v6564, %v6556
    %v7157 = vpack.c.b16 %v6573, %v6565
    %v7158 = vpack.c.b16 %v6574, %v6566
    %v7159 = vpack.c.b16 %v6575, %v6567
    %v7160 = vpack.c.b16 %v6576, %v6568
    %v7161 = vpack.c.b16 %v6577, %v6569
    %v7162 = vpack.c.b16 %v6578, %v6570
    %v7163 = vpack.c.b16 %v6579, %v6571
    %v7164 = vpack.c.b16 %v6580, %v6572
    %v7165 = vpack.c.b16 %v6589, %v6581
    %v7166 = vpack.c.b16 %v6590, %v6582
    %v7167 = vpack.c.b16 %v6591, %v6583
    %v7168 = vpack.c.b16 %v6592, %v6584
    %v7169 = vpack.c.b16 %v6593, %v6585
    %v7170 = vpack.c.b16 %v6594, %v6586
    %v7171 = vpack.c.b16 %v6595, %v6587
    %v7172 = vpack.c.b16 %v6596, %v6588
    %v7173 = vpack.c.b16 %v6605, %v6597
    %v7174 = vpack.c.b16 %v6606, %v6598
    %v7175 = vpack.c.b16 %v6607, %v6599
    %v7176 = vpack.c.b16 %v6608, %v6600
    %v7177 = vpack.c.b16 %v6609, %v6601
    %v7178 = vpack.c.b16 %v6610, %v6602
    %v7179 = vpack.c.b16 %v6611, %v6603
    %v7180 = vpack.c.b16 %v6612, %v6604
    %v7181 = vpack.c.b16 %v6621, %v6613
    %v7182 = vpack.c.b16 %v6622, %v6614
    %v7183 = vpack.c.b16 %v6623, %v6615
    %v7184 = vpack.c.b16 %v6624, %v6616
    %v7185 = vpack.c.b16 %v6625, %v6617
    %v7186 = vpack.c.b16 %v6626, %v6618
    %v7187 = vpack.c.b16 %v6627, %v6619
    %v7188 = vpack.c.b16 %v6628, %v6620
    %v7189 = vpack.c.b16 %v6637, %v6629
    %v7190 = vpack.c.b16 %v6638, %v6630
    %v7191 = vpack.c.b16 %v6639, %v6631
    %v7192 = vpack.c.b16 %v6640, %v6632
    %v7193 = vpack.c.b16 %v6641, %v6633
    %v7194 = vpack.c.b16 %v6642, %v6634
    %v7195 = vpack.c.b16 %v6643, %v6635
    %v7196 = vpack.c.b16 %v6644, %v6636
    %v7197 = vpack.c.b16 %v6653, %v6645
    %v7198 = vpack.c.b16 %v6654, %v6646
    %v7199 = vpack.c.b16 %v6655, %v6647
    %v7200 = vpack.c.b16 %v6656, %v6648
    %v7201 = vpack.c.b16 %v6657, %v6649
    %v7202 = vpack.c.b16 %v6658, %v6650
    %v7203 = vpack.c.b16 %v6659, %v6651
    %v7204 = vpack.c.b16 %v6660, %v6652
    %v7205 = vpack.c.b16 %v6669, %v6661
    %v7206 = vpack.c.b16 %v6670, %v6662
    %v7207 = vpack.c.b16 %v6671, %v6663
    %v7208 = vpack.c.b16 %v6672, %v6664
    %v7209 = vpack.c.b16 %v6673, %v6665
    %v7210 = vpack.c.b16 %v6674, %v6666
    %v7211 = vpack.c.b16 %v6675, %v6667
    %v7212 = vpack.c.b16 %v6676, %v6668
    %v7213 = vpack.c.b16 %v6685, %v6677
    %v7214 = vpack.c.b16 %v6686, %v6678
    %v7215 = vpack.c.b16 %v6687, %v6679
    %v7216 = vpack.c.b16 %v6688, %v6680
    %v7217 = vpack.c.b16 %v6689, %v6681
    %v7218 = vpack.c.b16 %v6690, %v6682
    %v7219 = vpack.c.b16 %v6691, %v6683
    %v7220 = vpack.c.b16 %v6692, %v6684
    %v7221 = vpack.c.b16 %v6701, %v6693
    %v7222 = vpack.c.b16 %v6702, %v6694
    %v7223 = vpack.c.b16 %v6703, %v6695
    %v7224 = vpack.c.b16 %v6704, %v6696
    %v7225 = vpack.c.b16 %v6705, %v6697
    %v7226 = vpack.c.b16 %v6706, %v6698
    %v7227 = vpack.c.b16 %v6707, %v6699
    %v7228 = vpack.c.b16 %v6708, %v6700
    %v7229 = vpack.c.b16 %v6717, %v6709
    %v7230 = vpack.c.b16 %v6718, %v6710
    %v7231 = vpack.c.b16 %v6719, %v6711
    %v7232 = vpack.c.b16 %v6720, %v6712
    %v7233 = vpack.c.b16 %v6721, %v6713
    %v7234 = vpack.c.b16 %v6722, %v6714
    %v7235 = vpack.c.b16 %v6723, %v6715
    %v7236 = vpack.c.b16 %v6724, %v6716
    %7749 = vmatprep.subr.bf16.mxu0 %v6726
    %7750 = vmatpush1.bf16.msra.mxu0 %v6725
    %7751 = vmatprep.subr.bf16.mxu0 %v6734
    %7752 = vmatpush1.bf16.msra.mxu0 %v6733
    %7753 = vmatprep.subr.bf16.mxu0 %v6742
    %7754 = vmatpush1.bf16.msra.mxu0 %v6741
    %7755 = vmatprep.subr.bf16.mxu0 %v6750
    %7756 = vmatpush1.bf16.msra.mxu0 %v6749
    %7757 = vmatprep.subr.bf16.mxu0 %v6758
    %7758 = vmatpush1.bf16.msra.mxu0 %v6757
    %7759 = vmatprep.subr.bf16.mxu0 %v6766
    %7760 = vmatpush1.bf16.msra.mxu0 %v6765
    %7761 = vmatprep.subr.bf16.mxu0 %v6774
    %7762 = vmatpush1.bf16.msra.mxu0 %v6773
    %7763 = vmatprep.subr.bf16.mxu0 %v6782
    %7764 = vmatpush1.bf16.msra.mxu0 %v6781
    %7765 = vmatprep.subr.bf16.mxu0 %v6790
    %7766 = vmatpush1.bf16.msra.mxu0 %v6789
    %7767 = vmatprep.subr.bf16.mxu0 %v6798
    %7768 = vmatpush1.bf16.msra.mxu0 %v6797
    %7769 = vmatprep.subr.bf16.mxu0 %v6806
    %7770 = vmatpush1.bf16.msra.mxu0 %v6805
    %7771 = vmatprep.subr.bf16.mxu0 %v6814
    %7772 = vmatpush1.bf16.msra.mxu0 %v6813
    %7773 = vmatprep.subr.bf16.mxu0 %v6822
    %7774 = vmatpush1.bf16.msra.mxu0 %v6821
    %7775 = vmatprep.subr.bf16.mxu0 %v6830
    %7776 = vmatpush1.bf16.msra.mxu0 %v6829
    %7777 = vmatprep.subr.bf16.mxu0 %v6838
    %7778 = vmatpush1.bf16.msra.mxu0 %v6837
    %7779 = vmatprep.subr.bf16.mxu0 %v6846
    %7780 = vmatpush1.bf16.msra.mxu0 %v6845
    %7781 = vmatprep.mubr.bf16.mxu0 %v4628
    %7782 = vmatmul.mubr.bf16.gmra.mrb[0].mxu0 %v4627
    %v7783 = vpop.f32.mrb[0].mxu0
    %v7784 = vadd.f32 %v5152, %v7783
    %v7785 = vpop.f32.mrb[0].mxu0
    %v7786 = vadd.f32 %v5156, %v7785
    %v7787 = vpop.f32.mrb[0].mxu0
    %v7788 = vadd.f32 %v5152, %v7787
    %v7789 = vpop.f32.mrb[0].mxu0
    %v7790 = vadd.f32 %v5156, %v7789
    %7791 = vdwg.mxu0
    %7792 = vmatprep.subr.bf16.mxu0 %v6854
    %7793 = vmatpush1.bf16.msra.mxu0 %v6853
    %7794 = vmatprep.subr.bf16.mxu0 %v6862
    %7795 = vmatpush1.bf16.msra.mxu0 %v6861
    %7796 = vmatprep.subr.bf16.mxu0 %v6870
    %7797 = vmatpush1.bf16.msra.mxu0 %v6869
    %7798 = vmatprep.subr.bf16.mxu0 %v6878
    %7799 = vmatpush1.bf16.msra.mxu0 %v6877
    %7800 = vmatprep.subr.bf16.mxu0 %v6886
    %7801 = vmatpush1.bf16.msra.mxu0 %v6885
    %7802 = vmatprep.subr.bf16.mxu0 %v6894
    %7803 = vmatpush1.bf16.msra.mxu0 %v6893
    %7804 = vmatprep.subr.bf16.mxu0 %v6902
    %7805 = vmatpush1.bf16.msra.mxu0 %v6901
    %7806 = vmatprep.subr.bf16.mxu0 %v6910
    %7807 = vmatpush1.bf16.msra.mxu0 %v6909
    %7808 = vmatprep.subr.bf16.mxu0 %v6918
    %7809 = vmatpush1.bf16.msra.mxu0 %v6917
    %7810 = vmatprep.subr.bf16.mxu0 %v6926
    %7811 = vmatpush1.bf16.msra.mxu0 %v6925
    %7812 = vmatprep.subr.bf16.mxu0 %v6934
    %7813 = vmatpush1.bf16.msra.mxu0 %v6933
    %7814 = vmatprep.subr.bf16.mxu0 %v6942
    %7815 = vmatpush1.bf16.msra.mxu0 %v6941
    %7816 = vmatprep.subr.bf16.mxu0 %v6950
    %7817 = vmatpush1.bf16.msra.mxu0 %v6949
    %7818 = vmatprep.subr.bf16.mxu0 %v6958
    %7819 = vmatpush1.bf16.msra.mxu0 %v6957
    %7820 = vmatprep.subr.bf16.mxu0 %v6966
    %7821 = vmatpush1.bf16.msra.mxu0 %v6965
    %7822 = vmatprep.subr.bf16.mxu0 %v6974
    %7823 = vmatpush1.bf16.msra.mxu0 %v6973
    %7824 = vmatprep.mubr.bf16.mxu0 %v4630
    %7825 = vmatmul.mubr.bf16.gmra.mrb[0].mxu0 %v4629
    %v7826 = vpop.f32.mrb[0].mxu0
    %v7827 = vadd.f32 %v7784, %v7826
    %v7828 = vpop.f32.mrb[0].mxu0
    %v7829 = vadd.f32 %v7786, %v7828
    %v7830 = vpop.f32.mrb[0].mxu0
    %v7831 = vadd.f32 %v7788, %v7830
    %v7832 = vpop.f32.mrb[0].mxu0
    %v7833 = vadd.f32 %v7790, %v7832
    %7834 = vdwg.mxu0
    %7835 = vmatprep.subr.bf16.mxu0 %v6982
    %7836 = vmatpush1.bf16.msra.mxu0 %v6981
    %7837 = vmatprep.subr.bf16.mxu0 %v6990
    %7838 = vmatpush1.bf16.msra.mxu0 %v6989
    %7839 = vmatprep.subr.bf16.mxu0 %v6998
    %7840 = vmatpush1.bf16.msra.mxu0 %v6997
    %7841 = vmatprep.subr.bf16.mxu0 %v7006
    %7842 = vmatpush1.bf16.msra.mxu0 %v7005
    %7843 = vmatprep.subr.bf16.mxu0 %v7014
    %7844 = vmatpush1.bf16.msra.mxu0 %v7013
    %7845 = vmatprep.subr.bf16.mxu0 %v7022
    %7846 = vmatpush1.bf16.msra.mxu0 %v7021
    %7847 = vmatprep.subr.bf16.mxu0 %v7030
    %7848 = vmatpush1.bf16.msra.mxu0 %v7029
    %7849 = vmatprep.subr.bf16.mxu0 %v7038
    %7850 = vmatpush1.bf16.msra.mxu0 %v7037
    %7851 = vmatprep.subr.bf16.mxu0 %v7046
    %7852 = vmatpush1.bf16.msra.mxu0 %v7045
    %7853 = vmatprep.subr.bf16.mxu0 %v7054
    %7854 = vmatpush1.bf16.msra.mxu0 %v7053
    %7855 = vmatprep.subr.bf16.mxu0 %v7062
    %7856 = vmatpush1.bf16.msra.mxu0 %v7061
    %7857 = vmatprep.subr.bf16.mxu0 %v7070
    %7858 = vmatpush1.bf16.msra.mxu0 %v7069
    %7859 = vmatprep.subr.bf16.mxu0 %v7078
    %7860 = vmatpush1.bf16.msra.mxu0 %v7077
    %7861 = vmatprep.subr.bf16.mxu0 %v7086
    %7862 = vmatpush1.bf16.msra.mxu0 %v7085
    %7863 = vmatprep.subr.bf16.mxu0 %v7094
    %7864 = vmatpush1.bf16.msra.mxu0 %v7093
    %7865 = vmatprep.subr.bf16.mxu0 %v7102
    %7866 = vmatpush1.bf16.msra.mxu0 %v7101
    %7867 = vmatprep.mubr.bf16.mxu0 %v4632
    %7868 = vmatmul.mubr.bf16.gmra.mrb[0].mxu0 %v4631
    %v7869 = vpop.f32.mrb[0].mxu0
    %v7870 = vadd.f32 %v7827, %v7869
    %v7871 = vpop.f32.mrb[0].mxu0
    %v7872 = vadd.f32 %v7829, %v7871
    %v7873 = vpop.f32.mrb[0].mxu0
    %v7874 = vadd.f32 %v7831, %v7873
    %v7875 = vpop.f32.mrb[0].mxu0
    %v7876 = vadd.f32 %v7833, %v7875
    %7877 = vdwg.mxu0
    %7878 = vmatprep.subr.bf16.mxu0 %v7110
    %7879 = vmatpush1.bf16.msra.mxu0 %v7109
    %7880 = vmatprep.subr.bf16.mxu0 %v7118
    %7881 = vmatpush1.bf16.msra.mxu0 %v7117
    %7882 = vmatprep.subr.bf16.mxu0 %v7126
    %7883 = vmatpush1.bf16.msra.mxu0 %v7125
    %7884 = vmatprep.subr.bf16.mxu0 %v7134
    %7885 = vmatpush1.bf16.msra.mxu0 %v7133
    %7886 = vmatprep.subr.bf16.mxu0 %v7142
    %7887 = vmatpush1.bf16.msra.mxu0 %v7141
    %7888 = vmatprep.subr.bf16.mxu0 %v7150
    %7889 = vmatpush1.bf16.msra.mxu0 %v7149
    %7890 = vmatprep.subr.bf16.mxu0 %v7158
    %7891 = vmatpush1.bf16.msra.mxu0 %v7157
    %7892 = vmatprep.subr.bf16.mxu0 %v7166
    %7893 = vmatpush1.bf16.msra.mxu0 %v7165
    %7894 = vmatprep.subr.bf16.mxu0 %v7174
    %7895 = vmatpush1.bf16.msra.mxu0 %v7173
    %7896 = vmatprep.subr.bf16.mxu0 %v7182
    %7897 = vmatpush1.bf16.msra.mxu0 %v7181
    %7898 = vmatprep.subr.bf16.mxu0 %v7190
    %7899 = vmatpush1.bf16.msra.mxu0 %v7189
    %7900 = vmatprep.subr.bf16.mxu0 %v7198
    %7901 = vmatpush1.bf16.msra.mxu0 %v7197
    %7902 = vmatprep.subr.bf16.mxu0 %v7206
    %7903 = vmatpush1.bf16.msra.mxu0 %v7205
    %7904 = vmatprep.subr.bf16.mxu0 %v7214
    %7905 = vmatpush1.bf16.msra.mxu0 %v7213
    %7906 = vmatprep.subr.bf16.mxu0 %v7222
    %7907 = vmatpush1.bf16.msra.mxu0 %v7221
    %7908 = vmatprep.subr.bf16.mxu0 %v7230
    %7909 = vmatpush1.bf16.msra.mxu0 %v7229
    %7910 = vmatprep.mubr.bf16.mxu0 %v4634
    %7911 = vmatmul.mubr.bf16.gmra.mrb[0].mxu0 %v4633
    %v7912 = vpop.f32.mrb[0].mxu0
    %v7913 = vadd.f32 %v7870, %v7912
    %v7914 = vpop.f32.mrb[0].mxu0
    %v7915 = vadd.f32 %v7872, %v7914
    %v7916 = vpop.f32.mrb[0].mxu0
    %v7917 = vadd.f32 %v7874, %v7916
    %v7918 = vpop.f32.mrb[0].mxu0
    %v7919 = vadd.f32 %v7876, %v7918
    %7920 = vdwg.mxu0
    %7921 = vmatprep.subr.bf16.mxu0 %v6728
    %7922 = vmatpush1.bf16.msra.mxu0 %v6727
    %7923 = vmatprep.subr.bf16.mxu0 %v6736
    %7924 = vmatpush1.bf16.msra.mxu0 %v6735
    %7925 = vmatprep.subr.bf16.mxu0 %v6744
    %7926 = vmatpush1.bf16.msra.mxu0 %v6743
    %7927 = vmatprep.subr.bf16.mxu0 %v6752
    %7928 = vmatpush1.bf16.msra.mxu0 %v6751
    %7929 = vmatprep.subr.bf16.mxu0 %v6760
    %7930 = vmatpush1.bf16.msra.mxu0 %v6759
    %7931 = vmatprep.subr.bf16.mxu0 %v6768
    %7932 = vmatpush1.bf16.msra.mxu0 %v6767
    %7933 = vmatprep.subr.bf16.mxu0 %v6776
    %7934 = vmatpush1.bf16.msra.mxu0 %v6775
    %7935 = vmatprep.subr.bf16.mxu0 %v6784
    %7936 = vmatpush1.bf16.msra.mxu0 %v6783
    %7937 = vmatprep.subr.bf16.mxu0 %v6792
    %7938 = vmatpush1.bf16.msra.mxu0 %v6791
    %7939 = vmatprep.subr.bf16.mxu0 %v6800
    %7940 = vmatpush1.bf16.msra.mxu0 %v6799
    %7941 = vmatprep.subr.bf16.mxu0 %v6808
    %7942 = vmatpush1.bf16.msra.mxu0 %v6807
    %7943 = vmatprep.subr.bf16.mxu0 %v6816
    %7944 = vmatpush1.bf16.msra.mxu0 %v6815
    %7945 = vmatprep.subr.bf16.mxu0 %v6824
    %7946 = vmatpush1.bf16.msra.mxu0 %v6823
    %7947 = vmatprep.subr.bf16.mxu0 %v6832
    %7948 = vmatpush1.bf16.msra.mxu0 %v6831
    %7949 = vmatprep.subr.bf16.mxu0 %v6840
    %7950 = vmatpush1.bf16.msra.mxu0 %v6839
    %7951 = vmatprep.subr.bf16.mxu0 %v6848
    %7952 = vmatpush1.bf16.msra.mxu0 %v6847
    %7953 = vmatprep.mubr.bf16.mxu0 %v4628
    %7954 = vmatmul.mubr.bf16.gmra.mrb[0].mxu0 %v4627
    %v7955 = vpop.f32.mrb[0].mxu0
    %v7956 = vadd.f32 %v5160, %v7955
    %v7957 = vpop.f32.mrb[0].mxu0
    %v7958 = vadd.f32 %v5164, %v7957
    %v7959 = vpop.f32.mrb[0].mxu0
    %v7960 = vadd.f32 %v5160, %v7959
    %v7961 = vpop.f32.mrb[0].mxu0
    %v7962 = vadd.f32 %v5164, %v7961
    %7963 = vdwg.mxu0
    %7964 = vmatprep.subr.bf16.mxu0 %v6856
    %7965 = vmatpush1.bf16.msra.mxu0 %v6855
    %7966 = vmatprep.subr.bf16.mxu0 %v6864
    %7967 = vmatpush1.bf16.msra.mxu0 %v6863
    %7968 = vmatprep.subr.bf16.mxu0 %v6872
    %7969 = vmatpush1.bf16.msra.mxu0 %v6871
    %7970 = vmatprep.subr.bf16.mxu0 %v6880
    %7971 = vmatpush1.bf16.msra.mxu0 %v6879
    %7972 = vmatprep.subr.bf16.mxu0 %v6888
    %7973 = vmatpush1.bf16.msra.mxu0 %v6887
    %7974 = vmatprep.subr.bf16.mxu0 %v6896
    %7975 = vmatpush1.bf16.msra.mxu0 %v6895
    %7976 = vmatprep.subr.bf16.mxu0 %v6904
    %7977 = vmatpush1.bf16.msra.mxu0 %v6903
    %7978 = vmatprep.subr.bf16.mxu0 %v6912
    %7979 = vmatpush1.bf16.msra.mxu0 %v6911
    %7980 = vmatprep.subr.bf16.mxu0 %v6920
    %7981 = vmatpush1.bf16.msra.mxu0 %v6919
    %7982 = vmatprep.subr.bf16.mxu0 %v6928
    %7983 = vmatpush1.bf16.msra.mxu0 %v6927
    %7984 = vmatprep.subr.bf16.mxu0 %v6936
    %7985 = vmatpush1.bf16.msra.mxu0 %v6935
    %7986 = vmatprep.subr.bf16.mxu0 %v6944
    %7987 = vmatpush1.bf16.msra.mxu0 %v6943
    %7988 = vmatprep.subr.bf16.mxu0 %v6952
    %7989 = vmatpush1.bf16.msra.mxu0 %v6951
    %7990 = vmatprep.subr.bf16.mxu0 %v6960
    %7991 = vmatpush1.bf16.msra.mxu0 %v6959
    %7992 = vmatprep.subr.bf16.mxu0 %v6968
    %7993 = vmatpush1.bf16.msra.mxu0 %v6967
    %7994 = vmatprep.subr.bf16.mxu0 %v6976
    %7995 = vmatpush1.bf16.msra.mxu0 %v6975
    %7996 = vmatprep.mubr.bf16.mxu0 %v4630
    %7997 = vmatmul.mubr.bf16.gmra.mrb[0].mxu0 %v4629
    %v7998 = vpop.f32.mrb[0].mxu0
    %v7999 = vadd.f32 %v7956, %v7998
    %v8000 = vpop.f32.mrb[0].mxu0
    %v8001 = vadd.f32 %v7958, %v8000
    %v8002 = vpop.f32.mrb[0].mxu0
    %v8003 = vadd.f32 %v7960, %v8002
    %v8004 = vpop.f32.mrb[0].mxu0
    %v8005 = vadd.f32 %v7962, %v8004
    %8006 = vdwg.mxu0
    %8007 = vmatprep.subr.bf16.mxu0 %v6984
    %8008 = vmatpush1.bf16.msra.mxu0 %v6983
    %8009 = vmatprep.subr.bf16.mxu0 %v6992
    %8010 = vmatpush1.bf16.msra.mxu0 %v6991
    %8011 = vmatprep.subr.bf16.mxu0 %v7000
    %8012 = vmatpush1.bf16.msra.mxu0 %v6999
    %8013 = vmatprep.subr.bf16.mxu0 %v7008
    %8014 = vmatpush1.bf16.msra.mxu0 %v7007
    %8015 = vmatprep.subr.bf16.mxu0 %v7016
    %8016 = vmatpush1.bf16.msra.mxu0 %v7015
    %8017 = vmatprep.subr.bf16.mxu0 %v7024
    %8018 = vmatpush1.bf16.msra.mxu0 %v7023
    %8019 = vmatprep.subr.bf16.mxu0 %v7032
    %8020 = vmatpush1.bf16.msra.mxu0 %v7031
    %8021 = vmatprep.subr.bf16.mxu0 %v7040
    %8022 = vmatpush1.bf16.msra.mxu0 %v7039
    %8023 = vmatprep.subr.bf16.mxu0 %v7048
    %8024 = vmatpush1.bf16.msra.mxu0 %v7047
    %8025 = vmatprep.subr.bf16.mxu0 %v7056
    %8026 = vmatpush1.bf16.msra.mxu0 %v7055
    %8027 = vmatprep.subr.bf16.mxu0 %v7064
    %8028 = vmatpush1.bf16.msra.mxu0 %v7063
    %8029 = vmatprep.subr.bf16.mxu0 %v7072
    %8030 = vmatpush1.bf16.msra.mxu0 %v7071
    %8031 = vmatprep.subr.bf16.mxu0 %v7080
    %8032 = vmatpush1.bf16.msra.mxu0 %v7079
    %8033 = vmatprep.subr.bf16.mxu0 %v7088
    %8034 = vmatpush1.bf16.msra.mxu0 %v7087
    %8035 = vmatprep.subr.bf16.mxu0 %v7096
    %8036 = vmatpush1.bf16.msra.mxu0 %v7095
    %8037 = vmatprep.subr.bf16.mxu0 %v7104
    %8038 = vmatpush1.bf16.msra.mxu0 %v7103
    %8039 = vmatprep.mubr.bf16.mxu0 %v4632
    %8040 = vmatmul.mubr.bf16.gmra.mrb[0].mxu0 %v4631
    %v8041 = vpop.f32.mrb[0].mxu0
    %v8042 = vadd.f32 %v7999, %v8041
    %v8043 = vpop.f32.mrb[0].mxu0
    %v8044 = vadd.f32 %v8001, %v8043
    %v8045 = vpop.f32.mrb[0].mxu0
    %v8046 = vadd.f32 %v8003, %v8045
    %v8047 = vpop.f32.mrb[0].mxu0
    %v8048 = vadd.f32 %v8005, %v8047
    %8049 = vdwg.mxu0
    %8050 = vmatprep.subr.bf16.mxu0 %v7112
    %8051 = vmatpush1.bf16.msra.mxu0 %v7111
    %8052 = vmatprep.subr.bf16.mxu0 %v7120
    %8053 = vmatpush1.bf16.msra.mxu0 %v7119
    %8054 = vmatprep.subr.bf16.mxu0 %v7128
    %8055 = vmatpush1.bf16.msra.mxu0 %v7127
    %8056 = vmatprep.subr.bf16.mxu0 %v7136
    %8057 = vmatpush1.bf16.msra.mxu0 %v7135
    %8058 = vmatprep.subr.bf16.mxu0 %v7144
    %8059 = vmatpush1.bf16.msra.mxu0 %v7143
    %8060 = vmatprep.subr.bf16.mxu0 %v7152
    %8061 = vmatpush1.bf16.msra.mxu0 %v7151
    %8062 = vmatprep.subr.bf16.mxu0 %v7160
    %8063 = vmatpush1.bf16.msra.mxu0 %v7159
    %8064 = vmatprep.subr.bf16.mxu0 %v7168
    %8065 = vmatpush1.bf16.msra.mxu0 %v7167
    %8066 = vmatprep.subr.bf16.mxu0 %v7176
    %8067 = vmatpush1.bf16.msra.mxu0 %v7175
    %8068 = vmatprep.subr.bf16.mxu0 %v7184
    %8069 = vmatpush1.bf16.msra.mxu0 %v7183
    %8070 = vmatprep.subr.bf16.mxu0 %v7192
    %8071 = vmatpush1.bf16.msra.mxu0 %v7191
    %8072 = vmatprep.subr.bf16.mxu0 %v7200
    %8073 = vmatpush1.bf16.msra.mxu0 %v7199
    %8074 = vmatprep.subr.bf16.mxu0 %v7208
    %8075 = vmatpush1.bf16.msra.mxu0 %v7207
    %8076 = vmatprep.subr.bf16.mxu0 %v7216
    %8077 = vmatpush1.bf16.msra.mxu0 %v7215
    %8078 = vmatprep.subr.bf16.mxu0 %v7224
    %8079 = vmatpush1.bf16.msra.mxu0 %v7223
    %8080 = vmatprep.subr.bf16.mxu0 %v7232
    %8081 = vmatpush1.bf16.msra.mxu0 %v7231
    %8082 = vmatprep.mubr.bf16.mxu0 %v4634
    %8083 = vmatmul.mubr.bf16.gmra.mrb[0].mxu0 %v4633
    %v8084 = vpop.f32.mrb[0].mxu0
    %v8085 = vadd.f32 %v8042, %v8084
    %v8086 = vpop.f32.mrb[0].mxu0
    %v8087 = vadd.f32 %v8044, %v8086
    %v8088 = vpop.f32.mrb[0].mxu0
    %v8089 = vadd.f32 %v8046, %v8088
    %v8090 = vpop.f32.mrb[0].mxu0
    %v8091 = vadd.f32 %v8048, %v8090
    %8092 = vdwg.mxu0
    %8093 = vmatprep.subr.bf16.mxu0 %v6730
    %8094 = vmatpush1.bf16.msra.mxu0 %v6729
    %8095 = vmatprep.subr.bf16.mxu0 %v6738
    %8096 = vmatpush1.bf16.msra.mxu0 %v6737
    %8097 = vmatprep.subr.bf16.mxu0 %v6746
    %8098 = vmatpush1.bf16.msra.mxu0 %v6745
    %8099 = vmatprep.subr.bf16.mxu0 %v6754
    %8100 = vmatpush1.bf16.msra.mxu0 %v6753
    %8101 = vmatprep.subr.bf16.mxu0 %v6762
    %8102 = vmatpush1.bf16.msra.mxu0 %v6761
    %8103 = vmatprep.subr.bf16.mxu0 %v6770
    %8104 = vmatpush1.bf16.msra.mxu0 %v6769
    %8105 = vmatprep.subr.bf16.mxu0 %v6778
    %8106 = vmatpush1.bf16.msra.mxu0 %v6777
    %8107 = vmatprep.subr.bf16.mxu0 %v6786
    %8108 = vmatpush1.bf16.msra.mxu0 %v6785
    %8109 = vmatprep.subr.bf16.mxu0 %v6794
    %8110 = vmatpush1.bf16.msra.mxu0 %v6793
    %8111 = vmatprep.subr.bf16.mxu0 %v6802
    %8112 = vmatpush1.bf16.msra.mxu0 %v6801
    %8113 = vmatprep.subr.bf16.mxu0 %v6810
    %8114 = vmatpush1.bf16.msra.mxu0 %v6809
    %8115 = vmatprep.subr.bf16.mxu0 %v6818
    %8116 = vmatpush1.bf16.msra.mxu0 %v6817
    %8117 = vmatprep.subr.bf16.mxu0 %v6826
    %8118 = vmatpush1.bf16.msra.mxu0 %v6825
    %8119 = vmatprep.subr.bf16.mxu0 %v6834
    %8120 = vmatpush1.bf16.msra.mxu0 %v6833
    %8121 = vmatprep.subr.bf16.mxu0 %v6842
    %8122 = vmatpush1.bf16.msra.mxu0 %v6841
    %8123 = vmatprep.subr.bf16.mxu0 %v6850
    %8124 = vmatpush1.bf16.msra.mxu0 %v6849
    %8125 = vmatprep.mubr.bf16.mxu0 %v4628
    %8126 = vmatmul.mubr.bf16.gmra.mrb[0].mxu0 %v4627
    %v8127 = vpop.f32.mrb[0].mxu0
    %v8128 = vadd.f32 %v5168, %v8127
    %v8129 = vpop.f32.mrb[0].mxu0
    %v8130 = vadd.f32 %v5172, %v8129
    %v8131 = vpop.f32.mrb[0].mxu0
    %v8132 = vadd.f32 %v5168, %v8131
    %v8133 = vpop.f32.mrb[0].mxu0
    %v8134 = vadd.f32 %v5172, %v8133
    %8135 = vdwg.mxu0
    %8136 = vmatprep.subr.bf16.mxu0 %v6858
    %8137 = vmatpush1.bf16.msra.mxu0 %v6857
    %8138 = vmatprep.subr.bf16.mxu0 %v6866
    %8139 = vmatpush1.bf16.msra.mxu0 %v6865
    %8140 = vmatprep.subr.bf16.mxu0 %v6874
    %8141 = vmatpush1.bf16.msra.mxu0 %v6873
    %8142 = vmatprep.subr.bf16.mxu0 %v6882
    %8143 = vmatpush1.bf16.msra.mxu0 %v6881
    %8144 = vmatprep.subr.bf16.mxu0 %v6890
    %8145 = vmatpush1.bf16.msra.mxu0 %v6889
    %8146 = vmatprep.subr.bf16.mxu0 %v6898
    %8147 = vmatpush1.bf16.msra.mxu0 %v6897
    %8148 = vmatprep.subr.bf16.mxu0 %v6906
    %8149 = vmatpush1.bf16.msra.mxu0 %v6905
    %8150 = vmatprep.subr.bf16.mxu0 %v6914
    %8151 = vmatpush1.bf16.msra.mxu0 %v6913
    %8152 = vmatprep.subr.bf16.mxu0 %v6922
    %8153 = vmatpush1.bf16.msra.mxu0 %v6921
    %8154 = vmatprep.subr.bf16.mxu0 %v6930
    %8155 = vmatpush1.bf16.msra.mxu0 %v6929
    %8156 = vmatprep.subr.bf16.mxu0 %v6938
    %8157 = vmatpush1.bf16.msra.mxu0 %v6937
    %8158 = vmatprep.subr.bf16.mxu0 %v6946
    %8159 = vmatpush1.bf16.msra.mxu0 %v6945
    %8160 = vmatprep.subr.bf16.mxu0 %v6954
    %8161 = vmatpush1.bf16.msra.mxu0 %v6953
    %8162 = vmatprep.subr.bf16.mxu0 %v6962
    %8163 = vmatpush1.bf16.msra.mxu0 %v6961
    %8164 = vmatprep.subr.bf16.mxu0 %v6970
    %8165 = vmatpush1.bf16.msra.mxu0 %v6969
    %8166 = vmatprep.subr.bf16.mxu0 %v6978
    %8167 = vmatpush1.bf16.msra.mxu0 %v6977
    %8168 = vmatprep.mubr.bf16.mxu0 %v4630
    %8169 = vmatmul.mubr.bf16.gmra.mrb[0].mxu0 %v4629
    %v8170 = vpop.f32.mrb[0].mxu0
    %v8171 = vadd.f32 %v8128, %v8170
    %v8172 = vpop.f32.mrb[0].mxu0
    %v8173 = vadd.f32 %v8130, %v8172
    %v8174 = vpop.f32.mrb[0].mxu0
    %v8175 = vadd.f32 %v8132, %v8174
    %v8176 = vpop.f32.mrb[0].mxu0
    %v8177 = vadd.f32 %v8134, %v8176
    %8178 = vdwg.mxu0
    %8179 = vmatprep.subr.bf16.mxu0 %v6986
    %8180 = vmatpush1.bf16.msra.mxu0 %v6985
    %8181 = vmatprep.subr.bf16.mxu0 %v6994
    %8182 = vmatpush1.bf16.msra.mxu0 %v6993
    %8183 = vmatprep.subr.bf16.mxu0 %v7002
    %8184 = vmatpush1.bf16.msra.mxu0 %v7001
    %8185 = vmatprep.subr.bf16.mxu0 %v7010
    %8186 = vmatpush1.bf16.msra.mxu0 %v7009
    %8187 = vmatprep.subr.bf16.mxu0 %v7018
    %8188 = vmatpush1.bf16.msra.mxu0 %v7017
    %8189 = vmatprep.subr.bf16.mxu0 %v7026
    %8190 = vmatpush1.bf16.msra.mxu0 %v7025
    %8191 = vmatprep.subr.bf16.mxu0 %v7034
    %8192 = vmatpush1.bf16.msra.mxu0 %v7033
    %8193 = vmatprep.subr.bf16.mxu0 %v7042
    %8194 = vmatpush1.bf16.msra.mxu0 %v7041
    %8195 = vmatprep.subr.bf16.mxu0 %v7050
    %8196 = vmatpush1.bf16.msra.mxu0 %v7049
    %8197 = vmatprep.subr.bf16.mxu0 %v7058
    %8198 = vmatpush1.bf16.msra.mxu0 %v7057
    %8199 = vmatprep.subr.bf16.mxu0 %v7066
    %8200 = vmatpush1.bf16.msra.mxu0 %v7065
    %8201 = vmatprep.subr.bf16.mxu0 %v7074
    %8202 = vmatpush1.bf16.msra.mxu0 %v7073
    %8203 = vmatprep.subr.bf16.mxu0 %v7082
    %8204 = vmatpush1.bf16.msra.mxu0 %v7081
    %8205 = vmatprep.subr.bf16.mxu0 %v7090
    %8206 = vmatpush1.bf16.msra.mxu0 %v7089
    %8207 = vmatprep.subr.bf16.mxu0 %v7098
    %8208 = vmatpush1.bf16.msra.mxu0 %v7097
    %8209 = vmatprep.subr.bf16.mxu0 %v7106
    %8210 = vmatpush1.bf16.msra.mxu0 %v7105
    %8211 = vmatprep.mubr.bf16.mxu0 %v4632
    %8212 = vmatmul.mubr.bf16.gmra.mrb[0].mxu0 %v4631
    %v8213 = vpop.f32.mrb[0].mxu0
    %v8214 = vadd.f32 %v8171, %v8213
    %v8215 = vpop.f32.mrb[0].mxu0
    %v8216 = vadd.f32 %v8173, %v8215
    %v8217 = vpop.f32.mrb[0].mxu0
    %v8218 = vadd.f32 %v8175, %v8217
    %v8219 = vpop.f32.mrb[0].mxu0
    %v8220 = vadd.f32 %v8177, %v8219
    %8221 = vdwg.mxu0
    %8222 = vmatprep.subr.bf16.mxu0 %v7114
    %8223 = vmatpush1.bf16.msra.mxu0 %v7113
    %8224 = vmatprep.subr.bf16.mxu0 %v7122
    %8225 = vmatpush1.bf16.msra.mxu0 %v7121
    %8226 = vmatprep.subr.bf16.mxu0 %v7130
    %8227 = vmatpush1.bf16.msra.mxu0 %v7129
    %8228 = vmatprep.subr.bf16.mxu0 %v7138
    %8229 = vmatpush1.bf16.msra.mxu0 %v7137
    %8230 = vmatprep.subr.bf16.mxu0 %v7146
    %8231 = vmatpush1.bf16.msra.mxu0 %v7145
    %8232 = vmatprep.subr.bf16.mxu0 %v7154
    %8233 = vmatpush1.bf16.msra.mxu0 %v7153
    %8234 = vmatprep.subr.bf16.mxu0 %v7162
    %8235 = vmatpush1.bf16.msra.mxu0 %v7161
    %8236 = vmatprep.subr.bf16.mxu0 %v7170
    %8237 = vmatpush1.bf16.msra.mxu0 %v7169
    %8238 = vmatprep.subr.bf16.mxu0 %v7178
    %8239 = vmatpush1.bf16.msra.mxu0 %v7177
    %8240 = vmatprep.subr.bf16.mxu0 %v7186
    %8241 = vmatpush1.bf16.msra.mxu0 %v7185
    %8242 = vmatprep.subr.bf16.mxu0 %v7194
    %8243 = vmatpush1.bf16.msra.mxu0 %v7193
    %8244 = vmatprep.subr.bf16.mxu0 %v7202
    %8245 = vmatpush1.bf16.msra.mxu0 %v7201
    %8246 = vmatprep.subr.bf16.mxu0 %v7210
    %8247 = vmatpush1.bf16.msra.mxu0 %v7209
    %8248 = vmatprep.subr.bf16.mxu0 %v7218
    %8249 = vmatpush1.bf16.msra.mxu0 %v7217
    %8250 = vmatprep.subr.bf16.mxu0 %v7226
    %8251 = vmatpush1.bf16.msra.mxu0 %v7225
    %8252 = vmatprep.subr.bf16.mxu0 %v7234
    %8253 = vmatpush1.bf16.msra.mxu0 %v7233
    %8254 = vmatprep.mubr.bf16.mxu0 %v4634
    %8255 = vmatmul.mubr.bf16.gmra.mrb[0].mxu0 %v4633
    %v8256 = vpop.f32.mrb[0].mxu0
    %v8257 = vadd.f32 %v8214, %v8256
    %v8258 = vpop.f32.mrb[0].mxu0
    %v8259 = vadd.f32 %v8216, %v8258
    %v8260 = vpop.f32.mrb[0].mxu0
    %v8261 = vadd.f32 %v8218, %v8260
    %v8262 = vpop.f32.mrb[0].mxu0
    %v8263 = vadd.f32 %v8220, %v8262
    %8264 = vdwg.mxu0
    %8265 = vmatprep.subr.bf16.mxu0 %v6732
    %8266 = vmatpush1.bf16.msra.mxu0 %v6731
    %8267 = vmatprep.subr.bf16.mxu0 %v6740
    %8268 = vmatpush1.bf16.msra.mxu0 %v6739
    %8269 = vmatprep.subr.bf16.mxu0 %v6748
    %8270 = vmatpush1.bf16.msra.mxu0 %v6747
    %8271 = vmatprep.subr.bf16.mxu0 %v6756
    %8272 = vmatpush1.bf16.msra.mxu0 %v6755
    %8273 = vmatprep.subr.bf16.mxu0 %v6764
    %8274 = vmatpush1.bf16.msra.mxu0 %v6763
    %8275 = vmatprep.subr.bf16.mxu0 %v6772
    %8276 = vmatpush1.bf16.msra.mxu0 %v6771
    %8277 = vmatprep.subr.bf16.mxu0 %v6780
    %8278 = vmatpush1.bf16.msra.mxu0 %v6779
    %8279 = vmatprep.subr.bf16.mxu0 %v6788
    %8280 = vmatpush1.bf16.msra.mxu0 %v6787
    %8281 = vmatprep.subr.bf16.mxu0 %v6796
    %8282 = vmatpush1.bf16.msra.mxu0 %v6795
    %8283 = vmatprep.subr.bf16.mxu0 %v6804
    %8284 = vmatpush1.bf16.msra.mxu0 %v6803
    %8285 = vmatprep.subr.bf16.mxu0 %v6812
    %8286 = vmatpush1.bf16.msra.mxu0 %v6811
    %8287 = vmatprep.subr.bf16.mxu0 %v6820
    %8288 = vmatpush1.bf16.msra.mxu0 %v6819
    %8289 = vmatprep.subr.bf16.mxu0 %v6828
    %8290 = vmatpush1.bf16.msra.mxu0 %v6827
    %8291 = vmatprep.subr.bf16.mxu0 %v6836
    %8292 = vmatpush1.bf16.msra.mxu0 %v6835
    %8293 = vmatprep.subr.bf16.mxu0 %v6844
    %8294 = vmatpush1.bf16.msra.mxu0 %v6843
    %8295 = vmatprep.subr.bf16.mxu0 %v6852
    %8296 = vmatpush1.bf16.msra.mxu0 %v6851
    %8297 = vmatprep.mubr.bf16.mxu0 %v4628
    %8298 = vmatmul.mubr.bf16.gmra.mrb[0].mxu0 %v4627
    %v8299 = vpop.f32.mrb[0].mxu0
    %v8300 = vadd.f32 %v5176, %v8299
    %v8301 = vpop.f32.mrb[0].mxu0
    %v8302 = vadd.f32 %v5180, %v8301
    %v8303 = vpop.f32.mrb[0].mxu0
    %v8304 = vadd.f32 %v5176, %v8303
    %v8305 = vpop.f32.mrb[0].mxu0
    %v8306 = vadd.f32 %v5180, %v8305
    %8307 = vdwg.mxu0
    %8308 = vmatprep.subr.bf16.mxu0 %v6860
    %8309 = vmatpush1.bf16.msra.mxu0 %v6859
    %8310 = vmatprep.subr.bf16.mxu0 %v6868
    %8311 = vmatpush1.bf16.msra.mxu0 %v6867
    %8312 = vmatprep.subr.bf16.mxu0 %v6876
    %8313 = vmatpush1.bf16.msra.mxu0 %v6875
    %8314 = vmatprep.subr.bf16.mxu0 %v6884
    %8315 = vmatpush1.bf16.msra.mxu0 %v6883
    %8316 = vmatprep.subr.bf16.mxu0 %v6892
    %8317 = vmatpush1.bf16.msra.mxu0 %v6891
    %8318 = vmatprep.subr.bf16.mxu0 %v6900
    %8319 = vmatpush1.bf16.msra.mxu0 %v6899
    %8320 = vmatprep.subr.bf16.mxu0 %v6908
    %8321 = vmatpush1.bf16.msra.mxu0 %v6907
    %8322 = vmatprep.subr.bf16.mxu0 %v6916
    %8323 = vmatpush1.bf16.msra.mxu0 %v6915
    %8324 = vmatprep.subr.bf16.mxu0 %v6924
    %8325 = vmatpush1.bf16.msra.mxu0 %v6923
    %8326 = vmatprep.subr.bf16.mxu0 %v6932
    %8327 = vmatpush1.bf16.msra.mxu0 %v6931
    %8328 = vmatprep.subr.bf16.mxu0 %v6940
    %8329 = vmatpush1.bf16.msra.mxu0 %v6939
    %8330 = vmatprep.subr.bf16.mxu0 %v6948
    %8331 = vmatpush1.bf16.msra.mxu0 %v6947
    %8332 = vmatprep.subr.bf16.mxu0 %v6956
    %8333 = vmatpush1.bf16.msra.mxu0 %v6955
    %8334 = vmatprep.subr.bf16.mxu0 %v6964
    %8335 = vmatpush1.bf16.msra.mxu0 %v6963
    %8336 = vmatprep.subr.bf16.mxu0 %v6972
    %8337 = vmatpush1.bf16.msra.mxu0 %v6971
    %8338 = vmatprep.subr.bf16.mxu0 %v6980
    %8339 = vmatpush1.bf16.msra.mxu0 %v6979
    %8340 = vmatprep.mubr.bf16.mxu0 %v4630
    %8341 = vmatmul.mubr.bf16.gmra.mrb[0].mxu0 %v4629
    %v8342 = vpop.f32.mrb[0].mxu0
    %v8343 = vadd.f32 %v8300, %v8342
    %v8344 = vpop.f32.mrb[0].mxu0
    %v8345 = vadd.f32 %v8302, %v8344
    %v8346 = vpop.f32.mrb[0].mxu0
    %v8347 = vadd.f32 %v8304, %v8346
    %v8348 = vpop.f32.mrb[0].mxu0
    %v8349 = vadd.f32 %v8306, %v8348
    %8350 = vdwg.mxu0
    %8351 = vmatprep.subr.bf16.mxu0 %v6988
    %8352 = vmatpush1.bf16.msra.mxu0 %v6987
    %8353 = vmatprep.subr.bf16.mxu0 %v6996
    %8354 = vmatpush1.bf16.msra.mxu0 %v6995
    %8355 = vmatprep.subr.bf16.mxu0 %v7004
    %8356 = vmatpush1.bf16.msra.mxu0 %v7003
    %8357 = vmatprep.subr.bf16.mxu0 %v7012
    %8358 = vmatpush1.bf16.msra.mxu0 %v7011
    %8359 = vmatprep.subr.bf16.mxu0 %v7020
    %8360 = vmatpush1.bf16.msra.mxu0 %v7019
    %8361 = vmatprep.subr.bf16.mxu0 %v7028
    %8362 = vmatpush1.bf16.msra.mxu0 %v7027
    %8363 = vmatprep.subr.bf16.mxu0 %v7036
    %8364 = vmatpush1.bf16.msra.mxu0 %v7035
    %8365 = vmatprep.subr.bf16.mxu0 %v7044
    %8366 = vmatpush1.bf16.msra.mxu0 %v7043
    %8367 = vmatprep.subr.bf16.mxu0 %v7052
    %8368 = vmatpush1.bf16.msra.mxu0 %v7051
    %8369 = vmatprep.subr.bf16.mxu0 %v7060
    %8370 = vmatpush1.bf16.msra.mxu0 %v7059
    %8371 = vmatprep.subr.bf16.mxu0 %v7068
    %8372 = vmatpush1.bf16.msra.mxu0 %v7067
    %8373 = vmatprep.subr.bf16.mxu0 %v7076
    %8374 = vmatpush1.bf16.msra.mxu0 %v7075
    %8375 = vmatprep.subr.bf16.mxu0 %v7084
    %8376 = vmatpush1.bf16.msra.mxu0 %v7083
    %8377 = vmatprep.subr.bf16.mxu0 %v7092
    %8378 = vmatpush1.bf16.msra.mxu0 %v7091
    %8379 = vmatprep.subr.bf16.mxu0 %v7100
    %8380 = vmatpush1.bf16.msra.mxu0 %v7099
    %8381 = vmatprep.subr.bf16.mxu0 %v7108
    %8382 = vmatpush1.bf16.msra.mxu0 %v7107
    %8383 = vmatprep.mubr.bf16.mxu0 %v4632
    %8384 = vmatmul.mubr.bf16.gmra.mrb[0].mxu0 %v4631
    %v8385 = vpop.f32.mrb[0].mxu0
    %v8386 = vadd.f32 %v8343, %v8385
    %v8387 = vpop.f32.mrb[0].mxu0
    %v8388 = vadd.f32 %v8345, %v8387
    %v8389 = vpop.f32.mrb[0].mxu0
    %v8390 = vadd.f32 %v8347, %v8389
    %v8391 = vpop.f32.mrb[0].mxu0
    %v8392 = vadd.f32 %v8349, %v8391
    %8393 = vdwg.mxu0
    %8394 = vmatprep.subr.bf16.mxu0 %v7116
    %8395 = vmatpush1.bf16.msra.mxu0 %v7115
    %8396 = vmatprep.subr.bf16.mxu0 %v7124
    %8397 = vmatpush1.bf16.msra.mxu0 %v7123
    %8398 = vmatprep.subr.bf16.mxu0 %v7132
    %8399 = vmatpush1.bf16.msra.mxu0 %v7131
    %8400 = vmatprep.subr.bf16.mxu0 %v7140
    %8401 = vmatpush1.bf16.msra.mxu0 %v7139
    %8402 = vmatprep.subr.bf16.mxu0 %v7148
    %8403 = vmatpush1.bf16.msra.mxu0 %v7147
    %8404 = vmatprep.subr.bf16.mxu0 %v7156
    %8405 = vmatpush1.bf16.msra.mxu0 %v7155
    %8406 = vmatprep.subr.bf16.mxu0 %v7164
    %8407 = vmatpush1.bf16.msra.mxu0 %v7163
    %8408 = vmatprep.subr.bf16.mxu0 %v7172
    %8409 = vmatpush1.bf16.msra.mxu0 %v7171
    %8410 = vmatprep.subr.bf16.mxu0 %v7180
    %8411 = vmatpush1.bf16.msra.mxu0 %v7179
    %8412 = vmatprep.subr.bf16.mxu0 %v7188
    %8413 = vmatpush1.bf16.msra.mxu0 %v7187
    %8414 = vmatprep.subr.bf16.mxu0 %v7196
    %8415 = vmatpush1.bf16.msra.mxu0 %v7195
    %8416 = vmatprep.subr.bf16.mxu0 %v7204
    %8417 = vmatpush1.bf16.msra.mxu0 %v7203
    %8418 = vmatprep.subr.bf16.mxu0 %v7212
    %8419 = vmatpush1.bf16.msra.mxu0 %v7211
    %8420 = vmatprep.subr.bf16.mxu0 %v7220
    %8421 = vmatpush1.bf16.msra.mxu0 %v7219
    %8422 = vmatprep.subr.bf16.mxu0 %v7228
    %8423 = vmatpush1.bf16.msra.mxu0 %v7227
    %8424 = vmatprep.subr.bf16.mxu0 %v7236
    %8425 = vmatpush1.bf16.msra.mxu0 %v7235
    %8426 = vmatprep.mubr.bf16.mxu0 %v4634
    %8427 = vmatmul.mubr.bf16.gmra.mrb[0].mxu0 %v4633
    %v8428 = vpop.f32.mrb[0].mxu0
    %v8429 = vadd.f32 %v8386, %v8428
    %v8430 = vpop.f32.mrb[0].mxu0
    %v8431 = vadd.f32 %v8388, %v8430
    %v8432 = vpop.f32.mrb[0].mxu0
    %v8433 = vadd.f32 %v8390, %v8432
    %v8434 = vpop.f32.mrb[0].mxu0
    %v8435 = vadd.f32 %v8392, %v8434
    %8436 = vdwg.mxu0
    %v8437 = vmax.f32 %v7913, 0.0
    %v8438 = vmax.f32 %v7915, 0.0
    %v8439 = vmax.f32 %v8085, 0.0
    %v8440 = vmax.f32 %v8087, 0.0
    %v8441 = vmax.f32 %v8257, 0.0
    %v8442 = vmax.f32 %v8259, 0.0
    %v8443 = vmax.f32 %v8429, 0.0
    %v8444 = vmax.f32 %v8431, 0.0
    %v8445 = vmax.f32 %v7917, 0.0
    %v8446 = vmax.f32 %v7919, 0.0
    %v8447 = vmax.f32 %v8089, 0.0
    %v8448 = vmax.f32 %v8091, 0.0
    %v8449 = vmax.f32 %v8261, 0.0
    %v8450 = vmax.f32 %v8263, 0.0
    %v8451 = vmax.f32 %v8433, 0.0
    %v8452 = vmax.f32 %v8435, 0.0
    %v8453 = vpack.c.bf16 %v8445, %v8437
    %v8454 = vpack.c.bf16 %v8446, %v8438
    %v8455 = vpack.c.bf16 %v8447, %v8439
    %v8456 = vpack.c.bf16 %v8448, %v8440
    %v8457 = vpack.c.bf16 %v8449, %v8441
    %v8458 = vpack.c.bf16 %v8450, %v8442
    %v8459 = vpack.c.bf16 %v8451, %v8443
    %v8460 = vpack.c.bf16 %v8452, %v8444
    %v8461 = vld [vmem:[#allocation14] sm:$0xff]
    %v8462 = vld [vmem:[#allocation14 + $0x8] sm:$0xff]
    %v8463 = vld [vmem:[#allocation14 + $0x10] sm:$0xff]
    %v8464 = vld [vmem:[#allocation14 + $0x18] sm:$0xff]
    %v8465 = vld [vmem:[#allocation14 + $0x20] sm:$0xff]
    %v8466 = vld [vmem:[#allocation14 + $0x28] sm:$0xff]
    %v8467 = vld [vmem:[#allocation14 + $0x30] sm:$0xff]
    %v8468 = vld [vmem:[#allocation14 + $0x38] sm:$0xff]
    %v8469 = vld [vmem:[#allocation14 + $0x40] sm:$0xff]
    %v8470 = vld [vmem:[#allocation14 + $0x48] sm:$0xff]
    %v8471 = vld [vmem:[#allocation14 + $0x50] sm:$0xff]
    %v8472 = vld [vmem:[#allocation14 + $0x58] sm:$0xff]
    %v8473 = vld [vmem:[#allocation14 + $0x60] sm:$0xff]
    %v8474 = vld [vmem:[#allocation14 + $0x68] sm:$0xff]
    %v8475 = vld [vmem:[#allocation14 + $0x70] sm:$0xff]
    %v8476 = vld [vmem:[#allocation14 + $0x78] sm:$0xff]
    %v8477 = vld [vmem:[#allocation14 + $0x80] sm:$0xff]
    %v8478 = vld [vmem:[#allocation14 + $0x88] sm:$0xff]
    %v8479 = vld [vmem:[#allocation14 + $0x90] sm:$0xff]
    %v8480 = vld [vmem:[#allocation14 + $0x98] sm:$0xff]
    %v8481 = vld [vmem:[#allocation14 + $0xa0] sm:$0xff]
    %v8482 = vld [vmem:[#allocation14 + $0xa8] sm:$0xff]
    %v8483 = vld [vmem:[#allocation14 + $0xb0] sm:$0xff]
    %v8484 = vld [vmem:[#allocation14 + $0xb8] sm:$0xff]
    %v8485 = vld [vmem:[#allocation14 + $0xc0] sm:$0xff]
    %v8486 = vld [vmem:[#allocation14 + $0xc8] sm:$0xff]
    %v8487 = vld [vmem:[#allocation14 + $0xd0] sm:$0xff]
    %v8488 = vld [vmem:[#allocation14 + $0xd8] sm:$0xff]
    %v8489 = vld [vmem:[#allocation14 + $0xe0] sm:$0xff]
    %v8490 = vld [vmem:[#allocation14 + $0xe8] sm:$0xff]
    %v8491 = vld [vmem:[#allocation14 + $0xf0] sm:$0xff]
    %v8492 = vld [vmem:[#allocation14 + $0xf8] sm:$0xff]
    %v8493 = vld [vmem:[#allocation14 + $0x100] sm:$0xff]
    %v8494 = vld [vmem:[#allocation14 + $0x108] sm:$0xff]
    %v8495 = vld [vmem:[#allocation14 + $0x110] sm:$0xff]
    %v8496 = vld [vmem:[#allocation14 + $0x118] sm:$0xff]
    %v8497 = vld [vmem:[#allocation14 + $0x120] sm:$0xff]
    %v8498 = vld [vmem:[#allocation14 + $0x128] sm:$0xff]
    %v8499 = vld [vmem:[#allocation14 + $0x130] sm:$0xff]
    %v8500 = vld [vmem:[#allocation14 + $0x138] sm:$0xff]
    %v8501 = vld [vmem:[#allocation14 + $0x140] sm:$0xff]
    %v8502 = vld [vmem:[#allocation14 + $0x148] sm:$0xff]
    %v8503 = vld [vmem:[#allocation14 + $0x150] sm:$0xff]
    %v8504 = vld [vmem:[#allocation14 + $0x158] sm:$0xff]
    %v8505 = vld [vmem:[#allocation14 + $0x160] sm:$0xff]
    %v8506 = vld [vmem:[#allocation14 + $0x168] sm:$0xff]
    %v8507 = vld [vmem:[#allocation14 + $0x170] sm:$0xff]
    %v8508 = vld [vmem:[#allocation14 + $0x178] sm:$0xff]
    %v8509 = vld [vmem:[#allocation14 + $0x180] sm:$0xff]
    %v8510 = vld [vmem:[#allocation14 + $0x188] sm:$0xff]
    %v8511 = vld [vmem:[#allocation14 + $0x190] sm:$0xff]
    %v8512 = vld [vmem:[#allocation14 + $0x198] sm:$0xff]
    %v8513 = vld [vmem:[#allocation14 + $0x1a0] sm:$0xff]
    %v8514 = vld [vmem:[#allocation14 + $0x1a8] sm:$0xff]
    %v8515 = vld [vmem:[#allocation14 + $0x1b0] sm:$0xff]
    %v8516 = vld [vmem:[#allocation14 + $0x1b8] sm:$0xff]
    %v8517 = vld [vmem:[#allocation14 + $0x1c0] sm:$0xff]
    %v8518 = vld [vmem:[#allocation14 + $0x1c8] sm:$0xff]
    %v8519 = vld [vmem:[#allocation14 + $0x1d0] sm:$0xff]
    %v8520 = vld [vmem:[#allocation14 + $0x1d8] sm:$0xff]
    %v8521 = vld [vmem:[#allocation14 + $0x1e0] sm:$0xff]
    %v8522 = vld [vmem:[#allocation14 + $0x1e8] sm:$0xff]
    %v8523 = vld [vmem:[#allocation14 + $0x1f0] sm:$0xff]
    %v8524 = vld [vmem:[#allocation14 + $0x1f8] sm:$0xff]
    %v8525 = vld [vmem:[#allocation14 + $0x200] sm:$0xff]
    %v8526 = vld [vmem:[#allocation14 + $0x208] sm:$0xff]
    %v8527 = vld [vmem:[#allocation14 + $0x210] sm:$0xff]
    %v8528 = vld [vmem:[#allocation14 + $0x218] sm:$0xff]
    %v8529 = vld [vmem:[#allocation14 + $0x220] sm:$0xff]
    %v8530 = vld [vmem:[#allocation14 + $0x228] sm:$0xff]
    %v8531 = vld [vmem:[#allocation14 + $0x230] sm:$0xff]
    %v8532 = vld [vmem:[#allocation14 + $0x238] sm:$0xff]
    %v8533 = vld [vmem:[#allocation14 + $0x240] sm:$0xff]
    %v8534 = vld [vmem:[#allocation14 + $0x248] sm:$0xff]
    %v8535 = vld [vmem:[#allocation14 + $0x250] sm:$0xff]
    %v8536 = vld [vmem:[#allocation14 + $0x258] sm:$0xff]
    %v8537 = vld [vmem:[#allocation14 + $0x260] sm:$0xff]
    %v8538 = vld [vmem:[#allocation14 + $0x268] sm:$0xff]
    %v8539 = vld [vmem:[#allocation14 + $0x270] sm:$0xff]
    %v8540 = vld [vmem:[#allocation14 + $0x278] sm:$0xff]
    %v8541 = vld [vmem:[#allocation14 + $0x280] sm:$0xff]
    %v8542 = vld [vmem:[#allocation14 + $0x288] sm:$0xff]
    %v8543 = vld [vmem:[#allocation14 + $0x290] sm:$0xff]
    %v8544 = vld [vmem:[#allocation14 + $0x298] sm:$0xff]
    %v8545 = vld [vmem:[#allocation14 + $0x2a0] sm:$0xff]
    %v8546 = vld [vmem:[#allocation14 + $0x2a8] sm:$0xff]
    %v8547 = vld [vmem:[#allocation14 + $0x2b0] sm:$0xff]
    %v8548 = vld [vmem:[#allocation14 + $0x2b8] sm:$0xff]
    %v8549 = vld [vmem:[#allocation14 + $0x2c0] sm:$0xff]
    %v8550 = vld [vmem:[#allocation14 + $0x2c8] sm:$0xff]
    %v8551 = vld [vmem:[#allocation14 + $0x2d0] sm:$0xff]
    %v8552 = vld [vmem:[#allocation14 + $0x2d8] sm:$0xff]
    %v8553 = vld [vmem:[#allocation14 + $0x2e0] sm:$0xff]
    %v8554 = vld [vmem:[#allocation14 + $0x2e8] sm:$0xff]
    %v8555 = vld [vmem:[#allocation14 + $0x2f0] sm:$0xff]
    %v8556 = vld [vmem:[#allocation14 + $0x2f8] sm:$0xff]
    %v8557 = vld [vmem:[#allocation14 + $0x300] sm:$0xff]
    %v8558 = vld [vmem:[#allocation14 + $0x308] sm:$0xff]
    %v8559 = vld [vmem:[#allocation14 + $0x310] sm:$0xff]
    %v8560 = vld [vmem:[#allocation14 + $0x318] sm:$0xff]
    %v8561 = vld [vmem:[#allocation14 + $0x320] sm:$0xff]
    %v8562 = vld [vmem:[#allocation14 + $0x328] sm:$0xff]
    %v8563 = vld [vmem:[#allocation14 + $0x330] sm:$0xff]
    %v8564 = vld [vmem:[#allocation14 + $0x338] sm:$0xff]
    %v8565 = vld [vmem:[#allocation14 + $0x340] sm:$0xff]
    %v8566 = vld [vmem:[#allocation14 + $0x348] sm:$0xff]
    %v8567 = vld [vmem:[#allocation14 + $0x350] sm:$0xff]
    %v8568 = vld [vmem:[#allocation14 + $0x358] sm:$0xff]
    %v8569 = vld [vmem:[#allocation14 + $0x360] sm:$0xff]
    %v8570 = vld [vmem:[#allocation14 + $0x368] sm:$0xff]
    %v8571 = vld [vmem:[#allocation14 + $0x370] sm:$0xff]
    %v8572 = vld [vmem:[#allocation14 + $0x378] sm:$0xff]
    %v8573 = vld [vmem:[#allocation14 + $0x380] sm:$0xff]
    %v8574 = vld [vmem:[#allocation14 + $0x388] sm:$0xff]
    %v8575 = vld [vmem:[#allocation14 + $0x390] sm:$0xff]
    %v8576 = vld [vmem:[#allocation14 + $0x398] sm:$0xff]
    %v8577 = vld [vmem:[#allocation14 + $0x3a0] sm:$0xff]
    %v8578 = vld [vmem:[#allocation14 + $0x3a8] sm:$0xff]
    %v8579 = vld [vmem:[#allocation14 + $0x3b0] sm:$0xff]
    %v8580 = vld [vmem:[#allocation14 + $0x3b8] sm:$0xff]
    %v8581 = vld [vmem:[#allocation14 + $0x3c0] sm:$0xff]
    %v8582 = vld [vmem:[#allocation14 + $0x3c8] sm:$0xff]
    %v8583 = vld [vmem:[#allocation14 + $0x3d0] sm:$0xff]
    %v8584 = vld [vmem:[#allocation14 + $0x3d8] sm:$0xff]
    %v8585 = vld [vmem:[#allocation14 + $0x3e0] sm:$0xff]
    %v8586 = vld [vmem:[#allocation14 + $0x3e8] sm:$0xff]
    %v8587 = vld [vmem:[#allocation14 + $0x3f0] sm:$0xff]
    %v8588 = vld [vmem:[#allocation14 + $0x3f8] sm:$0xff]
    %v8589 = vld [vmem:[#allocation14 + $0x400] sm:$0xff]
    %v8590 = vld [vmem:[#allocation14 + $0x408] sm:$0xff]
    %v8591 = vld [vmem:[#allocation14 + $0x410] sm:$0xff]
    %v8592 = vld [vmem:[#allocation14 + $0x418] sm:$0xff]
    %v8593 = vld [vmem:[#allocation14 + $0x420] sm:$0xff]
    %v8594 = vld [vmem:[#allocation14 + $0x428] sm:$0xff]
    %v8595 = vld [vmem:[#allocation14 + $0x430] sm:$0xff]
    %v8596 = vld [vmem:[#allocation14 + $0x438] sm:$0xff]
    %v8597 = vld [vmem:[#allocation14 + $0x440] sm:$0xff]
    %v8598 = vld [vmem:[#allocation14 + $0x448] sm:$0xff]
    %v8599 = vld [vmem:[#allocation14 + $0x450] sm:$0xff]
    %v8600 = vld [vmem:[#allocation14 + $0x458] sm:$0xff]
    %v8601 = vld [vmem:[#allocation14 + $0x460] sm:$0xff]
    %v8602 = vld [vmem:[#allocation14 + $0x468] sm:$0xff]
    %v8603 = vld [vmem:[#allocation14 + $0x470] sm:$0xff]
    %v8604 = vld [vmem:[#allocation14 + $0x478] sm:$0xff]
    %v8605 = vld [vmem:[#allocation14 + $0x480] sm:$0xff]
    %v8606 = vld [vmem:[#allocation14 + $0x488] sm:$0xff]
    %v8607 = vld [vmem:[#allocation14 + $0x490] sm:$0xff]
    %v8608 = vld [vmem:[#allocation14 + $0x498] sm:$0xff]
    %v8609 = vld [vmem:[#allocation14 + $0x4a0] sm:$0xff]
    %v8610 = vld [vmem:[#allocation14 + $0x4a8] sm:$0xff]
    %v8611 = vld [vmem:[#allocation14 + $0x4b0] sm:$0xff]
    %v8612 = vld [vmem:[#allocation14 + $0x4b8] sm:$0xff]
    %v8613 = vld [vmem:[#allocation14 + $0x4c0] sm:$0xff]
    %v8614 = vld [vmem:[#allocation14 + $0x4c8] sm:$0xff]
    %v8615 = vld [vmem:[#allocation14 + $0x4d0] sm:$0xff]
    %v8616 = vld [vmem:[#allocation14 + $0x4d8] sm:$0xff]
    %v8617 = vld [vmem:[#allocation14 + $0x4e0] sm:$0xff]
    %v8618 = vld [vmem:[#allocation14 + $0x4e8] sm:$0xff]
    %v8619 = vld [vmem:[#allocation14 + $0x4f0] sm:$0xff]
    %v8620 = vld [vmem:[#allocation14 + $0x4f8] sm:$0xff]
    %v8621 = vld [vmem:[#allocation14 + $0x500] sm:$0xff]
    %v8622 = vld [vmem:[#allocation14 + $0x508] sm:$0xff]
    %v8623 = vld [vmem:[#allocation14 + $0x510] sm:$0xff]
    %v8624 = vld [vmem:[#allocation14 + $0x518] sm:$0xff]
    %v8625 = vld [vmem:[#allocation14 + $0x520] sm:$0xff]
    %v8626 = vld [vmem:[#allocation14 + $0x528] sm:$0xff]
    %v8627 = vld [vmem:[#allocation14 + $0x530] sm:$0xff]
    %v8628 = vld [vmem:[#allocation14 + $0x538] sm:$0xff]
    %v8629 = vld [vmem:[#allocation14 + $0x540] sm:$0xff]
    %v8630 = vld [vmem:[#allocation14 + $0x548] sm:$0xff]
    %v8631 = vld [vmem:[#allocation14 + $0x550] sm:$0xff]
    %v8632 = vld [vmem:[#allocation14 + $0x558] sm:$0xff]
    %v8633 = vld [vmem:[#allocation14 + $0x560] sm:$0xff]
    %v8634 = vld [vmem:[#allocation14 + $0x568] sm:$0xff]
    %v8635 = vld [vmem:[#allocation14 + $0x570] sm:$0xff]
    %v8636 = vld [vmem:[#allocation14 + $0x578] sm:$0xff]
    %v8637 = vld [vmem:[#allocation14 + $0x580] sm:$0xff]
    %v8638 = vld [vmem:[#allocation14 + $0x588] sm:$0xff]
    %v8639 = vld [vmem:[#allocation14 + $0x590] sm:$0xff]
    %v8640 = vld [vmem:[#allocation14 + $0x598] sm:$0xff]
    %v8641 = vld [vmem:[#allocation14 + $0x5a0] sm:$0xff]
    %v8642 = vld [vmem:[#allocation14 + $0x5a8] sm:$0xff]
    %v8643 = vld [vmem:[#allocation14 + $0x5b0] sm:$0xff]
    %v8644 = vld [vmem:[#allocation14 + $0x5b8] sm:$0xff]
    %v8645 = vld [vmem:[#allocation14 + $0x5c0] sm:$0xff]
    %v8646 = vld [vmem:[#allocation14 + $0x5c8] sm:$0xff]
    %v8647 = vld [vmem:[#allocation14 + $0x5d0] sm:$0xff]
    %v8648 = vld [vmem:[#allocation14 + $0x5d8] sm:$0xff]
    %v8649 = vld [vmem:[#allocation14 + $0x5e0] sm:$0xff]
    %v8650 = vld [vmem:[#allocation14 + $0x5e8] sm:$0xff]
    %v8651 = vld [vmem:[#allocation14 + $0x5f0] sm:$0xff]
    %v8652 = vld [vmem:[#allocation14 + $0x5f8] sm:$0xff]
    %v8653 = vld [vmem:[#allocation14 + $0x600] sm:$0xff]
    %v8654 = vld [vmem:[#allocation14 + $0x608] sm:$0xff]
    %v8655 = vld [vmem:[#allocation14 + $0x610] sm:$0xff]
    %v8656 = vld [vmem:[#allocation14 + $0x618] sm:$0xff]
    %v8657 = vld [vmem:[#allocation14 + $0x620] sm:$0xff]
    %v8658 = vld [vmem:[#allocation14 + $0x628] sm:$0xff]
    %v8659 = vld [vmem:[#allocation14 + $0x630] sm:$0xff]
    %v8660 = vld [vmem:[#allocation14 + $0x638] sm:$0xff]
    %v8661 = vld [vmem:[#allocation14 + $0x640] sm:$0xff]
    %v8662 = vld [vmem:[#allocation14 + $0x648] sm:$0xff]
    %v8663 = vld [vmem:[#allocation14 + $0x650] sm:$0xff]
    %v8664 = vld [vmem:[#allocation14 + $0x658] sm:$0xff]
    %v8665 = vld [vmem:[#allocation14 + $0x660] sm:$0xff]
    %v8666 = vld [vmem:[#allocation14 + $0x668] sm:$0xff]
    %v8667 = vld [vmem:[#allocation14 + $0x670] sm:$0xff]
    %v8668 = vld [vmem:[#allocation14 + $0x678] sm:$0xff]
    %v8669 = vld [vmem:[#allocation14 + $0x680] sm:$0xff]
    %v8670 = vld [vmem:[#allocation14 + $0x688] sm:$0xff]
    %v8671 = vld [vmem:[#allocation14 + $0x690] sm:$0xff]
    %v8672 = vld [vmem:[#allocation14 + $0x698] sm:$0xff]
    %v8673 = vld [vmem:[#allocation14 + $0x6a0] sm:$0xff]
    %v8674 = vld [vmem:[#allocation14 + $0x6a8] sm:$0xff]
    %v8675 = vld [vmem:[#allocation14 + $0x6b0] sm:$0xff]
    %v8676 = vld [vmem:[#allocation14 + $0x6b8] sm:$0xff]
    %v8677 = vld [vmem:[#allocation14 + $0x6c0] sm:$0xff]
    %v8678 = vld [vmem:[#allocation14 + $0x6c8] sm:$0xff]
    %v8679 = vld [vmem:[#allocation14 + $0x6d0] sm:$0xff]
    %v8680 = vld [vmem:[#allocation14 + $0x6d8] sm:$0xff]
    %v8681 = vld [vmem:[#allocation14 + $0x6e0] sm:$0xff]
    %v8682 = vld [vmem:[#allocation14 + $0x6e8] sm:$0xff]
    %v8683 = vld [vmem:[#allocation14 + $0x6f0] sm:$0xff]
    %v8684 = vld [vmem:[#allocation14 + $0x6f8] sm:$0xff]
    %v8685 = vld [vmem:[#allocation14 + $0x700] sm:$0xff]
    %v8686 = vld [vmem:[#allocation14 + $0x708] sm:$0xff]
    %v8687 = vld [vmem:[#allocation14 + $0x710] sm:$0xff]
    %v8688 = vld [vmem:[#allocation14 + $0x718] sm:$0xff]
    %v8689 = vld [vmem:[#allocation14 + $0x720] sm:$0xff]
    %v8690 = vld [vmem:[#allocation14 + $0x728] sm:$0xff]
    %v8691 = vld [vmem:[#allocation14 + $0x730] sm:$0xff]
    %v8692 = vld [vmem:[#allocation14 + $0x738] sm:$0xff]
    %v8693 = vld [vmem:[#allocation14 + $0x740] sm:$0xff]
    %v8694 = vld [vmem:[#allocation14 + $0x748] sm:$0xff]
    %v8695 = vld [vmem:[#allocation14 + $0x750] sm:$0xff]
    %v8696 = vld [vmem:[#allocation14 + $0x758] sm:$0xff]
    %v8697 = vld [vmem:[#allocation14 + $0x760] sm:$0xff]
    %v8698 = vld [vmem:[#allocation14 + $0x768] sm:$0xff]
    %v8699 = vld [vmem:[#allocation14 + $0x770] sm:$0xff]
    %v8700 = vld [vmem:[#allocation14 + $0x778] sm:$0xff]
    %v8701 = vld [vmem:[#allocation14 + $0x780] sm:$0xff]
    %v8702 = vld [vmem:[#allocation14 + $0x788] sm:$0xff]
    %v8703 = vld [vmem:[#allocation14 + $0x790] sm:$0xff]
    %v8704 = vld [vmem:[#allocation14 + $0x798] sm:$0xff]
    %v8705 = vld [vmem:[#allocation14 + $0x7a0] sm:$0xff]
    %v8706 = vld [vmem:[#allocation14 + $0x7a8] sm:$0xff]
    %v8707 = vld [vmem:[#allocation14 + $0x7b0] sm:$0xff]
    %v8708 = vld [vmem:[#allocation14 + $0x7b8] sm:$0xff]
    %v8709 = vld [vmem:[#allocation14 + $0x7c0] sm:$0xff]
    %v8710 = vld [vmem:[#allocation14 + $0x7c8] sm:$0xff]
    %v8711 = vld [vmem:[#allocation14 + $0x7d0] sm:$0xff]
    %v8712 = vld [vmem:[#allocation14 + $0x7d8] sm:$0xff]
    %v8713 = vld [vmem:[#allocation14 + $0x7e0] sm:$0xff]
    %v8714 = vld [vmem:[#allocation14 + $0x7e8] sm:$0xff]
    %v8715 = vld [vmem:[#allocation14 + $0x7f0] sm:$0xff]
    %v8716 = vld [vmem:[#allocation14 + $0x7f8] sm:$0xff]
    %v8717 = vld [vmem:[#allocation14 + $0x800] sm:$0xff]
    %v8718 = vld [vmem:[#allocation14 + $0x808] sm:$0xff]
    %v8719 = vld [vmem:[#allocation14 + $0x810] sm:$0xff]
    %v8720 = vld [vmem:[#allocation14 + $0x818] sm:$0xff]
    %v8721 = vld [vmem:[#allocation14 + $0x820] sm:$0xff]
    %v8722 = vld [vmem:[#allocation14 + $0x828] sm:$0xff]
    %v8723 = vld [vmem:[#allocation14 + $0x830] sm:$0xff]
    %v8724 = vld [vmem:[#allocation14 + $0x838] sm:$0xff]
    %v8725 = vld [vmem:[#allocation14 + $0x840] sm:$0xff]
    %v8726 = vld [vmem:[#allocation14 + $0x848] sm:$0xff]
    %v8727 = vld [vmem:[#allocation14 + $0x850] sm:$0xff]
    %v8728 = vld [vmem:[#allocation14 + $0x858] sm:$0xff]
    %v8729 = vld [vmem:[#allocation14 + $0x860] sm:$0xff]
    %v8730 = vld [vmem:[#allocation14 + $0x868] sm:$0xff]
    %v8731 = vld [vmem:[#allocation14 + $0x870] sm:$0xff]
    %v8732 = vld [vmem:[#allocation14 + $0x878] sm:$0xff]
    %v8733 = vld [vmem:[#allocation14 + $0x880] sm:$0xff]
    %v8734 = vld [vmem:[#allocation14 + $0x888] sm:$0xff]
    %v8735 = vld [vmem:[#allocation14 + $0x890] sm:$0xff]
    %v8736 = vld [vmem:[#allocation14 + $0x898] sm:$0xff]
    %v8737 = vld [vmem:[#allocation14 + $0x8a0] sm:$0xff]
    %v8738 = vld [vmem:[#allocation14 + $0x8a8] sm:$0xff]
    %v8739 = vld [vmem:[#allocation14 + $0x8b0] sm:$0xff]
    %v8740 = vld [vmem:[#allocation14 + $0x8b8] sm:$0xff]
    %v8741 = vld [vmem:[#allocation14 + $0x8c0] sm:$0xff]
    %v8742 = vld [vmem:[#allocation14 + $0x8c8] sm:$0xff]
    %v8743 = vld [vmem:[#allocation14 + $0x8d0] sm:$0xff]
    %v8744 = vld [vmem:[#allocation14 + $0x8d8] sm:$0xff]
    %v8745 = vld [vmem:[#allocation14 + $0x8e0] sm:$0xff]
    %v8746 = vld [vmem:[#allocation14 + $0x8e8] sm:$0xff]
    %v8747 = vld [vmem:[#allocation14 + $0x8f0] sm:$0xff]
    %v8748 = vld [vmem:[#allocation14 + $0x8f8] sm:$0xff]
    %v8749 = vld [vmem:[#allocation14 + $0x900] sm:$0xff]
    %v8750 = vld [vmem:[#allocation14 + $0x908] sm:$0xff]
    %v8751 = vld [vmem:[#allocation14 + $0x910] sm:$0xff]
    %v8752 = vld [vmem:[#allocation14 + $0x918] sm:$0xff]
    %v8753 = vld [vmem:[#allocation14 + $0x920] sm:$0xff]
    %v8754 = vld [vmem:[#allocation14 + $0x928] sm:$0xff]
    %v8755 = vld [vmem:[#allocation14 + $0x930] sm:$0xff]
    %v8756 = vld [vmem:[#allocation14 + $0x938] sm:$0xff]
    %v8757 = vld [vmem:[#allocation14 + $0x940] sm:$0xff]
    %v8758 = vld [vmem:[#allocation14 + $0x948] sm:$0xff]
    %v8759 = vld [vmem:[#allocation14 + $0x950] sm:$0xff]
    %v8760 = vld [vmem:[#allocation14 + $0x958] sm:$0xff]
    %v8761 = vld [vmem:[#allocation14 + $0x960] sm:$0xff]
    %v8762 = vld [vmem:[#allocation14 + $0x968] sm:$0xff]
    %v8763 = vld [vmem:[#allocation14 + $0x970] sm:$0xff]
    %v8764 = vld [vmem:[#allocation14 + $0x978] sm:$0xff]
    %v8765 = vld [vmem:[#allocation14 + $0x980] sm:$0xff]
    %v8766 = vld [vmem:[#allocation14 + $0x988] sm:$0xff]
    %v8767 = vld [vmem:[#allocation14 + $0x990] sm:$0xff]
    %v8768 = vld [vmem:[#allocation14 + $0x998] sm:$0xff]
    %v8769 = vld [vmem:[#allocation14 + $0x9a0] sm:$0xff]
    %v8770 = vld [vmem:[#allocation14 + $0x9a8] sm:$0xff]
    %v8771 = vld [vmem:[#allocation14 + $0x9b0] sm:$0xff]
    %v8772 = vld [vmem:[#allocation14 + $0x9b8] sm:$0xff]
    %v8773 = vld [vmem:[#allocation14 + $0x9c0] sm:$0xff]
    %v8774 = vld [vmem:[#allocation14 + $0x9c8] sm:$0xff]
    %v8775 = vld [vmem:[#allocation14 + $0x9d0] sm:$0xff]
    %v8776 = vld [vmem:[#allocation14 + $0x9d8] sm:$0xff]
    %v8777 = vld [vmem:[#allocation14 + $0x9e0] sm:$0xff]
    %v8778 = vld [vmem:[#allocation14 + $0x9e8] sm:$0xff]
    %v8779 = vld [vmem:[#allocation14 + $0x9f0] sm:$0xff]
    %v8780 = vld [vmem:[#allocation14 + $0x9f8] sm:$0xff]
    %v8781 = vld [vmem:[#allocation14 + $0xa00] sm:$0xff]
    %v8782 = vld [vmem:[#allocation14 + $0xa08] sm:$0xff]
    %v8783 = vld [vmem:[#allocation14 + $0xa10] sm:$0xff]
    %v8784 = vld [vmem:[#allocation14 + $0xa18] sm:$0xff]
    %v8785 = vld [vmem:[#allocation14 + $0xa20] sm:$0xff]
    %v8786 = vld [vmem:[#allocation14 + $0xa28] sm:$0xff]
    %v8787 = vld [vmem:[#allocation14 + $0xa30] sm:$0xff]
    %v8788 = vld [vmem:[#allocation14 + $0xa38] sm:$0xff]
    %v8789 = vld [vmem:[#allocation14 + $0xa40] sm:$0xff]
    %v8790 = vld [vmem:[#allocation14 + $0xa48] sm:$0xff]
    %v8791 = vld [vmem:[#allocation14 + $0xa50] sm:$0xff]
    %v8792 = vld [vmem:[#allocation14 + $0xa58] sm:$0xff]
    %v8793 = vld [vmem:[#allocation14 + $0xa60] sm:$0xff]
    %v8794 = vld [vmem:[#allocation14 + $0xa68] sm:$0xff]
    %v8795 = vld [vmem:[#allocation14 + $0xa70] sm:$0xff]
    %v8796 = vld [vmem:[#allocation14 + $0xa78] sm:$0xff]
    %v8797 = vld [vmem:[#allocation14 + $0xa80] sm:$0xff]
    %v8798 = vld [vmem:[#allocation14 + $0xa88] sm:$0xff]
    %v8799 = vld [vmem:[#allocation14 + $0xa90] sm:$0xff]
    %v8800 = vld [vmem:[#allocation14 + $0xa98] sm:$0xff]
    %v8801 = vld [vmem:[#allocation14 + $0xaa0] sm:$0xff]
    %v8802 = vld [vmem:[#allocation14 + $0xaa8] sm:$0xff]
    %v8803 = vld [vmem:[#allocation14 + $0xab0] sm:$0xff]
    %v8804 = vld [vmem:[#allocation14 + $0xab8] sm:$0xff]
    %v8805 = vld [vmem:[#allocation14 + $0xac0] sm:$0xff]
    %v8806 = vld [vmem:[#allocation14 + $0xac8] sm:$0xff]
    %v8807 = vld [vmem:[#allocation14 + $0xad0] sm:$0xff]
    %v8808 = vld [vmem:[#allocation14 + $0xad8] sm:$0xff]
    %v8809 = vld [vmem:[#allocation14 + $0xae0] sm:$0xff]
    %v8810 = vld [vmem:[#allocation14 + $0xae8] sm:$0xff]
    %v8811 = vld [vmem:[#allocation14 + $0xaf0] sm:$0xff]
    %v8812 = vld [vmem:[#allocation14 + $0xaf8] sm:$0xff]
    %v8813 = vld [vmem:[#allocation14 + $0xb00] sm:$0xff]
    %v8814 = vld [vmem:[#allocation14 + $0xb08] sm:$0xff]
    %v8815 = vld [vmem:[#allocation14 + $0xb10] sm:$0xff]
    %v8816 = vld [vmem:[#allocation14 + $0xb18] sm:$0xff]
    %v8817 = vld [vmem:[#allocation14 + $0xb20] sm:$0xff]
    %v8818 = vld [vmem:[#allocation14 + $0xb28] sm:$0xff]
    %v8819 = vld [vmem:[#allocation14 + $0xb30] sm:$0xff]
    %v8820 = vld [vmem:[#allocation14 + $0xb38] sm:$0xff]
    %v8821 = vld [vmem:[#allocation14 + $0xb40] sm:$0xff]
    %v8822 = vld [vmem:[#allocation14 + $0xb48] sm:$0xff]
    %v8823 = vld [vmem:[#allocation14 + $0xb50] sm:$0xff]
    %v8824 = vld [vmem:[#allocation14 + $0xb58] sm:$0xff]
    %v8825 = vld [vmem:[#allocation14 + $0xb60] sm:$0xff]
    %v8826 = vld [vmem:[#allocation14 + $0xb68] sm:$0xff]
    %v8827 = vld [vmem:[#allocation14 + $0xb70] sm:$0xff]
    %v8828 = vld [vmem:[#allocation14 + $0xb78] sm:$0xff]
    %v8829 = vld [vmem:[#allocation14 + $0xb80] sm:$0xff]
    %v8830 = vld [vmem:[#allocation14 + $0xb88] sm:$0xff]
    %v8831 = vld [vmem:[#allocation14 + $0xb90] sm:$0xff]
    %v8832 = vld [vmem:[#allocation14 + $0xb98] sm:$0xff]
    %v8833 = vld [vmem:[#allocation14 + $0xba0] sm:$0xff]
    %v8834 = vld [vmem:[#allocation14 + $0xba8] sm:$0xff]
    %v8835 = vld [vmem:[#allocation14 + $0xbb0] sm:$0xff]
    %v8836 = vld [vmem:[#allocation14 + $0xbb8] sm:$0xff]
    %v8837 = vld [vmem:[#allocation14 + $0xbc0] sm:$0xff]
    %v8838 = vld [vmem:[#allocation14 + $0xbc8] sm:$0xff]
    %v8839 = vld [vmem:[#allocation14 + $0xbd0] sm:$0xff]
    %v8840 = vld [vmem:[#allocation14 + $0xbd8] sm:$0xff]
    %v8841 = vld [vmem:[#allocation14 + $0xbe0] sm:$0xff]
    %v8842 = vld [vmem:[#allocation14 + $0xbe8] sm:$0xff]
    %v8843 = vld [vmem:[#allocation14 + $0xbf0] sm:$0xff]
    %v8844 = vld [vmem:[#allocation14 + $0xbf8] sm:$0xff]
    %v8845 = vld [vmem:[#allocation14 + $0xc00] sm:$0xff]
    %v8846 = vld [vmem:[#allocation14 + $0xc08] sm:$0xff]
    %v8847 = vld [vmem:[#allocation14 + $0xc10] sm:$0xff]
    %v8848 = vld [vmem:[#allocation14 + $0xc18] sm:$0xff]
    %v8849 = vld [vmem:[#allocation14 + $0xc20] sm:$0xff]
    %v8850 = vld [vmem:[#allocation14 + $0xc28] sm:$0xff]
    %v8851 = vld [vmem:[#allocation14 + $0xc30] sm:$0xff]
    %v8852 = vld [vmem:[#allocation14 + $0xc38] sm:$0xff]
    %v8853 = vld [vmem:[#allocation14 + $0xc40] sm:$0xff]
    %v8854 = vld [vmem:[#allocation14 + $0xc48] sm:$0xff]
    %v8855 = vld [vmem:[#allocation14 + $0xc50] sm:$0xff]
    %v8856 = vld [vmem:[#allocation14 + $0xc58] sm:$0xff]
    %v8857 = vld [vmem:[#allocation14 + $0xc60] sm:$0xff]
    %v8858 = vld [vmem:[#allocation14 + $0xc68] sm:$0xff]
    %v8859 = vld [vmem:[#allocation14 + $0xc70] sm:$0xff]
    %v8860 = vld [vmem:[#allocation14 + $0xc78] sm:$0xff]
    %v8861 = vld [vmem:[#allocation14 + $0xc80] sm:$0xff]
    %v8862 = vld [vmem:[#allocation14 + $0xc88] sm:$0xff]
    %v8863 = vld [vmem:[#allocation14 + $0xc90] sm:$0xff]
    %v8864 = vld [vmem:[#allocation14 + $0xc98] sm:$0xff]
    %v8865 = vld [vmem:[#allocation14 + $0xca0] sm:$0xff]
    %v8866 = vld [vmem:[#allocation14 + $0xca8] sm:$0xff]
    %v8867 = vld [vmem:[#allocation14 + $0xcb0] sm:$0xff]
    %v8868 = vld [vmem:[#allocation14 + $0xcb8] sm:$0xff]
    %v8869 = vld [vmem:[#allocation14 + $0xcc0] sm:$0xff]
    %v8870 = vld [vmem:[#allocation14 + $0xcc8] sm:$0xff]
    %v8871 = vld [vmem:[#allocation14 + $0xcd0] sm:$0xff]
    %v8872 = vld [vmem:[#allocation14 + $0xcd8] sm:$0xff]
    %v8873 = vld [vmem:[#allocation14 + $0xce0] sm:$0xff]
    %v8874 = vld [vmem:[#allocation14 + $0xce8] sm:$0xff]
    %v8875 = vld [vmem:[#allocation14 + $0xcf0] sm:$0xff]
    %v8876 = vld [vmem:[#allocation14 + $0xcf8] sm:$0xff]
    %v8877 = vld [vmem:[#allocation14 + $0xd00] sm:$0xff]
    %v8878 = vld [vmem:[#allocation14 + $0xd08] sm:$0xff]
    %v8879 = vld [vmem:[#allocation14 + $0xd10] sm:$0xff]
    %v8880 = vld [vmem:[#allocation14 + $0xd18] sm:$0xff]
    %v8881 = vld [vmem:[#allocation14 + $0xd20] sm:$0xff]
    %v8882 = vld [vmem:[#allocation14 + $0xd28] sm:$0xff]
    %v8883 = vld [vmem:[#allocation14 + $0xd30] sm:$0xff]
    %v8884 = vld [vmem:[#allocation14 + $0xd38] sm:$0xff]
    %v8885 = vld [vmem:[#allocation14 + $0xd40] sm:$0xff]
    %v8886 = vld [vmem:[#allocation14 + $0xd48] sm:$0xff]
    %v8887 = vld [vmem:[#allocation14 + $0xd50] sm:$0xff]
    %v8888 = vld [vmem:[#allocation14 + $0xd58] sm:$0xff]
    %v8889 = vld [vmem:[#allocation14 + $0xd60] sm:$0xff]
    %v8890 = vld [vmem:[#allocation14 + $0xd68] sm:$0xff]
    %v8891 = vld [vmem:[#allocation14 + $0xd70] sm:$0xff]
    %v8892 = vld [vmem:[#allocation14 + $0xd78] sm:$0xff]
    %v8893 = vld [vmem:[#allocation14 + $0xd80] sm:$0xff]
    %v8894 = vld [vmem:[#allocation14 + $0xd88] sm:$0xff]
    %v8895 = vld [vmem:[#allocation14 + $0xd90] sm:$0xff]
    %v8896 = vld [vmem:[#allocation14 + $0xd98] sm:$0xff]
    %v8897 = vld [vmem:[#allocation14 + $0xda0] sm:$0xff]
    %v8898 = vld [vmem:[#allocation14 + $0xda8] sm:$0xff]
    %v8899 = vld [vmem:[#allocation14 + $0xdb0] sm:$0xff]
    %v8900 = vld [vmem:[#allocation14 + $0xdb8] sm:$0xff]
    %v8901 = vld [vmem:[#allocation14 + $0xdc0] sm:$0xff]
    %v8902 = vld [vmem:[#allocation14 + $0xdc8] sm:$0xff]
    %v8903 = vld [vmem:[#allocation14 + $0xdd0] sm:$0xff]
    %v8904 = vld [vmem:[#allocation14 + $0xdd8] sm:$0xff]
    %v8905 = vld [vmem:[#allocation14 + $0xde0] sm:$0xff]
    %v8906 = vld [vmem:[#allocation14 + $0xde8] sm:$0xff]
    %v8907 = vld [vmem:[#allocation14 + $0xdf0] sm:$0xff]
    %v8908 = vld [vmem:[#allocation14 + $0xdf8] sm:$0xff]
    %v8909 = vld [vmem:[#allocation14 + $0xe00] sm:$0xff]
    %v8910 = vld [vmem:[#allocation14 + $0xe08] sm:$0xff]
    %v8911 = vld [vmem:[#allocation14 + $0xe10] sm:$0xff]
    %v8912 = vld [vmem:[#allocation14 + $0xe18] sm:$0xff]
    %v8913 = vld [vmem:[#allocation14 + $0xe20] sm:$0xff]
    %v8914 = vld [vmem:[#allocation14 + $0xe28] sm:$0xff]
    %v8915 = vld [vmem:[#allocation14 + $0xe30] sm:$0xff]
    %v8916 = vld [vmem:[#allocation14 + $0xe38] sm:$0xff]
    %v8917 = vld [vmem:[#allocation14 + $0xe40] sm:$0xff]
    %v8918 = vld [vmem:[#allocation14 + $0xe48] sm:$0xff]
    %v8919 = vld [vmem:[#allocation14 + $0xe50] sm:$0xff]
    %v8920 = vld [vmem:[#allocation14 + $0xe58] sm:$0xff]
    %v8921 = vld [vmem:[#allocation14 + $0xe60] sm:$0xff]
    %v8922 = vld [vmem:[#allocation14 + $0xe68] sm:$0xff]
    %v8923 = vld [vmem:[#allocation14 + $0xe70] sm:$0xff]
    %v8924 = vld [vmem:[#allocation14 + $0xe78] sm:$0xff]
    %v8925 = vld [vmem:[#allocation14 + $0xe80] sm:$0xff]
    %v8926 = vld [vmem:[#allocation14 + $0xe88] sm:$0xff]
    %v8927 = vld [vmem:[#allocation14 + $0xe90] sm:$0xff]
    %v8928 = vld [vmem:[#allocation14 + $0xe98] sm:$0xff]
    %v8929 = vld [vmem:[#allocation14 + $0xea0] sm:$0xff]
    %v8930 = vld [vmem:[#allocation14 + $0xea8] sm:$0xff]
    %v8931 = vld [vmem:[#allocation14 + $0xeb0] sm:$0xff]
    %v8932 = vld [vmem:[#allocation14 + $0xeb8] sm:$0xff]
    %v8933 = vld [vmem:[#allocation14 + $0xec0] sm:$0xff]
    %v8934 = vld [vmem:[#allocation14 + $0xec8] sm:$0xff]
    %v8935 = vld [vmem:[#allocation14 + $0xed0] sm:$0xff]
    %v8936 = vld [vmem:[#allocation14 + $0xed8] sm:$0xff]
    %v8937 = vld [vmem:[#allocation14 + $0xee0] sm:$0xff]
    %v8938 = vld [vmem:[#allocation14 + $0xee8] sm:$0xff]
    %v8939 = vld [vmem:[#allocation14 + $0xef0] sm:$0xff]
    %v8940 = vld [vmem:[#allocation14 + $0xef8] sm:$0xff]
    %v8941 = vld [vmem:[#allocation14 + $0xf00] sm:$0xff]
    %v8942 = vld [vmem:[#allocation14 + $0xf08] sm:$0xff]
    %v8943 = vld [vmem:[#allocation14 + $0xf10] sm:$0xff]
    %v8944 = vld [vmem:[#allocation14 + $0xf18] sm:$0xff]
    %v8945 = vld [vmem:[#allocation14 + $0xf20] sm:$0xff]
    %v8946 = vld [vmem:[#allocation14 + $0xf28] sm:$0xff]
    %v8947 = vld [vmem:[#allocation14 + $0xf30] sm:$0xff]
    %v8948 = vld [vmem:[#allocation14 + $0xf38] sm:$0xff]
    %v8949 = vld [vmem:[#allocation14 + $0xf40] sm:$0xff]
    %v8950 = vld [vmem:[#allocation14 + $0xf48] sm:$0xff]
    %v8951 = vld [vmem:[#allocation14 + $0xf50] sm:$0xff]
    %v8952 = vld [vmem:[#allocation14 + $0xf58] sm:$0xff]
    %v8953 = vld [vmem:[#allocation14 + $0xf60] sm:$0xff]
    %v8954 = vld [vmem:[#allocation14 + $0xf68] sm:$0xff]
    %v8955 = vld [vmem:[#allocation14 + $0xf70] sm:$0xff]
    %v8956 = vld [vmem:[#allocation14 + $0xf78] sm:$0xff]
    %v8957 = vld [vmem:[#allocation14 + $0xf80] sm:$0xff]
    %v8958 = vld [vmem:[#allocation14 + $0xf88] sm:$0xff]
    %v8959 = vld [vmem:[#allocation14 + $0xf90] sm:$0xff]
    %v8960 = vld [vmem:[#allocation14 + $0xf98] sm:$0xff]
    %v8961 = vld [vmem:[#allocation14 + $0xfa0] sm:$0xff]
    %v8962 = vld [vmem:[#allocation14 + $0xfa8] sm:$0xff]
    %v8963 = vld [vmem:[#allocation14 + $0xfb0] sm:$0xff]
    %v8964 = vld [vmem:[#allocation14 + $0xfb8] sm:$0xff]
    %v8965 = vld [vmem:[#allocation14 + $0xfc0] sm:$0xff]
    %v8966 = vld [vmem:[#allocation14 + $0xfc8] sm:$0xff]
    %v8967 = vld [vmem:[#allocation14 + $0xfd0] sm:$0xff]
    %v8968 = vld [vmem:[#allocation14 + $0xfd8] sm:$0xff]
    %v8969 = vld [vmem:[#allocation14 + $0xfe0] sm:$0xff]
    %v8970 = vld [vmem:[#allocation14 + $0xfe8] sm:$0xff]
    %v8971 = vld [vmem:[#allocation14 + $0xff0] sm:$0xff]
    %v8972 = vld [vmem:[#allocation14 + $0xff8] sm:$0xff]
    %v8973 = vld [vmem:[#allocation16] sm:$0xff]
    %v8975 = vlaneseq
    %v8976 = vshrl.u32 %v8975, 7
    %v8977 = vsub.s32 0, %v8976
    %v8978 = vrot.slane %v8973, %v8977
    %v8979 = vlaneseq
    %v8980 = vshrl.u32 %v8979, 7
    %v8981 = vsub.s32 1, %v8980
    %v8982 = vrot.slane %v8973, %v8981
    %v8983 = vlaneseq
    %v8984 = vshrl.u32 %v8983, 7
    %v8985 = vsub.s32 2, %v8984
    %v8986 = vrot.slane %v8973, %v8985
    %v8987 = vlaneseq
    %v8988 = vshrl.u32 %v8987, 7
    %v8989 = vsub.s32 3, %v8988
    %v8990 = vrot.slane %v8973, %v8989
    %v8991 = vlaneseq
    %v8992 = vshrl.u32 %v8991, 7
    %v8993 = vsub.s32 4, %v8992
    %v8994 = vrot.slane %v8973, %v8993
    %v8995 = vlaneseq
    %v8996 = vshrl.u32 %v8995, 7
    %v8997 = vsub.s32 5, %v8996
    %v8998 = vrot.slane %v8973, %v8997
    %v8999 = vlaneseq
    %v9000 = vshrl.u32 %v8999, 7
    %v9001 = vsub.s32 6, %v9000
    %v9002 = vrot.slane %v8973, %v9001
    %v9003 = vlaneseq
    %v9004 = vshrl.u32 %v9003, 7
    %v9005 = vsub.s32 7, %v9004
    %v9006 = vrot.slane %v8973, %v9005
    %v9527 = vunpack.c.l.b16 %v8461
    %v9528 = vunpack.c.h.b16 %v8461
    %v9529 = vunpack.c.l.b16 %v8462
    %v9530 = vunpack.c.h.b16 %v8462
    %v9531 = vunpack.c.l.b16 %v8463
    %v9532 = vunpack.c.h.b16 %v8463
    %v9533 = vunpack.c.l.b16 %v8464
    %v9534 = vunpack.c.h.b16 %v8464
    %v9535 = vunpack.c.l.b16 %v8465
    %v9536 = vunpack.c.h.b16 %v8465
    %v9537 = vunpack.c.l.b16 %v8466
    %v9538 = vunpack.c.h.b16 %v8466
    %v9539 = vunpack.c.l.b16 %v8467
    %v9540 = vunpack.c.h.b16 %v8467
    %v9541 = vunpack.c.l.b16 %v8468
    %v9542 = vunpack.c.h.b16 %v8468
    %v9543 = vunpack.c.l.b16 %v8469
    %v9544 = vunpack.c.h.b16 %v8469
    %v9545 = vunpack.c.l.b16 %v8470
    %v9546 = vunpack.c.h.b16 %v8470
    %v9547 = vunpack.c.l.b16 %v8471
    %v9548 = vunpack.c.h.b16 %v8471
    %v9549 = vunpack.c.l.b16 %v8472
    %v9550 = vunpack.c.h.b16 %v8472
    %v9551 = vunpack.c.l.b16 %v8473
    %v9552 = vunpack.c.h.b16 %v8473
    %v9553 = vunpack.c.l.b16 %v8474
    %v9554 = vunpack.c.h.b16 %v8474
    %v9555 = vunpack.c.l.b16 %v8475
    %v9556 = vunpack.c.h.b16 %v8475
    %v9557 = vunpack.c.l.b16 %v8476
    %v9558 = vunpack.c.h.b16 %v8476
    %v9559 = vunpack.c.l.b16 %v8477
    %v9560 = vunpack.c.h.b16 %v8477
    %v9561 = vunpack.c.l.b16 %v8478
    %v9562 = vunpack.c.h.b16 %v8478
    %v9563 = vunpack.c.l.b16 %v8479
    %v9564 = vunpack.c.h.b16 %v8479
    %v9565 = vunpack.c.l.b16 %v8480
    %v9566 = vunpack.c.h.b16 %v8480
    %v9567 = vunpack.c.l.b16 %v8481
    %v9568 = vunpack.c.h.b16 %v8481
    %v9569 = vunpack.c.l.b16 %v8482
    %v9570 = vunpack.c.h.b16 %v8482
    %v9571 = vunpack.c.l.b16 %v8483
    %v9572 = vunpack.c.h.b16 %v8483
    %v9573 = vunpack.c.l.b16 %v8484
    %v9574 = vunpack.c.h.b16 %v8484
    %v9575 = vunpack.c.l.b16 %v8485
    %v9576 = vunpack.c.h.b16 %v8485
    %v9577 = vunpack.c.l.b16 %v8486
    %v9578 = vunpack.c.h.b16 %v8486
    %v9579 = vunpack.c.l.b16 %v8487
    %v9580 = vunpack.c.h.b16 %v8487
    %v9581 = vunpack.c.l.b16 %v8488
    %v9582 = vunpack.c.h.b16 %v8488
    %v9583 = vunpack.c.l.b16 %v8489
    %v9584 = vunpack.c.h.b16 %v8489
    %v9585 = vunpack.c.l.b16 %v8490
    %v9586 = vunpack.c.h.b16 %v8490
    %v9587 = vunpack.c.l.b16 %v8491
    %v9588 = vunpack.c.h.b16 %v8491
    %v9589 = vunpack.c.l.b16 %v8492
    %v9590 = vunpack.c.h.b16 %v8492
    %v9591 = vunpack.c.l.b16 %v8493
    %v9592 = vunpack.c.h.b16 %v8493
    %v9593 = vunpack.c.l.b16 %v8494
    %v9594 = vunpack.c.h.b16 %v8494
    %v9595 = vunpack.c.l.b16 %v8495
    %v9596 = vunpack.c.h.b16 %v8495
    %v9597 = vunpack.c.l.b16 %v8496
    %v9598 = vunpack.c.h.b16 %v8496
    %v9599 = vunpack.c.l.b16 %v8497
    %v9600 = vunpack.c.h.b16 %v8497
    %v9601 = vunpack.c.l.b16 %v8498
    %v9602 = vunpack.c.h.b16 %v8498
    %v9603 = vunpack.c.l.b16 %v8499
    %v9604 = vunpack.c.h.b16 %v8499
    %v9605 = vunpack.c.l.b16 %v8500
    %v9606 = vunpack.c.h.b16 %v8500
    %v9607 = vunpack.c.l.b16 %v8501
    %v9608 = vunpack.c.h.b16 %v8501
    %v9609 = vunpack.c.l.b16 %v8502
    %v9610 = vunpack.c.h.b16 %v8502
    %v9611 = vunpack.c.l.b16 %v8503
    %v9612 = vunpack.c.h.b16 %v8503
    %v9613 = vunpack.c.l.b16 %v8504
    %v9614 = vunpack.c.h.b16 %v8504
    %v9615 = vunpack.c.l.b16 %v8505
    %v9616 = vunpack.c.h.b16 %v8505
    %v9617 = vunpack.c.l.b16 %v8506
    %v9618 = vunpack.c.h.b16 %v8506
    %v9619 = vunpack.c.l.b16 %v8507
    %v9620 = vunpack.c.h.b16 %v8507
    %v9621 = vunpack.c.l.b16 %v8508
    %v9622 = vunpack.c.h.b16 %v8508
    %v9623 = vunpack.c.l.b16 %v8509
    %v9624 = vunpack.c.h.b16 %v8509
    %v9625 = vunpack.c.l.b16 %v8510
    %v9626 = vunpack.c.h.b16 %v8510
    %v9627 = vunpack.c.l.b16 %v8511
    %v9628 = vunpack.c.h.b16 %v8511
    %v9629 = vunpack.c.l.b16 %v8512
    %v9630 = vunpack.c.h.b16 %v8512
    %v9631 = vunpack.c.l.b16 %v8513
    %v9632 = vunpack.c.h.b16 %v8513
    %v9633 = vunpack.c.l.b16 %v8514
    %v9634 = vunpack.c.h.b16 %v8514
    %v9635 = vunpack.c.l.b16 %v8515
    %v9636 = vunpack.c.h.b16 %v8515
    %v9637 = vunpack.c.l.b16 %v8516
    %v9638 = vunpack.c.h.b16 %v8516
    %v9639 = vunpack.c.l.b16 %v8517
    %v9640 = vunpack.c.h.b16 %v8517
    %v9641 = vunpack.c.l.b16 %v8518
    %v9642 = vunpack.c.h.b16 %v8518
    %v9643 = vunpack.c.l.b16 %v8519
    %v9644 = vunpack.c.h.b16 %v8519
    %v9645 = vunpack.c.l.b16 %v8520
    %v9646 = vunpack.c.h.b16 %v8520
    %v9647 = vunpack.c.l.b16 %v8521
    %v9648 = vunpack.c.h.b16 %v8521
    %v9649 = vunpack.c.l.b16 %v8522
    %v9650 = vunpack.c.h.b16 %v8522
    %v9651 = vunpack.c.l.b16 %v8523
    %v9652 = vunpack.c.h.b16 %v8523
    %v9653 = vunpack.c.l.b16 %v8524
    %v9654 = vunpack.c.h.b16 %v8524
    %v9655 = vunpack.c.l.b16 %v8525
    %v9656 = vunpack.c.h.b16 %v8525
    %v9657 = vunpack.c.l.b16 %v8526
    %v9658 = vunpack.c.h.b16 %v8526
    %v9659 = vunpack.c.l.b16 %v8527
    %v9660 = vunpack.c.h.b16 %v8527
    %v9661 = vunpack.c.l.b16 %v8528
    %v9662 = vunpack.c.h.b16 %v8528
    %v9663 = vunpack.c.l.b16 %v8529
    %v9664 = vunpack.c.h.b16 %v8529
    %v9665 = vunpack.c.l.b16 %v8530
    %v9666 = vunpack.c.h.b16 %v8530
    %v9667 = vunpack.c.l.b16 %v8531
    %v9668 = vunpack.c.h.b16 %v8531
    %v9669 = vunpack.c.l.b16 %v8532
    %v9670 = vunpack.c.h.b16 %v8532
    %v9671 = vunpack.c.l.b16 %v8533
    %v9672 = vunpack.c.h.b16 %v8533
    %v9673 = vunpack.c.l.b16 %v8534
    %v9674 = vunpack.c.h.b16 %v8534
    %v9675 = vunpack.c.l.b16 %v8535
    %v9676 = vunpack.c.h.b16 %v8535
    %v9677 = vunpack.c.l.b16 %v8536
    %v9678 = vunpack.c.h.b16 %v8536
    %v9679 = vunpack.c.l.b16 %v8537
    %v9680 = vunpack.c.h.b16 %v8537
    %v9681 = vunpack.c.l.b16 %v8538
    %v9682 = vunpack.c.h.b16 %v8538
    %v9683 = vunpack.c.l.b16 %v8539
    %v9684 = vunpack.c.h.b16 %v8539
    %v9685 = vunpack.c.l.b16 %v8540
    %v9686 = vunpack.c.h.b16 %v8540
    %v9687 = vunpack.c.l.b16 %v8541
    %v9688 = vunpack.c.h.b16 %v8541
    %v9689 = vunpack.c.l.b16 %v8542
    %v9690 = vunpack.c.h.b16 %v8542
    %v9691 = vunpack.c.l.b16 %v8543
    %v9692 = vunpack.c.h.b16 %v8543
    %v9693 = vunpack.c.l.b16 %v8544
    %v9694 = vunpack.c.h.b16 %v8544
    %v9695 = vunpack.c.l.b16 %v8545
    %v9696 = vunpack.c.h.b16 %v8545
    %v9697 = vunpack.c.l.b16 %v8546
    %v9698 = vunpack.c.h.b16 %v8546
    %v9699 = vunpack.c.l.b16 %v8547
    %v9700 = vunpack.c.h.b16 %v8547
    %v9701 = vunpack.c.l.b16 %v8548
    %v9702 = vunpack.c.h.b16 %v8548
    %v9703 = vunpack.c.l.b16 %v8549
    %v9704 = vunpack.c.h.b16 %v8549
    %v9705 = vunpack.c.l.b16 %v8550
    %v9706 = vunpack.c.h.b16 %v8550
    %v9707 = vunpack.c.l.b16 %v8551
    %v9708 = vunpack.c.h.b16 %v8551
    %v9709 = vunpack.c.l.b16 %v8552
    %v9710 = vunpack.c.h.b16 %v8552
    %v9711 = vunpack.c.l.b16 %v8553
    %v9712 = vunpack.c.h.b16 %v8553
    %v9713 = vunpack.c.l.b16 %v8554
    %v9714 = vunpack.c.h.b16 %v8554
    %v9715 = vunpack.c.l.b16 %v8555
    %v9716 = vunpack.c.h.b16 %v8555
    %v9717 = vunpack.c.l.b16 %v8556
    %v9718 = vunpack.c.h.b16 %v8556
    %v9719 = vunpack.c.l.b16 %v8557
    %v9720 = vunpack.c.h.b16 %v8557
    %v9721 = vunpack.c.l.b16 %v8558
    %v9722 = vunpack.c.h.b16 %v8558
    %v9723 = vunpack.c.l.b16 %v8559
    %v9724 = vunpack.c.h.b16 %v8559
    %v9725 = vunpack.c.l.b16 %v8560
    %v9726 = vunpack.c.h.b16 %v8560
    %v9727 = vunpack.c.l.b16 %v8561
    %v9728 = vunpack.c.h.b16 %v8561
    %v9729 = vunpack.c.l.b16 %v8562
    %v9730 = vunpack.c.h.b16 %v8562
    %v9731 = vunpack.c.l.b16 %v8563
    %v9732 = vunpack.c.h.b16 %v8563
    %v9733 = vunpack.c.l.b16 %v8564
    %v9734 = vunpack.c.h.b16 %v8564
    %v9735 = vunpack.c.l.b16 %v8565
    %v9736 = vunpack.c.h.b16 %v8565
    %v9737 = vunpack.c.l.b16 %v8566
    %v9738 = vunpack.c.h.b16 %v8566
    %v9739 = vunpack.c.l.b16 %v8567
    %v9740 = vunpack.c.h.b16 %v8567
    %v9741 = vunpack.c.l.b16 %v8568
    %v9742 = vunpack.c.h.b16 %v8568
    %v9743 = vunpack.c.l.b16 %v8569
    %v9744 = vunpack.c.h.b16 %v8569
    %v9745 = vunpack.c.l.b16 %v8570
    %v9746 = vunpack.c.h.b16 %v8570
    %v9747 = vunpack.c.l.b16 %v8571
    %v9748 = vunpack.c.h.b16 %v8571
    %v9749 = vunpack.c.l.b16 %v8572
    %v9750 = vunpack.c.h.b16 %v8572
    %v9751 = vunpack.c.l.b16 %v8573
    %v9752 = vunpack.c.h.b16 %v8573
    %v9753 = vunpack.c.l.b16 %v8574
    %v9754 = vunpack.c.h.b16 %v8574
    %v9755 = vunpack.c.l.b16 %v8575
    %v9756 = vunpack.c.h.b16 %v8575
    %v9757 = vunpack.c.l.b16 %v8576
    %v9758 = vunpack.c.h.b16 %v8576
    %v9759 = vunpack.c.l.b16 %v8577
    %v9760 = vunpack.c.h.b16 %v8577
    %v9761 = vunpack.c.l.b16 %v8578
    %v9762 = vunpack.c.h.b16 %v8578
    %v9763 = vunpack.c.l.b16 %v8579
    %v9764 = vunpack.c.h.b16 %v8579
    %v9765 = vunpack.c.l.b16 %v8580
    %v9766 = vunpack.c.h.b16 %v8580
    %v9767 = vunpack.c.l.b16 %v8581
    %v9768 = vunpack.c.h.b16 %v8581
    %v9769 = vunpack.c.l.b16 %v8582
    %v9770 = vunpack.c.h.b16 %v8582
    %v9771 = vunpack.c.l.b16 %v8583
    %v9772 = vunpack.c.h.b16 %v8583
    %v9773 = vunpack.c.l.b16 %v8584
    %v9774 = vunpack.c.h.b16 %v8584
    %v9775 = vunpack.c.l.b16 %v8585
    %v9776 = vunpack.c.h.b16 %v8585
    %v9777 = vunpack.c.l.b16 %v8586
    %v9778 = vunpack.c.h.b16 %v8586
    %v9779 = vunpack.c.l.b16 %v8587
    %v9780 = vunpack.c.h.b16 %v8587
    %v9781 = vunpack.c.l.b16 %v8588
    %v9782 = vunpack.c.h.b16 %v8588
    %v9783 = vunpack.c.l.b16 %v8589
    %v9784 = vunpack.c.h.b16 %v8589
    %v9785 = vunpack.c.l.b16 %v8590
    %v9786 = vunpack.c.h.b16 %v8590
    %v9787 = vunpack.c.l.b16 %v8591
    %v9788 = vunpack.c.h.b16 %v8591
    %v9789 = vunpack.c.l.b16 %v8592
    %v9790 = vunpack.c.h.b16 %v8592
    %v9791 = vunpack.c.l.b16 %v8593
    %v9792 = vunpack.c.h.b16 %v8593
    %v9793 = vunpack.c.l.b16 %v8594
    %v9794 = vunpack.c.h.b16 %v8594
    %v9795 = vunpack.c.l.b16 %v8595
    %v9796 = vunpack.c.h.b16 %v8595
    %v9797 = vunpack.c.l.b16 %v8596
    %v9798 = vunpack.c.h.b16 %v8596
    %v9799 = vunpack.c.l.b16 %v8597
    %v9800 = vunpack.c.h.b16 %v8597
    %v9801 = vunpack.c.l.b16 %v8598
    %v9802 = vunpack.c.h.b16 %v8598
    %v9803 = vunpack.c.l.b16 %v8599
    %v9804 = vunpack.c.h.b16 %v8599
    %v9805 = vunpack.c.l.b16 %v8600
    %v9806 = vunpack.c.h.b16 %v8600
    %v9807 = vunpack.c.l.b16 %v8601
    %v9808 = vunpack.c.h.b16 %v8601
    %v9809 = vunpack.c.l.b16 %v8602
    %v9810 = vunpack.c.h.b16 %v8602
    %v9811 = vunpack.c.l.b16 %v8603
    %v9812 = vunpack.c.h.b16 %v8603
    %v9813 = vunpack.c.l.b16 %v8604
    %v9814 = vunpack.c.h.b16 %v8604
    %v9815 = vunpack.c.l.b16 %v8605
    %v9816 = vunpack.c.h.b16 %v8605
    %v9817 = vunpack.c.l.b16 %v8606
    %v9818 = vunpack.c.h.b16 %v8606
    %v9819 = vunpack.c.l.b16 %v8607
    %v9820 = vunpack.c.h.b16 %v8607
    %v9821 = vunpack.c.l.b16 %v8608
    %v9822 = vunpack.c.h.b16 %v8608
    %v9823 = vunpack.c.l.b16 %v8609
    %v9824 = vunpack.c.h.b16 %v8609
    %v9825 = vunpack.c.l.b16 %v8610
    %v9826 = vunpack.c.h.b16 %v8610
    %v9827 = vunpack.c.l.b16 %v8611
    %v9828 = vunpack.c.h.b16 %v8611
    %v9829 = vunpack.c.l.b16 %v8612
    %v9830 = vunpack.c.h.b16 %v8612
    %v9831 = vunpack.c.l.b16 %v8613
    %v9832 = vunpack.c.h.b16 %v8613
    %v9833 = vunpack.c.l.b16 %v8614
    %v9834 = vunpack.c.h.b16 %v8614
    %v9835 = vunpack.c.l.b16 %v8615
    %v9836 = vunpack.c.h.b16 %v8615
    %v9837 = vunpack.c.l.b16 %v8616
    %v9838 = vunpack.c.h.b16 %v8616
    %v9839 = vunpack.c.l.b16 %v8617
    %v9840 = vunpack.c.h.b16 %v8617
    %v9841 = vunpack.c.l.b16 %v8618
    %v9842 = vunpack.c.h.b16 %v8618
    %v9843 = vunpack.c.l.b16 %v8619
    %v9844 = vunpack.c.h.b16 %v8619
    %v9845 = vunpack.c.l.b16 %v8620
    %v9846 = vunpack.c.h.b16 %v8620
    %v9847 = vunpack.c.l.b16 %v8621
    %v9848 = vunpack.c.h.b16 %v8621
    %v9849 = vunpack.c.l.b16 %v8622
    %v9850 = vunpack.c.h.b16 %v8622
    %v9851 = vunpack.c.l.b16 %v8623
    %v9852 = vunpack.c.h.b16 %v8623
    %v9853 = vunpack.c.l.b16 %v8624
    %v9854 = vunpack.c.h.b16 %v8624
    %v9855 = vunpack.c.l.b16 %v8625
    %v9856 = vunpack.c.h.b16 %v8625
    %v9857 = vunpack.c.l.b16 %v8626
    %v9858 = vunpack.c.h.b16 %v8626
    %v9859 = vunpack.c.l.b16 %v8627
    %v9860 = vunpack.c.h.b16 %v8627
    %v9861 = vunpack.c.l.b16 %v8628
    %v9862 = vunpack.c.h.b16 %v8628
    %v9863 = vunpack.c.l.b16 %v8629
    %v9864 = vunpack.c.h.b16 %v8629
    %v9865 = vunpack.c.l.b16 %v8630
    %v9866 = vunpack.c.h.b16 %v8630
    %v9867 = vunpack.c.l.b16 %v8631
    %v9868 = vunpack.c.h.b16 %v8631
    %v9869 = vunpack.c.l.b16 %v8632
    %v9870 = vunpack.c.h.b16 %v8632
    %v9871 = vunpack.c.l.b16 %v8633
    %v9872 = vunpack.c.h.b16 %v8633
    %v9873 = vunpack.c.l.b16 %v8634
    %v9874 = vunpack.c.h.b16 %v8634
    %v9875 = vunpack.c.l.b16 %v8635
    %v9876 = vunpack.c.h.b16 %v8635
    %v9877 = vunpack.c.l.b16 %v8636
    %v9878 = vunpack.c.h.b16 %v8636
    %v9879 = vunpack.c.l.b16 %v8637
    %v9880 = vunpack.c.h.b16 %v8637
    %v9881 = vunpack.c.l.b16 %v8638
    %v9882 = vunpack.c.h.b16 %v8638
    %v9883 = vunpack.c.l.b16 %v8639
    %v9884 = vunpack.c.h.b16 %v8639
    %v9885 = vunpack.c.l.b16 %v8640
    %v9886 = vunpack.c.h.b16 %v8640
    %v9887 = vunpack.c.l.b16 %v8641
    %v9888 = vunpack.c.h.b16 %v8641
    %v9889 = vunpack.c.l.b16 %v8642
    %v9890 = vunpack.c.h.b16 %v8642
    %v9891 = vunpack.c.l.b16 %v8643
    %v9892 = vunpack.c.h.b16 %v8643
    %v9893 = vunpack.c.l.b16 %v8644
    %v9894 = vunpack.c.h.b16 %v8644
    %v9895 = vunpack.c.l.b16 %v8645
    %v9896 = vunpack.c.h.b16 %v8645
    %v9897 = vunpack.c.l.b16 %v8646
    %v9898 = vunpack.c.h.b16 %v8646
    %v9899 = vunpack.c.l.b16 %v8647
    %v9900 = vunpack.c.h.b16 %v8647
    %v9901 = vunpack.c.l.b16 %v8648
    %v9902 = vunpack.c.h.b16 %v8648
    %v9903 = vunpack.c.l.b16 %v8649
    %v9904 = vunpack.c.h.b16 %v8649
    %v9905 = vunpack.c.l.b16 %v8650
    %v9906 = vunpack.c.h.b16 %v8650
    %v9907 = vunpack.c.l.b16 %v8651
    %v9908 = vunpack.c.h.b16 %v8651
    %v9909 = vunpack.c.l.b16 %v8652
    %v9910 = vunpack.c.h.b16 %v8652
    %v9911 = vunpack.c.l.b16 %v8653
    %v9912 = vunpack.c.h.b16 %v8653
    %v9913 = vunpack.c.l.b16 %v8654
    %v9914 = vunpack.c.h.b16 %v8654
    %v9915 = vunpack.c.l.b16 %v8655
    %v9916 = vunpack.c.h.b16 %v8655
    %v9917 = vunpack.c.l.b16 %v8656
    %v9918 = vunpack.c.h.b16 %v8656
    %v9919 = vunpack.c.l.b16 %v8657
    %v9920 = vunpack.c.h.b16 %v8657
    %v9921 = vunpack.c.l.b16 %v8658
    %v9922 = vunpack.c.h.b16 %v8658
    %v9923 = vunpack.c.l.b16 %v8659
    %v9924 = vunpack.c.h.b16 %v8659
    %v9925 = vunpack.c.l.b16 %v8660
    %v9926 = vunpack.c.h.b16 %v8660
    %v9927 = vunpack.c.l.b16 %v8661
    %v9928 = vunpack.c.h.b16 %v8661
    %v9929 = vunpack.c.l.b16 %v8662
    %v9930 = vunpack.c.h.b16 %v8662
    %v9931 = vunpack.c.l.b16 %v8663
    %v9932 = vunpack.c.h.b16 %v8663
    %v9933 = vunpack.c.l.b16 %v8664
    %v9934 = vunpack.c.h.b16 %v8664
    %v9935 = vunpack.c.l.b16 %v8665
    %v9936 = vunpack.c.h.b16 %v8665
    %v9937 = vunpack.c.l.b16 %v8666
    %v9938 = vunpack.c.h.b16 %v8666
    %v9939 = vunpack.c.l.b16 %v8667
    %v9940 = vunpack.c.h.b16 %v8667
    %v9941 = vunpack.c.l.b16 %v8668
    %v9942 = vunpack.c.h.b16 %v8668
    %v9943 = vunpack.c.l.b16 %v8669
    %v9944 = vunpack.c.h.b16 %v8669
    %v9945 = vunpack.c.l.b16 %v8670
    %v9946 = vunpack.c.h.b16 %v8670
    %v9947 = vunpack.c.l.b16 %v8671
    %v9948 = vunpack.c.h.b16 %v8671
    %v9949 = vunpack.c.l.b16 %v8672
    %v9950 = vunpack.c.h.b16 %v8672
    %v9951 = vunpack.c.l.b16 %v8673
    %v9952 = vunpack.c.h.b16 %v8673
    %v9953 = vunpack.c.l.b16 %v8674
    %v9954 = vunpack.c.h.b16 %v8674
    %v9955 = vunpack.c.l.b16 %v8675
    %v9956 = vunpack.c.h.b16 %v8675
    %v9957 = vunpack.c.l.b16 %v8676
    %v9958 = vunpack.c.h.b16 %v8676
    %v9959 = vunpack.c.l.b16 %v8677
    %v9960 = vunpack.c.h.b16 %v8677
    %v9961 = vunpack.c.l.b16 %v8678
    %v9962 = vunpack.c.h.b16 %v8678
    %v9963 = vunpack.c.l.b16 %v8679
    %v9964 = vunpack.c.h.b16 %v8679
    %v9965 = vunpack.c.l.b16 %v8680
    %v9966 = vunpack.c.h.b16 %v8680
    %v9967 = vunpack.c.l.b16 %v8681
    %v9968 = vunpack.c.h.b16 %v8681
    %v9969 = vunpack.c.l.b16 %v8682
    %v9970 = vunpack.c.h.b16 %v8682
    %v9971 = vunpack.c.l.b16 %v8683
    %v9972 = vunpack.c.h.b16 %v8683
    %v9973 = vunpack.c.l.b16 %v8684
    %v9974 = vunpack.c.h.b16 %v8684
    %v9975 = vunpack.c.l.b16 %v8685
    %v9976 = vunpack.c.h.b16 %v8685
    %v9977 = vunpack.c.l.b16 %v8686
    %v9978 = vunpack.c.h.b16 %v8686
    %v9979 = vunpack.c.l.b16 %v8687
    %v9980 = vunpack.c.h.b16 %v8687
    %v9981 = vunpack.c.l.b16 %v8688
    %v9982 = vunpack.c.h.b16 %v8688
    %v9983 = vunpack.c.l.b16 %v8689
    %v9984 = vunpack.c.h.b16 %v8689
    %v9985 = vunpack.c.l.b16 %v8690
    %v9986 = vunpack.c.h.b16 %v8690
    %v9987 = vunpack.c.l.b16 %v8691
    %v9988 = vunpack.c.h.b16 %v8691
    %v9989 = vunpack.c.l.b16 %v8692
    %v9990 = vunpack.c.h.b16 %v8692
    %v9991 = vunpack.c.l.b16 %v8693
    %v9992 = vunpack.c.h.b16 %v8693
    %v9993 = vunpack.c.l.b16 %v8694
    %v9994 = vunpack.c.h.b16 %v8694
    %v9995 = vunpack.c.l.b16 %v8695
    %v9996 = vunpack.c.h.b16 %v8695
    %v9997 = vunpack.c.l.b16 %v8696
    %v9998 = vunpack.c.h.b16 %v8696
    %v9999 = vunpack.c.l.b16 %v8697
    %v10000 = vunpack.c.h.b16 %v8697
    %v10001 = vunpack.c.l.b16 %v8698
    %v10002 = vunpack.c.h.b16 %v8698
    %v10003 = vunpack.c.l.b16 %v8699
    %v10004 = vunpack.c.h.b16 %v8699
    %v10005 = vunpack.c.l.b16 %v8700
    %v10006 = vunpack.c.h.b16 %v8700
    %v10007 = vunpack.c.l.b16 %v8701
    %v10008 = vunpack.c.h.b16 %v8701
    %v10009 = vunpack.c.l.b16 %v8702
    %v10010 = vunpack.c.h.b16 %v8702
    %v10011 = vunpack.c.l.b16 %v8703
    %v10012 = vunpack.c.h.b16 %v8703
    %v10013 = vunpack.c.l.b16 %v8704
    %v10014 = vunpack.c.h.b16 %v8704
    %v10015 = vunpack.c.l.b16 %v8705
    %v10016 = vunpack.c.h.b16 %v8705
    %v10017 = vunpack.c.l.b16 %v8706
    %v10018 = vunpack.c.h.b16 %v8706
    %v10019 = vunpack.c.l.b16 %v8707
    %v10020 = vunpack.c.h.b16 %v8707
    %v10021 = vunpack.c.l.b16 %v8708
    %v10022 = vunpack.c.h.b16 %v8708
    %v10023 = vunpack.c.l.b16 %v8709
    %v10024 = vunpack.c.h.b16 %v8709
    %v10025 = vunpack.c.l.b16 %v8710
    %v10026 = vunpack.c.h.b16 %v8710
    %v10027 = vunpack.c.l.b16 %v8711
    %v10028 = vunpack.c.h.b16 %v8711
    %v10029 = vunpack.c.l.b16 %v8712
    %v10030 = vunpack.c.h.b16 %v8712
    %v10031 = vunpack.c.l.b16 %v8713
    %v10032 = vunpack.c.h.b16 %v8713
    %v10033 = vunpack.c.l.b16 %v8714
    %v10034 = vunpack.c.h.b16 %v8714
    %v10035 = vunpack.c.l.b16 %v8715
    %v10036 = vunpack.c.h.b16 %v8715
    %v10037 = vunpack.c.l.b16 %v8716
    %v10038 = vunpack.c.h.b16 %v8716
    %v10039 = vunpack.c.l.b16 %v8717
    %v10040 = vunpack.c.h.b16 %v8717
    %v10041 = vunpack.c.l.b16 %v8718
    %v10042 = vunpack.c.h.b16 %v8718
    %v10043 = vunpack.c.l.b16 %v8719
    %v10044 = vunpack.c.h.b16 %v8719
    %v10045 = vunpack.c.l.b16 %v8720
    %v10046 = vunpack.c.h.b16 %v8720
    %v10047 = vunpack.c.l.b16 %v8721
    %v10048 = vunpack.c.h.b16 %v8721
    %v10049 = vunpack.c.l.b16 %v8722
    %v10050 = vunpack.c.h.b16 %v8722
    %v10051 = vunpack.c.l.b16 %v8723
    %v10052 = vunpack.c.h.b16 %v8723
    %v10053 = vunpack.c.l.b16 %v8724
    %v10054 = vunpack.c.h.b16 %v8724
    %v10055 = vunpack.c.l.b16 %v8725
    %v10056 = vunpack.c.h.b16 %v8725
    %v10057 = vunpack.c.l.b16 %v8726
    %v10058 = vunpack.c.h.b16 %v8726
    %v10059 = vunpack.c.l.b16 %v8727
    %v10060 = vunpack.c.h.b16 %v8727
    %v10061 = vunpack.c.l.b16 %v8728
    %v10062 = vunpack.c.h.b16 %v8728
    %v10063 = vunpack.c.l.b16 %v8729
    %v10064 = vunpack.c.h.b16 %v8729
    %v10065 = vunpack.c.l.b16 %v8730
    %v10066 = vunpack.c.h.b16 %v8730
    %v10067 = vunpack.c.l.b16 %v8731
    %v10068 = vunpack.c.h.b16 %v8731
    %v10069 = vunpack.c.l.b16 %v8732
    %v10070 = vunpack.c.h.b16 %v8732
    %v10071 = vunpack.c.l.b16 %v8733
    %v10072 = vunpack.c.h.b16 %v8733
    %v10073 = vunpack.c.l.b16 %v8734
    %v10074 = vunpack.c.h.b16 %v8734
    %v10075 = vunpack.c.l.b16 %v8735
    %v10076 = vunpack.c.h.b16 %v8735
    %v10077 = vunpack.c.l.b16 %v8736
    %v10078 = vunpack.c.h.b16 %v8736
    %v10079 = vunpack.c.l.b16 %v8737
    %v10080 = vunpack.c.h.b16 %v8737
    %v10081 = vunpack.c.l.b16 %v8738
    %v10082 = vunpack.c.h.b16 %v8738
    %v10083 = vunpack.c.l.b16 %v8739
    %v10084 = vunpack.c.h.b16 %v8739
    %v10085 = vunpack.c.l.b16 %v8740
    %v10086 = vunpack.c.h.b16 %v8740
    %v10087 = vunpack.c.l.b16 %v8741
    %v10088 = vunpack.c.h.b16 %v8741
    %v10089 = vunpack.c.l.b16 %v8742
    %v10090 = vunpack.c.h.b16 %v8742
    %v10091 = vunpack.c.l.b16 %v8743
    %v10092 = vunpack.c.h.b16 %v8743
    %v10093 = vunpack.c.l.b16 %v8744
    %v10094 = vunpack.c.h.b16 %v8744
    %v10095 = vunpack.c.l.b16 %v8745
    %v10096 = vunpack.c.h.b16 %v8745
    %v10097 = vunpack.c.l.b16 %v8746
    %v10098 = vunpack.c.h.b16 %v8746
    %v10099 = vunpack.c.l.b16 %v8747
    %v10100 = vunpack.c.h.b16 %v8747
    %v10101 = vunpack.c.l.b16 %v8748
    %v10102 = vunpack.c.h.b16 %v8748
    %v10103 = vunpack.c.l.b16 %v8749
    %v10104 = vunpack.c.h.b16 %v8749
    %v10105 = vunpack.c.l.b16 %v8750
    %v10106 = vunpack.c.h.b16 %v8750
    %v10107 = vunpack.c.l.b16 %v8751
    %v10108 = vunpack.c.h.b16 %v8751
    %v10109 = vunpack.c.l.b16 %v8752
    %v10110 = vunpack.c.h.b16 %v8752
    %v10111 = vunpack.c.l.b16 %v8753
    %v10112 = vunpack.c.h.b16 %v8753
    %v10113 = vunpack.c.l.b16 %v8754
    %v10114 = vunpack.c.h.b16 %v8754
    %v10115 = vunpack.c.l.b16 %v8755
    %v10116 = vunpack.c.h.b16 %v8755
    %v10117 = vunpack.c.l.b16 %v8756
    %v10118 = vunpack.c.h.b16 %v8756
    %v10119 = vunpack.c.l.b16 %v8757
    %v10120 = vunpack.c.h.b16 %v8757
    %v10121 = vunpack.c.l.b16 %v8758
    %v10122 = vunpack.c.h.b16 %v8758
    %v10123 = vunpack.c.l.b16 %v8759
    %v10124 = vunpack.c.h.b16 %v8759
    %v10125 = vunpack.c.l.b16 %v8760
    %v10126 = vunpack.c.h.b16 %v8760
    %v10127 = vunpack.c.l.b16 %v8761
    %v10128 = vunpack.c.h.b16 %v8761
    %v10129 = vunpack.c.l.b16 %v8762
    %v10130 = vunpack.c.h.b16 %v8762
    %v10131 = vunpack.c.l.b16 %v8763
    %v10132 = vunpack.c.h.b16 %v8763
    %v10133 = vunpack.c.l.b16 %v8764
    %v10134 = vunpack.c.h.b16 %v8764
    %v10135 = vunpack.c.l.b16 %v8765
    %v10136 = vunpack.c.h.b16 %v8765
    %v10137 = vunpack.c.l.b16 %v8766
    %v10138 = vunpack.c.h.b16 %v8766
    %v10139 = vunpack.c.l.b16 %v8767
    %v10140 = vunpack.c.h.b16 %v8767
    %v10141 = vunpack.c.l.b16 %v8768
    %v10142 = vunpack.c.h.b16 %v8768
    %v10143 = vunpack.c.l.b16 %v8769
    %v10144 = vunpack.c.h.b16 %v8769
    %v10145 = vunpack.c.l.b16 %v8770
    %v10146 = vunpack.c.h.b16 %v8770
    %v10147 = vunpack.c.l.b16 %v8771
    %v10148 = vunpack.c.h.b16 %v8771
    %v10149 = vunpack.c.l.b16 %v8772
    %v10150 = vunpack.c.h.b16 %v8772
    %v10151 = vunpack.c.l.b16 %v8773
    %v10152 = vunpack.c.h.b16 %v8773
    %v10153 = vunpack.c.l.b16 %v8774
    %v10154 = vunpack.c.h.b16 %v8774
    %v10155 = vunpack.c.l.b16 %v8775
    %v10156 = vunpack.c.h.b16 %v8775
    %v10157 = vunpack.c.l.b16 %v8776
    %v10158 = vunpack.c.h.b16 %v8776
    %v10159 = vunpack.c.l.b16 %v8777
    %v10160 = vunpack.c.h.b16 %v8777
    %v10161 = vunpack.c.l.b16 %v8778
    %v10162 = vunpack.c.h.b16 %v8778
    %v10163 = vunpack.c.l.b16 %v8779
    %v10164 = vunpack.c.h.b16 %v8779
    %v10165 = vunpack.c.l.b16 %v8780
    %v10166 = vunpack.c.h.b16 %v8780
    %v10167 = vunpack.c.l.b16 %v8781
    %v10168 = vunpack.c.h.b16 %v8781
    %v10169 = vunpack.c.l.b16 %v8782
    %v10170 = vunpack.c.h.b16 %v8782
    %v10171 = vunpack.c.l.b16 %v8783
    %v10172 = vunpack.c.h.b16 %v8783
    %v10173 = vunpack.c.l.b16 %v8784
    %v10174 = vunpack.c.h.b16 %v8784
    %v10175 = vunpack.c.l.b16 %v8785
    %v10176 = vunpack.c.h.b16 %v8785
    %v10177 = vunpack.c.l.b16 %v8786
    %v10178 = vunpack.c.h.b16 %v8786
    %v10179 = vunpack.c.l.b16 %v8787
    %v10180 = vunpack.c.h.b16 %v8787
    %v10181 = vunpack.c.l.b16 %v8788
    %v10182 = vunpack.c.h.b16 %v8788
    %v10183 = vunpack.c.l.b16 %v8789
    %v10184 = vunpack.c.h.b16 %v8789
    %v10185 = vunpack.c.l.b16 %v8790
    %v10186 = vunpack.c.h.b16 %v8790
    %v10187 = vunpack.c.l.b16 %v8791
    %v10188 = vunpack.c.h.b16 %v8791
    %v10189 = vunpack.c.l.b16 %v8792
    %v10190 = vunpack.c.h.b16 %v8792
    %v10191 = vunpack.c.l.b16 %v8793
    %v10192 = vunpack.c.h.b16 %v8793
    %v10193 = vunpack.c.l.b16 %v8794
    %v10194 = vunpack.c.h.b16 %v8794
    %v10195 = vunpack.c.l.b16 %v8795
    %v10196 = vunpack.c.h.b16 %v8795
    %v10197 = vunpack.c.l.b16 %v8796
    %v10198 = vunpack.c.h.b16 %v8796
    %v10199 = vunpack.c.l.b16 %v8797
    %v10200 = vunpack.c.h.b16 %v8797
    %v10201 = vunpack.c.l.b16 %v8798
    %v10202 = vunpack.c.h.b16 %v8798
    %v10203 = vunpack.c.l.b16 %v8799
    %v10204 = vunpack.c.h.b16 %v8799
    %v10205 = vunpack.c.l.b16 %v8800
    %v10206 = vunpack.c.h.b16 %v8800
    %v10207 = vunpack.c.l.b16 %v8801
    %v10208 = vunpack.c.h.b16 %v8801
    %v10209 = vunpack.c.l.b16 %v8802
    %v10210 = vunpack.c.h.b16 %v8802
    %v10211 = vunpack.c.l.b16 %v8803
    %v10212 = vunpack.c.h.b16 %v8803
    %v10213 = vunpack.c.l.b16 %v8804
    %v10214 = vunpack.c.h.b16 %v8804
    %v10215 = vunpack.c.l.b16 %v8805
    %v10216 = vunpack.c.h.b16 %v8805
    %v10217 = vunpack.c.l.b16 %v8806
    %v10218 = vunpack.c.h.b16 %v8806
    %v10219 = vunpack.c.l.b16 %v8807
    %v10220 = vunpack.c.h.b16 %v8807
    %v10221 = vunpack.c.l.b16 %v8808
    %v10222 = vunpack.c.h.b16 %v8808
    %v10223 = vunpack.c.l.b16 %v8809
    %v10224 = vunpack.c.h.b16 %v8809
    %v10225 = vunpack.c.l.b16 %v8810
    %v10226 = vunpack.c.h.b16 %v8810
    %v10227 = vunpack.c.l.b16 %v8811
    %v10228 = vunpack.c.h.b16 %v8811
    %v10229 = vunpack.c.l.b16 %v8812
    %v10230 = vunpack.c.h.b16 %v8812
    %v10231 = vunpack.c.l.b16 %v8813
    %v10232 = vunpack.c.h.b16 %v8813
    %v10233 = vunpack.c.l.b16 %v8814
    %v10234 = vunpack.c.h.b16 %v8814
    %v10235 = vunpack.c.l.b16 %v8815
    %v10236 = vunpack.c.h.b16 %v8815
    %v10237 = vunpack.c.l.b16 %v8816
    %v10238 = vunpack.c.h.b16 %v8816
    %v10239 = vunpack.c.l.b16 %v8817
    %v10240 = vunpack.c.h.b16 %v8817
    %v10241 = vunpack.c.l.b16 %v8818
    %v10242 = vunpack.c.h.b16 %v8818
    %v10243 = vunpack.c.l.b16 %v8819
    %v10244 = vunpack.c.h.b16 %v8819
    %v10245 = vunpack.c.l.b16 %v8820
    %v10246 = vunpack.c.h.b16 %v8820
    %v10247 = vunpack.c.l.b16 %v8821
    %v10248 = vunpack.c.h.b16 %v8821
    %v10249 = vunpack.c.l.b16 %v8822
    %v10250 = vunpack.c.h.b16 %v8822
    %v10251 = vunpack.c.l.b16 %v8823
    %v10252 = vunpack.c.h.b16 %v8823
    %v10253 = vunpack.c.l.b16 %v8824
    %v10254 = vunpack.c.h.b16 %v8824
    %v10255 = vunpack.c.l.b16 %v8825
    %v10256 = vunpack.c.h.b16 %v8825
    %v10257 = vunpack.c.l.b16 %v8826
    %v10258 = vunpack.c.h.b16 %v8826
    %v10259 = vunpack.c.l.b16 %v8827
    %v10260 = vunpack.c.h.b16 %v8827
    %v10261 = vunpack.c.l.b16 %v8828
    %v10262 = vunpack.c.h.b16 %v8828
    %v10263 = vunpack.c.l.b16 %v8829
    %v10264 = vunpack.c.h.b16 %v8829
    %v10265 = vunpack.c.l.b16 %v8830
    %v10266 = vunpack.c.h.b16 %v8830
    %v10267 = vunpack.c.l.b16 %v8831
    %v10268 = vunpack.c.h.b16 %v8831
    %v10269 = vunpack.c.l.b16 %v8832
    %v10270 = vunpack.c.h.b16 %v8832
    %v10271 = vunpack.c.l.b16 %v8833
    %v10272 = vunpack.c.h.b16 %v8833
    %v10273 = vunpack.c.l.b16 %v8834
    %v10274 = vunpack.c.h.b16 %v8834
    %v10275 = vunpack.c.l.b16 %v8835
    %v10276 = vunpack.c.h.b16 %v8835
    %v10277 = vunpack.c.l.b16 %v8836
    %v10278 = vunpack.c.h.b16 %v8836
    %v10279 = vunpack.c.l.b16 %v8837
    %v10280 = vunpack.c.h.b16 %v8837
    %v10281 = vunpack.c.l.b16 %v8838
    %v10282 = vunpack.c.h.b16 %v8838
    %v10283 = vunpack.c.l.b16 %v8839
    %v10284 = vunpack.c.h.b16 %v8839
    %v10285 = vunpack.c.l.b16 %v8840
    %v10286 = vunpack.c.h.b16 %v8840
    %v10287 = vunpack.c.l.b16 %v8841
    %v10288 = vunpack.c.h.b16 %v8841
    %v10289 = vunpack.c.l.b16 %v8842
    %v10290 = vunpack.c.h.b16 %v8842
    %v10291 = vunpack.c.l.b16 %v8843
    %v10292 = vunpack.c.h.b16 %v8843
    %v10293 = vunpack.c.l.b16 %v8844
    %v10294 = vunpack.c.h.b16 %v8844
    %v10295 = vunpack.c.l.b16 %v8845
    %v10296 = vunpack.c.h.b16 %v8845
    %v10297 = vunpack.c.l.b16 %v8846
    %v10298 = vunpack.c.h.b16 %v8846
    %v10299 = vunpack.c.l.b16 %v8847
    %v10300 = vunpack.c.h.b16 %v8847
    %v10301 = vunpack.c.l.b16 %v8848
    %v10302 = vunpack.c.h.b16 %v8848
    %v10303 = vunpack.c.l.b16 %v8849
    %v10304 = vunpack.c.h.b16 %v8849
    %v10305 = vunpack.c.l.b16 %v8850
    %v10306 = vunpack.c.h.b16 %v8850
    %v10307 = vunpack.c.l.b16 %v8851
    %v10308 = vunpack.c.h.b16 %v8851
    %v10309 = vunpack.c.l.b16 %v8852
    %v10310 = vunpack.c.h.b16 %v8852
    %v10311 = vunpack.c.l.b16 %v8853
    %v10312 = vunpack.c.h.b16 %v8853
    %v10313 = vunpack.c.l.b16 %v8854
    %v10314 = vunpack.c.h.b16 %v8854
    %v10315 = vunpack.c.l.b16 %v8855
    %v10316 = vunpack.c.h.b16 %v8855
    %v10317 = vunpack.c.l.b16 %v8856
    %v10318 = vunpack.c.h.b16 %v8856
    %v10319 = vunpack.c.l.b16 %v8857
    %v10320 = vunpack.c.h.b16 %v8857
    %v10321 = vunpack.c.l.b16 %v8858
    %v10322 = vunpack.c.h.b16 %v8858
    %v10323 = vunpack.c.l.b16 %v8859
    %v10324 = vunpack.c.h.b16 %v8859
    %v10325 = vunpack.c.l.b16 %v8860
    %v10326 = vunpack.c.h.b16 %v8860
    %v10327 = vunpack.c.l.b16 %v8861
    %v10328 = vunpack.c.h.b16 %v8861
    %v10329 = vunpack.c.l.b16 %v8862
    %v10330 = vunpack.c.h.b16 %v8862
    %v10331 = vunpack.c.l.b16 %v8863
    %v10332 = vunpack.c.h.b16 %v8863
    %v10333 = vunpack.c.l.b16 %v8864
    %v10334 = vunpack.c.h.b16 %v8864
    %v10335 = vunpack.c.l.b16 %v8865
    %v10336 = vunpack.c.h.b16 %v8865
    %v10337 = vunpack.c.l.b16 %v8866
    %v10338 = vunpack.c.h.b16 %v8866
    %v10339 = vunpack.c.l.b16 %v8867
    %v10340 = vunpack.c.h.b16 %v8867
    %v10341 = vunpack.c.l.b16 %v8868
    %v10342 = vunpack.c.h.b16 %v8868
    %v10343 = vunpack.c.l.b16 %v8869
    %v10344 = vunpack.c.h.b16 %v8869
    %v10345 = vunpack.c.l.b16 %v8870
    %v10346 = vunpack.c.h.b16 %v8870
    %v10347 = vunpack.c.l.b16 %v8871
    %v10348 = vunpack.c.h.b16 %v8871
    %v10349 = vunpack.c.l.b16 %v8872
    %v10350 = vunpack.c.h.b16 %v8872
    %v10351 = vunpack.c.l.b16 %v8873
    %v10352 = vunpack.c.h.b16 %v8873
    %v10353 = vunpack.c.l.b16 %v8874
    %v10354 = vunpack.c.h.b16 %v8874
    %v10355 = vunpack.c.l.b16 %v8875
    %v10356 = vunpack.c.h.b16 %v8875
    %v10357 = vunpack.c.l.b16 %v8876
    %v10358 = vunpack.c.h.b16 %v8876
    %v10359 = vunpack.c.l.b16 %v8877
    %v10360 = vunpack.c.h.b16 %v8877
    %v10361 = vunpack.c.l.b16 %v8878
    %v10362 = vunpack.c.h.b16 %v8878
    %v10363 = vunpack.c.l.b16 %v8879
    %v10364 = vunpack.c.h.b16 %v8879
    %v10365 = vunpack.c.l.b16 %v8880
    %v10366 = vunpack.c.h.b16 %v8880
    %v10367 = vunpack.c.l.b16 %v8881
    %v10368 = vunpack.c.h.b16 %v8881
    %v10369 = vunpack.c.l.b16 %v8882
    %v10370 = vunpack.c.h.b16 %v8882
    %v10371 = vunpack.c.l.b16 %v8883
    %v10372 = vunpack.c.h.b16 %v8883
    %v10373 = vunpack.c.l.b16 %v8884
    %v10374 = vunpack.c.h.b16 %v8884
    %v10375 = vunpack.c.l.b16 %v8885
    %v10376 = vunpack.c.h.b16 %v8885
    %v10377 = vunpack.c.l.b16 %v8886
    %v10378 = vunpack.c.h.b16 %v8886
    %v10379 = vunpack.c.l.b16 %v8887
    %v10380 = vunpack.c.h.b16 %v8887
    %v10381 = vunpack.c.l.b16 %v8888
    %v10382 = vunpack.c.h.b16 %v8888
    %v10383 = vunpack.c.l.b16 %v8889
    %v10384 = vunpack.c.h.b16 %v8889
    %v10385 = vunpack.c.l.b16 %v8890
    %v10386 = vunpack.c.h.b16 %v8890
    %v10387 = vunpack.c.l.b16 %v8891
    %v10388 = vunpack.c.h.b16 %v8891
    %v10389 = vunpack.c.l.b16 %v8892
    %v10390 = vunpack.c.h.b16 %v8892
    %v10391 = vunpack.c.l.b16 %v8893
    %v10392 = vunpack.c.h.b16 %v8893
    %v10393 = vunpack.c.l.b16 %v8894
    %v10394 = vunpack.c.h.b16 %v8894
    %v10395 = vunpack.c.l.b16 %v8895
    %v10396 = vunpack.c.h.b16 %v8895
    %v10397 = vunpack.c.l.b16 %v8896
    %v10398 = vunpack.c.h.b16 %v8896
    %v10399 = vunpack.c.l.b16 %v8897
    %v10400 = vunpack.c.h.b16 %v8897
    %v10401 = vunpack.c.l.b16 %v8898
    %v10402 = vunpack.c.h.b16 %v8898
    %v10403 = vunpack.c.l.b16 %v8899
    %v10404 = vunpack.c.h.b16 %v8899
    %v10405 = vunpack.c.l.b16 %v8900
    %v10406 = vunpack.c.h.b16 %v8900
    %v10407 = vunpack.c.l.b16 %v8901
    %v10408 = vunpack.c.h.b16 %v8901
    %v10409 = vunpack.c.l.b16 %v8902
    %v10410 = vunpack.c.h.b16 %v8902
    %v10411 = vunpack.c.l.b16 %v8903
    %v10412 = vunpack.c.h.b16 %v8903
    %v10413 = vunpack.c.l.b16 %v8904
    %v10414 = vunpack.c.h.b16 %v8904
    %v10415 = vunpack.c.l.b16 %v8905
    %v10416 = vunpack.c.h.b16 %v8905
    %v10417 = vunpack.c.l.b16 %v8906
    %v10418 = vunpack.c.h.b16 %v8906
    %v10419 = vunpack.c.l.b16 %v8907
    %v10420 = vunpack.c.h.b16 %v8907
    %v10421 = vunpack.c.l.b16 %v8908
    %v10422 = vunpack.c.h.b16 %v8908
    %v10423 = vunpack.c.l.b16 %v8909
    %v10424 = vunpack.c.h.b16 %v8909
    %v10425 = vunpack.c.l.b16 %v8910
    %v10426 = vunpack.c.h.b16 %v8910
    %v10427 = vunpack.c.l.b16 %v8911
    %v10428 = vunpack.c.h.b16 %v8911
    %v10429 = vunpack.c.l.b16 %v8912
    %v10430 = vunpack.c.h.b16 %v8912
    %v10431 = vunpack.c.l.b16 %v8913
    %v10432 = vunpack.c.h.b16 %v8913
    %v10433 = vunpack.c.l.b16 %v8914
    %v10434 = vunpack.c.h.b16 %v8914
    %v10435 = vunpack.c.l.b16 %v8915
    %v10436 = vunpack.c.h.b16 %v8915
    %v10437 = vunpack.c.l.b16 %v8916
    %v10438 = vunpack.c.h.b16 %v8916
    %v10439 = vunpack.c.l.b16 %v8917
    %v10440 = vunpack.c.h.b16 %v8917
    %v10441 = vunpack.c.l.b16 %v8918
    %v10442 = vunpack.c.h.b16 %v8918
    %v10443 = vunpack.c.l.b16 %v8919
    %v10444 = vunpack.c.h.b16 %v8919
    %v10445 = vunpack.c.l.b16 %v8920
    %v10446 = vunpack.c.h.b16 %v8920
    %v10447 = vunpack.c.l.b16 %v8921
    %v10448 = vunpack.c.h.b16 %v8921
    %v10449 = vunpack.c.l.b16 %v8922
    %v10450 = vunpack.c.h.b16 %v8922
    %v10451 = vunpack.c.l.b16 %v8923
    %v10452 = vunpack.c.h.b16 %v8923
    %v10453 = vunpack.c.l.b16 %v8924
    %v10454 = vunpack.c.h.b16 %v8924
    %v10455 = vunpack.c.l.b16 %v8925
    %v10456 = vunpack.c.h.b16 %v8925
    %v10457 = vunpack.c.l.b16 %v8926
    %v10458 = vunpack.c.h.b16 %v8926
    %v10459 = vunpack.c.l.b16 %v8927
    %v10460 = vunpack.c.h.b16 %v8927
    %v10461 = vunpack.c.l.b16 %v8928
    %v10462 = vunpack.c.h.b16 %v8928
    %v10463 = vunpack.c.l.b16 %v8929
    %v10464 = vunpack.c.h.b16 %v8929
    %v10465 = vunpack.c.l.b16 %v8930
    %v10466 = vunpack.c.h.b16 %v8930
    %v10467 = vunpack.c.l.b16 %v8931
    %v10468 = vunpack.c.h.b16 %v8931
    %v10469 = vunpack.c.l.b16 %v8932
    %v10470 = vunpack.c.h.b16 %v8932
    %v10471 = vunpack.c.l.b16 %v8933
    %v10472 = vunpack.c.h.b16 %v8933
    %v10473 = vunpack.c.l.b16 %v8934
    %v10474 = vunpack.c.h.b16 %v8934
    %v10475 = vunpack.c.l.b16 %v8935
    %v10476 = vunpack.c.h.b16 %v8935
    %v10477 = vunpack.c.l.b16 %v8936
    %v10478 = vunpack.c.h.b16 %v8936
    %v10479 = vunpack.c.l.b16 %v8937
    %v10480 = vunpack.c.h.b16 %v8937
    %v10481 = vunpack.c.l.b16 %v8938
    %v10482 = vunpack.c.h.b16 %v8938
    %v10483 = vunpack.c.l.b16 %v8939
    %v10484 = vunpack.c.h.b16 %v8939
    %v10485 = vunpack.c.l.b16 %v8940
    %v10486 = vunpack.c.h.b16 %v8940
    %v10487 = vunpack.c.l.b16 %v8941
    %v10488 = vunpack.c.h.b16 %v8941
    %v10489 = vunpack.c.l.b16 %v8942
    %v10490 = vunpack.c.h.b16 %v8942
    %v10491 = vunpack.c.l.b16 %v8943
    %v10492 = vunpack.c.h.b16 %v8943
    %v10493 = vunpack.c.l.b16 %v8944
    %v10494 = vunpack.c.h.b16 %v8944
    %v10495 = vunpack.c.l.b16 %v8945
    %v10496 = vunpack.c.h.b16 %v8945
    %v10497 = vunpack.c.l.b16 %v8946
    %v10498 = vunpack.c.h.b16 %v8946
    %v10499 = vunpack.c.l.b16 %v8947
    %v10500 = vunpack.c.h.b16 %v8947
    %v10501 = vunpack.c.l.b16 %v8948
    %v10502 = vunpack.c.h.b16 %v8948
    %v10503 = vunpack.c.l.b16 %v8949
    %v10504 = vunpack.c.h.b16 %v8949
    %v10505 = vunpack.c.l.b16 %v8950
    %v10506 = vunpack.c.h.b16 %v8950
    %v10507 = vunpack.c.l.b16 %v8951
    %v10508 = vunpack.c.h.b16 %v8951
    %v10509 = vunpack.c.l.b16 %v8952
    %v10510 = vunpack.c.h.b16 %v8952
    %v10511 = vunpack.c.l.b16 %v8953
    %v10512 = vunpack.c.h.b16 %v8953
    %v10513 = vunpack.c.l.b16 %v8954
    %v10514 = vunpack.c.h.b16 %v8954
    %v10515 = vunpack.c.l.b16 %v8955
    %v10516 = vunpack.c.h.b16 %v8955
    %v10517 = vunpack.c.l.b16 %v8956
    %v10518 = vunpack.c.h.b16 %v8956
    %v10519 = vunpack.c.l.b16 %v8957
    %v10520 = vunpack.c.h.b16 %v8957
    %v10521 = vunpack.c.l.b16 %v8958
    %v10522 = vunpack.c.h.b16 %v8958
    %v10523 = vunpack.c.l.b16 %v8959
    %v10524 = vunpack.c.h.b16 %v8959
    %v10525 = vunpack.c.l.b16 %v8960
    %v10526 = vunpack.c.h.b16 %v8960
    %v10527 = vunpack.c.l.b16 %v8961
    %v10528 = vunpack.c.h.b16 %v8961
    %v10529 = vunpack.c.l.b16 %v8962
    %v10530 = vunpack.c.h.b16 %v8962
    %v10531 = vunpack.c.l.b16 %v8963
    %v10532 = vunpack.c.h.b16 %v8963
    %v10533 = vunpack.c.l.b16 %v8964
    %v10534 = vunpack.c.h.b16 %v8964
    %v10535 = vunpack.c.l.b16 %v8965
    %v10536 = vunpack.c.h.b16 %v8965
    %v10537 = vunpack.c.l.b16 %v8966
    %v10538 = vunpack.c.h.b16 %v8966
    %v10539 = vunpack.c.l.b16 %v8967
    %v10540 = vunpack.c.h.b16 %v8967
    %v10541 = vunpack.c.l.b16 %v8968
    %v10542 = vunpack.c.h.b16 %v8968
    %v10543 = vunpack.c.l.b16 %v8969
    %v10544 = vunpack.c.h.b16 %v8969
    %v10545 = vunpack.c.l.b16 %v8970
    %v10546 = vunpack.c.h.b16 %v8970
    %v10547 = vunpack.c.l.b16 %v8971
    %v10548 = vunpack.c.h.b16 %v8971
    %v10549 = vunpack.c.l.b16 %v8972
    %v10550 = vunpack.c.h.b16 %v8972
    %v10551 = vpack.c.b16 %v9535, %v9527
    %v10552 = vpack.c.b16 %v9536, %v9528
    %v10553 = vpack.c.b16 %v9537, %v9529
    %v10554 = vpack.c.b16 %v9538, %v9530
    %v10555 = vpack.c.b16 %v9539, %v9531
    %v10556 = vpack.c.b16 %v9540, %v9532
    %v10557 = vpack.c.b16 %v9541, %v9533
    %v10558 = vpack.c.b16 %v9542, %v9534
    %v10559 = vpack.c.b16 %v9551, %v9543
    %v10560 = vpack.c.b16 %v9552, %v9544
    %v10561 = vpack.c.b16 %v9553, %v9545
    %v10562 = vpack.c.b16 %v9554, %v9546
    %v10563 = vpack.c.b16 %v9555, %v9547
    %v10564 = vpack.c.b16 %v9556, %v9548
    %v10565 = vpack.c.b16 %v9557, %v9549
    %v10566 = vpack.c.b16 %v9558, %v9550
    %v10567 = vpack.c.b16 %v9567, %v9559
    %v10568 = vpack.c.b16 %v9568, %v9560
    %v10569 = vpack.c.b16 %v9569, %v9561
    %v10570 = vpack.c.b16 %v9570, %v9562
    %v10571 = vpack.c.b16 %v9571, %v9563
    %v10572 = vpack.c.b16 %v9572, %v9564
    %v10573 = vpack.c.b16 %v9573, %v9565
    %v10574 = vpack.c.b16 %v9574, %v9566
    %v10575 = vpack.c.b16 %v9583, %v9575
    %v10576 = vpack.c.b16 %v9584, %v9576
    %v10577 = vpack.c.b16 %v9585, %v9577
    %v10578 = vpack.c.b16 %v9586, %v9578
    %v10579 = vpack.c.b16 %v9587, %v9579
    %v10580 = vpack.c.b16 %v9588, %v9580
    %v10581 = vpack.c.b16 %v9589, %v9581
    %v10582 = vpack.c.b16 %v9590, %v9582
    %v10583 = vpack.c.b16 %v9599, %v9591
    %v10584 = vpack.c.b16 %v9600, %v9592
    %v10585 = vpack.c.b16 %v9601, %v9593
    %v10586 = vpack.c.b16 %v9602, %v9594
    %v10587 = vpack.c.b16 %v9603, %v9595
    %v10588 = vpack.c.b16 %v9604, %v9596
    %v10589 = vpack.c.b16 %v9605, %v9597
    %v10590 = vpack.c.b16 %v9606, %v9598
    %v10591 = vpack.c.b16 %v9615, %v9607
    %v10592 = vpack.c.b16 %v9616, %v9608
    %v10593 = vpack.c.b16 %v9617, %v9609
    %v10594 = vpack.c.b16 %v9618, %v9610
    %v10595 = vpack.c.b16 %v9619, %v9611
    %v10596 = vpack.c.b16 %v9620, %v9612
    %v10597 = vpack.c.b16 %v9621, %v9613
    %v10598 = vpack.c.b16 %v9622, %v9614
    %v10599 = vpack.c.b16 %v9631, %v9623
    %v10600 = vpack.c.b16 %v9632, %v9624
    %v10601 = vpack.c.b16 %v9633, %v9625
    %v10602 = vpack.c.b16 %v9634, %v9626
    %v10603 = vpack.c.b16 %v9635, %v9627
    %v10604 = vpack.c.b16 %v9636, %v9628
    %v10605 = vpack.c.b16 %v9637, %v9629
    %v10606 = vpack.c.b16 %v9638, %v9630
    %v10607 = vpack.c.b16 %v9647, %v9639
    %v10608 = vpack.c.b16 %v9648, %v9640
    %v10609 = vpack.c.b16 %v9649, %v9641
    %v10610 = vpack.c.b16 %v9650, %v9642
    %v10611 = vpack.c.b16 %v9651, %v9643
    %v10612 = vpack.c.b16 %v9652, %v9644
    %v10613 = vpack.c.b16 %v9653, %v9645
    %v10614 = vpack.c.b16 %v9654, %v9646
    %v10615 = vpack.c.b16 %v9663, %v9655
    %v10616 = vpack.c.b16 %v9664, %v9656
    %v10617 = vpack.c.b16 %v9665, %v9657
    %v10618 = vpack.c.b16 %v9666, %v9658
    %v10619 = vpack.c.b16 %v9667, %v9659
    %v10620 = vpack.c.b16 %v9668, %v9660
    %v10621 = vpack.c.b16 %v9669, %v9661
    %v10622 = vpack.c.b16 %v9670, %v9662
    %v10623 = vpack.c.b16 %v9679, %v9671
    %v10624 = vpack.c.b16 %v9680, %v9672
    %v10625 = vpack.c.b16 %v9681, %v9673
    %v10626 = vpack.c.b16 %v9682, %v9674
    %v10627 = vpack.c.b16 %v9683, %v9675
    %v10628 = vpack.c.b16 %v9684, %v9676
    %v10629 = vpack.c.b16 %v9685, %v9677
    %v10630 = vpack.c.b16 %v9686, %v9678
    %v10631 = vpack.c.b16 %v9695, %v9687
    %v10632 = vpack.c.b16 %v9696, %v9688
    %v10633 = vpack.c.b16 %v9697, %v9689
    %v10634 = vpack.c.b16 %v9698, %v9690
    %v10635 = vpack.c.b16 %v9699, %v9691
    %v10636 = vpack.c.b16 %v9700, %v9692
    %v10637 = vpack.c.b16 %v9701, %v9693
    %v10638 = vpack.c.b16 %v9702, %v9694
    %v10639 = vpack.c.b16 %v9711, %v9703
    %v10640 = vpack.c.b16 %v9712, %v9704
    %v10641 = vpack.c.b16 %v9713, %v9705
    %v10642 = vpack.c.b16 %v9714, %v9706
    %v10643 = vpack.c.b16 %v9715, %v9707
    %v10644 = vpack.c.b16 %v9716, %v9708
    %v10645 = vpack.c.b16 %v9717, %v9709
    %v10646 = vpack.c.b16 %v9718, %v9710
    %v10647 = vpack.c.b16 %v9727, %v9719
    %v10648 = vpack.c.b16 %v9728, %v9720
    %v10649 = vpack.c.b16 %v9729, %v9721
    %v10650 = vpack.c.b16 %v9730, %v9722
    %v10651 = vpack.c.b16 %v9731, %v9723
    %v10652 = vpack.c.b16 %v9732, %v9724
    %v10653 = vpack.c.b16 %v9733, %v9725
    %v10654 = vpack.c.b16 %v9734, %v9726
    %v10655 = vpack.c.b16 %v9743, %v9735
    %v10656 = vpack.c.b16 %v9744, %v9736
    %v10657 = vpack.c.b16 %v9745, %v9737
    %v10658 = vpack.c.b16 %v9746, %v9738
    %v10659 = vpack.c.b16 %v9747, %v9739
    %v10660 = vpack.c.b16 %v9748, %v9740
    %v10661 = vpack.c.b16 %v9749, %v9741
    %v10662 = vpack.c.b16 %v9750, %v9742
    %v10663 = vpack.c.b16 %v9759, %v9751
    %v10664 = vpack.c.b16 %v9760, %v9752
    %v10665 = vpack.c.b16 %v9761, %v9753
    %v10666 = vpack.c.b16 %v9762, %v9754
    %v10667 = vpack.c.b16 %v9763, %v9755
    %v10668 = vpack.c.b16 %v9764, %v9756
    %v10669 = vpack.c.b16 %v9765, %v9757
    %v10670 = vpack.c.b16 %v9766, %v9758
    %v10671 = vpack.c.b16 %v9775, %v9767
    %v10672 = vpack.c.b16 %v9776, %v9768
    %v10673 = vpack.c.b16 %v9777, %v9769
    %v10674 = vpack.c.b16 %v9778, %v9770
    %v10675 = vpack.c.b16 %v9779, %v9771
    %v10676 = vpack.c.b16 %v9780, %v9772
    %v10677 = vpack.c.b16 %v9781, %v9773
    %v10678 = vpack.c.b16 %v9782, %v9774
    %v10679 = vpack.c.b16 %v9791, %v9783
    %v10680 = vpack.c.b16 %v9792, %v9784
    %v10681 = vpack.c.b16 %v9793, %v9785
    %v10682 = vpack.c.b16 %v9794, %v9786
    %v10683 = vpack.c.b16 %v9795, %v9787
    %v10684 = vpack.c.b16 %v9796, %v9788
    %v10685 = vpack.c.b16 %v9797, %v9789
    %v10686 = vpack.c.b16 %v9798, %v9790
    %v10687 = vpack.c.b16 %v9807, %v9799
    %v10688 = vpack.c.b16 %v9808, %v9800
    %v10689 = vpack.c.b16 %v9809, %v9801
    %v10690 = vpack.c.b16 %v9810, %v9802
    %v10691 = vpack.c.b16 %v9811, %v9803
    %v10692 = vpack.c.b16 %v9812, %v9804
    %v10693 = vpack.c.b16 %v9813, %v9805
    %v10694 = vpack.c.b16 %v9814, %v9806
    %v10695 = vpack.c.b16 %v9823, %v9815
    %v10696 = vpack.c.b16 %v9824, %v9816
    %v10697 = vpack.c.b16 %v9825, %v9817
    %v10698 = vpack.c.b16 %v9826, %v9818
    %v10699 = vpack.c.b16 %v9827, %v9819
    %v10700 = vpack.c.b16 %v9828, %v9820
    %v10701 = vpack.c.b16 %v9829, %v9821
    %v10702 = vpack.c.b16 %v9830, %v9822
    %v10703 = vpack.c.b16 %v9839, %v9831
    %v10704 = vpack.c.b16 %v9840, %v9832
    %v10705 = vpack.c.b16 %v9841, %v9833
    %v10706 = vpack.c.b16 %v9842, %v9834
    %v10707 = vpack.c.b16 %v9843, %v9835
    %v10708 = vpack.c.b16 %v9844, %v9836
    %v10709 = vpack.c.b16 %v9845, %v9837
    %v10710 = vpack.c.b16 %v9846, %v9838
    %v10711 = vpack.c.b16 %v9855, %v9847
    %v10712 = vpack.c.b16 %v9856, %v9848
    %v10713 = vpack.c.b16 %v9857, %v9849
    %v10714 = vpack.c.b16 %v9858, %v9850
    %v10715 = vpack.c.b16 %v9859, %v9851
    %v10716 = vpack.c.b16 %v9860, %v9852
    %v10717 = vpack.c.b16 %v9861, %v9853
    %v10718 = vpack.c.b16 %v9862, %v9854
    %v10719 = vpack.c.b16 %v9871, %v9863
    %v10720 = vpack.c.b16 %v9872, %v9864
    %v10721 = vpack.c.b16 %v9873, %v9865
    %v10722 = vpack.c.b16 %v9874, %v9866
    %v10723 = vpack.c.b16 %v9875, %v9867
    %v10724 = vpack.c.b16 %v9876, %v9868
    %v10725 = vpack.c.b16 %v9877, %v9869
    %v10726 = vpack.c.b16 %v9878, %v9870
    %v10727 = vpack.c.b16 %v9887, %v9879
    %v10728 = vpack.c.b16 %v9888, %v9880
    %v10729 = vpack.c.b16 %v9889, %v9881
    %v10730 = vpack.c.b16 %v9890, %v9882
    %v10731 = vpack.c.b16 %v9891, %v9883
    %v10732 = vpack.c.b16 %v9892, %v9884
    %v10733 = vpack.c.b16 %v9893, %v9885
    %v10734 = vpack.c.b16 %v9894, %v9886
    %v10735 = vpack.c.b16 %v9903, %v9895
    %v10736 = vpack.c.b16 %v9904, %v9896
    %v10737 = vpack.c.b16 %v9905, %v9897
    %v10738 = vpack.c.b16 %v9906, %v9898
    %v10739 = vpack.c.b16 %v9907, %v9899
    %v10740 = vpack.c.b16 %v9908, %v9900
    %v10741 = vpack.c.b16 %v9909, %v9901
    %v10742 = vpack.c.b16 %v9910, %v9902
    %v10743 = vpack.c.b16 %v9919, %v9911
    %v10744 = vpack.c.b16 %v9920, %v9912
    %v10745 = vpack.c.b16 %v9921, %v9913
    %v10746 = vpack.c.b16 %v9922, %v9914
    %v10747 = vpack.c.b16 %v9923, %v9915
    %v10748 = vpack.c.b16 %v9924, %v9916
    %v10749 = vpack.c.b16 %v9925, %v9917
    %v10750 = vpack.c.b16 %v9926, %v9918
    %v10751 = vpack.c.b16 %v9935, %v9927
    %v10752 = vpack.c.b16 %v9936, %v9928
    %v10753 = vpack.c.b16 %v9937, %v9929
    %v10754 = vpack.c.b16 %v9938, %v9930
    %v10755 = vpack.c.b16 %v9939, %v9931
    %v10756 = vpack.c.b16 %v9940, %v9932
    %v10757 = vpack.c.b16 %v9941, %v9933
    %v10758 = vpack.c.b16 %v9942, %v9934
    %v10759 = vpack.c.b16 %v9951, %v9943
    %v10760 = vpack.c.b16 %v9952, %v9944
    %v10761 = vpack.c.b16 %v9953, %v9945
    %v10762 = vpack.c.b16 %v9954, %v9946
    %v10763 = vpack.c.b16 %v9955, %v9947
    %v10764 = vpack.c.b16 %v9956, %v9948
    %v10765 = vpack.c.b16 %v9957, %v9949
    %v10766 = vpack.c.b16 %v9958, %v9950
    %v10767 = vpack.c.b16 %v9967, %v9959
    %v10768 = vpack.c.b16 %v9968, %v9960
    %v10769 = vpack.c.b16 %v9969, %v9961
    %v10770 = vpack.c.b16 %v9970, %v9962
    %v10771 = vpack.c.b16 %v9971, %v9963
    %v10772 = vpack.c.b16 %v9972, %v9964
    %v10773 = vpack.c.b16 %v9973, %v9965
    %v10774 = vpack.c.b16 %v9974, %v9966
    %v10775 = vpack.c.b16 %v9983, %v9975
    %v10776 = vpack.c.b16 %v9984, %v9976
    %v10777 = vpack.c.b16 %v9985, %v9977
    %v10778 = vpack.c.b16 %v9986, %v9978
    %v10779 = vpack.c.b16 %v9987, %v9979
    %v10780 = vpack.c.b16 %v9988, %v9980
    %v10781 = vpack.c.b16 %v9989, %v9981
    %v10782 = vpack.c.b16 %v9990, %v9982
    %v10783 = vpack.c.b16 %v9999, %v9991
    %v10784 = vpack.c.b16 %v10000, %v9992
    %v10785 = vpack.c.b16 %v10001, %v9993
    %v10786 = vpack.c.b16 %v10002, %v9994
    %v10787 = vpack.c.b16 %v10003, %v9995
    %v10788 = vpack.c.b16 %v10004, %v9996
    %v10789 = vpack.c.b16 %v10005, %v9997
    %v10790 = vpack.c.b16 %v10006, %v9998
    %v10791 = vpack.c.b16 %v10015, %v10007
    %v10792 = vpack.c.b16 %v10016, %v10008
    %v10793 = vpack.c.b16 %v10017, %v10009
    %v10794 = vpack.c.b16 %v10018, %v10010
    %v10795 = vpack.c.b16 %v10019, %v10011
    %v10796 = vpack.c.b16 %v10020, %v10012
    %v10797 = vpack.c.b16 %v10021, %v10013
    %v10798 = vpack.c.b16 %v10022, %v10014
    %v10799 = vpack.c.b16 %v10031, %v10023
    %v10800 = vpack.c.b16 %v10032, %v10024
    %v10801 = vpack.c.b16 %v10033, %v10025
    %v10802 = vpack.c.b16 %v10034, %v10026
    %v10803 = vpack.c.b16 %v10035, %v10027
    %v10804 = vpack.c.b16 %v10036, %v10028
    %v10805 = vpack.c.b16 %v10037, %v10029
    %v10806 = vpack.c.b16 %v10038, %v10030
    %v10807 = vpack.c.b16 %v10047, %v10039
    %v10808 = vpack.c.b16 %v10048, %v10040
    %v10809 = vpack.c.b16 %v10049, %v10041
    %v10810 = vpack.c.b16 %v10050, %v10042
    %v10811 = vpack.c.b16 %v10051, %v10043
    %v10812 = vpack.c.b16 %v10052, %v10044
    %v10813 = vpack.c.b16 %v10053, %v10045
    %v10814 = vpack.c.b16 %v10054, %v10046
    %v10815 = vpack.c.b16 %v10063, %v10055
    %v10816 = vpack.c.b16 %v10064, %v10056
    %v10817 = vpack.c.b16 %v10065, %v10057
    %v10818 = vpack.c.b16 %v10066, %v10058
    %v10819 = vpack.c.b16 %v10067, %v10059
    %v10820 = vpack.c.b16 %v10068, %v10060
    %v10821 = vpack.c.b16 %v10069, %v10061
    %v10822 = vpack.c.b16 %v10070, %v10062
    %v10823 = vpack.c.b16 %v10079, %v10071
    %v10824 = vpack.c.b16 %v10080, %v10072
    %v10825 = vpack.c.b16 %v10081, %v10073
    %v10826 = vpack.c.b16 %v10082, %v10074
    %v10827 = vpack.c.b16 %v10083, %v10075
    %v10828 = vpack.c.b16 %v10084, %v10076
    %v10829 = vpack.c.b16 %v10085, %v10077
    %v10830 = vpack.c.b16 %v10086, %v10078
    %v10831 = vpack.c.b16 %v10095, %v10087
    %v10832 = vpack.c.b16 %v10096, %v10088
    %v10833 = vpack.c.b16 %v10097, %v10089
    %v10834 = vpack.c.b16 %v10098, %v10090
    %v10835 = vpack.c.b16 %v10099, %v10091
    %v10836 = vpack.c.b16 %v10100, %v10092
    %v10837 = vpack.c.b16 %v10101, %v10093
    %v10838 = vpack.c.b16 %v10102, %v10094
    %v10839 = vpack.c.b16 %v10111, %v10103
    %v10840 = vpack.c.b16 %v10112, %v10104
    %v10841 = vpack.c.b16 %v10113, %v10105
    %v10842 = vpack.c.b16 %v10114, %v10106
    %v10843 = vpack.c.b16 %v10115, %v10107
    %v10844 = vpack.c.b16 %v10116, %v10108
    %v10845 = vpack.c.b16 %v10117, %v10109
    %v10846 = vpack.c.b16 %v10118, %v10110
    %v10847 = vpack.c.b16 %v10127, %v10119
    %v10848 = vpack.c.b16 %v10128, %v10120
    %v10849 = vpack.c.b16 %v10129, %v10121
    %v10850 = vpack.c.b16 %v10130, %v10122
    %v10851 = vpack.c.b16 %v10131, %v10123
    %v10852 = vpack.c.b16 %v10132, %v10124
    %v10853 = vpack.c.b16 %v10133, %v10125
    %v10854 = vpack.c.b16 %v10134, %v10126
    %v10855 = vpack.c.b16 %v10143, %v10135
    %v10856 = vpack.c.b16 %v10144, %v10136
    %v10857 = vpack.c.b16 %v10145, %v10137
    %v10858 = vpack.c.b16 %v10146, %v10138
    %v10859 = vpack.c.b16 %v10147, %v10139
    %v10860 = vpack.c.b16 %v10148, %v10140
    %v10861 = vpack.c.b16 %v10149, %v10141
    %v10862 = vpack.c.b16 %v10150, %v10142
    %v10863 = vpack.c.b16 %v10159, %v10151
    %v10864 = vpack.c.b16 %v10160, %v10152
    %v10865 = vpack.c.b16 %v10161, %v10153
    %v10866 = vpack.c.b16 %v10162, %v10154
    %v10867 = vpack.c.b16 %v10163, %v10155
    %v10868 = vpack.c.b16 %v10164, %v10156
    %v10869 = vpack.c.b16 %v10165, %v10157
    %v10870 = vpack.c.b16 %v10166, %v10158
    %v10871 = vpack.c.b16 %v10175, %v10167
    %v10872 = vpack.c.b16 %v10176, %v10168
    %v10873 = vpack.c.b16 %v10177, %v10169
    %v10874 = vpack.c.b16 %v10178, %v10170
    %v10875 = vpack.c.b16 %v10179, %v10171
    %v10876 = vpack.c.b16 %v10180, %v10172
    %v10877 = vpack.c.b16 %v10181, %v10173
    %v10878 = vpack.c.b16 %v10182, %v10174
    %v10879 = vpack.c.b16 %v10191, %v10183
    %v10880 = vpack.c.b16 %v10192, %v10184
    %v10881 = vpack.c.b16 %v10193, %v10185
    %v10882 = vpack.c.b16 %v10194, %v10186
    %v10883 = vpack.c.b16 %v10195, %v10187
    %v10884 = vpack.c.b16 %v10196, %v10188
    %v10885 = vpack.c.b16 %v10197, %v10189
    %v10886 = vpack.c.b16 %v10198, %v10190
    %v10887 = vpack.c.b16 %v10207, %v10199
    %v10888 = vpack.c.b16 %v10208, %v10200
    %v10889 = vpack.c.b16 %v10209, %v10201
    %v10890 = vpack.c.b16 %v10210, %v10202
    %v10891 = vpack.c.b16 %v10211, %v10203
    %v10892 = vpack.c.b16 %v10212, %v10204
    %v10893 = vpack.c.b16 %v10213, %v10205
    %v10894 = vpack.c.b16 %v10214, %v10206
    %v10895 = vpack.c.b16 %v10223, %v10215
    %v10896 = vpack.c.b16 %v10224, %v10216
    %v10897 = vpack.c.b16 %v10225, %v10217
    %v10898 = vpack.c.b16 %v10226, %v10218
    %v10899 = vpack.c.b16 %v10227, %v10219
    %v10900 = vpack.c.b16 %v10228, %v10220
    %v10901 = vpack.c.b16 %v10229, %v10221
    %v10902 = vpack.c.b16 %v10230, %v10222
    %v10903 = vpack.c.b16 %v10239, %v10231
    %v10904 = vpack.c.b16 %v10240, %v10232
    %v10905 = vpack.c.b16 %v10241, %v10233
    %v10906 = vpack.c.b16 %v10242, %v10234
    %v10907 = vpack.c.b16 %v10243, %v10235
    %v10908 = vpack.c.b16 %v10244, %v10236
    %v10909 = vpack.c.b16 %v10245, %v10237
    %v10910 = vpack.c.b16 %v10246, %v10238
    %v10911 = vpack.c.b16 %v10255, %v10247
    %v10912 = vpack.c.b16 %v10256, %v10248
    %v10913 = vpack.c.b16 %v10257, %v10249
    %v10914 = vpack.c.b16 %v10258, %v10250
    %v10915 = vpack.c.b16 %v10259, %v10251
    %v10916 = vpack.c.b16 %v10260, %v10252
    %v10917 = vpack.c.b16 %v10261, %v10253
    %v10918 = vpack.c.b16 %v10262, %v10254
    %v10919 = vpack.c.b16 %v10271, %v10263
    %v10920 = vpack.c.b16 %v10272, %v10264
    %v10921 = vpack.c.b16 %v10273, %v10265
    %v10922 = vpack.c.b16 %v10274, %v10266
    %v10923 = vpack.c.b16 %v10275, %v10267
    %v10924 = vpack.c.b16 %v10276, %v10268
    %v10925 = vpack.c.b16 %v10277, %v10269
    %v10926 = vpack.c.b16 %v10278, %v10270
    %v10927 = vpack.c.b16 %v10287, %v10279
    %v10928 = vpack.c.b16 %v10288, %v10280
    %v10929 = vpack.c.b16 %v10289, %v10281
    %v10930 = vpack.c.b16 %v10290, %v10282
    %v10931 = vpack.c.b16 %v10291, %v10283
    %v10932 = vpack.c.b16 %v10292, %v10284
    %v10933 = vpack.c.b16 %v10293, %v10285
    %v10934 = vpack.c.b16 %v10294, %v10286
    %v10935 = vpack.c.b16 %v10303, %v10295
    %v10936 = vpack.c.b16 %v10304, %v10296
    %v10937 = vpack.c.b16 %v10305, %v10297
    %v10938 = vpack.c.b16 %v10306, %v10298
    %v10939 = vpack.c.b16 %v10307, %v10299
    %v10940 = vpack.c.b16 %v10308, %v10300
    %v10941 = vpack.c.b16 %v10309, %v10301
    %v10942 = vpack.c.b16 %v10310, %v10302
    %v10943 = vpack.c.b16 %v10319, %v10311
    %v10944 = vpack.c.b16 %v10320, %v10312
    %v10945 = vpack.c.b16 %v10321, %v10313
    %v10946 = vpack.c.b16 %v10322, %v10314
    %v10947 = vpack.c.b16 %v10323, %v10315
    %v10948 = vpack.c.b16 %v10324, %v10316
    %v10949 = vpack.c.b16 %v10325, %v10317
    %v10950 = vpack.c.b16 %v10326, %v10318
    %v10951 = vpack.c.b16 %v10335, %v10327
    %v10952 = vpack.c.b16 %v10336, %v10328
    %v10953 = vpack.c.b16 %v10337, %v10329
    %v10954 = vpack.c.b16 %v10338, %v10330
    %v10955 = vpack.c.b16 %v10339, %v10331
    %v10956 = vpack.c.b16 %v10340, %v10332
    %v10957 = vpack.c.b16 %v10341, %v10333
    %v10958 = vpack.c.b16 %v10342, %v10334
    %v10959 = vpack.c.b16 %v10351, %v10343
    %v10960 = vpack.c.b16 %v10352, %v10344
    %v10961 = vpack.c.b16 %v10353, %v10345
    %v10962 = vpack.c.b16 %v10354, %v10346
    %v10963 = vpack.c.b16 %v10355, %v10347
    %v10964 = vpack.c.b16 %v10356, %v10348
    %v10965 = vpack.c.b16 %v10357, %v10349
    %v10966 = vpack.c.b16 %v10358, %v10350
    %v10967 = vpack.c.b16 %v10367, %v10359
    %v10968 = vpack.c.b16 %v10368, %v10360
    %v10969 = vpack.c.b16 %v10369, %v10361
    %v10970 = vpack.c.b16 %v10370, %v10362
    %v10971 = vpack.c.b16 %v10371, %v10363
    %v10972 = vpack.c.b16 %v10372, %v10364
    %v10973 = vpack.c.b16 %v10373, %v10365
    %v10974 = vpack.c.b16 %v10374, %v10366
    %v10975 = vpack.c.b16 %v10383, %v10375
    %v10976 = vpack.c.b16 %v10384, %v10376
    %v10977 = vpack.c.b16 %v10385, %v10377
    %v10978 = vpack.c.b16 %v10386, %v10378
    %v10979 = vpack.c.b16 %v10387, %v10379
    %v10980 = vpack.c.b16 %v10388, %v10380
    %v10981 = vpack.c.b16 %v10389, %v10381
    %v10982 = vpack.c.b16 %v10390, %v10382
    %v10983 = vpack.c.b16 %v10399, %v10391
    %v10984 = vpack.c.b16 %v10400, %v10392
    %v10985 = vpack.c.b16 %v10401, %v10393
    %v10986 = vpack.c.b16 %v10402, %v10394
    %v10987 = vpack.c.b16 %v10403, %v10395
    %v10988 = vpack.c.b16 %v10404, %v10396
    %v10989 = vpack.c.b16 %v10405, %v10397
    %v10990 = vpack.c.b16 %v10406, %v10398
    %v10991 = vpack.c.b16 %v10415, %v10407
    %v10992 = vpack.c.b16 %v10416, %v10408
    %v10993 = vpack.c.b16 %v10417, %v10409
    %v10994 = vpack.c.b16 %v10418, %v10410
    %v10995 = vpack.c.b16 %v10419, %v10411
    %v10996 = vpack.c.b16 %v10420, %v10412
    %v10997 = vpack.c.b16 %v10421, %v10413
    %v10998 = vpack.c.b16 %v10422, %v10414
    %v10999 = vpack.c.b16 %v10431, %v10423
    %v11000 = vpack.c.b16 %v10432, %v10424
    %v11001 = vpack.c.b16 %v10433, %v10425
    %v11002 = vpack.c.b16 %v10434, %v10426
    %v11003 = vpack.c.b16 %v10435, %v10427
    %v11004 = vpack.c.b16 %v10436, %v10428
    %v11005 = vpack.c.b16 %v10437, %v10429
    %v11006 = vpack.c.b16 %v10438, %v10430
    %v11007 = vpack.c.b16 %v10447, %v10439
    %v11008 = vpack.c.b16 %v10448, %v10440
    %v11009 = vpack.c.b16 %v10449, %v10441
    %v11010 = vpack.c.b16 %v10450, %v10442
    %v11011 = vpack.c.b16 %v10451, %v10443
    %v11012 = vpack.c.b16 %v10452, %v10444
    %v11013 = vpack.c.b16 %v10453, %v10445
    %v11014 = vpack.c.b16 %v10454, %v10446
    %v11015 = vpack.c.b16 %v10463, %v10455
    %v11016 = vpack.c.b16 %v10464, %v10456
    %v11017 = vpack.c.b16 %v10465, %v10457
    %v11018 = vpack.c.b16 %v10466, %v10458
    %v11019 = vpack.c.b16 %v10467, %v10459
    %v11020 = vpack.c.b16 %v10468, %v10460
    %v11021 = vpack.c.b16 %v10469, %v10461
    %v11022 = vpack.c.b16 %v10470, %v10462
    %v11023 = vpack.c.b16 %v10479, %v10471
    %v11024 = vpack.c.b16 %v10480, %v10472
    %v11025 = vpack.c.b16 %v10481, %v10473
    %v11026 = vpack.c.b16 %v10482, %v10474
    %v11027 = vpack.c.b16 %v10483, %v10475
    %v11028 = vpack.c.b16 %v10484, %v10476
    %v11029 = vpack.c.b16 %v10485, %v10477
    %v11030 = vpack.c.b16 %v10486, %v10478
    %v11031 = vpack.c.b16 %v10495, %v10487
    %v11032 = vpack.c.b16 %v10496, %v10488
    %v11033 = vpack.c.b16 %v10497, %v10489
    %v11034 = vpack.c.b16 %v10498, %v10490
    %v11035 = vpack.c.b16 %v10499, %v10491
    %v11036 = vpack.c.b16 %v10500, %v10492
    %v11037 = vpack.c.b16 %v10501, %v10493
    %v11038 = vpack.c.b16 %v10502, %v10494
    %v11039 = vpack.c.b16 %v10511, %v10503
    %v11040 = vpack.c.b16 %v10512, %v10504
    %v11041 = vpack.c.b16 %v10513, %v10505
    %v11042 = vpack.c.b16 %v10514, %v10506
    %v11043 = vpack.c.b16 %v10515, %v10507
    %v11044 = vpack.c.b16 %v10516, %v10508
    %v11045 = vpack.c.b16 %v10517, %v10509
    %v11046 = vpack.c.b16 %v10518, %v10510
    %v11047 = vpack.c.b16 %v10527, %v10519
    %v11048 = vpack.c.b16 %v10528, %v10520
    %v11049 = vpack.c.b16 %v10529, %v10521
    %v11050 = vpack.c.b16 %v10530, %v10522
    %v11051 = vpack.c.b16 %v10531, %v10523
    %v11052 = vpack.c.b16 %v10532, %v10524
    %v11053 = vpack.c.b16 %v10533, %v10525
    %v11054 = vpack.c.b16 %v10534, %v10526
    %v11055 = vpack.c.b16 %v10543, %v10535
    %v11056 = vpack.c.b16 %v10544, %v10536
    %v11057 = vpack.c.b16 %v10545, %v10537
    %v11058 = vpack.c.b16 %v10546, %v10538
    %v11059 = vpack.c.b16 %v10547, %v10539
    %v11060 = vpack.c.b16 %v10548, %v10540
    %v11061 = vpack.c.b16 %v10549, %v10541
    %v11062 = vpack.c.b16 %v10550, %v10542
    %11575 = vmatprep.subr.bf16.mxu0 %v10552
    %11576 = vmatpush1.bf16.msra.mxu0 %v10551
    %11577 = vmatprep.subr.bf16.mxu0 %v10560
    %11578 = vmatpush1.bf16.msra.mxu0 %v10559
    %11579 = vmatprep.subr.bf16.mxu0 %v10568
    %11580 = vmatpush1.bf16.msra.mxu0 %v10567
    %11581 = vmatprep.subr.bf16.mxu0 %v10576
    %11582 = vmatpush1.bf16.msra.mxu0 %v10575
    %11583 = vmatprep.subr.bf16.mxu0 %v10584
    %11584 = vmatpush1.bf16.msra.mxu0 %v10583
    %11585 = vmatprep.subr.bf16.mxu0 %v10592
    %11586 = vmatpush1.bf16.msra.mxu0 %v10591
    %11587 = vmatprep.subr.bf16.mxu0 %v10600
    %11588 = vmatpush1.bf16.msra.mxu0 %v10599
    %11589 = vmatprep.subr.bf16.mxu0 %v10608
    %11590 = vmatpush1.bf16.msra.mxu0 %v10607
    %11591 = vmatprep.subr.bf16.mxu0 %v10616
    %11592 = vmatpush1.bf16.msra.mxu0 %v10615
    %11593 = vmatprep.subr.bf16.mxu0 %v10624
    %11594 = vmatpush1.bf16.msra.mxu0 %v10623
    %11595 = vmatprep.subr.bf16.mxu0 %v10632
    %11596 = vmatpush1.bf16.msra.mxu0 %v10631
    %11597 = vmatprep.subr.bf16.mxu0 %v10640
    %11598 = vmatpush1.bf16.msra.mxu0 %v10639
    %11599 = vmatprep.subr.bf16.mxu0 %v10648
    %11600 = vmatpush1.bf16.msra.mxu0 %v10647
    %11601 = vmatprep.subr.bf16.mxu0 %v10656
    %11602 = vmatpush1.bf16.msra.mxu0 %v10655
    %11603 = vmatprep.subr.bf16.mxu0 %v10664
    %11604 = vmatpush1.bf16.msra.mxu0 %v10663
    %11605 = vmatprep.subr.bf16.mxu0 %v10672
    %11606 = vmatpush1.bf16.msra.mxu0 %v10671
    %11607 = vmatprep.mubr.bf16.mxu0 %v8454
    %11608 = vmatmul.mubr.bf16.gmra.mrb[0].mxu0 %v8453
    %v11609 = vpop.f32.mrb[0].mxu0
    %v11610 = vadd.f32 %v8978, %v11609
    %v11611 = vpop.f32.mrb[0].mxu0
    %v11612 = vadd.f32 %v8982, %v11611
    %v11613 = vpop.f32.mrb[0].mxu0
    %v11614 = vadd.f32 %v8978, %v11613
    %v11615 = vpop.f32.mrb[0].mxu0
    %v11616 = vadd.f32 %v8982, %v11615
    %11617 = vdwg.mxu0
    %11618 = vmatprep.subr.bf16.mxu0 %v10680
    %11619 = vmatpush1.bf16.msra.mxu0 %v10679
    %11620 = vmatprep.subr.bf16.mxu0 %v10688
    %11621 = vmatpush1.bf16.msra.mxu0 %v10687
    %11622 = vmatprep.subr.bf16.mxu0 %v10696
    %11623 = vmatpush1.bf16.msra.mxu0 %v10695
    %11624 = vmatprep.subr.bf16.mxu0 %v10704
    %11625 = vmatpush1.bf16.msra.mxu0 %v10703
    %11626 = vmatprep.subr.bf16.mxu0 %v10712
    %11627 = vmatpush1.bf16.msra.mxu0 %v10711
    %11628 = vmatprep.subr.bf16.mxu0 %v10720
    %11629 = vmatpush1.bf16.msra.mxu0 %v10719
    %11630 = vmatprep.subr.bf16.mxu0 %v10728
    %11631 = vmatpush1.bf16.msra.mxu0 %v10727
    %11632 = vmatprep.subr.bf16.mxu0 %v10736
    %11633 = vmatpush1.bf16.msra.mxu0 %v10735
    %11634 = vmatprep.subr.bf16.mxu0 %v10744
    %11635 = vmatpush1.bf16.msra.mxu0 %v10743
    %11636 = vmatprep.subr.bf16.mxu0 %v10752
    %11637 = vmatpush1.bf16.msra.mxu0 %v10751
    %11638 = vmatprep.subr.bf16.mxu0 %v10760
    %11639 = vmatpush1.bf16.msra.mxu0 %v10759
    %11640 = vmatprep.subr.bf16.mxu0 %v10768
    %11641 = vmatpush1.bf16.msra.mxu0 %v10767
    %11642 = vmatprep.subr.bf16.mxu0 %v10776
    %11643 = vmatpush1.bf16.msra.mxu0 %v10775
    %11644 = vmatprep.subr.bf16.mxu0 %v10784
    %11645 = vmatpush1.bf16.msra.mxu0 %v10783
    %11646 = vmatprep.subr.bf16.mxu0 %v10792
    %11647 = vmatpush1.bf16.msra.mxu0 %v10791
    %11648 = vmatprep.subr.bf16.mxu0 %v10800
    %11649 = vmatpush1.bf16.msra.mxu0 %v10799
    %11650 = vmatprep.mubr.bf16.mxu0 %v8456
    %11651 = vmatmul.mubr.bf16.gmra.mrb[0].mxu0 %v8455
    %v11652 = vpop.f32.mrb[0].mxu0
    %v11653 = vadd.f32 %v11610, %v11652
    %v11654 = vpop.f32.mrb[0].mxu0
    %v11655 = vadd.f32 %v11612, %v11654
    %v11656 = vpop.f32.mrb[0].mxu0
    %v11657 = vadd.f32 %v11614, %v11656
    %v11658 = vpop.f32.mrb[0].mxu0
    %v11659 = vadd.f32 %v11616, %v11658
    %11660 = vdwg.mxu0
    %11661 = vmatprep.subr.bf16.mxu0 %v10808
    %11662 = vmatpush1.bf16.msra.mxu0 %v10807
    %11663 = vmatprep.subr.bf16.mxu0 %v10816
    %11664 = vmatpush1.bf16.msra.mxu0 %v10815
    %11665 = vmatprep.subr.bf16.mxu0 %v10824
    %11666 = vmatpush1.bf16.msra.mxu0 %v10823
    %11667 = vmatprep.subr.bf16.mxu0 %v10832
    %11668 = vmatpush1.bf16.msra.mxu0 %v10831
    %11669 = vmatprep.subr.bf16.mxu0 %v10840
    %11670 = vmatpush1.bf16.msra.mxu0 %v10839
    %11671 = vmatprep.subr.bf16.mxu0 %v10848
    %11672 = vmatpush1.bf16.msra.mxu0 %v10847
    %11673 = vmatprep.subr.bf16.mxu0 %v10856
    %11674 = vmatpush1.bf16.msra.mxu0 %v10855
    %11675 = vmatprep.subr.bf16.mxu0 %v10864
    %11676 = vmatpush1.bf16.msra.mxu0 %v10863
    %11677 = vmatprep.subr.bf16.mxu0 %v10872
    %11678 = vmatpush1.bf16.msra.mxu0 %v10871
    %11679 = vmatprep.subr.bf16.mxu0 %v10880
    %11680 = vmatpush1.bf16.msra.mxu0 %v10879
    %11681 = vmatprep.subr.bf16.mxu0 %v10888
    %11682 = vmatpush1.bf16.msra.mxu0 %v10887
    %11683 = vmatprep.subr.bf16.mxu0 %v10896
    %11684 = vmatpush1.bf16.msra.mxu0 %v10895
    %11685 = vmatprep.subr.bf16.mxu0 %v10904
    %11686 = vmatpush1.bf16.msra.mxu0 %v10903
    %11687 = vmatprep.subr.bf16.mxu0 %v10912
    %11688 = vmatpush1.bf16.msra.mxu0 %v10911
    %11689 = vmatprep.subr.bf16.mxu0 %v10920
    %11690 = vmatpush1.bf16.msra.mxu0 %v10919
    %11691 = vmatprep.subr.bf16.mxu0 %v10928
    %11692 = vmatpush1.bf16.msra.mxu0 %v10927
    %11693 = vmatprep.mubr.bf16.mxu0 %v8458
    %11694 = vmatmul.mubr.bf16.gmra.mrb[0].mxu0 %v8457
    %v11695 = vpop.f32.mrb[0].mxu0
    %v11696 = vadd.f32 %v11653, %v11695
    %v11697 = vpop.f32.mrb[0].mxu0
    %v11698 = vadd.f32 %v11655, %v11697
    %v11699 = vpop.f32.mrb[0].mxu0
    %v11700 = vadd.f32 %v11657, %v11699
    %v11701 = vpop.f32.mrb[0].mxu0
    %v11702 = vadd.f32 %v11659, %v11701
    %11703 = vdwg.mxu0
    %11704 = vmatprep.subr.bf16.mxu0 %v10936
    %11705 = vmatpush1.bf16.msra.mxu0 %v10935
    %11706 = vmatprep.subr.bf16.mxu0 %v10944
    %11707 = vmatpush1.bf16.msra.mxu0 %v10943
    %11708 = vmatprep.subr.bf16.mxu0 %v10952
    %11709 = vmatpush1.bf16.msra.mxu0 %v10951
    %11710 = vmatprep.subr.bf16.mxu0 %v10960
    %11711 = vmatpush1.bf16.msra.mxu0 %v10959
    %11712 = vmatprep.subr.bf16.mxu0 %v10968
    %11713 = vmatpush1.bf16.msra.mxu0 %v10967
    %11714 = vmatprep.subr.bf16.mxu0 %v10976
    %11715 = vmatpush1.bf16.msra.mxu0 %v10975
    %11716 = vmatprep.subr.bf16.mxu0 %v10984
    %11717 = vmatpush1.bf16.msra.mxu0 %v10983
    %11718 = vmatprep.subr.bf16.mxu0 %v10992
    %11719 = vmatpush1.bf16.msra.mxu0 %v10991
    %11720 = vmatprep.subr.bf16.mxu0 %v11000
    %11721 = vmatpush1.bf16.msra.mxu0 %v10999
    %11722 = vmatprep.subr.bf16.mxu0 %v11008
    %11723 = vmatpush1.bf16.msra.mxu0 %v11007
    %11724 = vmatprep.subr.bf16.mxu0 %v11016
    %11725 = vmatpush1.bf16.msra.mxu0 %v11015
    %11726 = vmatprep.subr.bf16.mxu0 %v11024
    %11727 = vmatpush1.bf16.msra.mxu0 %v11023
    %11728 = vmatprep.subr.bf16.mxu0 %v11032
    %11729 = vmatpush1.bf16.msra.mxu0 %v11031
    %11730 = vmatprep.subr.bf16.mxu0 %v11040
    %11731 = vmatpush1.bf16.msra.mxu0 %v11039
    %11732 = vmatprep.subr.bf16.mxu0 %v11048
    %11733 = vmatpush1.bf16.msra.mxu0 %v11047
    %11734 = vmatprep.subr.bf16.mxu0 %v11056
    %11735 = vmatpush1.bf16.msra.mxu0 %v11055
    %11736 = vmatprep.mubr.bf16.mxu0 %v8460
    %11737 = vmatmul.mubr.bf16.gmra.mrb[0].mxu0 %v8459
    %v11738 = vpop.f32.mrb[0].mxu0
    %v11739 = vadd.f32 %v11696, %v11738
    %v11740 = vpop.f32.mrb[0].mxu0
    %v11741 = vadd.f32 %v11698, %v11740
    %v11742 = vpop.f32.mrb[0].mxu0
    %v11743 = vadd.f32 %v11700, %v11742
    %v11744 = vpop.f32.mrb[0].mxu0
    %v11745 = vadd.f32 %v11702, %v11744
    %11746 = vdwg.mxu0
    %11747 = vmatprep.subr.bf16.mxu0 %v10554
    %11748 = vmatpush1.bf16.msra.mxu0 %v10553
    %11749 = vmatprep.subr.bf16.mxu0 %v10562
    %11750 = vmatpush1.bf16.msra.mxu0 %v10561
    %11751 = vmatprep.subr.bf16.mxu0 %v10570
    %11752 = vmatpush1.bf16.msra.mxu0 %v10569
    %11753 = vmatprep.subr.bf16.mxu0 %v10578
    %11754 = vmatpush1.bf16.msra.mxu0 %v10577
    %11755 = vmatprep.subr.bf16.mxu0 %v10586
    %11756 = vmatpush1.bf16.msra.mxu0 %v10585
    %11757 = vmatprep.subr.bf16.mxu0 %v10594
    %11758 = vmatpush1.bf16.msra.mxu0 %v10593
    %11759 = vmatprep.subr.bf16.mxu0 %v10602
    %11760 = vmatpush1.bf16.msra.mxu0 %v10601
    %11761 = vmatprep.subr.bf16.mxu0 %v10610
    %11762 = vmatpush1.bf16.msra.mxu0 %v10609
    %11763 = vmatprep.subr.bf16.mxu0 %v10618
    %11764 = vmatpush1.bf16.msra.mxu0 %v10617
    %11765 = vmatprep.subr.bf16.mxu0 %v10626
    %11766 = vmatpush1.bf16.msra.mxu0 %v10625
    %11767 = vmatprep.subr.bf16.mxu0 %v10634
    %11768 = vmatpush1.bf16.msra.mxu0 %v10633
    %11769 = vmatprep.subr.bf16.mxu0 %v10642
    %11770 = vmatpush1.bf16.msra.mxu0 %v10641
    %11771 = vmatprep.subr.bf16.mxu0 %v10650
    %11772 = vmatpush1.bf16.msra.mxu0 %v10649
    %11773 = vmatprep.subr.bf16.mxu0 %v10658
    %11774 = vmatpush1.bf16.msra.mxu0 %v10657
    %11775 = vmatprep.subr.bf16.mxu0 %v10666
    %11776 = vmatpush1.bf16.msra.mxu0 %v10665
    %11777 = vmatprep.subr.bf16.mxu0 %v10674
    %11778 = vmatpush1.bf16.msra.mxu0 %v10673
    %11779 = vmatprep.mubr.bf16.mxu0 %v8454
    %11780 = vmatmul.mubr.bf16.gmra.mrb[0].mxu0 %v8453
    %v11781 = vpop.f32.mrb[0].mxu0
    %v11782 = vadd.f32 %v8986, %v11781
    %v11783 = vpop.f32.mrb[0].mxu0
    %v11784 = vadd.f32 %v8990, %v11783
    %v11785 = vpop.f32.mrb[0].mxu0
    %v11786 = vadd.f32 %v8986, %v11785
    %v11787 = vpop.f32.mrb[0].mxu0
    %v11788 = vadd.f32 %v8990, %v11787
    %11789 = vdwg.mxu0
    %11790 = vmatprep.subr.bf16.mxu0 %v10682
    %11791 = vmatpush1.bf16.msra.mxu0 %v10681
    %11792 = vmatprep.subr.bf16.mxu0 %v10690
    %11793 = vmatpush1.bf16.msra.mxu0 %v10689
    %11794 = vmatprep.subr.bf16.mxu0 %v10698
    %11795 = vmatpush1.bf16.msra.mxu0 %v10697
    %11796 = vmatprep.subr.bf16.mxu0 %v10706
    %11797 = vmatpush1.bf16.msra.mxu0 %v10705
    %11798 = vmatprep.subr.bf16.mxu0 %v10714
    %11799 = vmatpush1.bf16.msra.mxu0 %v10713
    %11800 = vmatprep.subr.bf16.mxu0 %v10722
    %11801 = vmatpush1.bf16.msra.mxu0 %v10721
    %11802 = vmatprep.subr.bf16.mxu0 %v10730
    %11803 = vmatpush1.bf16.msra.mxu0 %v10729
    %11804 = vmatprep.subr.bf16.mxu0 %v10738
    %11805 = vmatpush1.bf16.msra.mxu0 %v10737
    %11806 = vmatprep.subr.bf16.mxu0 %v10746
    %11807 = vmatpush1.bf16.msra.mxu0 %v10745
    %11808 = vmatprep.subr.bf16.mxu0 %v10754
    %11809 = vmatpush1.bf16.msra.mxu0 %v10753
    %11810 = vmatprep.subr.bf16.mxu0 %v10762
    %11811 = vmatpush1.bf16.msra.mxu0 %v10761
    %11812 = vmatprep.subr.bf16.mxu0 %v10770
    %11813 = vmatpush1.bf16.msra.mxu0 %v10769
    %11814 = vmatprep.subr.bf16.mxu0 %v10778
    %11815 = vmatpush1.bf16.msra.mxu0 %v10777
    %11816 = vmatprep.subr.bf16.mxu0 %v10786
    %11817 = vmatpush1.bf16.msra.mxu0 %v10785
    %11818 = vmatprep.subr.bf16.mxu0 %v10794
    %11819 = vmatpush1.bf16.msra.mxu0 %v10793
    %11820 = vmatprep.subr.bf16.mxu0 %v10802
    %11821 = vmatpush1.bf16.msra.mxu0 %v10801
    %11822 = vmatprep.mubr.bf16.mxu0 %v8456
    %11823 = vmatmul.mubr.bf16.gmra.mrb[0].mxu0 %v8455
    %v11824 = vpop.f32.mrb[0].mxu0
    %v11825 = vadd.f32 %v11782, %v11824
    %v11826 = vpop.f32.mrb[0].mxu0
    %v11827 = vadd.f32 %v11784, %v11826
    %v11828 = vpop.f32.mrb[0].mxu0
    %v11829 = vadd.f32 %v11786, %v11828
    %v11830 = vpop.f32.mrb[0].mxu0
    %v11831 = vadd.f32 %v11788, %v11830
    %11832 = vdwg.mxu0
    %11833 = vmatprep.subr.bf16.mxu0 %v10810
    %11834 = vmatpush1.bf16.msra.mxu0 %v10809
    %11835 = vmatprep.subr.bf16.mxu0 %v10818
    %11836 = vmatpush1.bf16.msra.mxu0 %v10817
    %11837 = vmatprep.subr.bf16.mxu0 %v10826
    %11838 = vmatpush1.bf16.msra.mxu0 %v10825
    %11839 = vmatprep.subr.bf16.mxu0 %v10834
    %11840 = vmatpush1.bf16.msra.mxu0 %v10833
    %11841 = vmatprep.subr.bf16.mxu0 %v10842
    %11842 = vmatpush1.bf16.msra.mxu0 %v10841
    %11843 = vmatprep.subr.bf16.mxu0 %v10850
    %11844 = vmatpush1.bf16.msra.mxu0 %v10849
    %11845 = vmatprep.subr.bf16.mxu0 %v10858
    %11846 = vmatpush1.bf16.msra.mxu0 %v10857
    %11847 = vmatprep.subr.bf16.mxu0 %v10866
    %11848 = vmatpush1.bf16.msra.mxu0 %v10865
    %11849 = vmatprep.subr.bf16.mxu0 %v10874
    %11850 = vmatpush1.bf16.msra.mxu0 %v10873
    %11851 = vmatprep.subr.bf16.mxu0 %v10882
    %11852 = vmatpush1.bf16.msra.mxu0 %v10881
    %11853 = vmatprep.subr.bf16.mxu0 %v10890
    %11854 = vmatpush1.bf16.msra.mxu0 %v10889
    %11855 = vmatprep.subr.bf16.mxu0 %v10898
    %11856 = vmatpush1.bf16.msra.mxu0 %v10897
    %11857 = vmatprep.subr.bf16.mxu0 %v10906
    %11858 = vmatpush1.bf16.msra.mxu0 %v10905
    %11859 = vmatprep.subr.bf16.mxu0 %v10914
    %11860 = vmatpush1.bf16.msra.mxu0 %v10913
    %11861 = vmatprep.subr.bf16.mxu0 %v10922
    %11862 = vmatpush1.bf16.msra.mxu0 %v10921
    %11863 = vmatprep.subr.bf16.mxu0 %v10930
    %11864 = vmatpush1.bf16.msra.mxu0 %v10929
    %11865 = vmatprep.mubr.bf16.mxu0 %v8458
    %11866 = vmatmul.mubr.bf16.gmra.mrb[0].mxu0 %v8457
    %v11867 = vpop.f32.mrb[0].mxu0
    %v11868 = vadd.f32 %v11825, %v11867
    %v11869 = vpop.f32.mrb[0].mxu0
    %v11870 = vadd.f32 %v11827, %v11869
    %v11871 = vpop.f32.mrb[0].mxu0
    %v11872 = vadd.f32 %v11829, %v11871
    %v11873 = vpop.f32.mrb[0].mxu0
    %v11874 = vadd.f32 %v11831, %v11873
    %11875 = vdwg.mxu0
    %11876 = vmatprep.subr.bf16.mxu0 %v10938
    %11877 = vmatpush1.bf16.msra.mxu0 %v10937
    %11878 = vmatprep.subr.bf16.mxu0 %v10946
    %11879 = vmatpush1.bf16.msra.mxu0 %v10945
    %11880 = vmatprep.subr.bf16.mxu0 %v10954
    %11881 = vmatpush1.bf16.msra.mxu0 %v10953
    %11882 = vmatprep.subr.bf16.mxu0 %v10962
    %11883 = vmatpush1.bf16.msra.mxu0 %v10961
    %11884 = vmatprep.subr.bf16.mxu0 %v10970
    %11885 = vmatpush1.bf16.msra.mxu0 %v10969
    %11886 = vmatprep.subr.bf16.mxu0 %v10978
    %11887 = vmatpush1.bf16.msra.mxu0 %v10977
    %11888 = vmatprep.subr.bf16.mxu0 %v10986
    %11889 = vmatpush1.bf16.msra.mxu0 %v10985
    %11890 = vmatprep.subr.bf16.mxu0 %v10994
    %11891 = vmatpush1.bf16.msra.mxu0 %v10993
    %11892 = vmatprep.subr.bf16.mxu0 %v11002
    %11893 = vmatpush1.bf16.msra.mxu0 %v11001
    %11894 = vmatprep.subr.bf16.mxu0 %v11010
    %11895 = vmatpush1.bf16.msra.mxu0 %v11009
    %11896 = vmatprep.subr.bf16.mxu0 %v11018
    %11897 = vmatpush1.bf16.msra.mxu0 %v11017
    %11898 = vmatprep.subr.bf16.mxu0 %v11026
    %11899 = vmatpush1.bf16.msra.mxu0 %v11025
    %11900 = vmatprep.subr.bf16.mxu0 %v11034
    %11901 = vmatpush1.bf16.msra.mxu0 %v11033
    %11902 = vmatprep.subr.bf16.mxu0 %v11042
    %11903 = vmatpush1.bf16.msra.mxu0 %v11041
    %11904 = vmatprep.subr.bf16.mxu0 %v11050
    %11905 = vmatpush1.bf16.msra.mxu0 %v11049
    %11906 = vmatprep.subr.bf16.mxu0 %v11058
    %11907 = vmatpush1.bf16.msra.mxu0 %v11057
    %11908 = vmatprep.mubr.bf16.mxu0 %v8460
    %11909 = vmatmul.mubr.bf16.gmra.mrb[0].mxu0 %v8459
    %v11910 = vpop.f32.mrb[0].mxu0
    %v11911 = vadd.f32 %v11868, %v11910
    %v11912 = vpop.f32.mrb[0].mxu0
    %v11913 = vadd.f32 %v11870, %v11912
    %v11914 = vpop.f32.mrb[0].mxu0
    %v11915 = vadd.f32 %v11872, %v11914
    %v11916 = vpop.f32.mrb[0].mxu0
    %v11917 = vadd.f32 %v11874, %v11916
    %11918 = vdwg.mxu0
    %11919 = vmatprep.subr.bf16.mxu0 %v10556
    %11920 = vmatpush1.bf16.msra.mxu0 %v10555
    %11921 = vmatprep.subr.bf16.mxu0 %v10564
    %11922 = vmatpush1.bf16.msra.mxu0 %v10563
    %11923 = vmatprep.subr.bf16.mxu0 %v10572
    %11924 = vmatpush1.bf16.msra.mxu0 %v10571
    %11925 = vmatprep.subr.bf16.mxu0 %v10580
    %11926 = vmatpush1.bf16.msra.mxu0 %v10579
    %11927 = vmatprep.subr.bf16.mxu0 %v10588
    %11928 = vmatpush1.bf16.msra.mxu0 %v10587
    %11929 = vmatprep.subr.bf16.mxu0 %v10596
    %11930 = vmatpush1.bf16.msra.mxu0 %v10595
    %11931 = vmatprep.subr.bf16.mxu0 %v10604
    %11932 = vmatpush1.bf16.msra.mxu0 %v10603
    %11933 = vmatprep.subr.bf16.mxu0 %v10612
    %11934 = vmatpush1.bf16.msra.mxu0 %v10611
    %11935 = vmatprep.subr.bf16.mxu0 %v10620
    %11936 = vmatpush1.bf16.msra.mxu0 %v10619
    %11937 = vmatprep.subr.bf16.mxu0 %v10628
    %11938 = vmatpush1.bf16.msra.mxu0 %v10627
    %11939 = vmatprep.subr.bf16.mxu0 %v10636
    %11940 = vmatpush1.bf16.msra.mxu0 %v10635
    %11941 = vmatprep.subr.bf16.mxu0 %v10644
    %11942 = vmatpush1.bf16.msra.mxu0 %v10643
    %11943 = vmatprep.subr.bf16.mxu0 %v10652
    %11944 = vmatpush1.bf16.msra.mxu0 %v10651
    %11945 = vmatprep.subr.bf16.mxu0 %v10660
    %11946 = vmatpush1.bf16.msra.mxu0 %v10659
    %11947 = vmatprep.subr.bf16.mxu0 %v10668
    %11948 = vmatpush1.bf16.msra.mxu0 %v10667
    %11949 = vmatprep.subr.bf16.mxu0 %v10676
    %11950 = vmatpush1.bf16.msra.mxu0 %v10675
    %11951 = vmatprep.mubr.bf16.mxu0 %v8454
    %11952 = vmatmul.mubr.bf16.gmra.mrb[0].mxu0 %v8453
    %v11953 = vpop.f32.mrb[0].mxu0
    %v11954 = vadd.f32 %v8994, %v11953
    %v11955 = vpop.f32.mrb[0].mxu0
    %v11956 = vadd.f32 %v8998, %v11955
    %v11957 = vpop.f32.mrb[0].mxu0
    %v11958 = vadd.f32 %v8994, %v11957
    %v11959 = vpop.f32.mrb[0].mxu0
    %v11960 = vadd.f32 %v8998, %v11959
    %11961 = vdwg.mxu0
    %11962 = vmatprep.subr.bf16.mxu0 %v10684
    %11963 = vmatpush1.bf16.msra.mxu0 %v10683
    %11964 = vmatprep.subr.bf16.mxu0 %v10692
    %11965 = vmatpush1.bf16.msra.mxu0 %v10691
    %11966 = vmatprep.subr.bf16.mxu0 %v10700
    %11967 = vmatpush1.bf16.msra.mxu0 %v10699
    %11968 = vmatprep.subr.bf16.mxu0 %v10708
    %11969 = vmatpush1.bf16.msra.mxu0 %v10707
    %11970 = vmatprep.subr.bf16.mxu0 %v10716
    %11971 = vmatpush1.bf16.msra.mxu0 %v10715
    %11972 = vmatprep.subr.bf16.mxu0 %v10724
    %11973 = vmatpush1.bf16.msra.mxu0 %v10723
    %11974 = vmatprep.subr.bf16.mxu0 %v10732
    %11975 = vmatpush1.bf16.msra.mxu0 %v10731
    %11976 = vmatprep.subr.bf16.mxu0 %v10740
    %11977 = vmatpush1.bf16.msra.mxu0 %v10739
    %11978 = vmatprep.subr.bf16.mxu0 %v10748
    %11979 = vmatpush1.bf16.msra.mxu0 %v10747
    %11980 = vmatprep.subr.bf16.mxu0 %v10756
    %11981 = vmatpush1.bf16.msra.mxu0 %v10755
    %11982 = vmatprep.subr.bf16.mxu0 %v10764
    %11983 = vmatpush1.bf16.msra.mxu0 %v10763
    %11984 = vmatprep.subr.bf16.mxu0 %v10772
    %11985 = vmatpush1.bf16.msra.mxu0 %v10771
    %11986 = vmatprep.subr.bf16.mxu0 %v10780
    %11987 = vmatpush1.bf16.msra.mxu0 %v10779
    %11988 = vmatprep.subr.bf16.mxu0 %v10788
    %11989 = vmatpush1.bf16.msra.mxu0 %v10787
    %11990 = vmatprep.subr.bf16.mxu0 %v10796
    %11991 = vmatpush1.bf16.msra.mxu0 %v10795
    %11992 = vmatprep.subr.bf16.mxu0 %v10804
    %11993 = vmatpush1.bf16.msra.mxu0 %v10803
    %11994 = vmatprep.mubr.bf16.mxu0 %v8456
    %11995 = vmatmul.mubr.bf16.gmra.mrb[0].mxu0 %v8455
    %v11996 = vpop.f32.mrb[0].mxu0
    %v11997 = vadd.f32 %v11954, %v11996
    %v11998 = vpop.f32.mrb[0].mxu0
    %v11999 = vadd.f32 %v11956, %v11998
    %v12000 = vpop.f32.mrb[0].mxu0
    %v12001 = vadd.f32 %v11958, %v12000
    %v12002 = vpop.f32.mrb[0].mxu0
    %v12003 = vadd.f32 %v11960, %v12002
    %12004 = vdwg.mxu0
    %12005 = vmatprep.subr.bf16.mxu0 %v10812
    %12006 = vmatpush1.bf16.msra.mxu0 %v10811
    %12007 = vmatprep.subr.bf16.mxu0 %v10820
    %12008 = vmatpush1.bf16.msra.mxu0 %v10819
    %12009 = vmatprep.subr.bf16.mxu0 %v10828
    %12010 = vmatpush1.bf16.msra.mxu0 %v10827
    %12011 = vmatprep.subr.bf16.mxu0 %v10836
    %12012 = vmatpush1.bf16.msra.mxu0 %v10835
    %12013 = vmatprep.subr.bf16.mxu0 %v10844
    %12014 = vmatpush1.bf16.msra.mxu0 %v10843
    %12015 = vmatprep.subr.bf16.mxu0 %v10852
    %12016 = vmatpush1.bf16.msra.mxu0 %v10851
    %12017 = vmatprep.subr.bf16.mxu0 %v10860
    %12018 = vmatpush1.bf16.msra.mxu0 %v10859
    %12019 = vmatprep.subr.bf16.mxu0 %v10868
    %12020 = vmatpush1.bf16.msra.mxu0 %v10867
    %12021 = vmatprep.subr.bf16.mxu0 %v10876
    %12022 = vmatpush1.bf16.msra.mxu0 %v10875
    %12023 = vmatprep.subr.bf16.mxu0 %v10884
    %12024 = vmatpush1.bf16.msra.mxu0 %v10883
    %12025 = vmatprep.subr.bf16.mxu0 %v10892
    %12026 = vmatpush1.bf16.msra.mxu0 %v10891
    %12027 = vmatprep.subr.bf16.mxu0 %v10900
    %12028 = vmatpush1.bf16.msra.mxu0 %v10899
    %12029 = vmatprep.subr.bf16.mxu0 %v10908
    %12030 = vmatpush1.bf16.msra.mxu0 %v10907
    %12031 = vmatprep.subr.bf16.mxu0 %v10916
    %12032 = vmatpush1.bf16.msra.mxu0 %v10915
    %12033 = vmatprep.subr.bf16.mxu0 %v10924
    %12034 = vmatpush1.bf16.msra.mxu0 %v10923
    %12035 = vmatprep.subr.bf16.mxu0 %v10932
    %12036 = vmatpush1.bf16.msra.mxu0 %v10931
    %12037 = vmatprep.mubr.bf16.mxu0 %v8458
    %12038 = vmatmul.mubr.bf16.gmra.mrb[0].mxu0 %v8457
    %v12039 = vpop.f32.mrb[0].mxu0
    %v12040 = vadd.f32 %v11997, %v12039
    %v12041 = vpop.f32.mrb[0].mxu0
    %v12042 = vadd.f32 %v11999, %v12041
    %v12043 = vpop.f32.mrb[0].mxu0
    %v12044 = vadd.f32 %v12001, %v12043
    %v12045 = vpop.f32.mrb[0].mxu0
    %v12046 = vadd.f32 %v12003, %v12045
    %12047 = vdwg.mxu0
    %12048 = vmatprep.subr.bf16.mxu0 %v10940
    %12049 = vmatpush1.bf16.msra.mxu0 %v10939
    %12050 = vmatprep.subr.bf16.mxu0 %v10948
    %12051 = vmatpush1.bf16.msra.mxu0 %v10947
    %12052 = vmatprep.subr.bf16.mxu0 %v10956
    %12053 = vmatpush1.bf16.msra.mxu0 %v10955
    %12054 = vmatprep.subr.bf16.mxu0 %v10964
    %12055 = vmatpush1.bf16.msra.mxu0 %v10963
    %12056 = vmatprep.subr.bf16.mxu0 %v10972
    %12057 = vmatpush1.bf16.msra.mxu0 %v10971
    %12058 = vmatprep.subr.bf16.mxu0 %v10980
    %12059 = vmatpush1.bf16.msra.mxu0 %v10979
    %12060 = vmatprep.subr.bf16.mxu0 %v10988
    %12061 = vmatpush1.bf16.msra.mxu0 %v10987
    %12062 = vmatprep.subr.bf16.mxu0 %v10996
    %12063 = vmatpush1.bf16.msra.mxu0 %v10995
    %12064 = vmatprep.subr.bf16.mxu0 %v11004
    %12065 = vmatpush1.bf16.msra.mxu0 %v11003
    %12066 = vmatprep.subr.bf16.mxu0 %v11012
    %12067 = vmatpush1.bf16.msra.mxu0 %v11011
    %12068 = vmatprep.subr.bf16.mxu0 %v11020
    %12069 = vmatpush1.bf16.msra.mxu0 %v11019
    %12070 = vmatprep.subr.bf16.mxu0 %v11028
    %12071 = vmatpush1.bf16.msra.mxu0 %v11027
    %12072 = vmatprep.subr.bf16.mxu0 %v11036
    %12073 = vmatpush1.bf16.msra.mxu0 %v11035
    %12074 = vmatprep.subr.bf16.mxu0 %v11044
    %12075 = vmatpush1.bf16.msra.mxu0 %v11043
    %12076 = vmatprep.subr.bf16.mxu0 %v11052
    %12077 = vmatpush1.bf16.msra.mxu0 %v11051
    %12078 = vmatprep.subr.bf16.mxu0 %v11060
    %12079 = vmatpush1.bf16.msra.mxu0 %v11059
    %12080 = vmatprep.mubr.bf16.mxu0 %v8460
    %12081 = vmatmul.mubr.bf16.gmra.mrb[0].mxu0 %v8459
    %v12082 = vpop.f32.mrb[0].mxu0
    %v12083 = vadd.f32 %v12040, %v12082
    %v12084 = vpop.f32.mrb[0].mxu0
    %v12085 = vadd.f32 %v12042, %v12084
    %v12086 = vpop.f32.mrb[0].mxu0
    %v12087 = vadd.f32 %v12044, %v12086
    %v12088 = vpop.f32.mrb[0].mxu0
    %v12089 = vadd.f32 %v12046, %v12088
    %12090 = vdwg.mxu0
    %12091 = vmatprep.subr.bf16.mxu0 %v10558
    %12092 = vmatpush1.bf16.msra.mxu0 %v10557
    %12093 = vmatprep.subr.bf16.mxu0 %v10566
    %12094 = vmatpush1.bf16.msra.mxu0 %v10565
    %12095 = vmatprep.subr.bf16.mxu0 %v10574
    %12096 = vmatpush1.bf16.msra.mxu0 %v10573
    %12097 = vmatprep.subr.bf16.mxu0 %v10582
    %12098 = vmatpush1.bf16.msra.mxu0 %v10581
    %12099 = vmatprep.subr.bf16.mxu0 %v10590
    %12100 = vmatpush1.bf16.msra.mxu0 %v10589
    %12101 = vmatprep.subr.bf16.mxu0 %v10598
    %12102 = vmatpush1.bf16.msra.mxu0 %v10597
    %12103 = vmatprep.subr.bf16.mxu0 %v10606
    %12104 = vmatpush1.bf16.msra.mxu0 %v10605
    %12105 = vmatprep.subr.bf16.mxu0 %v10614
    %12106 = vmatpush1.bf16.msra.mxu0 %v10613
    %12107 = vmatprep.subr.bf16.mxu0 %v10622
    %12108 = vmatpush1.bf16.msra.mxu0 %v10621
    %12109 = vmatprep.subr.bf16.mxu0 %v10630
    %12110 = vmatpush1.bf16.msra.mxu0 %v10629
    %12111 = vmatprep.subr.bf16.mxu0 %v10638
    %12112 = vmatpush1.bf16.msra.mxu0 %v10637
    %12113 = vmatprep.subr.bf16.mxu0 %v10646
    %12114 = vmatpush1.bf16.msra.mxu0 %v10645
    %12115 = vmatprep.subr.bf16.mxu0 %v10654
    %12116 = vmatpush1.bf16.msra.mxu0 %v10653
    %12117 = vmatprep.subr.bf16.mxu0 %v10662
    %12118 = vmatpush1.bf16.msra.mxu0 %v10661
    %12119 = vmatprep.subr.bf16.mxu0 %v10670
    %12120 = vmatpush1.bf16.msra.mxu0 %v10669
    %12121 = vmatprep.subr.bf16.mxu0 %v10678
    %12122 = vmatpush1.bf16.msra.mxu0 %v10677
    %12123 = vmatprep.mubr.bf16.mxu0 %v8454
    %12124 = vmatmul.mubr.bf16.gmra.mrb[0].mxu0 %v8453
    %v12125 = vpop.f32.mrb[0].mxu0
    %v12126 = vadd.f32 %v9002, %v12125
    %v12127 = vpop.f32.mrb[0].mxu0
    %v12128 = vadd.f32 %v9006, %v12127
    %v12129 = vpop.f32.mrb[0].mxu0
    %v12130 = vadd.f32 %v9002, %v12129
    %v12131 = vpop.f32.mrb[0].mxu0
    %v12132 = vadd.f32 %v9006, %v12131
    %12133 = vdwg.mxu0
    %12134 = vmatprep.subr.bf16.mxu0 %v10686
    %12135 = vmatpush1.bf16.msra.mxu0 %v10685
    %12136 = vmatprep.subr.bf16.mxu0 %v10694
    %12137 = vmatpush1.bf16.msra.mxu0 %v10693
    %12138 = vmatprep.subr.bf16.mxu0 %v10702
    %12139 = vmatpush1.bf16.msra.mxu0 %v10701
    %12140 = vmatprep.subr.bf16.mxu0 %v10710
    %12141 = vmatpush1.bf16.msra.mxu0 %v10709
    %12142 = vmatprep.subr.bf16.mxu0 %v10718
    %12143 = vmatpush1.bf16.msra.mxu0 %v10717
    %12144 = vmatprep.subr.bf16.mxu0 %v10726
    %12145 = vmatpush1.bf16.msra.mxu0 %v10725
    %12146 = vmatprep.subr.bf16.mxu0 %v10734
    %12147 = vmatpush1.bf16.msra.mxu0 %v10733
    %12148 = vmatprep.subr.bf16.mxu0 %v10742
    %12149 = vmatpush1.bf16.msra.mxu0 %v10741
    %12150 = vmatprep.subr.bf16.mxu0 %v10750
    %12151 = vmatpush1.bf16.msra.mxu0 %v10749
    %12152 = vmatprep.subr.bf16.mxu0 %v10758
    %12153 = vmatpush1.bf16.msra.mxu0 %v10757
    %12154 = vmatprep.subr.bf16.mxu0 %v10766
    %12155 = vmatpush1.bf16.msra.mxu0 %v10765
    %12156 = vmatprep.subr.bf16.mxu0 %v10774
    %12157 = vmatpush1.bf16.msra.mxu0 %v10773
    %12158 = vmatprep.subr.bf16.mxu0 %v10782
    %12159 = vmatpush1.bf16.msra.mxu0 %v10781
    %12160 = vmatprep.subr.bf16.mxu0 %v10790
    %12161 = vmatpush1.bf16.msra.mxu0 %v10789
    %12162 = vmatprep.subr.bf16.mxu0 %v10798
    %12163 = vmatpush1.bf16.msra.mxu0 %v10797
    %12164 = vmatprep.subr.bf16.mxu0 %v10806
    %12165 = vmatpush1.bf16.msra.mxu0 %v10805
    %12166 = vmatprep.mubr.bf16.mxu0 %v8456
    %12167 = vmatmul.mubr.bf16.gmra.mrb[0].mxu0 %v8455
    %v12168 = vpop.f32.mrb[0].mxu0
    %v12169 = vadd.f32 %v12126, %v12168
    %v12170 = vpop.f32.mrb[0].mxu0
    %v12171 = vadd.f32 %v12128, %v12170
    %v12172 = vpop.f32.mrb[0].mxu0
    %v12173 = vadd.f32 %v12130, %v12172
    %v12174 = vpop.f32.mrb[0].mxu0
    %v12175 = vadd.f32 %v12132, %v12174
    %12176 = vdwg.mxu0
    %12177 = vmatprep.subr.bf16.mxu0 %v10814
    %12178 = vmatpush1.bf16.msra.mxu0 %v10813
    %12179 = vmatprep.subr.bf16.mxu0 %v10822
    %12180 = vmatpush1.bf16.msra.mxu0 %v10821
    %12181 = vmatprep.subr.bf16.mxu0 %v10830
    %12182 = vmatpush1.bf16.msra.mxu0 %v10829
    %12183 = vmatprep.subr.bf16.mxu0 %v10838
    %12184 = vmatpush1.bf16.msra.mxu0 %v10837
    %12185 = vmatprep.subr.bf16.mxu0 %v10846
    %12186 = vmatpush1.bf16.msra.mxu0 %v10845
    %12187 = vmatprep.subr.bf16.mxu0 %v10854
    %12188 = vmatpush1.bf16.msra.mxu0 %v10853
    %12189 = vmatprep.subr.bf16.mxu0 %v10862
    %12190 = vmatpush1.bf16.msra.mxu0 %v10861
    %12191 = vmatprep.subr.bf16.mxu0 %v10870
    %12192 = vmatpush1.bf16.msra.mxu0 %v10869
    %12193 = vmatprep.subr.bf16.mxu0 %v10878
    %12194 = vmatpush1.bf16.msra.mxu0 %v10877
    %12195 = vmatprep.subr.bf16.mxu0 %v10886
    %12196 = vmatpush1.bf16.msra.mxu0 %v10885
    %12197 = vmatprep.subr.bf16.mxu0 %v10894
    %12198 = vmatpush1.bf16.msra.mxu0 %v10893
    %12199 = vmatprep.subr.bf16.mxu0 %v10902
    %12200 = vmatpush1.bf16.msra.mxu0 %v10901
    %12201 = vmatprep.subr.bf16.mxu0 %v10910
    %12202 = vmatpush1.bf16.msra.mxu0 %v10909
    %12203 = vmatprep.subr.bf16.mxu0 %v10918
    %12204 = vmatpush1.bf16.msra.mxu0 %v10917
    %12205 = vmatprep.subr.bf16.mxu0 %v10926
    %12206 = vmatpush1.bf16.msra.mxu0 %v10925
    %12207 = vmatprep.subr.bf16.mxu0 %v10934
    %12208 = vmatpush1.bf16.msra.mxu0 %v10933
    %12209 = vmatprep.mubr.bf16.mxu0 %v8458
    %12210 = vmatmul.mubr.bf16.gmra.mrb[0].mxu0 %v8457
    %v12211 = vpop.f32.mrb[0].mxu0
    %v12212 = vadd.f32 %v12169, %v12211
    %v12213 = vpop.f32.mrb[0].mxu0
    %v12214 = vadd.f32 %v12171, %v12213
    %v12215 = vpop.f32.mrb[0].mxu0
    %v12216 = vadd.f32 %v12173, %v12215
    %v12217 = vpop.f32.mrb[0].mxu0
    %v12218 = vadd.f32 %v12175, %v12217
    %12219 = vdwg.mxu0
    %12220 = vmatprep.subr.bf16.mxu0 %v10942
    %12221 = vmatpush1.bf16.msra.mxu0 %v10941
    %12222 = vmatprep.subr.bf16.mxu0 %v10950
    %12223 = vmatpush1.bf16.msra.mxu0 %v10949
    %12224 = vmatprep.subr.bf16.mxu0 %v10958
    %12225 = vmatpush1.bf16.msra.mxu0 %v10957
    %12226 = vmatprep.subr.bf16.mxu0 %v10966
    %12227 = vmatpush1.bf16.msra.mxu0 %v10965
    %12228 = vmatprep.subr.bf16.mxu0 %v10974
    %12229 = vmatpush1.bf16.msra.mxu0 %v10973
    %12230 = vmatprep.subr.bf16.mxu0 %v10982
    %12231 = vmatpush1.bf16.msra.mxu0 %v10981
    %12232 = vmatprep.subr.bf16.mxu0 %v10990
    %12233 = vmatpush1.bf16.msra.mxu0 %v10989
    %12234 = vmatprep.subr.bf16.mxu0 %v10998
    %12235 = vmatpush1.bf16.msra.mxu0 %v10997
    %12236 = vmatprep.subr.bf16.mxu0 %v11006
    %12237 = vmatpush1.bf16.msra.mxu0 %v11005
    %12238 = vmatprep.subr.bf16.mxu0 %v11014
    %12239 = vmatpush1.bf16.msra.mxu0 %v11013
    %12240 = vmatprep.subr.bf16.mxu0 %v11022
    %12241 = vmatpush1.bf16.msra.mxu0 %v11021
    %12242 = vmatprep.subr.bf16.mxu0 %v11030
    %12243 = vmatpush1.bf16.msra.mxu0 %v11029
    %12244 = vmatprep.subr.bf16.mxu0 %v11038
    %12245 = vmatpush1.bf16.msra.mxu0 %v11037
    %12246 = vmatprep.subr.bf16.mxu0 %v11046
    %12247 = vmatpush1.bf16.msra.mxu0 %v11045
    %12248 = vmatprep.subr.bf16.mxu0 %v11054
    %12249 = vmatpush1.bf16.msra.mxu0 %v11053
    %12250 = vmatprep.subr.bf16.mxu0 %v11062
    %12251 = vmatpush1.bf16.msra.mxu0 %v11061
    %12252 = vmatprep.mubr.bf16.mxu0 %v8460
    %12253 = vmatmul.mubr.bf16.gmra.mrb[0].mxu0 %v8459
    %v12254 = vpop.f32.mrb[0].mxu0
    %v12255 = vadd.f32 %v12212, %v12254
    %v12256 = vpop.f32.mrb[0].mxu0
    %v12257 = vadd.f32 %v12214, %v12256
    %v12258 = vpop.f32.mrb[0].mxu0
    %v12259 = vadd.f32 %v12216, %v12258
    %v12260 = vpop.f32.mrb[0].mxu0
    %v12261 = vadd.f32 %v12218, %v12260
    %12262 = vdwg.mxu0
    %v12263 = vmax.f32 %v11739, 0.0
    %v12264 = vmax.f32 %v11741, 0.0
    %v12265 = vmax.f32 %v11911, 0.0
    %v12266 = vmax.f32 %v11913, 0.0
    %v12267 = vmax.f32 %v12083, 0.0
    %v12268 = vmax.f32 %v12085, 0.0
    %v12269 = vmax.f32 %v12255, 0.0
    %v12270 = vmax.f32 %v12257, 0.0
    %v12271 = vmax.f32 %v11743, 0.0
    %v12272 = vmax.f32 %v11745, 0.0
    %v12273 = vmax.f32 %v11915, 0.0
    %v12274 = vmax.f32 %v11917, 0.0
    %v12275 = vmax.f32 %v12087, 0.0
    %v12276 = vmax.f32 %v12089, 0.0
    %v12277 = vmax.f32 %v12259, 0.0
    %v12278 = vmax.f32 %v12261, 0.0
    %v12279 = vpack.c.bf16 %v12271, %v12263
    %v12280 = vpack.c.bf16 %v12272, %v12264
    %v12281 = vpack.c.bf16 %v12273, %v12265
    %v12282 = vpack.c.bf16 %v12274, %v12266
    %v12283 = vpack.c.bf16 %v12275, %v12267
    %v12284 = vpack.c.bf16 %v12276, %v12268
    %v12285 = vpack.c.bf16 %v12277, %v12269
    %v12286 = vpack.c.bf16 %v12278, %v12270
    %v12287 = vld [vmem:[#allocation17] sm:$0xf]
    %v12288 = vld [vmem:[#allocation17 + $0x4] sm:$0xf]
    %v12289 = vld [vmem:[#allocation17 + $0x8] sm:$0xf]
    %v12290 = vld [vmem:[#allocation17 + $0xc] sm:$0xf]
    %v12291 = vld [vmem:[#allocation17 + $0x10] sm:$0xf]
    %v12292 = vld [vmem:[#allocation17 + $0x14] sm:$0xf]
    %v12293 = vld [vmem:[#allocation17 + $0x18] sm:$0xf]
    %v12294 = vld [vmem:[#allocation17 + $0x1c] sm:$0xf]
    %v12295 = vld [vmem:[#allocation17 + $0x20] sm:$0xf]
    %v12296 = vld [vmem:[#allocation17 + $0x24] sm:$0xf]
    %v12297 = vld [vmem:[#allocation17 + $0x28] sm:$0xf]
    %v12298 = vld [vmem:[#allocation17 + $0x2c] sm:$0xf]
    %v12299 = vld [vmem:[#allocation17 + $0x30] sm:$0xf]
    %v12300 = vld [vmem:[#allocation17 + $0x34] sm:$0xf]
    %v12301 = vld [vmem:[#allocation17 + $0x38] sm:$0xf]
    %v12302 = vld [vmem:[#allocation17 + $0x3c] sm:$0xf]
    %v12303 = vld [vmem:[#allocation17 + $0x40] sm:$0xf]
    %v12304 = vld [vmem:[#allocation17 + $0x44] sm:$0xf]
    %v12305 = vld [vmem:[#allocation17 + $0x48] sm:$0xf]
    %v12306 = vld [vmem:[#allocation17 + $0x4c] sm:$0xf]
    %v12307 = vld [vmem:[#allocation17 + $0x50] sm:$0xf]
    %v12308 = vld [vmem:[#allocation17 + $0x54] sm:$0xf]
    %v12309 = vld [vmem:[#allocation17 + $0x58] sm:$0xf]
    %v12310 = vld [vmem:[#allocation17 + $0x5c] sm:$0xf]
    %v12311 = vld [vmem:[#allocation17 + $0x60] sm:$0xf]
    %v12312 = vld [vmem:[#allocation17 + $0x64] sm:$0xf]
    %v12313 = vld [vmem:[#allocation17 + $0x68] sm:$0xf]
    %v12314 = vld [vmem:[#allocation17 + $0x6c] sm:$0xf]
    %v12315 = vld [vmem:[#allocation17 + $0x70] sm:$0xf]
    %v12316 = vld [vmem:[#allocation17 + $0x74] sm:$0xf]
    %v12317 = vld [vmem:[#allocation17 + $0x78] sm:$0xf]
    %v12318 = vld [vmem:[#allocation17 + $0x7c] sm:$0xf]
    %v12319 = vld [vmem:[#allocation17 + $0x80] sm:$0xf]
    %v12320 = vld [vmem:[#allocation17 + $0x84] sm:$0xf]
    %v12321 = vld [vmem:[#allocation17 + $0x88] sm:$0xf]
    %v12322 = vld [vmem:[#allocation17 + $0x8c] sm:$0xf]
    %v12323 = vld [vmem:[#allocation17 + $0x90] sm:$0xf]
    %v12324 = vld [vmem:[#allocation17 + $0x94] sm:$0xf]
    %v12325 = vld [vmem:[#allocation17 + $0x98] sm:$0xf]
    %v12326 = vld [vmem:[#allocation17 + $0x9c] sm:$0xf]
    %v12327 = vld [vmem:[#allocation17 + $0xa0] sm:$0xf]
    %v12328 = vld [vmem:[#allocation17 + $0xa4] sm:$0xf]
    %v12329 = vld [vmem:[#allocation17 + $0xa8] sm:$0xf]
    %v12330 = vld [vmem:[#allocation17 + $0xac] sm:$0xf]
    %v12331 = vld [vmem:[#allocation17 + $0xb0] sm:$0xf]
    %v12332 = vld [vmem:[#allocation17 + $0xb4] sm:$0xf]
    %v12333 = vld [vmem:[#allocation17 + $0xb8] sm:$0xf]
    %v12334 = vld [vmem:[#allocation17 + $0xbc] sm:$0xf]
    %v12335 = vld [vmem:[#allocation17 + $0xc0] sm:$0xf]
    %v12336 = vld [vmem:[#allocation17 + $0xc4] sm:$0xf]
    %v12337 = vld [vmem:[#allocation17 + $0xc8] sm:$0xf]
    %v12338 = vld [vmem:[#allocation17 + $0xcc] sm:$0xf]
    %v12339 = vld [vmem:[#allocation17 + $0xd0] sm:$0xf]
    %v12340 = vld [vmem:[#allocation17 + $0xd4] sm:$0xf]
    %v12341 = vld [vmem:[#allocation17 + $0xd8] sm:$0xf]
    %v12342 = vld [vmem:[#allocation17 + $0xdc] sm:$0xf]
    %v12343 = vld [vmem:[#allocation17 + $0xe0] sm:$0xf]
    %v12344 = vld [vmem:[#allocation17 + $0xe4] sm:$0xf]
    %v12345 = vld [vmem:[#allocation17 + $0xe8] sm:$0xf]
    %v12346 = vld [vmem:[#allocation17 + $0xec] sm:$0xf]
    %v12347 = vld [vmem:[#allocation17 + $0xf0] sm:$0xf]
    %v12348 = vld [vmem:[#allocation17 + $0xf4] sm:$0xf]
    %v12349 = vld [vmem:[#allocation17 + $0xf8] sm:$0xf]
    %v12350 = vld [vmem:[#allocation17 + $0xfc] sm:$0xf]
    %v12351 = vld [vmem:[#allocation17 + $0x100] sm:$0xf]
    %v12352 = vld [vmem:[#allocation17 + $0x104] sm:$0xf]
    %v12353 = vld [vmem:[#allocation17 + $0x108] sm:$0xf]
    %v12354 = vld [vmem:[#allocation17 + $0x10c] sm:$0xf]
    %v12355 = vld [vmem:[#allocation17 + $0x110] sm:$0xf]
    %v12356 = vld [vmem:[#allocation17 + $0x114] sm:$0xf]
    %v12357 = vld [vmem:[#allocation17 + $0x118] sm:$0xf]
    %v12358 = vld [vmem:[#allocation17 + $0x11c] sm:$0xf]
    %v12359 = vld [vmem:[#allocation17 + $0x120] sm:$0xf]
    %v12360 = vld [vmem:[#allocation17 + $0x124] sm:$0xf]
    %v12361 = vld [vmem:[#allocation17 + $0x128] sm:$0xf]
    %v12362 = vld [vmem:[#allocation17 + $0x12c] sm:$0xf]
    %v12363 = vld [vmem:[#allocation17 + $0x130] sm:$0xf]
    %v12364 = vld [vmem:[#allocation17 + $0x134] sm:$0xf]
    %v12365 = vld [vmem:[#allocation17 + $0x138] sm:$0xf]
    %v12366 = vld [vmem:[#allocation17 + $0x13c] sm:$0xf]
    %v12367 = vld [vmem:[#allocation17 + $0x140] sm:$0xf]
    %v12368 = vld [vmem:[#allocation17 + $0x144] sm:$0xf]
    %v12369 = vld [vmem:[#allocation17 + $0x148] sm:$0xf]
    %v12370 = vld [vmem:[#allocation17 + $0x14c] sm:$0xf]
    %v12371 = vld [vmem:[#allocation17 + $0x150] sm:$0xf]
    %v12372 = vld [vmem:[#allocation17 + $0x154] sm:$0xf]
    %v12373 = vld [vmem:[#allocation17 + $0x158] sm:$0xf]
    %v12374 = vld [vmem:[#allocation17 + $0x15c] sm:$0xf]
    %v12375 = vld [vmem:[#allocation17 + $0x160] sm:$0xf]
    %v12376 = vld [vmem:[#allocation17 + $0x164] sm:$0xf]
    %v12377 = vld [vmem:[#allocation17 + $0x168] sm:$0xf]
    %v12378 = vld [vmem:[#allocation17 + $0x16c] sm:$0xf]
    %v12379 = vld [vmem:[#allocation17 + $0x170] sm:$0xf]
    %v12380 = vld [vmem:[#allocation17 + $0x174] sm:$0xf]
    %v12381 = vld [vmem:[#allocation17 + $0x178] sm:$0xf]
    %v12382 = vld [vmem:[#allocation17 + $0x17c] sm:$0xf]
    %v12383 = vld [vmem:[#allocation17 + $0x180] sm:$0xf]
    %v12384 = vld [vmem:[#allocation17 + $0x184] sm:$0xf]
    %v12385 = vld [vmem:[#allocation17 + $0x188] sm:$0xf]
    %v12386 = vld [vmem:[#allocation17 + $0x18c] sm:$0xf]
    %v12387 = vld [vmem:[#allocation17 + $0x190] sm:$0xf]
    %v12388 = vld [vmem:[#allocation17 + $0x194] sm:$0xf]
    %v12389 = vld [vmem:[#allocation17 + $0x198] sm:$0xf]
    %v12390 = vld [vmem:[#allocation17 + $0x19c] sm:$0xf]
    %v12391 = vld [vmem:[#allocation17 + $0x1a0] sm:$0xf]
    %v12392 = vld [vmem:[#allocation17 + $0x1a4] sm:$0xf]
    %v12393 = vld [vmem:[#allocation17 + $0x1a8] sm:$0xf]
    %v12394 = vld [vmem:[#allocation17 + $0x1ac] sm:$0xf]
    %v12395 = vld [vmem:[#allocation17 + $0x1b0] sm:$0xf]
    %v12396 = vld [vmem:[#allocation17 + $0x1b4] sm:$0xf]
    %v12397 = vld [vmem:[#allocation17 + $0x1b8] sm:$0xf]
    %v12398 = vld [vmem:[#allocation17 + $0x1bc] sm:$0xf]
    %v12399 = vld [vmem:[#allocation17 + $0x1c0] sm:$0xf]
    %v12400 = vld [vmem:[#allocation17 + $0x1c4] sm:$0xf]
    %v12401 = vld [vmem:[#allocation17 + $0x1c8] sm:$0xf]
    %v12402 = vld [vmem:[#allocation17 + $0x1cc] sm:$0xf]
    %v12403 = vld [vmem:[#allocation17 + $0x1d0] sm:$0xf]
    %v12404 = vld [vmem:[#allocation17 + $0x1d4] sm:$0xf]
    %v12405 = vld [vmem:[#allocation17 + $0x1d8] sm:$0xf]
    %v12406 = vld [vmem:[#allocation17 + $0x1dc] sm:$0xf]
    %v12407 = vld [vmem:[#allocation17 + $0x1e0] sm:$0xf]
    %v12408 = vld [vmem:[#allocation17 + $0x1e4] sm:$0xf]
    %v12409 = vld [vmem:[#allocation17 + $0x1e8] sm:$0xf]
    %v12410 = vld [vmem:[#allocation17 + $0x1ec] sm:$0xf]
    %v12411 = vld [vmem:[#allocation17 + $0x1f0] sm:$0xf]
    %v12412 = vld [vmem:[#allocation17 + $0x1f4] sm:$0xf]
    %v12413 = vld [vmem:[#allocation17 + $0x1f8] sm:$0xf]
    %v12414 = vld [vmem:[#allocation17 + $0x1fc] sm:$0xf]
    %v12415 = vld [vmem:[#allocation19] sm:$0x1]
    %v12417 = vlaneseq
    %v12418 = vshrl.u32 %v12417, 7
    %v12419 = vsub.s32 0, %v12418
    %v12420 = vrot.slane %v12415, %v12419
    %v12550 = vunpack.c.l.b16 %v12287
    %v12551 = vunpack.c.l.b16 %v12288
    %v12552 = vunpack.c.l.b16 %v12289
    %v12553 = vunpack.c.l.b16 %v12290
    %v12554 = vunpack.c.l.b16 %v12291
    %v12555 = vunpack.c.l.b16 %v12292
    %v12556 = vunpack.c.l.b16 %v12293
    %v12557 = vunpack.c.l.b16 %v12294
    %v12558 = vunpack.c.l.b16 %v12295
    %v12559 = vunpack.c.l.b16 %v12296
    %v12560 = vunpack.c.l.b16 %v12297
    %v12561 = vunpack.c.l.b16 %v12298
    %v12562 = vunpack.c.l.b16 %v12299
    %v12563 = vunpack.c.l.b16 %v12300
    %v12564 = vunpack.c.l.b16 %v12301
    %v12565 = vunpack.c.l.b16 %v12302
    %v12566 = vunpack.c.l.b16 %v12303
    %v12567 = vunpack.c.l.b16 %v12304
    %v12568 = vunpack.c.l.b16 %v12305
    %v12569 = vunpack.c.l.b16 %v12306
    %v12570 = vunpack.c.l.b16 %v12307
    %v12571 = vunpack.c.l.b16 %v12308
    %v12572 = vunpack.c.l.b16 %v12309
    %v12573 = vunpack.c.l.b16 %v12310
    %v12574 = vunpack.c.l.b16 %v12311
    %v12575 = vunpack.c.l.b16 %v12312
    %v12576 = vunpack.c.l.b16 %v12313
    %v12577 = vunpack.c.l.b16 %v12314
    %v12578 = vunpack.c.l.b16 %v12315
    %v12579 = vunpack.c.l.b16 %v12316
    %v12580 = vunpack.c.l.b16 %v12317
    %v12581 = vunpack.c.l.b16 %v12318
    %v12582 = vunpack.c.l.b16 %v12319
    %v12583 = vunpack.c.l.b16 %v12320
    %v12584 = vunpack.c.l.b16 %v12321
    %v12585 = vunpack.c.l.b16 %v12322
    %v12586 = vunpack.c.l.b16 %v12323
    %v12587 = vunpack.c.l.b16 %v12324
    %v12588 = vunpack.c.l.b16 %v12325
    %v12589 = vunpack.c.l.b16 %v12326
    %v12590 = vunpack.c.l.b16 %v12327
    %v12591 = vunpack.c.l.b16 %v12328
    %v12592 = vunpack.c.l.b16 %v12329
    %v12593 = vunpack.c.l.b16 %v12330
    %v12594 = vunpack.c.l.b16 %v12331
    %v12595 = vunpack.c.l.b16 %v12332
    %v12596 = vunpack.c.l.b16 %v12333
    %v12597 = vunpack.c.l.b16 %v12334
    %v12598 = vunpack.c.l.b16 %v12335
    %v12599 = vunpack.c.l.b16 %v12336
    %v12600 = vunpack.c.l.b16 %v12337
    %v12601 = vunpack.c.l.b16 %v12338
    %v12602 = vunpack.c.l.b16 %v12339
    %v12603 = vunpack.c.l.b16 %v12340
    %v12604 = vunpack.c.l.b16 %v12341
    %v12605 = vunpack.c.l.b16 %v12342
    %v12606 = vunpack.c.l.b16 %v12343
    %v12607 = vunpack.c.l.b16 %v12344
    %v12608 = vunpack.c.l.b16 %v12345
    %v12609 = vunpack.c.l.b16 %v12346
    %v12610 = vunpack.c.l.b16 %v12347
    %v12611 = vunpack.c.l.b16 %v12348
    %v12612 = vunpack.c.l.b16 %v12349
    %v12613 = vunpack.c.l.b16 %v12350
    %v12614 = vunpack.c.l.b16 %v12351
    %v12615 = vunpack.c.l.b16 %v12352
    %v12616 = vunpack.c.l.b16 %v12353
    %v12617 = vunpack.c.l.b16 %v12354
    %v12618 = vunpack.c.l.b16 %v12355
    %v12619 = vunpack.c.l.b16 %v12356
    %v12620 = vunpack.c.l.b16 %v12357
    %v12621 = vunpack.c.l.b16 %v12358
    %v12622 = vunpack.c.l.b16 %v12359
    %v12623 = vunpack.c.l.b16 %v12360
    %v12624 = vunpack.c.l.b16 %v12361
    %v12625 = vunpack.c.l.b16 %v12362
    %v12626 = vunpack.c.l.b16 %v12363
    %v12627 = vunpack.c.l.b16 %v12364
    %v12628 = vunpack.c.l.b16 %v12365
    %v12629 = vunpack.c.l.b16 %v12366
    %v12630 = vunpack.c.l.b16 %v12367
    %v12631 = vunpack.c.l.b16 %v12368
    %v12632 = vunpack.c.l.b16 %v12369
    %v12633 = vunpack.c.l.b16 %v12370
    %v12634 = vunpack.c.l.b16 %v12371
    %v12635 = vunpack.c.l.b16 %v12372
    %v12636 = vunpack.c.l.b16 %v12373
    %v12637 = vunpack.c.l.b16 %v12374
    %v12638 = vunpack.c.l.b16 %v12375
    %v12639 = vunpack.c.l.b16 %v12376
    %v12640 = vunpack.c.l.b16 %v12377
    %v12641 = vunpack.c.l.b16 %v12378
    %v12642 = vunpack.c.l.b16 %v12379
    %v12643 = vunpack.c.l.b16 %v12380
    %v12644 = vunpack.c.l.b16 %v12381
    %v12645 = vunpack.c.l.b16 %v12382
    %v12646 = vunpack.c.l.b16 %v12383
    %v12647 = vunpack.c.l.b16 %v12384
    %v12648 = vunpack.c.l.b16 %v12385
    %v12649 = vunpack.c.l.b16 %v12386
    %v12650 = vunpack.c.l.b16 %v12387
    %v12651 = vunpack.c.l.b16 %v12388
    %v12652 = vunpack.c.l.b16 %v12389
    %v12653 = vunpack.c.l.b16 %v12390
    %v12654 = vunpack.c.l.b16 %v12391
    %v12655 = vunpack.c.l.b16 %v12392
    %v12656 = vunpack.c.l.b16 %v12393
    %v12657 = vunpack.c.l.b16 %v12394
    %v12658 = vunpack.c.l.b16 %v12395
    %v12659 = vunpack.c.l.b16 %v12396
    %v12660 = vunpack.c.l.b16 %v12397
    %v12661 = vunpack.c.l.b16 %v12398
    %v12662 = vunpack.c.l.b16 %v12399
    %v12663 = vunpack.c.l.b16 %v12400
    %v12664 = vunpack.c.l.b16 %v12401
    %v12665 = vunpack.c.l.b16 %v12402
    %v12666 = vunpack.c.l.b16 %v12403
    %v12667 = vunpack.c.l.b16 %v12404
    %v12668 = vunpack.c.l.b16 %v12405
    %v12669 = vunpack.c.l.b16 %v12406
    %v12670 = vunpack.c.l.b16 %v12407
    %v12671 = vunpack.c.l.b16 %v12408
    %v12672 = vunpack.c.l.b16 %v12409
    %v12673 = vunpack.c.l.b16 %v12410
    %v12674 = vunpack.c.l.b16 %v12411
    %v12675 = vunpack.c.l.b16 %v12412
    %v12676 = vunpack.c.l.b16 %v12413
    %v12677 = vunpack.c.l.b16 %v12414
    %v12678 = vpack.c.b16 %v12551, %v12550
    %v12679 = vpack.c.b16 %v12553, %v12552
    %v12680 = vpack.c.b16 %v12555, %v12554
    %v12681 = vpack.c.b16 %v12557, %v12556
    %v12682 = vpack.c.b16 %v12559, %v12558
    %v12683 = vpack.c.b16 %v12561, %v12560
    %v12684 = vpack.c.b16 %v12563, %v12562
    %v12685 = vpack.c.b16 %v12565, %v12564
    %v12686 = vpack.c.b16 %v12567, %v12566
    %v12687 = vpack.c.b16 %v12569, %v12568
    %v12688 = vpack.c.b16 %v12571, %v12570
    %v12689 = vpack.c.b16 %v12573, %v12572
    %v12690 = vpack.c.b16 %v12575, %v12574
    %v12691 = vpack.c.b16 %v12577, %v12576
    %v12692 = vpack.c.b16 %v12579, %v12578
    %v12693 = vpack.c.b16 %v12581, %v12580
    %v12694 = vpack.c.b16 %v12583, %v12582
    %v12695 = vpack.c.b16 %v12585, %v12584
    %v12696 = vpack.c.b16 %v12587, %v12586
    %v12697 = vpack.c.b16 %v12589, %v12588
    %v12698 = vpack.c.b16 %v12591, %v12590
    %v12699 = vpack.c.b16 %v12593, %v12592
    %v12700 = vpack.c.b16 %v12595, %v12594
    %v12701 = vpack.c.b16 %v12597, %v12596
    %v12702 = vpack.c.b16 %v12599, %v12598
    %v12703 = vpack.c.b16 %v12601, %v12600
    %v12704 = vpack.c.b16 %v12603, %v12602
    %v12705 = vpack.c.b16 %v12605, %v12604
    %v12706 = vpack.c.b16 %v12607, %v12606
    %v12707 = vpack.c.b16 %v12609, %v12608
    %v12708 = vpack.c.b16 %v12611, %v12610
    %v12709 = vpack.c.b16 %v12613, %v12612
    %v12710 = vpack.c.b16 %v12615, %v12614
    %v12711 = vpack.c.b16 %v12617, %v12616
    %v12712 = vpack.c.b16 %v12619, %v12618
    %v12713 = vpack.c.b16 %v12621, %v12620
    %v12714 = vpack.c.b16 %v12623, %v12622
    %v12715 = vpack.c.b16 %v12625, %v12624
    %v12716 = vpack.c.b16 %v12627, %v12626
    %v12717 = vpack.c.b16 %v12629, %v12628
    %v12718 = vpack.c.b16 %v12631, %v12630
    %v12719 = vpack.c.b16 %v12633, %v12632
    %v12720 = vpack.c.b16 %v12635, %v12634
    %v12721 = vpack.c.b16 %v12637, %v12636
    %v12722 = vpack.c.b16 %v12639, %v12638
    %v12723 = vpack.c.b16 %v12641, %v12640
    %v12724 = vpack.c.b16 %v12643, %v12642
    %v12725 = vpack.c.b16 %v12645, %v12644
    %v12726 = vpack.c.b16 %v12647, %v12646
    %v12727 = vpack.c.b16 %v12649, %v12648
    %v12728 = vpack.c.b16 %v12651, %v12650
    %v12729 = vpack.c.b16 %v12653, %v12652
    %v12730 = vpack.c.b16 %v12655, %v12654
    %v12731 = vpack.c.b16 %v12657, %v12656
    %v12732 = vpack.c.b16 %v12659, %v12658
    %v12733 = vpack.c.b16 %v12661, %v12660
    %v12734 = vpack.c.b16 %v12663, %v12662
    %v12735 = vpack.c.b16 %v12665, %v12664
    %v12736 = vpack.c.b16 %v12667, %v12666
    %v12737 = vpack.c.b16 %v12669, %v12668
    %v12738 = vpack.c.b16 %v12671, %v12670
    %v12739 = vpack.c.b16 %v12673, %v12672
    %v12740 = vpack.c.b16 %v12675, %v12674
    %v12741 = vpack.c.b16 %v12677, %v12676
    %12806 = vmatprep.subr.bf16.mxu0 0
    %12807 = vmatpush1.bf16.msra.mxu0 %v12678
    %12808 = vmatprep.subr.bf16.mxu0 0
    %12809 = vmatpush1.bf16.msra.mxu0 %v12679
    %12810 = vmatprep.subr.bf16.mxu0 0
    %12811 = vmatpush1.bf16.msra.mxu0 %v12680
    %12812 = vmatprep.subr.bf16.mxu0 0
    %12813 = vmatpush1.bf16.msra.mxu0 %v12681
    %12814 = vmatprep.subr.bf16.mxu0 0
    %12815 = vmatpush1.bf16.msra.mxu0 %v12682
    %12816 = vmatprep.subr.bf16.mxu0 0
    %12817 = vmatpush1.bf16.msra.mxu0 %v12683
    %12818 = vmatprep.subr.bf16.mxu0 0
    %12819 = vmatpush1.bf16.msra.mxu0 %v12684
    %12820 = vmatprep.subr.bf16.mxu0 0
    %12821 = vmatpush1.bf16.msra.mxu0 %v12685
    %12822 = vmatprep.subr.bf16.mxu0 0
    %12823 = vmatpush1.bf16.msra.mxu0 %v12686
    %12824 = vmatprep.subr.bf16.mxu0 0
    %12825 = vmatpush1.bf16.msra.mxu0 %v12687
    %12826 = vmatprep.subr.bf16.mxu0 0
    %12827 = vmatpush1.bf16.msra.mxu0 %v12688
    %12828 = vmatprep.subr.bf16.mxu0 0
    %12829 = vmatpush1.bf16.msra.mxu0 %v12689
    %12830 = vmatprep.subr.bf16.mxu0 0
    %12831 = vmatpush1.bf16.msra.mxu0 %v12690
    %12832 = vmatprep.subr.bf16.mxu0 0
    %12833 = vmatpush1.bf16.msra.mxu0 %v12691
    %12834 = vmatprep.subr.bf16.mxu0 0
    %12835 = vmatpush1.bf16.msra.mxu0 %v12692
    %12836 = vmatprep.subr.bf16.mxu0 0
    %12837 = vmatpush1.bf16.msra.mxu0 %v12693
    %12838 = vmatprep.mubr.bf16.mxu0 %v12280
    %12839 = vmatmul.mubr.bf16.gmra.mrb[0].mxu0 %v12279
    %v12840 = vpop.f32.mrb[0].mxu0
    %v12841 = vadd.f32 %v12420, %v12840
    %v12842 = vpop.f32.mrb[0].mxu0
    %v12843 = vpop.f32.mrb[0].mxu0
    %v12844 = vadd.f32 %v12420, %v12843
    %v12845 = vpop.f32.mrb[0].mxu0
    %12846 = vdwg.mxu0
    %12847 = vmatprep.subr.bf16.mxu0 0
    %12848 = vmatpush1.bf16.msra.mxu0 %v12694
    %12849 = vmatprep.subr.bf16.mxu0 0
    %12850 = vmatpush1.bf16.msra.mxu0 %v12695
    %12851 = vmatprep.subr.bf16.mxu0 0
    %12852 = vmatpush1.bf16.msra.mxu0 %v12696
    %12853 = vmatprep.subr.bf16.mxu0 0
    %12854 = vmatpush1.bf16.msra.mxu0 %v12697
    %12855 = vmatprep.subr.bf16.mxu0 0
    %12856 = vmatpush1.bf16.msra.mxu0 %v12698
    %12857 = vmatprep.subr.bf16.mxu0 0
    %12858 = vmatpush1.bf16.msra.mxu0 %v12699
    %12859 = vmatprep.subr.bf16.mxu0 0
    %12860 = vmatpush1.bf16.msra.mxu0 %v12700
    %12861 = vmatprep.subr.bf16.mxu0 0
    %12862 = vmatpush1.bf16.msra.mxu0 %v12701
    %12863 = vmatprep.subr.bf16.mxu0 0
    %12864 = vmatpush1.bf16.msra.mxu0 %v12702
    %12865 = vmatprep.subr.bf16.mxu0 0
    %12866 = vmatpush1.bf16.msra.mxu0 %v12703
    %12867 = vmatprep.subr.bf16.mxu0 0
    %12868 = vmatpush1.bf16.msra.mxu0 %v12704
    %12869 = vmatprep.subr.bf16.mxu0 0
    %12870 = vmatpush1.bf16.msra.mxu0 %v12705
    %12871 = vmatprep.subr.bf16.mxu0 0
    %12872 = vmatpush1.bf16.msra.mxu0 %v12706
    %12873 = vmatprep.subr.bf16.mxu0 0
    %12874 = vmatpush1.bf16.msra.mxu0 %v12707
    %12875 = vmatprep.subr.bf16.mxu0 0
    %12876 = vmatpush1.bf16.msra.mxu0 %v12708
    %12877 = vmatprep.subr.bf16.mxu0 0
    %12878 = vmatpush1.bf16.msra.mxu0 %v12709
    %12879 = vmatprep.mubr.bf16.mxu0 %v12282
    %12880 = vmatmul.mubr.bf16.gmra.mrb[0].mxu0 %v12281
    %v12881 = vpop.f32.mrb[0].mxu0
    %v12882 = vadd.f32 %v12841, %v12881
    %v12883 = vpop.f32.mrb[0].mxu0
    %v12884 = vpop.f32.mrb[0].mxu0
    %v12885 = vadd.f32 %v12844, %v12884
    %v12886 = vpop.f32.mrb[0].mxu0
    %12887 = vdwg.mxu0
    %12888 = vmatprep.subr.bf16.mxu0 0
    %12889 = vmatpush1.bf16.msra.mxu0 %v12710
    %12890 = vmatprep.subr.bf16.mxu0 0
    %12891 = vmatpush1.bf16.msra.mxu0 %v12711
    %12892 = vmatprep.subr.bf16.mxu0 0
    %12893 = vmatpush1.bf16.msra.mxu0 %v12712
    %12894 = vmatprep.subr.bf16.mxu0 0
    %12895 = vmatpush1.bf16.msra.mxu0 %v12713
    %12896 = vmatprep.subr.bf16.mxu0 0
    %12897 = vmatpush1.bf16.msra.mxu0 %v12714
    %12898 = vmatprep.subr.bf16.mxu0 0
    %12899 = vmatpush1.bf16.msra.mxu0 %v12715
    %12900 = vmatprep.subr.bf16.mxu0 0
    %12901 = vmatpush1.bf16.msra.mxu0 %v12716
    %12902 = vmatprep.subr.bf16.mxu0 0
    %12903 = vmatpush1.bf16.msra.mxu0 %v12717
    %12904 = vmatprep.subr.bf16.mxu0 0
    %12905 = vmatpush1.bf16.msra.mxu0 %v12718
    %12906 = vmatprep.subr.bf16.mxu0 0
    %12907 = vmatpush1.bf16.msra.mxu0 %v12719
    %12908 = vmatprep.subr.bf16.mxu0 0
    %12909 = vmatpush1.bf16.msra.mxu0 %v12720
    %12910 = vmatprep.subr.bf16.mxu0 0
    %12911 = vmatpush1.bf16.msra.mxu0 %v12721
    %12912 = vmatprep.subr.bf16.mxu0 0
    %12913 = vmatpush1.bf16.msra.mxu0 %v12722
    %12914 = vmatprep.subr.bf16.mxu0 0
    %12915 = vmatpush1.bf16.msra.mxu0 %v12723
    %12916 = vmatprep.subr.bf16.mxu0 0
    %12917 = vmatpush1.bf16.msra.mxu0 %v12724
    %12918 = vmatprep.subr.bf16.mxu0 0
    %12919 = vmatpush1.bf16.msra.mxu0 %v12725
    %12920 = vmatprep.mubr.bf16.mxu0 %v12284
    %12921 = vmatmul.mubr.bf16.gmra.mrb[0].mxu0 %v12283
    %v12922 = vpop.f32.mrb[0].mxu0
    %v12923 = vadd.f32 %v12882, %v12922
    %v12924 = vpop.f32.mrb[0].mxu0
    %v12925 = vpop.f32.mrb[0].mxu0
    %v12926 = vadd.f32 %v12885, %v12925
    %v12927 = vpop.f32.mrb[0].mxu0
    %12928 = vdwg.mxu0
    %12929 = vmatprep.subr.bf16.mxu0 0
    %12930 = vmatpush1.bf16.msra.mxu0 %v12726
    %12931 = vmatprep.subr.bf16.mxu0 0
    %12932 = vmatpush1.bf16.msra.mxu0 %v12727
    %12933 = vmatprep.subr.bf16.mxu0 0
    %12934 = vmatpush1.bf16.msra.mxu0 %v12728
    %12935 = vmatprep.subr.bf16.mxu0 0
    %12936 = vmatpush1.bf16.msra.mxu0 %v12729
    %12937 = vmatprep.subr.bf16.mxu0 0
    %12938 = vmatpush1.bf16.msra.mxu0 %v12730
    %12939 = vmatprep.subr.bf16.mxu0 0
    %12940 = vmatpush1.bf16.msra.mxu0 %v12731
    %12941 = vmatprep.subr.bf16.mxu0 0
    %12942 = vmatpush1.bf16.msra.mxu0 %v12732
    %12943 = vmatprep.subr.bf16.mxu0 0
    %12944 = vmatpush1.bf16.msra.mxu0 %v12733
    %12945 = vmatprep.subr.bf16.mxu0 0
    %12946 = vmatpush1.bf16.msra.mxu0 %v12734
    %12947 = vmatprep.subr.bf16.mxu0 0
    %12948 = vmatpush1.bf16.msra.mxu0 %v12735
    %12949 = vmatprep.subr.bf16.mxu0 0
    %12950 = vmatpush1.bf16.msra.mxu0 %v12736
    %12951 = vmatprep.subr.bf16.mxu0 0
    %12952 = vmatpush1.bf16.msra.mxu0 %v12737
    %12953 = vmatprep.subr.bf16.mxu0 0
    %12954 = vmatpush1.bf16.msra.mxu0 %v12738
    %12955 = vmatprep.subr.bf16.mxu0 0
    %12956 = vmatpush1.bf16.msra.mxu0 %v12739
    %12957 = vmatprep.subr.bf16.mxu0 0
    %12958 = vmatpush1.bf16.msra.mxu0 %v12740
    %12959 = vmatprep.subr.bf16.mxu0 0
    %12960 = vmatpush1.bf16.msra.mxu0 %v12741
    %12961 = vmatprep.mubr.bf16.mxu0 %v12286
    %12962 = vmatmul.mubr.bf16.gmra.mrb[0].mxu0 %v12285
    %v12963 = vpop.f32.mrb[0].mxu0
    %v12964 = vadd.f32 %v12923, %v12963
    %v12965 = vpop.f32.mrb[0].mxu0
    %v12966 = vpop.f32.mrb[0].mxu0
    %v12967 = vadd.f32 %v12926, %v12966
    %v12968 = vpop.f32.mrb[0].mxu0
    %12969 = vdwg.mxu0
    %12970 = vst [vmem:[#allocation20] sm:$0xff] %v12964
    %12971 = vst [vmem:[#allocation20 + $0x8] sm:$0xff] %v12967
    // Predicated region
    $region90: #{tpu_custom_call.1} parent=1 // pred_check
      _
    $region91: #{tpu_custom_call.1} parent=1 // pred_check_branch
      %12973 = sbr.rel (0) target = $region93
    $region92: #{tpu_custom_call.1} parent=1 // pred_region
      %s12975 = ssub.s32 256, 256
      %12976 = vsyncadd [#allocation4], %s12975
      %s12977 = sshll.u32 [#allocation20], 4
      %s12978 = int_to_ptr.vmem [resolvable:$true] %s12977
      %12983 = dma.vmem_to_hbm [thread:$0]  %s12978, 256, %s11, [#allocation4], 128, 128, 8
    $region93: #{tpu_custom_call.1} parent=1 // pred_fallthru
      _
    // Predicated region
    $region94: #{tpu_custom_call.1} parent=1 // pred_check
      _
    $region95: #{tpu_custom_call.1} parent=1 // pred_check_branch
      %12985 = sbr.rel (0) target = $region97
    $region96: #{tpu_custom_call.1} parent=1 // pred_region
      %12986 = dma.done [#allocation4], 256
    $region97: #{tpu_custom_call.1} parent=1 // pred_fallthru
      _
    %12987 = vsyncpa [#allocation3], 1
    %12988 = vsyncpa [#allocation6], 1
    %12989 = vsyncpa [#allocation9], 1
    %12990 = vsyncpa [#allocation12], 1
    %12991 = vsyncpa [#allocation15], 1
    %12992 = vsyncpa [#allocation18], 1
    %12993 = vsyncpa [#allocation4], 1

</llo_original>
